<compile_context>
chip_gen: v7x
topology: tpu7x:2x2x1
jax: 0.10.0
libtpu: 0.0.40
codegen_flags: <defaults>
</compile_context>

<pallas_src>
import jax
import jax.numpy as jnp
from jax.experimental import pallas as pl
from jax.experimental.pallas import tpu as pltpu


def _conv_bn_relu_kernel(w_ref, p_ref, shift_ref, o_ref):
    # w_ref:     (C_out, Kp)  bf16   (BN scale pre-folded, K zero-padded to 32)
    # p_ref:     (Kp, TP)     bf16   (transposed patches tile, zero-padded rows)
    # shift_ref: (C_out, 1)   f32    (conv bias + BN shift)
    # o_ref:     (C_out, TP)  bf16/f32 (lane-dense, channel-first / NCDHW order)
    y = jnp.dot(w_ref[...], p_ref[...], preferred_element_type=jnp.float32)
    o_ref[...] = jnp.maximum(y + shift_ref[...], 0.0).astype(o_ref.dtype)


def _patch_matmul_pallas(w_rows, patches_t, shift, tp, out_dtype):
    """relu(w_rows @ patches_t + shift): (C_out,K)bf16 x (K,P)bf16 -> (C_out,P)."""
    C_out, K = w_rows.shape
    P = patches_t.shape[1]
    pad = (-P) % tp
    if pad:  # trace-time branch; never triggers for FNet's shapes (TP divides P)
        patches_t = jnp.pad(patches_t, ((0, 0), (0, pad)))
    Pp = P + pad
    out_itemsize = jnp.dtype(out_dtype).itemsize
    cost = pl.CostEstimate(
        flops=2 * C_out * K * Pp,
        transcendentals=0,
        bytes_accessed=(w_rows.size * w_rows.dtype.itemsize
                        + patches_t.size * patches_t.dtype.itemsize
                        + shift.size * 4
                        + C_out * Pp * out_itemsize),
    )
    out = pl.pallas_call(
        _conv_bn_relu_kernel,
        out_shape=jax.ShapeDtypeStruct((C_out, Pp), out_dtype),
        grid_spec=pltpu.PrefetchScalarGridSpec(
            num_scalar_prefetch=0,
            grid=(Pp // tp,),
            in_specs=[
                pl.BlockSpec((C_out, K), lambda i: (0, 0)),
                pl.BlockSpec((K, tp), lambda i: (0, i)),
                pl.BlockSpec((C_out, 1), lambda i: (0, 0)),
            ],
            out_specs=pl.BlockSpec((C_out, tp), lambda i: (0, i)),
        ),
        compiler_params=pltpu.CompilerParams(
            dimension_semantics=("parallel",),
            vmem_limit_bytes=32 * 1024 * 1024),
        cost_estimate=cost,
    )(w_rows, patches_t, shift)
    return out[:, :P] if pad else out


def _extract_patches_t(L, *, dtype=None, c_pad_to=None):
    """L: (C, D, H, W) -> transposed patches (C*8, Do*Ho*Wo).

    K axis is flattened (c, kd, kh, kw) channel-major (matches the PyTorch
    Conv3d weight layout); P axis is (do, ho, wo) row-major (NCDHW order).
    `dtype` casts BEFORE the 7-D transpose so the copy pass runs at that width;
    `c_pad_to` appends zero channels so K lands on a multiple of 16 (bf16 tile).
    """
    C, D, H, W = L.shape
    if dtype is not None and L.dtype != dtype:
        L = L.astype(dtype)
    if c_pad_to is not None and C < c_pad_to:
        L = jnp.pad(L, ((0, c_pad_to - C), (0, 0), (0, 0), (0, 0)))
        C = c_pad_to
    Do, Ho, Wo = D // 2, H // 2, W // 2
    Lc = L[:, : 2 * Do, : 2 * Ho, : 2 * Wo].reshape(C, Do, 2, Ho, 2, Wo, 2)
    pt = jnp.transpose(Lc, (0, 2, 4, 6, 1, 3, 5)).reshape(C * 8, Do * Ho * Wo)
    return pt, (Do, Ho, Wo)


def conv3d_k2s2_bn_relu(L, w, b, bn_scale, bn_shift, *, tp=None,
                        out_dtype=jnp.float32):
    """Fused Conv3d(k=2,s=2) + BatchNorm3d(eval) + ReLU.

    L: (C_in, D, H, W) logical conv input (batch dropped).
    Returns (C_out, Do, Ho, Wo) -- i.e. NCDHW without batch.
    tp=None -> tiny layer, plain XLA matmul (per perf review); else Pallas.
    """
    C_out, C_in = w.shape[0], w.shape[1]
    K = C_in * 8
    # relu(((p.W + b) - mu)*g/sqrt(v+eps) + beta) = relu(p.(W*scale) + shift)
    w_rows = w.reshape(C_out, K) * bn_scale[:, None]      # fold BN scale (f32)
    shift = (b * bn_scale + bn_shift).reshape(C_out, 1).astype(jnp.float32)
    if tp is None:
        patches_t, (Do, Ho, Wo) = _extract_patches_t(L)
        y = jnp.maximum(w_rows @ patches_t + shift, 0.0).astype(out_dtype)
    else:
        k_pad = (-K) % 16                                  # 24 -> 32 for bf16 tiles
        Kp = K + k_pad
        w_bf = w_rows.astype(jnp.bfloat16)
        if k_pad:
            w_bf = jnp.pad(w_bf, ((0, 0), (0, k_pad)))
        patches_t, (Do, Ho, Wo) = _extract_patches_t(
            L, dtype=jnp.bfloat16, c_pad_to=Kp // 8)
        y = _patch_matmul_pallas(w_bf, patches_t, shift, tp, out_dtype)
    return y.reshape(C_out, Do, Ho, Wo)


def fnet_forward(x, params):
    x = x.reshape(1, 3, 2, 14, 28).astype(jnp.float32)
    w1, b1 = params["conv3d_w"], params["conv3d_b"]
    w2, b2 = params["conv3d2_w"], params["conv3d2_b"]
    g, s = params["bn_scale"], params["bn_shift"]

    # Activations are stored channel-first (C, D, H, W) exactly as the kernel
    # writes them, so PyTorch's x.transpose(1, k) is just an axis swap (0, k-1)
    # that fuses with the next layer's patch extraction.
    y = x[0]                                                     # (3, 2, 14, 28)
    # x = dropout(relu(bn(conv3d(x))))            dropout == identity (eval)
    y = conv3d_k2s2_bn_relu(y, w1, b1, g, s)                     # (128, 1, 7, 14)   P=98    XLA
    # x = relu(bn(conv3d2(x.transpose(1, 2))))
    y = conv3d_k2s2_bn_relu(jnp.transpose(y, (1, 0, 2, 3)),
                            w2, b2, g, s)                        # (128, 64, 3, 7)   P=1344  XLA
    # x = dropout(relu(bn(conv3d(x.transpose(1, 3)))))
    y = conv3d_k2s2_bn_relu(jnp.transpose(y, (2, 1, 0, 3)),
                            w1, b1, g, s, tp=768,
                            out_dtype=jnp.bfloat16)              # (128, 32, 64, 3)  P=6144  Pallas, grid=8, bf16 out
    # x = relu(bn(conv3d(x.transpose(1, 4))))
    # Final output kept f32 to match the PyTorch module's dtype; switch
    # out_dtype to jnp.bfloat16 here if downstream consumers accept bf16.
    y = conv3d_k2s2_bn_relu(jnp.transpose(y, (3, 1, 2, 0)),
                            w1, b1, g, s, tp=4096,
                            out_dtype=jnp.float32)               # (128, 16, 32, 64) P=32768 Pallas, grid=8
    return y[None]                                               # (1, 128, 16, 32, 64)


def init_params(key):
    k1, k2, k3, k4, k5, k6 = jax.random.split(key, 6)
    eps = 1e-5
    gamma = 1.0 + 0.1 * jax.random.normal(k5, (128,), jnp.float32)
    beta = 0.1 * jax.random.normal(k6, (128,), jnp.float32)
    running_mean = jnp.zeros((128,), jnp.float32)   # fresh BatchNorm3d running stats
    running_var = jnp.ones((128,), jnp.float32)
    bn_scale = gamma / jnp.sqrt(running_var + eps)
    bn_shift = beta - running_mean * bn_scale
    return {
        "conv3d_w": 0.1 * jax.random.normal(k1, (128, 3, 2, 2, 2), jnp.float32),
        "conv3d_b": 0.1 * jax.random.normal(k2, (128,), jnp.float32),
        "conv3d2_w": 0.1 * jax.random.normal(k3, (128, 1, 2, 2, 2), jnp.float32),
        "conv3d2_b": 0.1 * jax.random.normal(k4, (128,), jnp.float32),
        "bn_scale": bn_scale,
        "bn_shift": bn_shift,
    }
    # TODO(synk): training-mode dropout (p=0.4) and batch-stat BatchNorm are
    # stochastic/batch-dependent; eval-mode semantics are used here.


if __name__ == "__main__":
    key = jax.random.PRNGKey(0)
    kx, kp = jax.random.split(key)
    x = jax.random.normal(kx, (1, 3, 2, 14, 28), jnp.float32)
    params = init_params(kp)

    out = jax.jit(fnet_forward)(x, params)
    out = jax.block_until_ready(out)
    assert out.shape == (1, 128, 16, 32, 64), out.shape
    assert bool(jnp.all(jnp.isfinite(out)))
    print("KERNEL_OK")
</pallas_src>

<mosaic_0001>
module attributes {stable_mosaic.version = 11 : i64} {
  func.func @_conv_bn_relu_kernel(%arg0: i32, %arg1: memref<128x32xbf16, #tpu.memory_space<vmem>>, %arg2: memref<32x768xbf16, #tpu.memory_space<vmem>>, %arg3: memref<128x1xf32, #tpu.memory_space<vmem>>, %arg4: memref<128x768xbf16, #tpu.memory_space<vmem>>) attributes {dimension_semantics = [#tpu.dimension_semantics<parallel>], iteration_bounds = array<i64: 8>, scalar_prefetch = 0 : i64, scratch_operands = 0 : i64, tpu.core_type = #tpu.core_type<tc>, window_params = [{pipeline_mode = #tpu.pipeline_mode<synchronous>, transform_indices = @transform_0, window_bounds = array<i64: 128, 32>}, {transform_indices = @transform_1, window_bounds = array<i64: 32, 768>}, {pipeline_mode = #tpu.pipeline_mode<synchronous>, transform_indices = @transform_2, window_bounds = array<i64: 128, 1>}, {transform_indices = @transform_3, window_bounds = array<i64: 128, 768>}]} {
    %c0 = arith.constant 0 : index
    %c0_0 = arith.constant 0 : index
    %0 = vector.load %arg1[%c0, %c0_0] : memref<128x32xbf16, #tpu.memory_space<vmem>>, vector<128x32xbf16>
    %c0_1 = arith.constant 0 : index
    %c0_2 = arith.constant 0 : index
    %1 = vector.load %arg2[%c0_1, %c0_2] : memref<32x768xbf16, #tpu.memory_space<vmem>>, vector<32x768xbf16>
    %cst = arith.constant dense<0.000000e+00> : vector<128x768xf32>
    %2 = tpu.matmul %0, %1, %cst {dimension_numbers = #tpu.dot_dimension_numbers<[1], [0], [0], [1], [0, 0, 1, 1], [], []>} : vector<128x32xbf16>, vector<32x768xbf16>, vector<128x768xf32> -> vector<128x768xf32>
    %c0_3 = arith.constant 0 : index
    %c0_4 = arith.constant 0 : index
    %3 = vector.load %arg3[%c0_3, %c0_4] : memref<128x1xf32, #tpu.memory_space<vmem>>, vector<128x1xf32>
    %4 = vector.broadcast %3 : vector<128x1xf32> to vector<128x768xf32>
    %5 = arith.addf %2, %4 : vector<128x768xf32>
    %cst_5 = arith.constant 0.000000e+00 : f32
    %6 = vector.broadcast %cst_5 : f32 to vector<128x768xf32>
    %7 = arith.maximumf %5, %6 : vector<128x768xf32>
    %8 = arith.truncf %7 : vector<128x768xf32> to vector<128x768xbf16>
    %c0_6 = arith.constant 0 : index
    %c0_7 = arith.constant 0 : index
    %9 = vector.load %arg4[%c0_6, %c0_7] : memref<128x768xbf16, #tpu.memory_space<vmem>>, vector<128x768xbf16>
    tpu.vector_store %arg4[%c0_6, %c0_7], %8 {strides = array<i32>} : memref<128x768xbf16, #tpu.memory_space<vmem>>, vector<128x768xbf16>,
    return
  }
  func.func @transform_0(%arg0: i32) -> (i32, i32) {
    %c0_i32 = arith.constant 0 : i32
    %c0_i32_0 = arith.constant 0 : i32
    %c0_i32_1 = arith.constant 0 : i32
    return %c0_i32, %c0_i32_0 : i32, i32
  }
  func.func @transform_1(%arg0: i32) -> (i32, i32) {
    %c0_i32 = arith.constant 0 : i32
    %c0_i32_0 = arith.constant 0 : i32
    return %c0_i32, %arg0 : i32, i32
  }
  func.func @transform_2(%arg0: i32) -> (i32, i32) {
    %c0_i32 = arith.constant 0 : i32
    %c0_i32_0 = arith.constant 0 : i32
    %c0_i32_1 = arith.constant 0 : i32
    return %c0_i32, %c0_i32_0 : i32, i32
  }
  func.func @transform_3(%arg0: i32) -> (i32, i32) {
    %c0_i32 = arith.constant 0 : i32
    %c0_i32_0 = arith.constant 0 : i32
    return %c0_i32, %arg0 : i32, i32
  }
}

module attributes {stable_mosaic.version = 11 : i64} {
  func.func @_conv_bn_relu_kernel(%arg0: i32, %arg1: memref<128x32xbf16, #tpu.memory_space<vmem>>, %arg2: memref<32x4096xbf16, #tpu.memory_space<vmem>>, %arg3: memref<128x1xf32, #tpu.memory_space<vmem>>, %arg4: memref<128x4096xf32, #tpu.memory_space<vmem>>) attributes {dimension_semantics = [#tpu.dimension_semantics<parallel>], iteration_bounds = array<i64: 8>, scalar_prefetch = 0 : i64, scratch_operands = 0 : i64, tpu.core_type = #tpu.core_type<tc>, window_params = [{pipeline_mode = #tpu.pipeline_mode<synchronous>, transform_indices = @transform_0, window_bounds = array<i64: 128, 32>}, {transform_indices = @transform_1, window_bounds = array<i64: 32, 4096>}, {pipeline_mode = #tpu.pipeline_mode<synchronous>, transform_indices = @transform_2, window_bounds = array<i64: 128, 1>}, {transform_indices = @transform_3, window_bounds = array<i64: 128, 4096>}]} {
    %c0 = arith.constant 0 : index
    %c0_0 = arith.constant 0 : index
    %0 = vector.load %arg1[%c0, %c0_0] : memref<128x32xbf16, #tpu.memory_space<vmem>>, vector<128x32xbf16>
    %c0_1 = arith.constant 0 : index
    %c0_2 = arith.constant 0 : index
    %1 = vector.load %arg2[%c0_1, %c0_2] : memref<32x4096xbf16, #tpu.memory_space<vmem>>, vector<32x4096xbf16>
    %cst = arith.constant dense<0.000000e+00> : vector<128x4096xf32>
    %2 = tpu.matmul %0, %1, %cst {dimension_numbers = #tpu.dot_dimension_numbers<[1], [0], [0], [1], [0, 0, 1, 1], [], []>} : vector<128x32xbf16>, vector<32x4096xbf16>, vector<128x4096xf32> -> vector<128x4096xf32>
    %c0_3 = arith.constant 0 : index
    %c0_4 = arith.constant 0 : index
    %3 = vector.load %arg3[%c0_3, %c0_4] : memref<128x1xf32, #tpu.memory_space<vmem>>, vector<128x1xf32>
    %4 = vector.broadcast %3 : vector<128x1xf32> to vector<128x4096xf32>
    %5 = arith.addf %2, %4 : vector<128x4096xf32>
    %cst_5 = arith.constant 0.000000e+00 : f32
    %6 = vector.broadcast %cst_5 : f32 to vector<128x4096xf32>
    %7 = arith.maximumf %5, %6 : vector<128x4096xf32>
    %c0_6 = arith.constant 0 : index
    %c0_7 = arith.constant 0 : index
    %8 = vector.load %arg4[%c0_6, %c0_7] : memref<128x4096xf32, #tpu.memory_space<vmem>>, vector<128x4096xf32>
    tpu.vector_store %arg4[%c0_6, %c0_7], %7 {strides = array<i32>} : memref<128x4096xf32, #tpu.memory_space<vmem>>, vector<128x4096xf32>,
    return
  }
  func.func @transform_0(%arg0: i32) -> (i32, i32) {
    %c0_i32 = arith.constant 0 : i32
    %c0_i32_0 = arith.constant 0 : i32
    %c0_i32_1 = arith.constant 0 : i32
    return %c0_i32, %c0_i32_0 : i32, i32
  }
  func.func @transform_1(%arg0: i32) -> (i32, i32) {
    %c0_i32 = arith.constant 0 : i32
    %c0_i32_0 = arith.constant 0 : i32
    return %c0_i32, %arg0 : i32, i32
  }
  func.func @transform_2(%arg0: i32) -> (i32, i32) {
    %c0_i32 = arith.constant 0 : i32
    %c0_i32_0 = arith.constant 0 : i32
    %c0_i32_1 = arith.constant 0 : i32
    return %c0_i32, %c0_i32_0 : i32, i32
  }
  func.func @transform_3(%arg0: i32) -> (i32, i32) {
    %c0_i32 = arith.constant 0 : i32
    %c0_i32_0 = arith.constant 0 : i32
    return %c0_i32, %arg0 : i32, i32
  }
}

</mosaic_0001>

<llo_original>
// kernel: squeeze.1
$region0: #{squeeze.1}
  %s0 = inlined_call_operand.hbm [shape: f32[1,3,2,14,28], index: 0, kind: input, shape index: {}]
  %s1 = inlined_call_operand.vmem [shape: bf16[3,1,2,7,2,14,2], index: 1, kind: output, shape index: {}]
  $region1: #{squeeze.1} parent=0
    #allocation0 [shape = 'u8[43008]{0}', space=vmem, size = 0xa800, scoped, tag = 'operand span for operand 0']
    #allocation1 [shape = 's32[1]{0}', space=sflag, size = 0x4, scoped, tag = 'scoped memory for squeeze.1']
    #allocation2 [shape = 'u8[688128]{0}', space=vmem, size = 0xa8000, scoped, tag = 'scoped mem for output reshape']
    #allocation3 [shape = 'u8[172032]{0}', space=vmem, size = 0x2a000, scoped, tag = 'scoped mem for input reshape']
    %2 = vsyncpa [#allocation1], 0
    %s4 = ssub.s32 1344, 1344
    %5 = vsyncadd [#allocation1], %s4
    %s7 = sshll.u32 [#allocation0], 4
    %s8 = int_to_ptr.vmem [resolvable:$true] %s7
    %10 = dma.hbm_to_vmem [thread:$0]  %s0, 1344, %s8, [#allocation1]
    %11 = dma.done [#allocation1], 1344
    %s13 = sshllo.u32 0, 2
    %s14 = smul.addr 2, 41
    %s15 = scalar_lea.vmem [#allocation0], %s14
    %v16 = vld [vmem:[%s15] sm:%s13]
    %s17 = scalar_lea.vmem [#allocation3], 328
    %18 = vst [vmem:[%s17] sm:%s13] %v16
    %s19 = smul.addr 2, 40
    %s20 = scalar_lea.vmem [#allocation0], %s19
    %v21 = vld [vmem:[%s20] sm:%s13]
    %s22 = scalar_lea.vmem [#allocation3], 320
    %23 = vst [vmem:[%s22] sm:%s13] %v21
    %s24 = smul.addr 2, 39
    %s25 = scalar_lea.vmem [#allocation0], %s24
    %v26 = vld [vmem:[%s25] sm:%s13]
    %s27 = scalar_lea.vmem [#allocation3], 312
    %28 = vst [vmem:[%s27] sm:%s13] %v26
    %s29 = smul.addr 2, 38
    %s30 = scalar_lea.vmem [#allocation0], %s29
    %v31 = vld [vmem:[%s30] sm:%s13]
    %s32 = scalar_lea.vmem [#allocation3], 304
    %33 = vst [vmem:[%s32] sm:%s13] %v31
    %s34 = smul.addr 2, 37
    %s35 = scalar_lea.vmem [#allocation0], %s34
    %v36 = vld [vmem:[%s35] sm:%s13]
    %s37 = scalar_lea.vmem [#allocation3], 296
    %38 = vst [vmem:[%s37] sm:%s13] %v36
    %s39 = smul.addr 2, 36
    %s40 = scalar_lea.vmem [#allocation0], %s39
    %v41 = vld [vmem:[%s40] sm:%s13]
    %s42 = scalar_lea.vmem [#allocation3], 288
    %43 = vst [vmem:[%s42] sm:%s13] %v41
    %s44 = smul.addr 2, 35
    %s45 = scalar_lea.vmem [#allocation0], %s44
    %v46 = vld [vmem:[%s45] sm:%s13]
    %s47 = scalar_lea.vmem [#allocation3], 280
    %48 = vst [vmem:[%s47] sm:%s13] %v46
    %s49 = smul.addr 2, 34
    %s50 = scalar_lea.vmem [#allocation0], %s49
    %v51 = vld [vmem:[%s50] sm:%s13]
    %s52 = scalar_lea.vmem [#allocation3], 272
    %53 = vst [vmem:[%s52] sm:%s13] %v51
    %s54 = smul.addr 2, 33
    %s55 = scalar_lea.vmem [#allocation0], %s54
    %v56 = vld [vmem:[%s55] sm:%s13]
    %s57 = scalar_lea.vmem [#allocation3], 264
    %58 = vst [vmem:[%s57] sm:%s13] %v56
    %s59 = smul.addr 2, 32
    %s60 = scalar_lea.vmem [#allocation0], %s59
    %v61 = vld [vmem:[%s60] sm:%s13]
    %s62 = scalar_lea.vmem [#allocation3], 256
    %63 = vst [vmem:[%s62] sm:%s13] %v61
    %s64 = smul.addr 2, 31
    %s65 = scalar_lea.vmem [#allocation0], %s64
    %v66 = vld [vmem:[%s65] sm:%s13]
    %s67 = scalar_lea.vmem [#allocation3], 248
    %68 = vst [vmem:[%s67] sm:%s13] %v66
    %s69 = smul.addr 2, 30
    %s70 = scalar_lea.vmem [#allocation0], %s69
    %v71 = vld [vmem:[%s70] sm:%s13]
    %s72 = scalar_lea.vmem [#allocation3], 240
    %73 = vst [vmem:[%s72] sm:%s13] %v71
    %s74 = smul.addr 2, 29
    %s75 = scalar_lea.vmem [#allocation0], %s74
    %v76 = vld [vmem:[%s75] sm:%s13]
    %s77 = scalar_lea.vmem [#allocation3], 232
    %78 = vst [vmem:[%s77] sm:%s13] %v76
    %s79 = smul.addr 2, 28
    %s80 = scalar_lea.vmem [#allocation0], %s79
    %v81 = vld [vmem:[%s80] sm:%s13]
    %s82 = scalar_lea.vmem [#allocation3], 224
    %83 = vst [vmem:[%s82] sm:%s13] %v81
    %s84 = smul.addr 2, 27
    %s85 = scalar_lea.vmem [#allocation0], %s84
    %v86 = vld [vmem:[%s85] sm:%s13]
    %s87 = scalar_lea.vmem [#allocation3], 216
    %88 = vst [vmem:[%s87] sm:%s13] %v86
    %s89 = smul.addr 2, 26
    %s90 = scalar_lea.vmem [#allocation0], %s89
    %v91 = vld [vmem:[%s90] sm:%s13]
    %s92 = scalar_lea.vmem [#allocation3], 208
    %93 = vst [vmem:[%s92] sm:%s13] %v91
    %s94 = smul.addr 2, 25
    %s95 = scalar_lea.vmem [#allocation0], %s94
    %v96 = vld [vmem:[%s95] sm:%s13]
    %s97 = scalar_lea.vmem [#allocation3], 200
    %98 = vst [vmem:[%s97] sm:%s13] %v96
    %s99 = smul.addr 2, 24
    %s100 = scalar_lea.vmem [#allocation0], %s99
    %v101 = vld [vmem:[%s100] sm:%s13]
    %s102 = scalar_lea.vmem [#allocation3], 192
    %103 = vst [vmem:[%s102] sm:%s13] %v101
    %s104 = smul.addr 2, 23
    %s105 = scalar_lea.vmem [#allocation0], %s104
    %v106 = vld [vmem:[%s105] sm:%s13]
    %s107 = scalar_lea.vmem [#allocation3], 184
    %108 = vst [vmem:[%s107] sm:%s13] %v106
    %s109 = smul.addr 2, 22
    %s110 = scalar_lea.vmem [#allocation0], %s109
    %v111 = vld [vmem:[%s110] sm:%s13]
    %s112 = scalar_lea.vmem [#allocation3], 176
    %113 = vst [vmem:[%s112] sm:%s13] %v111
    %s114 = smul.addr 2, 21
    %s115 = scalar_lea.vmem [#allocation0], %s114
    %v116 = vld [vmem:[%s115] sm:%s13]
    %s117 = scalar_lea.vmem [#allocation3], 168
    %118 = vst [vmem:[%s117] sm:%s13] %v116
    %s119 = smul.addr 2, 20
    %s120 = scalar_lea.vmem [#allocation0], %s119
    %v121 = vld [vmem:[%s120] sm:%s13]
    %s122 = scalar_lea.vmem [#allocation3], 160
    %123 = vst [vmem:[%s122] sm:%s13] %v121
    %s124 = smul.addr 2, 19
    %s125 = scalar_lea.vmem [#allocation0], %s124
    %v126 = vld [vmem:[%s125] sm:%s13]
    %s127 = scalar_lea.vmem [#allocation3], 152
    %128 = vst [vmem:[%s127] sm:%s13] %v126
    %s129 = smul.addr 2, 18
    %s130 = scalar_lea.vmem [#allocation0], %s129
    %v131 = vld [vmem:[%s130] sm:%s13]
    %s132 = scalar_lea.vmem [#allocation3], 144
    %133 = vst [vmem:[%s132] sm:%s13] %v131
    %s134 = smul.addr 2, 17
    %s135 = scalar_lea.vmem [#allocation0], %s134
    %v136 = vld [vmem:[%s135] sm:%s13]
    %s137 = scalar_lea.vmem [#allocation3], 136
    %138 = vst [vmem:[%s137] sm:%s13] %v136
    %s139 = smul.addr 2, 16
    %s140 = scalar_lea.vmem [#allocation0], %s139
    %v141 = vld [vmem:[%s140] sm:%s13]
    %s142 = scalar_lea.vmem [#allocation3], 128
    %143 = vst [vmem:[%s142] sm:%s13] %v141
    %s144 = smul.addr 2, 15
    %s145 = scalar_lea.vmem [#allocation0], %s144
    %v146 = vld [vmem:[%s145] sm:%s13]
    %s147 = scalar_lea.vmem [#allocation3], 120
    %148 = vst [vmem:[%s147] sm:%s13] %v146
    %s149 = smul.addr 2, 14
    %s150 = scalar_lea.vmem [#allocation0], %s149
    %v151 = vld [vmem:[%s150] sm:%s13]
    %s152 = scalar_lea.vmem [#allocation3], 112
    %153 = vst [vmem:[%s152] sm:%s13] %v151
    %s154 = smul.addr 2, 13
    %s155 = scalar_lea.vmem [#allocation0], %s154
    %v156 = vld [vmem:[%s155] sm:%s13]
    %s157 = scalar_lea.vmem [#allocation3], 104
    %158 = vst [vmem:[%s157] sm:%s13] %v156
    %s159 = smul.addr 2, 12
    %s160 = scalar_lea.vmem [#allocation0], %s159
    %v161 = vld [vmem:[%s160] sm:%s13]
    %s162 = scalar_lea.vmem [#allocation3], 96
    %163 = vst [vmem:[%s162] sm:%s13] %v161
    %s164 = smul.addr 2, 11
    %s165 = scalar_lea.vmem [#allocation0], %s164
    %v166 = vld [vmem:[%s165] sm:%s13]
    %s167 = scalar_lea.vmem [#allocation3], 88
    %168 = vst [vmem:[%s167] sm:%s13] %v166
    %s169 = smul.addr 2, 10
    %s170 = scalar_lea.vmem [#allocation0], %s169
    %v171 = vld [vmem:[%s170] sm:%s13]
    %s172 = scalar_lea.vmem [#allocation3], 80
    %173 = vst [vmem:[%s172] sm:%s13] %v171
    %s174 = smul.addr 2, 9
    %s175 = scalar_lea.vmem [#allocation0], %s174
    %v176 = vld [vmem:[%s175] sm:%s13]
    %s177 = scalar_lea.vmem [#allocation3], 72
    %178 = vst [vmem:[%s177] sm:%s13] %v176
    %s179 = smul.addr 2, 8
    %s180 = scalar_lea.vmem [#allocation0], %s179
    %v181 = vld [vmem:[%s180] sm:%s13]
    %s182 = scalar_lea.vmem [#allocation3], 64
    %183 = vst [vmem:[%s182] sm:%s13] %v181
    %s184 = smul.addr 2, 7
    %s185 = scalar_lea.vmem [#allocation0], %s184
    %v186 = vld [vmem:[%s185] sm:%s13]
    %s187 = scalar_lea.vmem [#allocation3], 56
    %188 = vst [vmem:[%s187] sm:%s13] %v186
    %s189 = smul.addr 2, 6
    %s190 = scalar_lea.vmem [#allocation0], %s189
    %v191 = vld [vmem:[%s190] sm:%s13]
    %s192 = scalar_lea.vmem [#allocation3], 48
    %193 = vst [vmem:[%s192] sm:%s13] %v191
    %s194 = smul.addr 2, 5
    %s195 = scalar_lea.vmem [#allocation0], %s194
    %v196 = vld [vmem:[%s195] sm:%s13]
    %s197 = scalar_lea.vmem [#allocation3], 40
    %198 = vst [vmem:[%s197] sm:%s13] %v196
    %s199 = smul.addr 2, 4
    %s200 = scalar_lea.vmem [#allocation0], %s199
    %v201 = vld [vmem:[%s200] sm:%s13]
    %s202 = scalar_lea.vmem [#allocation3], 32
    %203 = vst [vmem:[%s202] sm:%s13] %v201
    %s204 = smul.addr 2, 3
    %s205 = scalar_lea.vmem [#allocation0], %s204
    %v206 = vld [vmem:[%s205] sm:%s13]
    %s207 = scalar_lea.vmem [#allocation3], 24
    %208 = vst [vmem:[%s207] sm:%s13] %v206
    %s209 = smul.addr 2, 2
    %s210 = scalar_lea.vmem [#allocation0], %s209
    %v211 = vld [vmem:[%s210] sm:%s13]
    %s212 = scalar_lea.vmem [#allocation3], 16
    %213 = vst [vmem:[%s212] sm:%s13] %v211
    %s214 = scalar_lea.vmem [#allocation0], 2
    %v215 = vld [vmem:[%s214] sm:%s13]
    %s216 = scalar_lea.vmem [#allocation3], 8
    %217 = vst [vmem:[%s216] sm:%s13] %v215
    %v218 = vld [vmem:[#allocation0] sm:%s13]
    %219 = vst [vmem:[#allocation3] sm:%s13] %v218
    %v220 = vld [vmem:[#allocation3] sm:$0x3]
    %vm221 = vcmask 15360
    %222 = vst.msk [vmem:[#allocation2] ss:$16 sm:$0x3] %vm221, %v220
    %s223 = scalar_lea.vmem [#allocation3], 8
    %v224 = vld [vmem:[%s223] sm:$0x3]
    %vm225 = vcmask 15360
    %s226 = scalar_lea.vmem [#allocation2], 32
    %227 = vst.msk [vmem:[%s226] ss:$16 sm:$0x3] %vm225, %v224
    %s228 = scalar_lea.vmem [#allocation3], 16
    %v229 = vld [vmem:[%s228] sm:$0x3]
    %vm230 = vcmask 15360
    %s231 = scalar_lea.vmem [#allocation2], 64
    %232 = vst.msk [vmem:[%s231] ss:$16 sm:$0x3] %vm230, %v229
    %s233 = scalar_lea.vmem [#allocation3], 24
    %v234 = vld [vmem:[%s233] sm:$0x3]
    %vm235 = vcmask 15360
    %s236 = scalar_lea.vmem [#allocation2], 96
    %237 = vst.msk [vmem:[%s236] ss:$16 sm:$0x3] %vm235, %v234
    %s238 = scalar_lea.vmem [#allocation3], 32
    %v239 = vld [vmem:[%s238] sm:$0x3]
    %vm240 = vcmask 15360
    %s241 = scalar_lea.vmem [#allocation2], 128
    %242 = vst.msk [vmem:[%s241] ss:$16 sm:$0x3] %vm240, %v239
    %s243 = scalar_lea.vmem [#allocation3], 40
    %v244 = vld [vmem:[%s243] sm:$0x3]
    %vm245 = vcmask 15360
    %s246 = scalar_lea.vmem [#allocation2], 160
    %247 = vst.msk [vmem:[%s246] ss:$16 sm:$0x3] %vm245, %v244
    %s248 = scalar_lea.vmem [#allocation3], 48
    %v249 = vld [vmem:[%s248] sm:$0x3]
    %vm250 = vcmask 15360
    %s251 = scalar_lea.vmem [#allocation2], 192
    %252 = vst.msk [vmem:[%s251] ss:$16 sm:$0x3] %vm250, %v249
    %s253 = scalar_lea.vmem [#allocation3], 56
    %v254 = vld [vmem:[%s253] sm:$0x3]
    %vm255 = vcmask 15360
    %s256 = scalar_lea.vmem [#allocation2], 224
    %257 = vst.msk [vmem:[%s256] ss:$16 sm:$0x3] %vm255, %v254
    %s258 = scalar_lea.vmem [#allocation3], 64
    %v259 = vld [vmem:[%s258] sm:$0x3]
    %vm260 = vcmask 15360
    %s261 = scalar_lea.vmem [#allocation2], 256
    %262 = vst.msk [vmem:[%s261] ss:$16 sm:$0x3] %vm260, %v259
    %s263 = scalar_lea.vmem [#allocation3], 72
    %v264 = vld [vmem:[%s263] sm:$0x3]
    %vm265 = vcmask 15360
    %s266 = scalar_lea.vmem [#allocation2], 288
    %267 = vst.msk [vmem:[%s266] ss:$16 sm:$0x3] %vm265, %v264
    %s268 = scalar_lea.vmem [#allocation3], 80
    %v269 = vld [vmem:[%s268] sm:$0x3]
    %vm270 = vcmask 15360
    %s271 = scalar_lea.vmem [#allocation2], 320
    %272 = vst.msk [vmem:[%s271] ss:$16 sm:$0x3] %vm270, %v269
    %s273 = scalar_lea.vmem [#allocation3], 88
    %v274 = vld [vmem:[%s273] sm:$0x3]
    %vm275 = vcmask 15360
    %s276 = scalar_lea.vmem [#allocation2], 352
    %277 = vst.msk [vmem:[%s276] ss:$16 sm:$0x3] %vm275, %v274
    %s278 = scalar_lea.vmem [#allocation3], 96
    %v279 = vld [vmem:[%s278] sm:$0x3]
    %vm280 = vcmask 15360
    %s281 = scalar_lea.vmem [#allocation2], 384
    %282 = vst.msk [vmem:[%s281] ss:$16 sm:$0x3] %vm280, %v279
    %s283 = scalar_lea.vmem [#allocation3], 104
    %v284 = vld [vmem:[%s283] sm:$0x3]
    %vm285 = vcmask 15360
    %s286 = scalar_lea.vmem [#allocation2], 416
    %287 = vst.msk [vmem:[%s286] ss:$16 sm:$0x3] %vm285, %v284
    %s288 = scalar_lea.vmem [#allocation3], 112
    %v289 = vld [vmem:[%s288] sm:$0x3]
    %vm290 = vcmask 15360
    %s291 = scalar_lea.vmem [#allocation2], 448
    %292 = vst.msk [vmem:[%s291] ss:$16 sm:$0x3] %vm290, %v289
    %s293 = scalar_lea.vmem [#allocation3], 120
    %v294 = vld [vmem:[%s293] sm:$0x3]
    %vm295 = vcmask 15360
    %s296 = scalar_lea.vmem [#allocation2], 480
    %297 = vst.msk [vmem:[%s296] ss:$16 sm:$0x3] %vm295, %v294
    %s298 = scalar_lea.vmem [#allocation3], 128
    %v299 = vld [vmem:[%s298] sm:$0x3]
    %vm300 = vcmask 15360
    %s301 = scalar_lea.vmem [#allocation2], 512
    %302 = vst.msk [vmem:[%s301] ss:$16 sm:$0x3] %vm300, %v299
    %s303 = scalar_lea.vmem [#allocation3], 136
    %v304 = vld [vmem:[%s303] sm:$0x3]
    %vm305 = vcmask 15360
    %s306 = scalar_lea.vmem [#allocation2], 544
    %307 = vst.msk [vmem:[%s306] ss:$16 sm:$0x3] %vm305, %v304
    %s308 = scalar_lea.vmem [#allocation3], 144
    %v309 = vld [vmem:[%s308] sm:$0x3]
    %vm310 = vcmask 15360
    %s311 = scalar_lea.vmem [#allocation2], 576
    %312 = vst.msk [vmem:[%s311] ss:$16 sm:$0x3] %vm310, %v309
    %s313 = scalar_lea.vmem [#allocation3], 152
    %v314 = vld [vmem:[%s313] sm:$0x3]
    %vm315 = vcmask 15360
    %s316 = scalar_lea.vmem [#allocation2], 608
    %317 = vst.msk [vmem:[%s316] ss:$16 sm:$0x3] %vm315, %v314
    %s318 = scalar_lea.vmem [#allocation3], 160
    %v319 = vld [vmem:[%s318] sm:$0x3]
    %vm320 = vcmask 15360
    %s321 = scalar_lea.vmem [#allocation2], 640
    %322 = vst.msk [vmem:[%s321] ss:$16 sm:$0x3] %vm320, %v319
    %s323 = scalar_lea.vmem [#allocation3], 168
    %v324 = vld [vmem:[%s323] sm:$0x3]
    %vm325 = vcmask 15360
    %s326 = scalar_lea.vmem [#allocation2], 672
    %327 = vst.msk [vmem:[%s326] ss:$16 sm:$0x3] %vm325, %v324
    %s328 = scalar_lea.vmem [#allocation3], 176
    %v329 = vld [vmem:[%s328] sm:$0x3]
    %vm330 = vcmask 15360
    %s331 = scalar_lea.vmem [#allocation2], 704
    %332 = vst.msk [vmem:[%s331] ss:$16 sm:$0x3] %vm330, %v329
    %s333 = scalar_lea.vmem [#allocation3], 184
    %v334 = vld [vmem:[%s333] sm:$0x3]
    %vm335 = vcmask 15360
    %s336 = scalar_lea.vmem [#allocation2], 736
    %337 = vst.msk [vmem:[%s336] ss:$16 sm:$0x3] %vm335, %v334
    %s338 = scalar_lea.vmem [#allocation3], 192
    %v339 = vld [vmem:[%s338] sm:$0x3]
    %vm340 = vcmask 15360
    %s341 = scalar_lea.vmem [#allocation2], 768
    %342 = vst.msk [vmem:[%s341] ss:$16 sm:$0x3] %vm340, %v339
    %s343 = scalar_lea.vmem [#allocation3], 200
    %v344 = vld [vmem:[%s343] sm:$0x3]
    %vm345 = vcmask 15360
    %s346 = scalar_lea.vmem [#allocation2], 800
    %347 = vst.msk [vmem:[%s346] ss:$16 sm:$0x3] %vm345, %v344
    %s348 = scalar_lea.vmem [#allocation3], 208
    %v349 = vld [vmem:[%s348] sm:$0x3]
    %vm350 = vcmask 15360
    %s351 = scalar_lea.vmem [#allocation2], 832
    %352 = vst.msk [vmem:[%s351] ss:$16 sm:$0x3] %vm350, %v349
    %s353 = scalar_lea.vmem [#allocation3], 216
    %v354 = vld [vmem:[%s353] sm:$0x3]
    %vm355 = vcmask 15360
    %s356 = scalar_lea.vmem [#allocation2], 864
    %357 = vst.msk [vmem:[%s356] ss:$16 sm:$0x3] %vm355, %v354
    %s358 = scalar_lea.vmem [#allocation3], 224
    %v359 = vld [vmem:[%s358] sm:$0x3]
    %vm360 = vcmask 15360
    %s361 = scalar_lea.vmem [#allocation2], 896
    %362 = vst.msk [vmem:[%s361] ss:$16 sm:$0x3] %vm360, %v359
    %s363 = scalar_lea.vmem [#allocation3], 232
    %v364 = vld [vmem:[%s363] sm:$0x3]
    %vm365 = vcmask 15360
    %s366 = scalar_lea.vmem [#allocation2], 928
    %367 = vst.msk [vmem:[%s366] ss:$16 sm:$0x3] %vm365, %v364
    %s368 = scalar_lea.vmem [#allocation3], 240
    %v369 = vld [vmem:[%s368] sm:$0x3]
    %vm370 = vcmask 15360
    %s371 = scalar_lea.vmem [#allocation2], 960
    %372 = vst.msk [vmem:[%s371] ss:$16 sm:$0x3] %vm370, %v369
    %s373 = scalar_lea.vmem [#allocation3], 248
    %v374 = vld [vmem:[%s373] sm:$0x3]
    %vm375 = vcmask 15360
    %s376 = scalar_lea.vmem [#allocation2], 992
    %377 = vst.msk [vmem:[%s376] ss:$16 sm:$0x3] %vm375, %v374
    %s378 = scalar_lea.vmem [#allocation3], 256
    %v379 = vld [vmem:[%s378] sm:$0x3]
    %vm380 = vcmask 15360
    %s381 = scalar_lea.vmem [#allocation2], 1024
    %382 = vst.msk [vmem:[%s381] ss:$16 sm:$0x3] %vm380, %v379
    %s383 = scalar_lea.vmem [#allocation3], 264
    %v384 = vld [vmem:[%s383] sm:$0x3]
    %vm385 = vcmask 15360
    %s386 = scalar_lea.vmem [#allocation2], 1056
    %387 = vst.msk [vmem:[%s386] ss:$16 sm:$0x3] %vm385, %v384
    %s388 = scalar_lea.vmem [#allocation3], 272
    %v389 = vld [vmem:[%s388] sm:$0x3]
    %vm390 = vcmask 15360
    %s391 = scalar_lea.vmem [#allocation2], 1088
    %392 = vst.msk [vmem:[%s391] ss:$16 sm:$0x3] %vm390, %v389
    %s393 = scalar_lea.vmem [#allocation3], 280
    %v394 = vld [vmem:[%s393] sm:$0x3]
    %vm395 = vcmask 15360
    %s396 = scalar_lea.vmem [#allocation2], 1120
    %397 = vst.msk [vmem:[%s396] ss:$16 sm:$0x3] %vm395, %v394
    %s398 = scalar_lea.vmem [#allocation3], 288
    %v399 = vld [vmem:[%s398] sm:$0x3]
    %vm400 = vcmask 15360
    %s401 = scalar_lea.vmem [#allocation2], 1152
    %402 = vst.msk [vmem:[%s401] ss:$16 sm:$0x3] %vm400, %v399
    %s403 = scalar_lea.vmem [#allocation3], 296
    %v404 = vld [vmem:[%s403] sm:$0x3]
    %vm405 = vcmask 15360
    %s406 = scalar_lea.vmem [#allocation2], 1184
    %407 = vst.msk [vmem:[%s406] ss:$16 sm:$0x3] %vm405, %v404
    %s408 = scalar_lea.vmem [#allocation3], 304
    %v409 = vld [vmem:[%s408] sm:$0x3]
    %vm410 = vcmask 15360
    %s411 = scalar_lea.vmem [#allocation2], 1216
    %412 = vst.msk [vmem:[%s411] ss:$16 sm:$0x3] %vm410, %v409
    %s413 = scalar_lea.vmem [#allocation3], 312
    %v414 = vld [vmem:[%s413] sm:$0x3]
    %vm415 = vcmask 15360
    %s416 = scalar_lea.vmem [#allocation2], 1248
    %417 = vst.msk [vmem:[%s416] ss:$16 sm:$0x3] %vm415, %v414
    %s418 = scalar_lea.vmem [#allocation3], 320
    %v419 = vld [vmem:[%s418] sm:$0x3]
    %vm420 = vcmask 15360
    %s421 = scalar_lea.vmem [#allocation2], 1280
    %422 = vst.msk [vmem:[%s421] ss:$16 sm:$0x3] %vm420, %v419
    %s423 = scalar_lea.vmem [#allocation3], 328
    %v424 = vld [vmem:[%s423] sm:$0x3]
    %vm425 = vcmask 15360
    %s426 = scalar_lea.vmem [#allocation2], 1312
    %427 = vst.msk [vmem:[%s426] ss:$16 sm:$0x3] %vm425, %v424
    %v428 = vld.sshfl [vmem:[#allocation3] sm:$0xff pattern:$0x99999810]
    %s429 = scalar_lea.vmem [#allocation3], 16
    %v430 = vld.sshfl [vmem:[%s429] sm:$0xff pattern:$0x98100000]
    %vm431 = vcmask 1047556
    %v432 = vsel %vm431, %v430, %v428
    %433 = vrot.lane.b32.xlu0 %v432, 126
    %v434 = vpop.permute.xlu0 %433
    %vm435 = vcmask 15360
    %s436 = scalar_lea.vmem [#allocation2], 1
    %437 = vst.msk [vmem:[%s436] ss:$16 sm:$0x3] %vm435, %v434
    %s438 = scalar_lea.vmem [#allocation2], 1
    %439 = vst.msk [vmem:[%s438] ss:$16 sm:$0xc] %vm435, %v434
    %s440 = scalar_lea.vmem [#allocation2], 1
    %441 = vst.msk [vmem:[%s440] ss:$16 sm:$0x30] %vm435, %v434
    %s442 = scalar_lea.vmem [#allocation2], 1
    %443 = vst.msk [vmem:[%s442] ss:$16 sm:$0xc0] %vm435, %v434
    %s444 = scalar_lea.vmem [#allocation3], 32
    %v445 = vld.sshfl [vmem:[%s444] sm:$0xff pattern:$0x99999810]
    %s446 = scalar_lea.vmem [#allocation3], 48
    %v447 = vld.sshfl [vmem:[%s446] sm:$0xff pattern:$0x98100000]
    %vm448 = vcmask 1047556
    %v449 = vsel %vm448, %v447, %v445
    %450 = vrot.lane.b32.xlu0 %v449, 126
    %v451 = vpop.permute.xlu0 %450
    %vm452 = vcmask 15360
    %s453 = scalar_lea.vmem [#allocation2], 129
    %454 = vst.msk [vmem:[%s453] ss:$16 sm:$0x3] %vm452, %v451
    %s455 = scalar_lea.vmem [#allocation2], 129
    %456 = vst.msk [vmem:[%s455] ss:$16 sm:$0xc] %vm452, %v451
    %s457 = scalar_lea.vmem [#allocation2], 129
    %458 = vst.msk [vmem:[%s457] ss:$16 sm:$0x30] %vm452, %v451
    %s459 = scalar_lea.vmem [#allocation2], 129
    %460 = vst.msk [vmem:[%s459] ss:$16 sm:$0xc0] %vm452, %v451
    %s461 = scalar_lea.vmem [#allocation3], 64
    %v462 = vld.sshfl [vmem:[%s461] sm:$0xff pattern:$0x99999810]
    %s463 = scalar_lea.vmem [#allocation3], 80
    %v464 = vld.sshfl [vmem:[%s463] sm:$0xff pattern:$0x98100000]
    %vm465 = vcmask 1047556
    %v466 = vsel %vm465, %v464, %v462
    %467 = vrot.lane.b32.xlu0 %v466, 126
    %v468 = vpop.permute.xlu0 %467
    %vm469 = vcmask 15360
    %s470 = scalar_lea.vmem [#allocation2], 257
    %471 = vst.msk [vmem:[%s470] ss:$16 sm:$0x3] %vm469, %v468
    %s472 = scalar_lea.vmem [#allocation2], 257
    %473 = vst.msk [vmem:[%s472] ss:$16 sm:$0xc] %vm469, %v468
    %s474 = scalar_lea.vmem [#allocation2], 257
    %475 = vst.msk [vmem:[%s474] ss:$16 sm:$0x30] %vm469, %v468
    %s476 = scalar_lea.vmem [#allocation2], 257
    %477 = vst.msk [vmem:[%s476] ss:$16 sm:$0xc0] %vm469, %v468
    %s478 = scalar_lea.vmem [#allocation3], 96
    %v479 = vld.sshfl [vmem:[%s478] sm:$0xff pattern:$0x99999810]
    %s480 = scalar_lea.vmem [#allocation3], 112
    %v481 = vld.sshfl [vmem:[%s480] sm:$0xff pattern:$0x98100000]
    %vm482 = vcmask 1047556
    %v483 = vsel %vm482, %v481, %v479
    %484 = vrot.lane.b32.xlu0 %v483, 126
    %v485 = vpop.permute.xlu0 %484
    %vm486 = vcmask 15360
    %s487 = scalar_lea.vmem [#allocation2], 385
    %488 = vst.msk [vmem:[%s487] ss:$16 sm:$0x3] %vm486, %v485
    %s489 = scalar_lea.vmem [#allocation2], 385
    %490 = vst.msk [vmem:[%s489] ss:$16 sm:$0xc] %vm486, %v485
    %s491 = scalar_lea.vmem [#allocation2], 385
    %492 = vst.msk [vmem:[%s491] ss:$16 sm:$0x30] %vm486, %v485
    %s493 = scalar_lea.vmem [#allocation2], 385
    %494 = vst.msk [vmem:[%s493] ss:$16 sm:$0xc0] %vm486, %v485
    %s495 = scalar_lea.vmem [#allocation3], 128
    %v496 = vld.sshfl [vmem:[%s495] sm:$0xff pattern:$0x99999810]
    %s497 = scalar_lea.vmem [#allocation3], 144
    %v498 = vld.sshfl [vmem:[%s497] sm:$0xff pattern:$0x98100000]
    %vm499 = vcmask 1047556
    %v500 = vsel %vm499, %v498, %v496
    %501 = vrot.lane.b32.xlu0 %v500, 126
    %v502 = vpop.permute.xlu0 %501
    %vm503 = vcmask 15360
    %s504 = scalar_lea.vmem [#allocation2], 513
    %505 = vst.msk [vmem:[%s504] ss:$16 sm:$0x3] %vm503, %v502
    %s506 = scalar_lea.vmem [#allocation2], 513
    %507 = vst.msk [vmem:[%s506] ss:$16 sm:$0xc] %vm503, %v502
    %s508 = scalar_lea.vmem [#allocation2], 513
    %509 = vst.msk [vmem:[%s508] ss:$16 sm:$0x30] %vm503, %v502
    %s510 = scalar_lea.vmem [#allocation2], 513
    %511 = vst.msk [vmem:[%s510] ss:$16 sm:$0xc0] %vm503, %v502
    %s512 = scalar_lea.vmem [#allocation3], 160
    %v513 = vld.sshfl [vmem:[%s512] sm:$0xff pattern:$0x99999810]
    %s514 = scalar_lea.vmem [#allocation3], 176
    %v515 = vld.sshfl [vmem:[%s514] sm:$0xff pattern:$0x98100000]
    %vm516 = vcmask 1047556
    %v517 = vsel %vm516, %v515, %v513
    %518 = vrot.lane.b32.xlu0 %v517, 126
    %v519 = vpop.permute.xlu0 %518
    %vm520 = vcmask 15360
    %s521 = scalar_lea.vmem [#allocation2], 641
    %522 = vst.msk [vmem:[%s521] ss:$16 sm:$0x3] %vm520, %v519
    %s523 = scalar_lea.vmem [#allocation2], 641
    %524 = vst.msk [vmem:[%s523] ss:$16 sm:$0xc] %vm520, %v519
    %s525 = scalar_lea.vmem [#allocation2], 641
    %526 = vst.msk [vmem:[%s525] ss:$16 sm:$0x30] %vm520, %v519
    %s527 = scalar_lea.vmem [#allocation2], 641
    %528 = vst.msk [vmem:[%s527] ss:$16 sm:$0xc0] %vm520, %v519
    %s529 = scalar_lea.vmem [#allocation3], 192
    %v530 = vld.sshfl [vmem:[%s529] sm:$0xff pattern:$0x99999810]
    %s531 = scalar_lea.vmem [#allocation3], 208
    %v532 = vld.sshfl [vmem:[%s531] sm:$0xff pattern:$0x98100000]
    %vm533 = vcmask 1047556
    %v534 = vsel %vm533, %v532, %v530
    %535 = vrot.lane.b32.xlu0 %v534, 126
    %v536 = vpop.permute.xlu0 %535
    %vm537 = vcmask 15360
    %s538 = scalar_lea.vmem [#allocation2], 769
    %539 = vst.msk [vmem:[%s538] ss:$16 sm:$0x3] %vm537, %v536
    %s540 = scalar_lea.vmem [#allocation2], 769
    %541 = vst.msk [vmem:[%s540] ss:$16 sm:$0xc] %vm537, %v536
    %s542 = scalar_lea.vmem [#allocation2], 769
    %543 = vst.msk [vmem:[%s542] ss:$16 sm:$0x30] %vm537, %v536
    %s544 = scalar_lea.vmem [#allocation2], 769
    %545 = vst.msk [vmem:[%s544] ss:$16 sm:$0xc0] %vm537, %v536
    %s546 = scalar_lea.vmem [#allocation3], 224
    %v547 = vld.sshfl [vmem:[%s546] sm:$0xff pattern:$0x99999810]
    %s548 = scalar_lea.vmem [#allocation3], 240
    %v549 = vld.sshfl [vmem:[%s548] sm:$0xff pattern:$0x98100000]
    %vm550 = vcmask 1047556
    %v551 = vsel %vm550, %v549, %v547
    %552 = vrot.lane.b32.xlu0 %v551, 126
    %v553 = vpop.permute.xlu0 %552
    %vm554 = vcmask 15360
    %s555 = scalar_lea.vmem [#allocation2], 897
    %556 = vst.msk [vmem:[%s555] ss:$16 sm:$0x3] %vm554, %v553
    %s557 = scalar_lea.vmem [#allocation2], 897
    %558 = vst.msk [vmem:[%s557] ss:$16 sm:$0xc] %vm554, %v553
    %s559 = scalar_lea.vmem [#allocation2], 897
    %560 = vst.msk [vmem:[%s559] ss:$16 sm:$0x30] %vm554, %v553
    %s561 = scalar_lea.vmem [#allocation2], 897
    %562 = vst.msk [vmem:[%s561] ss:$16 sm:$0xc0] %vm554, %v553
    %s563 = scalar_lea.vmem [#allocation3], 256
    %v564 = vld.sshfl [vmem:[%s563] sm:$0xff pattern:$0x99999810]
    %s565 = scalar_lea.vmem [#allocation3], 272
    %v566 = vld.sshfl [vmem:[%s565] sm:$0xff pattern:$0x98100000]
    %vm567 = vcmask 1047556
    %v568 = vsel %vm567, %v566, %v564
    %569 = vrot.lane.b32.xlu0 %v568, 126
    %v570 = vpop.permute.xlu0 %569
    %vm571 = vcmask 15360
    %s572 = scalar_lea.vmem [#allocation2], 1025
    %573 = vst.msk [vmem:[%s572] ss:$16 sm:$0x3] %vm571, %v570
    %s574 = scalar_lea.vmem [#allocation2], 1025
    %575 = vst.msk [vmem:[%s574] ss:$16 sm:$0xc] %vm571, %v570
    %s576 = scalar_lea.vmem [#allocation2], 1025
    %577 = vst.msk [vmem:[%s576] ss:$16 sm:$0x30] %vm571, %v570
    %s578 = scalar_lea.vmem [#allocation2], 1025
    %579 = vst.msk [vmem:[%s578] ss:$16 sm:$0xc0] %vm571, %v570
    %s580 = scalar_lea.vmem [#allocation3], 288
    %v581 = vld.sshfl [vmem:[%s580] sm:$0xff pattern:$0x99999810]
    %s582 = scalar_lea.vmem [#allocation3], 304
    %v583 = vld.sshfl [vmem:[%s582] sm:$0xff pattern:$0x98100000]
    %vm584 = vcmask 1047556
    %v585 = vsel %vm584, %v583, %v581
    %586 = vrot.lane.b32.xlu0 %v585, 126
    %v587 = vpop.permute.xlu0 %586
    %vm588 = vcmask 15360
    %s589 = scalar_lea.vmem [#allocation2], 1153
    %590 = vst.msk [vmem:[%s589] ss:$16 sm:$0x3] %vm588, %v587
    %s591 = scalar_lea.vmem [#allocation2], 1153
    %592 = vst.msk [vmem:[%s591] ss:$16 sm:$0xc] %vm588, %v587
    %s593 = scalar_lea.vmem [#allocation2], 1153
    %594 = vst.msk [vmem:[%s593] ss:$16 sm:$0x30] %vm588, %v587
    %s595 = scalar_lea.vmem [#allocation2], 1153
    %596 = vst.msk [vmem:[%s595] ss:$16 sm:$0xc0] %vm588, %v587
    %s597 = scalar_lea.vmem [#allocation3], 320
    %v598 = vld.sshfl [vmem:[%s597] sm:$0xff pattern:$0x99999810]
    %599 = vrot.lane.b32.xlu0 %v598, 126
    %v600 = vpop.permute.xlu0 %599
    %vm601 = vcmask 15360
    %s602 = scalar_lea.vmem [#allocation2], 1281
    %603 = vst.msk [vmem:[%s602] ss:$16 sm:$0x3] %vm601, %v600
    %s604 = scalar_lea.vmem [#allocation2], 1281
    %605 = vst.msk [vmem:[%s604] ss:$16 sm:$0xc] %vm601, %v600
    %v606 = vld.sshfl [vmem:[#allocation3] sm:$0xff pattern:$0x99999810]
    %s607 = scalar_lea.vmem [#allocation3], 16
    %v608 = vld.sshfl [vmem:[%s607] sm:$0xff pattern:$0x98100000]
    %vm609 = vcmask 1047556
    %v610 = vsel %vm609, %v608, %v606
    %611 = vrot.lane.b32.xlu0 %v610, 124
    %v612 = vpop.permute.xlu0 %611
    %vm613 = vcmask 15360
    %s614 = scalar_lea.vmem [#allocation2], 2
    %615 = vst.msk [vmem:[%s614] ss:$16 sm:$0x3] %vm613, %v612
    %s616 = scalar_lea.vmem [#allocation2], 2
    %617 = vst.msk [vmem:[%s616] ss:$16 sm:$0xc] %vm613, %v612
    %s618 = scalar_lea.vmem [#allocation2], 2
    %619 = vst.msk [vmem:[%s618] ss:$16 sm:$0x30] %vm613, %v612
    %s620 = scalar_lea.vmem [#allocation2], 2
    %621 = vst.msk [vmem:[%s620] ss:$16 sm:$0xc0] %vm613, %v612
    %s622 = scalar_lea.vmem [#allocation3], 32
    %v623 = vld.sshfl [vmem:[%s622] sm:$0xff pattern:$0x99999810]
    %s624 = scalar_lea.vmem [#allocation3], 48
    %v625 = vld.sshfl [vmem:[%s624] sm:$0xff pattern:$0x98100000]
    %vm626 = vcmask 1047556
    %v627 = vsel %vm626, %v625, %v623
    %628 = vrot.lane.b32.xlu0 %v627, 124
    %v629 = vpop.permute.xlu0 %628
    %vm630 = vcmask 15360
    %s631 = scalar_lea.vmem [#allocation2], 130
    %632 = vst.msk [vmem:[%s631] ss:$16 sm:$0x3] %vm630, %v629
    %s633 = scalar_lea.vmem [#allocation2], 130
    %634 = vst.msk [vmem:[%s633] ss:$16 sm:$0xc] %vm630, %v629
    %s635 = scalar_lea.vmem [#allocation2], 130
    %636 = vst.msk [vmem:[%s635] ss:$16 sm:$0x30] %vm630, %v629
    %s637 = scalar_lea.vmem [#allocation2], 130
    %638 = vst.msk [vmem:[%s637] ss:$16 sm:$0xc0] %vm630, %v629
    %s639 = scalar_lea.vmem [#allocation3], 64
    %v640 = vld.sshfl [vmem:[%s639] sm:$0xff pattern:$0x99999810]
    %s641 = scalar_lea.vmem [#allocation3], 80
    %v642 = vld.sshfl [vmem:[%s641] sm:$0xff pattern:$0x98100000]
    %vm643 = vcmask 1047556
    %v644 = vsel %vm643, %v642, %v640
    %645 = vrot.lane.b32.xlu0 %v644, 124
    %v646 = vpop.permute.xlu0 %645
    %vm647 = vcmask 15360
    %s648 = scalar_lea.vmem [#allocation2], 258
    %649 = vst.msk [vmem:[%s648] ss:$16 sm:$0x3] %vm647, %v646
    %s650 = scalar_lea.vmem [#allocation2], 258
    %651 = vst.msk [vmem:[%s650] ss:$16 sm:$0xc] %vm647, %v646
    %s652 = scalar_lea.vmem [#allocation2], 258
    %653 = vst.msk [vmem:[%s652] ss:$16 sm:$0x30] %vm647, %v646
    %s654 = scalar_lea.vmem [#allocation2], 258
    %655 = vst.msk [vmem:[%s654] ss:$16 sm:$0xc0] %vm647, %v646
    %s656 = scalar_lea.vmem [#allocation3], 96
    %v657 = vld.sshfl [vmem:[%s656] sm:$0xff pattern:$0x99999810]
    %s658 = scalar_lea.vmem [#allocation3], 112
    %v659 = vld.sshfl [vmem:[%s658] sm:$0xff pattern:$0x98100000]
    %vm660 = vcmask 1047556
    %v661 = vsel %vm660, %v659, %v657
    %662 = vrot.lane.b32.xlu0 %v661, 124
    %v663 = vpop.permute.xlu0 %662
    %vm664 = vcmask 15360
    %s665 = scalar_lea.vmem [#allocation2], 386
    %666 = vst.msk [vmem:[%s665] ss:$16 sm:$0x3] %vm664, %v663
    %s667 = scalar_lea.vmem [#allocation2], 386
    %668 = vst.msk [vmem:[%s667] ss:$16 sm:$0xc] %vm664, %v663
    %s669 = scalar_lea.vmem [#allocation2], 386
    %670 = vst.msk [vmem:[%s669] ss:$16 sm:$0x30] %vm664, %v663
    %s671 = scalar_lea.vmem [#allocation2], 386
    %672 = vst.msk [vmem:[%s671] ss:$16 sm:$0xc0] %vm664, %v663
    %s673 = scalar_lea.vmem [#allocation3], 128
    %v674 = vld.sshfl [vmem:[%s673] sm:$0xff pattern:$0x99999810]
    %s675 = scalar_lea.vmem [#allocation3], 144
    %v676 = vld.sshfl [vmem:[%s675] sm:$0xff pattern:$0x98100000]
    %vm677 = vcmask 1047556
    %v678 = vsel %vm677, %v676, %v674
    %679 = vrot.lane.b32.xlu0 %v678, 124
    %v680 = vpop.permute.xlu0 %679
    %vm681 = vcmask 15360
    %s682 = scalar_lea.vmem [#allocation2], 514
    %683 = vst.msk [vmem:[%s682] ss:$16 sm:$0x3] %vm681, %v680
    %s684 = scalar_lea.vmem [#allocation2], 514
    %685 = vst.msk [vmem:[%s684] ss:$16 sm:$0xc] %vm681, %v680
    %s686 = scalar_lea.vmem [#allocation2], 514
    %687 = vst.msk [vmem:[%s686] ss:$16 sm:$0x30] %vm681, %v680
    %s688 = scalar_lea.vmem [#allocation2], 514
    %689 = vst.msk [vmem:[%s688] ss:$16 sm:$0xc0] %vm681, %v680
    %s690 = scalar_lea.vmem [#allocation3], 160
    %v691 = vld.sshfl [vmem:[%s690] sm:$0xff pattern:$0x99999810]
    %s692 = scalar_lea.vmem [#allocation3], 176
    %v693 = vld.sshfl [vmem:[%s692] sm:$0xff pattern:$0x98100000]
    %vm694 = vcmask 1047556
    %v695 = vsel %vm694, %v693, %v691
    %696 = vrot.lane.b32.xlu0 %v695, 124
    %v697 = vpop.permute.xlu0 %696
    %vm698 = vcmask 15360
    %s699 = scalar_lea.vmem [#allocation2], 642
    %700 = vst.msk [vmem:[%s699] ss:$16 sm:$0x3] %vm698, %v697
    %s701 = scalar_lea.vmem [#allocation2], 642
    %702 = vst.msk [vmem:[%s701] ss:$16 sm:$0xc] %vm698, %v697
    %s703 = scalar_lea.vmem [#allocation2], 642
    %704 = vst.msk [vmem:[%s703] ss:$16 sm:$0x30] %vm698, %v697
    %s705 = scalar_lea.vmem [#allocation2], 642
    %706 = vst.msk [vmem:[%s705] ss:$16 sm:$0xc0] %vm698, %v697
    %s707 = scalar_lea.vmem [#allocation3], 192
    %v708 = vld.sshfl [vmem:[%s707] sm:$0xff pattern:$0x99999810]
    %s709 = scalar_lea.vmem [#allocation3], 208
    %v710 = vld.sshfl [vmem:[%s709] sm:$0xff pattern:$0x98100000]
    %vm711 = vcmask 1047556
    %v712 = vsel %vm711, %v710, %v708
    %713 = vrot.lane.b32.xlu0 %v712, 124
    %v714 = vpop.permute.xlu0 %713
    %vm715 = vcmask 15360
    %s716 = scalar_lea.vmem [#allocation2], 770
    %717 = vst.msk [vmem:[%s716] ss:$16 sm:$0x3] %vm715, %v714
    %s718 = scalar_lea.vmem [#allocation2], 770
    %719 = vst.msk [vmem:[%s718] ss:$16 sm:$0xc] %vm715, %v714
    %s720 = scalar_lea.vmem [#allocation2], 770
    %721 = vst.msk [vmem:[%s720] ss:$16 sm:$0x30] %vm715, %v714
    %s722 = scalar_lea.vmem [#allocation2], 770
    %723 = vst.msk [vmem:[%s722] ss:$16 sm:$0xc0] %vm715, %v714
    %s724 = scalar_lea.vmem [#allocation3], 224
    %v725 = vld.sshfl [vmem:[%s724] sm:$0xff pattern:$0x99999810]
    %s726 = scalar_lea.vmem [#allocation3], 240
    %v727 = vld.sshfl [vmem:[%s726] sm:$0xff pattern:$0x98100000]
    %vm728 = vcmask 1047556
    %v729 = vsel %vm728, %v727, %v725
    %730 = vrot.lane.b32.xlu0 %v729, 124
    %v731 = vpop.permute.xlu0 %730
    %vm732 = vcmask 15360
    %s733 = scalar_lea.vmem [#allocation2], 898
    %734 = vst.msk [vmem:[%s733] ss:$16 sm:$0x3] %vm732, %v731
    %s735 = scalar_lea.vmem [#allocation2], 898
    %736 = vst.msk [vmem:[%s735] ss:$16 sm:$0xc] %vm732, %v731
    %s737 = scalar_lea.vmem [#allocation2], 898
    %738 = vst.msk [vmem:[%s737] ss:$16 sm:$0x30] %vm732, %v731
    %s739 = scalar_lea.vmem [#allocation2], 898
    %740 = vst.msk [vmem:[%s739] ss:$16 sm:$0xc0] %vm732, %v731
    %s741 = scalar_lea.vmem [#allocation3], 256
    %v742 = vld.sshfl [vmem:[%s741] sm:$0xff pattern:$0x99999810]
    %s743 = scalar_lea.vmem [#allocation3], 272
    %v744 = vld.sshfl [vmem:[%s743] sm:$0xff pattern:$0x98100000]
    %vm745 = vcmask 1047556
    %v746 = vsel %vm745, %v744, %v742
    %747 = vrot.lane.b32.xlu0 %v746, 124
    %v748 = vpop.permute.xlu0 %747
    %vm749 = vcmask 15360
    %s750 = scalar_lea.vmem [#allocation2], 1026
    %751 = vst.msk [vmem:[%s750] ss:$16 sm:$0x3] %vm749, %v748
    %s752 = scalar_lea.vmem [#allocation2], 1026
    %753 = vst.msk [vmem:[%s752] ss:$16 sm:$0xc] %vm749, %v748
    %s754 = scalar_lea.vmem [#allocation2], 1026
    %755 = vst.msk [vmem:[%s754] ss:$16 sm:$0x30] %vm749, %v748
    %s756 = scalar_lea.vmem [#allocation2], 1026
    %757 = vst.msk [vmem:[%s756] ss:$16 sm:$0xc0] %vm749, %v748
    %s758 = scalar_lea.vmem [#allocation3], 288
    %v759 = vld.sshfl [vmem:[%s758] sm:$0xff pattern:$0x99999810]
    %s760 = scalar_lea.vmem [#allocation3], 304
    %v761 = vld.sshfl [vmem:[%s760] sm:$0xff pattern:$0x98100000]
    %vm762 = vcmask 1047556
    %v763 = vsel %vm762, %v761, %v759
    %764 = vrot.lane.b32.xlu0 %v763, 124
    %v765 = vpop.permute.xlu0 %764
    %vm766 = vcmask 15360
    %s767 = scalar_lea.vmem [#allocation2], 1154
    %768 = vst.msk [vmem:[%s767] ss:$16 sm:$0x3] %vm766, %v765
    %s769 = scalar_lea.vmem [#allocation2], 1154
    %770 = vst.msk [vmem:[%s769] ss:$16 sm:$0xc] %vm766, %v765
    %s771 = scalar_lea.vmem [#allocation2], 1154
    %772 = vst.msk [vmem:[%s771] ss:$16 sm:$0x30] %vm766, %v765
    %s773 = scalar_lea.vmem [#allocation2], 1154
    %774 = vst.msk [vmem:[%s773] ss:$16 sm:$0xc0] %vm766, %v765
    %s775 = scalar_lea.vmem [#allocation3], 320
    %v776 = vld.sshfl [vmem:[%s775] sm:$0xff pattern:$0x99999810]
    %777 = vrot.lane.b32.xlu0 %v776, 124
    %v778 = vpop.permute.xlu0 %777
    %vm779 = vcmask 15360
    %s780 = scalar_lea.vmem [#allocation2], 1282
    %781 = vst.msk [vmem:[%s780] ss:$16 sm:$0x3] %vm779, %v778
    %s782 = scalar_lea.vmem [#allocation2], 1282
    %783 = vst.msk [vmem:[%s782] ss:$16 sm:$0xc] %vm779, %v778
    %v784 = vld.sshfl [vmem:[#allocation3] sm:$0xff pattern:$0x99999810]
    %s785 = scalar_lea.vmem [#allocation3], 16
    %v786 = vld.sshfl [vmem:[%s785] sm:$0xff pattern:$0x98100000]
    %vm787 = vcmask 1047556
    %v788 = vsel %vm787, %v786, %v784
    %789 = vrot.lane.b32.xlu0 %v788, 122
    %v790 = vpop.permute.xlu0 %789
    %vm791 = vcmask 15360
    %s792 = scalar_lea.vmem [#allocation2], 3
    %793 = vst.msk [vmem:[%s792] ss:$16 sm:$0x3] %vm791, %v790
    %s794 = scalar_lea.vmem [#allocation2], 3
    %795 = vst.msk [vmem:[%s794] ss:$16 sm:$0xc] %vm791, %v790
    %s796 = scalar_lea.vmem [#allocation2], 3
    %797 = vst.msk [vmem:[%s796] ss:$16 sm:$0x30] %vm791, %v790
    %s798 = scalar_lea.vmem [#allocation2], 3
    %799 = vst.msk [vmem:[%s798] ss:$16 sm:$0xc0] %vm791, %v790
    %s800 = scalar_lea.vmem [#allocation3], 32
    %v801 = vld.sshfl [vmem:[%s800] sm:$0xff pattern:$0x99999810]
    %s802 = scalar_lea.vmem [#allocation3], 48
    %v803 = vld.sshfl [vmem:[%s802] sm:$0xff pattern:$0x98100000]
    %vm804 = vcmask 1047556
    %v805 = vsel %vm804, %v803, %v801
    %806 = vrot.lane.b32.xlu0 %v805, 122
    %v807 = vpop.permute.xlu0 %806
    %vm808 = vcmask 15360
    %s809 = scalar_lea.vmem [#allocation2], 131
    %810 = vst.msk [vmem:[%s809] ss:$16 sm:$0x3] %vm808, %v807
    %s811 = scalar_lea.vmem [#allocation2], 131
    %812 = vst.msk [vmem:[%s811] ss:$16 sm:$0xc] %vm808, %v807
    %s813 = scalar_lea.vmem [#allocation2], 131
    %814 = vst.msk [vmem:[%s813] ss:$16 sm:$0x30] %vm808, %v807
    %s815 = scalar_lea.vmem [#allocation2], 131
    %816 = vst.msk [vmem:[%s815] ss:$16 sm:$0xc0] %vm808, %v807
    %s817 = scalar_lea.vmem [#allocation3], 64
    %v818 = vld.sshfl [vmem:[%s817] sm:$0xff pattern:$0x99999810]
    %s819 = scalar_lea.vmem [#allocation3], 80
    %v820 = vld.sshfl [vmem:[%s819] sm:$0xff pattern:$0x98100000]
    %vm821 = vcmask 1047556
    %v822 = vsel %vm821, %v820, %v818
    %823 = vrot.lane.b32.xlu0 %v822, 122
    %v824 = vpop.permute.xlu0 %823
    %vm825 = vcmask 15360
    %s826 = scalar_lea.vmem [#allocation2], 259
    %827 = vst.msk [vmem:[%s826] ss:$16 sm:$0x3] %vm825, %v824
    %s828 = scalar_lea.vmem [#allocation2], 259
    %829 = vst.msk [vmem:[%s828] ss:$16 sm:$0xc] %vm825, %v824
    %s830 = scalar_lea.vmem [#allocation2], 259
    %831 = vst.msk [vmem:[%s830] ss:$16 sm:$0x30] %vm825, %v824
    %s832 = scalar_lea.vmem [#allocation2], 259
    %833 = vst.msk [vmem:[%s832] ss:$16 sm:$0xc0] %vm825, %v824
    %s834 = scalar_lea.vmem [#allocation3], 96
    %v835 = vld.sshfl [vmem:[%s834] sm:$0xff pattern:$0x99999810]
    %s836 = scalar_lea.vmem [#allocation3], 112
    %v837 = vld.sshfl [vmem:[%s836] sm:$0xff pattern:$0x98100000]
    %vm838 = vcmask 1047556
    %v839 = vsel %vm838, %v837, %v835
    %840 = vrot.lane.b32.xlu0 %v839, 122
    %v841 = vpop.permute.xlu0 %840
    %vm842 = vcmask 15360
    %s843 = scalar_lea.vmem [#allocation2], 387
    %844 = vst.msk [vmem:[%s843] ss:$16 sm:$0x3] %vm842, %v841
    %s845 = scalar_lea.vmem [#allocation2], 387
    %846 = vst.msk [vmem:[%s845] ss:$16 sm:$0xc] %vm842, %v841
    %s847 = scalar_lea.vmem [#allocation2], 387
    %848 = vst.msk [vmem:[%s847] ss:$16 sm:$0x30] %vm842, %v841
    %s849 = scalar_lea.vmem [#allocation2], 387
    %850 = vst.msk [vmem:[%s849] ss:$16 sm:$0xc0] %vm842, %v841
    %s851 = scalar_lea.vmem [#allocation3], 128
    %v852 = vld.sshfl [vmem:[%s851] sm:$0xff pattern:$0x99999810]
    %s853 = scalar_lea.vmem [#allocation3], 144
    %v854 = vld.sshfl [vmem:[%s853] sm:$0xff pattern:$0x98100000]
    %vm855 = vcmask 1047556
    %v856 = vsel %vm855, %v854, %v852
    %857 = vrot.lane.b32.xlu0 %v856, 122
    %v858 = vpop.permute.xlu0 %857
    %vm859 = vcmask 15360
    %s860 = scalar_lea.vmem [#allocation2], 515
    %861 = vst.msk [vmem:[%s860] ss:$16 sm:$0x3] %vm859, %v858
    %s862 = scalar_lea.vmem [#allocation2], 515
    %863 = vst.msk [vmem:[%s862] ss:$16 sm:$0xc] %vm859, %v858
    %s864 = scalar_lea.vmem [#allocation2], 515
    %865 = vst.msk [vmem:[%s864] ss:$16 sm:$0x30] %vm859, %v858
    %s866 = scalar_lea.vmem [#allocation2], 515
    %867 = vst.msk [vmem:[%s866] ss:$16 sm:$0xc0] %vm859, %v858
    %s868 = scalar_lea.vmem [#allocation3], 160
    %v869 = vld.sshfl [vmem:[%s868] sm:$0xff pattern:$0x99999810]
    %s870 = scalar_lea.vmem [#allocation3], 176
    %v871 = vld.sshfl [vmem:[%s870] sm:$0xff pattern:$0x98100000]
    %vm872 = vcmask 1047556
    %v873 = vsel %vm872, %v871, %v869
    %874 = vrot.lane.b32.xlu0 %v873, 122
    %v875 = vpop.permute.xlu0 %874
    %vm876 = vcmask 15360
    %s877 = scalar_lea.vmem [#allocation2], 643
    %878 = vst.msk [vmem:[%s877] ss:$16 sm:$0x3] %vm876, %v875
    %s879 = scalar_lea.vmem [#allocation2], 643
    %880 = vst.msk [vmem:[%s879] ss:$16 sm:$0xc] %vm876, %v875
    %s881 = scalar_lea.vmem [#allocation2], 643
    %882 = vst.msk [vmem:[%s881] ss:$16 sm:$0x30] %vm876, %v875
    %s883 = scalar_lea.vmem [#allocation2], 643
    %884 = vst.msk [vmem:[%s883] ss:$16 sm:$0xc0] %vm876, %v875
    %s885 = scalar_lea.vmem [#allocation3], 192
    %v886 = vld.sshfl [vmem:[%s885] sm:$0xff pattern:$0x99999810]
    %s887 = scalar_lea.vmem [#allocation3], 208
    %v888 = vld.sshfl [vmem:[%s887] sm:$0xff pattern:$0x98100000]
    %vm889 = vcmask 1047556
    %v890 = vsel %vm889, %v888, %v886
    %891 = vrot.lane.b32.xlu0 %v890, 122
    %v892 = vpop.permute.xlu0 %891
    %vm893 = vcmask 15360
    %s894 = scalar_lea.vmem [#allocation2], 771
    %895 = vst.msk [vmem:[%s894] ss:$16 sm:$0x3] %vm893, %v892
    %s896 = scalar_lea.vmem [#allocation2], 771
    %897 = vst.msk [vmem:[%s896] ss:$16 sm:$0xc] %vm893, %v892
    %s898 = scalar_lea.vmem [#allocation2], 771
    %899 = vst.msk [vmem:[%s898] ss:$16 sm:$0x30] %vm893, %v892
    %s900 = scalar_lea.vmem [#allocation2], 771
    %901 = vst.msk [vmem:[%s900] ss:$16 sm:$0xc0] %vm893, %v892
    %s902 = scalar_lea.vmem [#allocation3], 224
    %v903 = vld.sshfl [vmem:[%s902] sm:$0xff pattern:$0x99999810]
    %s904 = scalar_lea.vmem [#allocation3], 240
    %v905 = vld.sshfl [vmem:[%s904] sm:$0xff pattern:$0x98100000]
    %vm906 = vcmask 1047556
    %v907 = vsel %vm906, %v905, %v903
    %908 = vrot.lane.b32.xlu0 %v907, 122
    %v909 = vpop.permute.xlu0 %908
    %vm910 = vcmask 15360
    %s911 = scalar_lea.vmem [#allocation2], 899
    %912 = vst.msk [vmem:[%s911] ss:$16 sm:$0x3] %vm910, %v909
    %s913 = scalar_lea.vmem [#allocation2], 899
    %914 = vst.msk [vmem:[%s913] ss:$16 sm:$0xc] %vm910, %v909
    %s915 = scalar_lea.vmem [#allocation2], 899
    %916 = vst.msk [vmem:[%s915] ss:$16 sm:$0x30] %vm910, %v909
    %s917 = scalar_lea.vmem [#allocation2], 899
    %918 = vst.msk [vmem:[%s917] ss:$16 sm:$0xc0] %vm910, %v909
    %s919 = scalar_lea.vmem [#allocation3], 256
    %v920 = vld.sshfl [vmem:[%s919] sm:$0xff pattern:$0x99999810]
    %s921 = scalar_lea.vmem [#allocation3], 272
    %v922 = vld.sshfl [vmem:[%s921] sm:$0xff pattern:$0x98100000]
    %vm923 = vcmask 1047556
    %v924 = vsel %vm923, %v922, %v920
    %925 = vrot.lane.b32.xlu0 %v924, 122
    %v926 = vpop.permute.xlu0 %925
    %vm927 = vcmask 15360
    %s928 = scalar_lea.vmem [#allocation2], 1027
    %929 = vst.msk [vmem:[%s928] ss:$16 sm:$0x3] %vm927, %v926
    %s930 = scalar_lea.vmem [#allocation2], 1027
    %931 = vst.msk [vmem:[%s930] ss:$16 sm:$0xc] %vm927, %v926
    %s932 = scalar_lea.vmem [#allocation2], 1027
    %933 = vst.msk [vmem:[%s932] ss:$16 sm:$0x30] %vm927, %v926
    %s934 = scalar_lea.vmem [#allocation2], 1027
    %935 = vst.msk [vmem:[%s934] ss:$16 sm:$0xc0] %vm927, %v926
    %s936 = scalar_lea.vmem [#allocation3], 288
    %v937 = vld.sshfl [vmem:[%s936] sm:$0xff pattern:$0x99999810]
    %s938 = scalar_lea.vmem [#allocation3], 304
    %v939 = vld.sshfl [vmem:[%s938] sm:$0xff pattern:$0x98100000]
    %vm940 = vcmask 1047556
    %v941 = vsel %vm940, %v939, %v937
    %942 = vrot.lane.b32.xlu0 %v941, 122
    %v943 = vpop.permute.xlu0 %942
    %vm944 = vcmask 15360
    %s945 = scalar_lea.vmem [#allocation2], 1155
    %946 = vst.msk [vmem:[%s945] ss:$16 sm:$0x3] %vm944, %v943
    %s947 = scalar_lea.vmem [#allocation2], 1155
    %948 = vst.msk [vmem:[%s947] ss:$16 sm:$0xc] %vm944, %v943
    %s949 = scalar_lea.vmem [#allocation2], 1155
    %950 = vst.msk [vmem:[%s949] ss:$16 sm:$0x30] %vm944, %v943
    %s951 = scalar_lea.vmem [#allocation2], 1155
    %952 = vst.msk [vmem:[%s951] ss:$16 sm:$0xc0] %vm944, %v943
    %s953 = scalar_lea.vmem [#allocation3], 320
    %v954 = vld.sshfl [vmem:[%s953] sm:$0xff pattern:$0x99999810]
    %955 = vrot.lane.b32.xlu0 %v954, 122
    %v956 = vpop.permute.xlu0 %955
    %vm957 = vcmask 15360
    %s958 = scalar_lea.vmem [#allocation2], 1283
    %959 = vst.msk [vmem:[%s958] ss:$16 sm:$0x3] %vm957, %v956
    %s960 = scalar_lea.vmem [#allocation2], 1283
    %961 = vst.msk [vmem:[%s960] ss:$16 sm:$0xc] %vm957, %v956
    %v962 = vld.sshfl [vmem:[#allocation3] sm:$0xff pattern:$0x99999810]
    %s963 = scalar_lea.vmem [#allocation3], 16
    %v964 = vld.sshfl [vmem:[%s963] sm:$0xff pattern:$0x98100000]
    %vm965 = vcmask 1047556
    %v966 = vsel %vm965, %v964, %v962
    %967 = vrot.lane.b32.xlu0 %v966, 120
    %v968 = vpop.permute.xlu0 %967
    %vm969 = vcmask 15360
    %s970 = scalar_lea.vmem [#allocation2], 4
    %971 = vst.msk [vmem:[%s970] ss:$16 sm:$0x3] %vm969, %v968
    %s972 = scalar_lea.vmem [#allocation2], 4
    %973 = vst.msk [vmem:[%s972] ss:$16 sm:$0xc] %vm969, %v968
    %s974 = scalar_lea.vmem [#allocation2], 4
    %975 = vst.msk [vmem:[%s974] ss:$16 sm:$0x30] %vm969, %v968
    %s976 = scalar_lea.vmem [#allocation2], 4
    %977 = vst.msk [vmem:[%s976] ss:$16 sm:$0xc0] %vm969, %v968
    %s978 = scalar_lea.vmem [#allocation3], 32
    %v979 = vld.sshfl [vmem:[%s978] sm:$0xff pattern:$0x99999810]
    %s980 = scalar_lea.vmem [#allocation3], 48
    %v981 = vld.sshfl [vmem:[%s980] sm:$0xff pattern:$0x98100000]
    %vm982 = vcmask 1047556
    %v983 = vsel %vm982, %v981, %v979
    %984 = vrot.lane.b32.xlu0 %v983, 120
    %v985 = vpop.permute.xlu0 %984
    %vm986 = vcmask 15360
    %s987 = scalar_lea.vmem [#allocation2], 132
    %988 = vst.msk [vmem:[%s987] ss:$16 sm:$0x3] %vm986, %v985
    %s989 = scalar_lea.vmem [#allocation2], 132
    %990 = vst.msk [vmem:[%s989] ss:$16 sm:$0xc] %vm986, %v985
    %s991 = scalar_lea.vmem [#allocation2], 132
    %992 = vst.msk [vmem:[%s991] ss:$16 sm:$0x30] %vm986, %v985
    %s993 = scalar_lea.vmem [#allocation2], 132
    %994 = vst.msk [vmem:[%s993] ss:$16 sm:$0xc0] %vm986, %v985
    %s995 = scalar_lea.vmem [#allocation3], 64
    %v996 = vld.sshfl [vmem:[%s995] sm:$0xff pattern:$0x99999810]
    %s997 = scalar_lea.vmem [#allocation3], 80
    %v998 = vld.sshfl [vmem:[%s997] sm:$0xff pattern:$0x98100000]
    %vm999 = vcmask 1047556
    %v1000 = vsel %vm999, %v998, %v996
    %1001 = vrot.lane.b32.xlu0 %v1000, 120
    %v1002 = vpop.permute.xlu0 %1001
    %vm1003 = vcmask 15360
    %s1004 = scalar_lea.vmem [#allocation2], 260
    %1005 = vst.msk [vmem:[%s1004] ss:$16 sm:$0x3] %vm1003, %v1002
    %s1006 = scalar_lea.vmem [#allocation2], 260
    %1007 = vst.msk [vmem:[%s1006] ss:$16 sm:$0xc] %vm1003, %v1002
    %s1008 = scalar_lea.vmem [#allocation2], 260
    %1009 = vst.msk [vmem:[%s1008] ss:$16 sm:$0x30] %vm1003, %v1002
    %s1010 = scalar_lea.vmem [#allocation2], 260
    %1011 = vst.msk [vmem:[%s1010] ss:$16 sm:$0xc0] %vm1003, %v1002
    %s1012 = scalar_lea.vmem [#allocation3], 96
    %v1013 = vld.sshfl [vmem:[%s1012] sm:$0xff pattern:$0x99999810]
    %s1014 = scalar_lea.vmem [#allocation3], 112
    %v1015 = vld.sshfl [vmem:[%s1014] sm:$0xff pattern:$0x98100000]
    %vm1016 = vcmask 1047556
    %v1017 = vsel %vm1016, %v1015, %v1013
    %1018 = vrot.lane.b32.xlu0 %v1017, 120
    %v1019 = vpop.permute.xlu0 %1018
    %vm1020 = vcmask 15360
    %s1021 = scalar_lea.vmem [#allocation2], 388
    %1022 = vst.msk [vmem:[%s1021] ss:$16 sm:$0x3] %vm1020, %v1019
    %s1023 = scalar_lea.vmem [#allocation2], 388
    %1024 = vst.msk [vmem:[%s1023] ss:$16 sm:$0xc] %vm1020, %v1019
    %s1025 = scalar_lea.vmem [#allocation2], 388
    %1026 = vst.msk [vmem:[%s1025] ss:$16 sm:$0x30] %vm1020, %v1019
    %s1027 = scalar_lea.vmem [#allocation2], 388
    %1028 = vst.msk [vmem:[%s1027] ss:$16 sm:$0xc0] %vm1020, %v1019
    %s1029 = scalar_lea.vmem [#allocation3], 128
    %v1030 = vld.sshfl [vmem:[%s1029] sm:$0xff pattern:$0x99999810]
    %s1031 = scalar_lea.vmem [#allocation3], 144
    %v1032 = vld.sshfl [vmem:[%s1031] sm:$0xff pattern:$0x98100000]
    %vm1033 = vcmask 1047556
    %v1034 = vsel %vm1033, %v1032, %v1030
    %1035 = vrot.lane.b32.xlu0 %v1034, 120
    %v1036 = vpop.permute.xlu0 %1035
    %vm1037 = vcmask 15360
    %s1038 = scalar_lea.vmem [#allocation2], 516
    %1039 = vst.msk [vmem:[%s1038] ss:$16 sm:$0x3] %vm1037, %v1036
    %s1040 = scalar_lea.vmem [#allocation2], 516
    %1041 = vst.msk [vmem:[%s1040] ss:$16 sm:$0xc] %vm1037, %v1036
    %s1042 = scalar_lea.vmem [#allocation2], 516
    %1043 = vst.msk [vmem:[%s1042] ss:$16 sm:$0x30] %vm1037, %v1036
    %s1044 = scalar_lea.vmem [#allocation2], 516
    %1045 = vst.msk [vmem:[%s1044] ss:$16 sm:$0xc0] %vm1037, %v1036
    %s1046 = scalar_lea.vmem [#allocation3], 160
    %v1047 = vld.sshfl [vmem:[%s1046] sm:$0xff pattern:$0x99999810]
    %s1048 = scalar_lea.vmem [#allocation3], 176
    %v1049 = vld.sshfl [vmem:[%s1048] sm:$0xff pattern:$0x98100000]
    %vm1050 = vcmask 1047556
    %v1051 = vsel %vm1050, %v1049, %v1047
    %1052 = vrot.lane.b32.xlu0 %v1051, 120
    %v1053 = vpop.permute.xlu0 %1052
    %vm1054 = vcmask 15360
    %s1055 = scalar_lea.vmem [#allocation2], 644
    %1056 = vst.msk [vmem:[%s1055] ss:$16 sm:$0x3] %vm1054, %v1053
    %s1057 = scalar_lea.vmem [#allocation2], 644
    %1058 = vst.msk [vmem:[%s1057] ss:$16 sm:$0xc] %vm1054, %v1053
    %s1059 = scalar_lea.vmem [#allocation2], 644
    %1060 = vst.msk [vmem:[%s1059] ss:$16 sm:$0x30] %vm1054, %v1053
    %s1061 = scalar_lea.vmem [#allocation2], 644
    %1062 = vst.msk [vmem:[%s1061] ss:$16 sm:$0xc0] %vm1054, %v1053
    %s1063 = scalar_lea.vmem [#allocation3], 192
    %v1064 = vld.sshfl [vmem:[%s1063] sm:$0xff pattern:$0x99999810]
    %s1065 = scalar_lea.vmem [#allocation3], 208
    %v1066 = vld.sshfl [vmem:[%s1065] sm:$0xff pattern:$0x98100000]
    %vm1067 = vcmask 1047556
    %v1068 = vsel %vm1067, %v1066, %v1064
    %1069 = vrot.lane.b32.xlu0 %v1068, 120
    %v1070 = vpop.permute.xlu0 %1069
    %vm1071 = vcmask 15360
    %s1072 = scalar_lea.vmem [#allocation2], 772
    %1073 = vst.msk [vmem:[%s1072] ss:$16 sm:$0x3] %vm1071, %v1070
    %s1074 = scalar_lea.vmem [#allocation2], 772
    %1075 = vst.msk [vmem:[%s1074] ss:$16 sm:$0xc] %vm1071, %v1070
    %s1076 = scalar_lea.vmem [#allocation2], 772
    %1077 = vst.msk [vmem:[%s1076] ss:$16 sm:$0x30] %vm1071, %v1070
    %s1078 = scalar_lea.vmem [#allocation2], 772
    %1079 = vst.msk [vmem:[%s1078] ss:$16 sm:$0xc0] %vm1071, %v1070
    %s1080 = scalar_lea.vmem [#allocation3], 224
    %v1081 = vld.sshfl [vmem:[%s1080] sm:$0xff pattern:$0x99999810]
    %s1082 = scalar_lea.vmem [#allocation3], 240
    %v1083 = vld.sshfl [vmem:[%s1082] sm:$0xff pattern:$0x98100000]
    %vm1084 = vcmask 1047556
    %v1085 = vsel %vm1084, %v1083, %v1081
    %1086 = vrot.lane.b32.xlu0 %v1085, 120
    %v1087 = vpop.permute.xlu0 %1086
    %vm1088 = vcmask 15360
    %s1089 = scalar_lea.vmem [#allocation2], 900
    %1090 = vst.msk [vmem:[%s1089] ss:$16 sm:$0x3] %vm1088, %v1087
    %s1091 = scalar_lea.vmem [#allocation2], 900
    %1092 = vst.msk [vmem:[%s1091] ss:$16 sm:$0xc] %vm1088, %v1087
    %s1093 = scalar_lea.vmem [#allocation2], 900
    %1094 = vst.msk [vmem:[%s1093] ss:$16 sm:$0x30] %vm1088, %v1087
    %s1095 = scalar_lea.vmem [#allocation2], 900
    %1096 = vst.msk [vmem:[%s1095] ss:$16 sm:$0xc0] %vm1088, %v1087
    %s1097 = scalar_lea.vmem [#allocation3], 256
    %v1098 = vld.sshfl [vmem:[%s1097] sm:$0xff pattern:$0x99999810]
    %s1099 = scalar_lea.vmem [#allocation3], 272
    %v1100 = vld.sshfl [vmem:[%s1099] sm:$0xff pattern:$0x98100000]
    %vm1101 = vcmask 1047556
    %v1102 = vsel %vm1101, %v1100, %v1098
    %1103 = vrot.lane.b32.xlu0 %v1102, 120
    %v1104 = vpop.permute.xlu0 %1103
    %vm1105 = vcmask 15360
    %s1106 = scalar_lea.vmem [#allocation2], 1028
    %1107 = vst.msk [vmem:[%s1106] ss:$16 sm:$0x3] %vm1105, %v1104
    %s1108 = scalar_lea.vmem [#allocation2], 1028
    %1109 = vst.msk [vmem:[%s1108] ss:$16 sm:$0xc] %vm1105, %v1104
    %s1110 = scalar_lea.vmem [#allocation2], 1028
    %1111 = vst.msk [vmem:[%s1110] ss:$16 sm:$0x30] %vm1105, %v1104
    %s1112 = scalar_lea.vmem [#allocation2], 1028
    %1113 = vst.msk [vmem:[%s1112] ss:$16 sm:$0xc0] %vm1105, %v1104
    %s1114 = scalar_lea.vmem [#allocation3], 288
    %v1115 = vld.sshfl [vmem:[%s1114] sm:$0xff pattern:$0x99999810]
    %s1116 = scalar_lea.vmem [#allocation3], 304
    %v1117 = vld.sshfl [vmem:[%s1116] sm:$0xff pattern:$0x98100000]
    %vm1118 = vcmask 1047556
    %v1119 = vsel %vm1118, %v1117, %v1115
    %1120 = vrot.lane.b32.xlu0 %v1119, 120
    %v1121 = vpop.permute.xlu0 %1120
    %vm1122 = vcmask 15360
    %s1123 = scalar_lea.vmem [#allocation2], 1156
    %1124 = vst.msk [vmem:[%s1123] ss:$16 sm:$0x3] %vm1122, %v1121
    %s1125 = scalar_lea.vmem [#allocation2], 1156
    %1126 = vst.msk [vmem:[%s1125] ss:$16 sm:$0xc] %vm1122, %v1121
    %s1127 = scalar_lea.vmem [#allocation2], 1156
    %1128 = vst.msk [vmem:[%s1127] ss:$16 sm:$0x30] %vm1122, %v1121
    %s1129 = scalar_lea.vmem [#allocation2], 1156
    %1130 = vst.msk [vmem:[%s1129] ss:$16 sm:$0xc0] %vm1122, %v1121
    %s1131 = scalar_lea.vmem [#allocation3], 320
    %v1132 = vld.sshfl [vmem:[%s1131] sm:$0xff pattern:$0x99999810]
    %1133 = vrot.lane.b32.xlu0 %v1132, 120
    %v1134 = vpop.permute.xlu0 %1133
    %vm1135 = vcmask 15360
    %s1136 = scalar_lea.vmem [#allocation2], 1284
    %1137 = vst.msk [vmem:[%s1136] ss:$16 sm:$0x3] %vm1135, %v1134
    %s1138 = scalar_lea.vmem [#allocation2], 1284
    %1139 = vst.msk [vmem:[%s1138] ss:$16 sm:$0xc] %vm1135, %v1134
    %v1140 = vld.sshfl [vmem:[#allocation3] sm:$0xff pattern:$0x99999810]
    %s1141 = scalar_lea.vmem [#allocation3], 16
    %v1142 = vld.sshfl [vmem:[%s1141] sm:$0xff pattern:$0x98100000]
    %vm1143 = vcmask 1047556
    %v1144 = vsel %vm1143, %v1142, %v1140
    %1145 = vrot.lane.b32.xlu0 %v1144, 118
    %v1146 = vpop.permute.xlu0 %1145
    %vm1147 = vcmask 15360
    %s1148 = scalar_lea.vmem [#allocation2], 5
    %1149 = vst.msk [vmem:[%s1148] ss:$16 sm:$0x3] %vm1147, %v1146
    %s1150 = scalar_lea.vmem [#allocation2], 5
    %1151 = vst.msk [vmem:[%s1150] ss:$16 sm:$0xc] %vm1147, %v1146
    %s1152 = scalar_lea.vmem [#allocation2], 5
    %1153 = vst.msk [vmem:[%s1152] ss:$16 sm:$0x30] %vm1147, %v1146
    %s1154 = scalar_lea.vmem [#allocation2], 5
    %1155 = vst.msk [vmem:[%s1154] ss:$16 sm:$0xc0] %vm1147, %v1146
    %s1156 = scalar_lea.vmem [#allocation3], 32
    %v1157 = vld.sshfl [vmem:[%s1156] sm:$0xff pattern:$0x99999810]
    %s1158 = scalar_lea.vmem [#allocation3], 48
    %v1159 = vld.sshfl [vmem:[%s1158] sm:$0xff pattern:$0x98100000]
    %vm1160 = vcmask 1047556
    %v1161 = vsel %vm1160, %v1159, %v1157
    %1162 = vrot.lane.b32.xlu0 %v1161, 118
    %v1163 = vpop.permute.xlu0 %1162
    %vm1164 = vcmask 15360
    %s1165 = scalar_lea.vmem [#allocation2], 133
    %1166 = vst.msk [vmem:[%s1165] ss:$16 sm:$0x3] %vm1164, %v1163
    %s1167 = scalar_lea.vmem [#allocation2], 133
    %1168 = vst.msk [vmem:[%s1167] ss:$16 sm:$0xc] %vm1164, %v1163
    %s1169 = scalar_lea.vmem [#allocation2], 133
    %1170 = vst.msk [vmem:[%s1169] ss:$16 sm:$0x30] %vm1164, %v1163
    %s1171 = scalar_lea.vmem [#allocation2], 133
    %1172 = vst.msk [vmem:[%s1171] ss:$16 sm:$0xc0] %vm1164, %v1163
    %s1173 = scalar_lea.vmem [#allocation3], 64
    %v1174 = vld.sshfl [vmem:[%s1173] sm:$0xff pattern:$0x99999810]
    %s1175 = scalar_lea.vmem [#allocation3], 80
    %v1176 = vld.sshfl [vmem:[%s1175] sm:$0xff pattern:$0x98100000]
    %vm1177 = vcmask 1047556
    %v1178 = vsel %vm1177, %v1176, %v1174
    %1179 = vrot.lane.b32.xlu0 %v1178, 118
    %v1180 = vpop.permute.xlu0 %1179
    %vm1181 = vcmask 15360
    %s1182 = scalar_lea.vmem [#allocation2], 261
    %1183 = vst.msk [vmem:[%s1182] ss:$16 sm:$0x3] %vm1181, %v1180
    %s1184 = scalar_lea.vmem [#allocation2], 261
    %1185 = vst.msk [vmem:[%s1184] ss:$16 sm:$0xc] %vm1181, %v1180
    %s1186 = scalar_lea.vmem [#allocation2], 261
    %1187 = vst.msk [vmem:[%s1186] ss:$16 sm:$0x30] %vm1181, %v1180
    %s1188 = scalar_lea.vmem [#allocation2], 261
    %1189 = vst.msk [vmem:[%s1188] ss:$16 sm:$0xc0] %vm1181, %v1180
    %s1190 = scalar_lea.vmem [#allocation3], 96
    %v1191 = vld.sshfl [vmem:[%s1190] sm:$0xff pattern:$0x99999810]
    %s1192 = scalar_lea.vmem [#allocation3], 112
    %v1193 = vld.sshfl [vmem:[%s1192] sm:$0xff pattern:$0x98100000]
    %vm1194 = vcmask 1047556
    %v1195 = vsel %vm1194, %v1193, %v1191
    %1196 = vrot.lane.b32.xlu0 %v1195, 118
    %v1197 = vpop.permute.xlu0 %1196
    %vm1198 = vcmask 15360
    %s1199 = scalar_lea.vmem [#allocation2], 389
    %1200 = vst.msk [vmem:[%s1199] ss:$16 sm:$0x3] %vm1198, %v1197
    %s1201 = scalar_lea.vmem [#allocation2], 389
    %1202 = vst.msk [vmem:[%s1201] ss:$16 sm:$0xc] %vm1198, %v1197
    %s1203 = scalar_lea.vmem [#allocation2], 389
    %1204 = vst.msk [vmem:[%s1203] ss:$16 sm:$0x30] %vm1198, %v1197
    %s1205 = scalar_lea.vmem [#allocation2], 389
    %1206 = vst.msk [vmem:[%s1205] ss:$16 sm:$0xc0] %vm1198, %v1197
    %s1207 = scalar_lea.vmem [#allocation3], 128
    %v1208 = vld.sshfl [vmem:[%s1207] sm:$0xff pattern:$0x99999810]
    %s1209 = scalar_lea.vmem [#allocation3], 144
    %v1210 = vld.sshfl [vmem:[%s1209] sm:$0xff pattern:$0x98100000]
    %vm1211 = vcmask 1047556
    %v1212 = vsel %vm1211, %v1210, %v1208
    %1213 = vrot.lane.b32.xlu0 %v1212, 118
    %v1214 = vpop.permute.xlu0 %1213
    %vm1215 = vcmask 15360
    %s1216 = scalar_lea.vmem [#allocation2], 517
    %1217 = vst.msk [vmem:[%s1216] ss:$16 sm:$0x3] %vm1215, %v1214
    %s1218 = scalar_lea.vmem [#allocation2], 517
    %1219 = vst.msk [vmem:[%s1218] ss:$16 sm:$0xc] %vm1215, %v1214
    %s1220 = scalar_lea.vmem [#allocation2], 517
    %1221 = vst.msk [vmem:[%s1220] ss:$16 sm:$0x30] %vm1215, %v1214
    %s1222 = scalar_lea.vmem [#allocation2], 517
    %1223 = vst.msk [vmem:[%s1222] ss:$16 sm:$0xc0] %vm1215, %v1214
    %s1224 = scalar_lea.vmem [#allocation3], 160
    %v1225 = vld.sshfl [vmem:[%s1224] sm:$0xff pattern:$0x99999810]
    %s1226 = scalar_lea.vmem [#allocation3], 176
    %v1227 = vld.sshfl [vmem:[%s1226] sm:$0xff pattern:$0x98100000]
    %vm1228 = vcmask 1047556
    %v1229 = vsel %vm1228, %v1227, %v1225
    %1230 = vrot.lane.b32.xlu0 %v1229, 118
    %v1231 = vpop.permute.xlu0 %1230
    %vm1232 = vcmask 15360
    %s1233 = scalar_lea.vmem [#allocation2], 645
    %1234 = vst.msk [vmem:[%s1233] ss:$16 sm:$0x3] %vm1232, %v1231
    %s1235 = scalar_lea.vmem [#allocation2], 645
    %1236 = vst.msk [vmem:[%s1235] ss:$16 sm:$0xc] %vm1232, %v1231
    %s1237 = scalar_lea.vmem [#allocation2], 645
    %1238 = vst.msk [vmem:[%s1237] ss:$16 sm:$0x30] %vm1232, %v1231
    %s1239 = scalar_lea.vmem [#allocation2], 645
    %1240 = vst.msk [vmem:[%s1239] ss:$16 sm:$0xc0] %vm1232, %v1231
    %s1241 = scalar_lea.vmem [#allocation3], 192
    %v1242 = vld.sshfl [vmem:[%s1241] sm:$0xff pattern:$0x99999810]
    %s1243 = scalar_lea.vmem [#allocation3], 208
    %v1244 = vld.sshfl [vmem:[%s1243] sm:$0xff pattern:$0x98100000]
    %vm1245 = vcmask 1047556
    %v1246 = vsel %vm1245, %v1244, %v1242
    %1247 = vrot.lane.b32.xlu0 %v1246, 118
    %v1248 = vpop.permute.xlu0 %1247
    %vm1249 = vcmask 15360
    %s1250 = scalar_lea.vmem [#allocation2], 773
    %1251 = vst.msk [vmem:[%s1250] ss:$16 sm:$0x3] %vm1249, %v1248
    %s1252 = scalar_lea.vmem [#allocation2], 773
    %1253 = vst.msk [vmem:[%s1252] ss:$16 sm:$0xc] %vm1249, %v1248
    %s1254 = scalar_lea.vmem [#allocation2], 773
    %1255 = vst.msk [vmem:[%s1254] ss:$16 sm:$0x30] %vm1249, %v1248
    %s1256 = scalar_lea.vmem [#allocation2], 773
    %1257 = vst.msk [vmem:[%s1256] ss:$16 sm:$0xc0] %vm1249, %v1248
    %s1258 = scalar_lea.vmem [#allocation3], 224
    %v1259 = vld.sshfl [vmem:[%s1258] sm:$0xff pattern:$0x99999810]
    %s1260 = scalar_lea.vmem [#allocation3], 240
    %v1261 = vld.sshfl [vmem:[%s1260] sm:$0xff pattern:$0x98100000]
    %vm1262 = vcmask 1047556
    %v1263 = vsel %vm1262, %v1261, %v1259
    %1264 = vrot.lane.b32.xlu0 %v1263, 118
    %v1265 = vpop.permute.xlu0 %1264
    %vm1266 = vcmask 15360
    %s1267 = scalar_lea.vmem [#allocation2], 901
    %1268 = vst.msk [vmem:[%s1267] ss:$16 sm:$0x3] %vm1266, %v1265
    %s1269 = scalar_lea.vmem [#allocation2], 901
    %1270 = vst.msk [vmem:[%s1269] ss:$16 sm:$0xc] %vm1266, %v1265
    %s1271 = scalar_lea.vmem [#allocation2], 901
    %1272 = vst.msk [vmem:[%s1271] ss:$16 sm:$0x30] %vm1266, %v1265
    %s1273 = scalar_lea.vmem [#allocation2], 901
    %1274 = vst.msk [vmem:[%s1273] ss:$16 sm:$0xc0] %vm1266, %v1265
    %s1275 = scalar_lea.vmem [#allocation3], 256
    %v1276 = vld.sshfl [vmem:[%s1275] sm:$0xff pattern:$0x99999810]
    %s1277 = scalar_lea.vmem [#allocation3], 272
    %v1278 = vld.sshfl [vmem:[%s1277] sm:$0xff pattern:$0x98100000]
    %vm1279 = vcmask 1047556
    %v1280 = vsel %vm1279, %v1278, %v1276
    %1281 = vrot.lane.b32.xlu0 %v1280, 118
    %v1282 = vpop.permute.xlu0 %1281
    %vm1283 = vcmask 15360
    %s1284 = scalar_lea.vmem [#allocation2], 1029
    %1285 = vst.msk [vmem:[%s1284] ss:$16 sm:$0x3] %vm1283, %v1282
    %s1286 = scalar_lea.vmem [#allocation2], 1029
    %1287 = vst.msk [vmem:[%s1286] ss:$16 sm:$0xc] %vm1283, %v1282
    %s1288 = scalar_lea.vmem [#allocation2], 1029
    %1289 = vst.msk [vmem:[%s1288] ss:$16 sm:$0x30] %vm1283, %v1282
    %s1290 = scalar_lea.vmem [#allocation2], 1029
    %1291 = vst.msk [vmem:[%s1290] ss:$16 sm:$0xc0] %vm1283, %v1282
    %s1292 = scalar_lea.vmem [#allocation3], 288
    %v1293 = vld.sshfl [vmem:[%s1292] sm:$0xff pattern:$0x99999810]
    %s1294 = scalar_lea.vmem [#allocation3], 304
    %v1295 = vld.sshfl [vmem:[%s1294] sm:$0xff pattern:$0x98100000]
    %vm1296 = vcmask 1047556
    %v1297 = vsel %vm1296, %v1295, %v1293
    %1298 = vrot.lane.b32.xlu0 %v1297, 118
    %v1299 = vpop.permute.xlu0 %1298
    %vm1300 = vcmask 15360
    %s1301 = scalar_lea.vmem [#allocation2], 1157
    %1302 = vst.msk [vmem:[%s1301] ss:$16 sm:$0x3] %vm1300, %v1299
    %s1303 = scalar_lea.vmem [#allocation2], 1157
    %1304 = vst.msk [vmem:[%s1303] ss:$16 sm:$0xc] %vm1300, %v1299
    %s1305 = scalar_lea.vmem [#allocation2], 1157
    %1306 = vst.msk [vmem:[%s1305] ss:$16 sm:$0x30] %vm1300, %v1299
    %s1307 = scalar_lea.vmem [#allocation2], 1157
    %1308 = vst.msk [vmem:[%s1307] ss:$16 sm:$0xc0] %vm1300, %v1299
    %s1309 = scalar_lea.vmem [#allocation3], 320
    %v1310 = vld.sshfl [vmem:[%s1309] sm:$0xff pattern:$0x99999810]
    %1311 = vrot.lane.b32.xlu0 %v1310, 118
    %v1312 = vpop.permute.xlu0 %1311
    %vm1313 = vcmask 15360
    %s1314 = scalar_lea.vmem [#allocation2], 1285
    %1315 = vst.msk [vmem:[%s1314] ss:$16 sm:$0x3] %vm1313, %v1312
    %s1316 = scalar_lea.vmem [#allocation2], 1285
    %1317 = vst.msk [vmem:[%s1316] ss:$16 sm:$0xc] %vm1313, %v1312
    %v1318 = vld.sshfl [vmem:[#allocation3] sm:$0xff pattern:$0x99999810]
    %s1319 = scalar_lea.vmem [#allocation3], 16
    %v1320 = vld.sshfl [vmem:[%s1319] sm:$0xff pattern:$0x98100000]
    %vm1321 = vcmask 1047556
    %v1322 = vsel %vm1321, %v1320, %v1318
    %1323 = vrot.lane.b32.xlu0 %v1322, 116
    %v1324 = vpop.permute.xlu0 %1323
    %vm1325 = vcmask 15360
    %s1326 = scalar_lea.vmem [#allocation2], 6
    %1327 = vst.msk [vmem:[%s1326] ss:$16 sm:$0x3] %vm1325, %v1324
    %s1328 = scalar_lea.vmem [#allocation2], 6
    %1329 = vst.msk [vmem:[%s1328] ss:$16 sm:$0xc] %vm1325, %v1324
    %s1330 = scalar_lea.vmem [#allocation2], 6
    %1331 = vst.msk [vmem:[%s1330] ss:$16 sm:$0x30] %vm1325, %v1324
    %s1332 = scalar_lea.vmem [#allocation2], 6
    %1333 = vst.msk [vmem:[%s1332] ss:$16 sm:$0xc0] %vm1325, %v1324
    %s1334 = scalar_lea.vmem [#allocation3], 32
    %v1335 = vld.sshfl [vmem:[%s1334] sm:$0xff pattern:$0x99999810]
    %s1336 = scalar_lea.vmem [#allocation3], 48
    %v1337 = vld.sshfl [vmem:[%s1336] sm:$0xff pattern:$0x98100000]
    %vm1338 = vcmask 1047556
    %v1339 = vsel %vm1338, %v1337, %v1335
    %1340 = vrot.lane.b32.xlu0 %v1339, 116
    %v1341 = vpop.permute.xlu0 %1340
    %vm1342 = vcmask 15360
    %s1343 = scalar_lea.vmem [#allocation2], 134
    %1344 = vst.msk [vmem:[%s1343] ss:$16 sm:$0x3] %vm1342, %v1341
    %s1345 = scalar_lea.vmem [#allocation2], 134
    %1346 = vst.msk [vmem:[%s1345] ss:$16 sm:$0xc] %vm1342, %v1341
    %s1347 = scalar_lea.vmem [#allocation2], 134
    %1348 = vst.msk [vmem:[%s1347] ss:$16 sm:$0x30] %vm1342, %v1341
    %s1349 = scalar_lea.vmem [#allocation2], 134
    %1350 = vst.msk [vmem:[%s1349] ss:$16 sm:$0xc0] %vm1342, %v1341
    %s1351 = scalar_lea.vmem [#allocation3], 64
    %v1352 = vld.sshfl [vmem:[%s1351] sm:$0xff pattern:$0x99999810]
    %s1353 = scalar_lea.vmem [#allocation3], 80
    %v1354 = vld.sshfl [vmem:[%s1353] sm:$0xff pattern:$0x98100000]
    %vm1355 = vcmask 1047556
    %v1356 = vsel %vm1355, %v1354, %v1352
    %1357 = vrot.lane.b32.xlu0 %v1356, 116
    %v1358 = vpop.permute.xlu0 %1357
    %vm1359 = vcmask 15360
    %s1360 = scalar_lea.vmem [#allocation2], 262
    %1361 = vst.msk [vmem:[%s1360] ss:$16 sm:$0x3] %vm1359, %v1358
    %s1362 = scalar_lea.vmem [#allocation2], 262
    %1363 = vst.msk [vmem:[%s1362] ss:$16 sm:$0xc] %vm1359, %v1358
    %s1364 = scalar_lea.vmem [#allocation2], 262
    %1365 = vst.msk [vmem:[%s1364] ss:$16 sm:$0x30] %vm1359, %v1358
    %s1366 = scalar_lea.vmem [#allocation2], 262
    %1367 = vst.msk [vmem:[%s1366] ss:$16 sm:$0xc0] %vm1359, %v1358
    %s1368 = scalar_lea.vmem [#allocation3], 96
    %v1369 = vld.sshfl [vmem:[%s1368] sm:$0xff pattern:$0x99999810]
    %s1370 = scalar_lea.vmem [#allocation3], 112
    %v1371 = vld.sshfl [vmem:[%s1370] sm:$0xff pattern:$0x98100000]
    %vm1372 = vcmask 1047556
    %v1373 = vsel %vm1372, %v1371, %v1369
    %1374 = vrot.lane.b32.xlu0 %v1373, 116
    %v1375 = vpop.permute.xlu0 %1374
    %vm1376 = vcmask 15360
    %s1377 = scalar_lea.vmem [#allocation2], 390
    %1378 = vst.msk [vmem:[%s1377] ss:$16 sm:$0x3] %vm1376, %v1375
    %s1379 = scalar_lea.vmem [#allocation2], 390
    %1380 = vst.msk [vmem:[%s1379] ss:$16 sm:$0xc] %vm1376, %v1375
    %s1381 = scalar_lea.vmem [#allocation2], 390
    %1382 = vst.msk [vmem:[%s1381] ss:$16 sm:$0x30] %vm1376, %v1375
    %s1383 = scalar_lea.vmem [#allocation2], 390
    %1384 = vst.msk [vmem:[%s1383] ss:$16 sm:$0xc0] %vm1376, %v1375
    %s1385 = scalar_lea.vmem [#allocation3], 128
    %v1386 = vld.sshfl [vmem:[%s1385] sm:$0xff pattern:$0x99999810]
    %s1387 = scalar_lea.vmem [#allocation3], 144
    %v1388 = vld.sshfl [vmem:[%s1387] sm:$0xff pattern:$0x98100000]
    %vm1389 = vcmask 1047556
    %v1390 = vsel %vm1389, %v1388, %v1386
    %1391 = vrot.lane.b32.xlu0 %v1390, 116
    %v1392 = vpop.permute.xlu0 %1391
    %vm1393 = vcmask 15360
    %s1394 = scalar_lea.vmem [#allocation2], 518
    %1395 = vst.msk [vmem:[%s1394] ss:$16 sm:$0x3] %vm1393, %v1392
    %s1396 = scalar_lea.vmem [#allocation2], 518
    %1397 = vst.msk [vmem:[%s1396] ss:$16 sm:$0xc] %vm1393, %v1392
    %s1398 = scalar_lea.vmem [#allocation2], 518
    %1399 = vst.msk [vmem:[%s1398] ss:$16 sm:$0x30] %vm1393, %v1392
    %s1400 = scalar_lea.vmem [#allocation2], 518
    %1401 = vst.msk [vmem:[%s1400] ss:$16 sm:$0xc0] %vm1393, %v1392
    %s1402 = scalar_lea.vmem [#allocation3], 160
    %v1403 = vld.sshfl [vmem:[%s1402] sm:$0xff pattern:$0x99999810]
    %s1404 = scalar_lea.vmem [#allocation3], 176
    %v1405 = vld.sshfl [vmem:[%s1404] sm:$0xff pattern:$0x98100000]
    %vm1406 = vcmask 1047556
    %v1407 = vsel %vm1406, %v1405, %v1403
    %1408 = vrot.lane.b32.xlu0 %v1407, 116
    %v1409 = vpop.permute.xlu0 %1408
    %vm1410 = vcmask 15360
    %s1411 = scalar_lea.vmem [#allocation2], 646
    %1412 = vst.msk [vmem:[%s1411] ss:$16 sm:$0x3] %vm1410, %v1409
    %s1413 = scalar_lea.vmem [#allocation2], 646
    %1414 = vst.msk [vmem:[%s1413] ss:$16 sm:$0xc] %vm1410, %v1409
    %s1415 = scalar_lea.vmem [#allocation2], 646
    %1416 = vst.msk [vmem:[%s1415] ss:$16 sm:$0x30] %vm1410, %v1409
    %s1417 = scalar_lea.vmem [#allocation2], 646
    %1418 = vst.msk [vmem:[%s1417] ss:$16 sm:$0xc0] %vm1410, %v1409
    %s1419 = scalar_lea.vmem [#allocation3], 192
    %v1420 = vld.sshfl [vmem:[%s1419] sm:$0xff pattern:$0x99999810]
    %s1421 = scalar_lea.vmem [#allocation3], 208
    %v1422 = vld.sshfl [vmem:[%s1421] sm:$0xff pattern:$0x98100000]
    %vm1423 = vcmask 1047556
    %v1424 = vsel %vm1423, %v1422, %v1420
    %1425 = vrot.lane.b32.xlu0 %v1424, 116
    %v1426 = vpop.permute.xlu0 %1425
    %vm1427 = vcmask 15360
    %s1428 = scalar_lea.vmem [#allocation2], 774
    %1429 = vst.msk [vmem:[%s1428] ss:$16 sm:$0x3] %vm1427, %v1426
    %s1430 = scalar_lea.vmem [#allocation2], 774
    %1431 = vst.msk [vmem:[%s1430] ss:$16 sm:$0xc] %vm1427, %v1426
    %s1432 = scalar_lea.vmem [#allocation2], 774
    %1433 = vst.msk [vmem:[%s1432] ss:$16 sm:$0x30] %vm1427, %v1426
    %s1434 = scalar_lea.vmem [#allocation2], 774
    %1435 = vst.msk [vmem:[%s1434] ss:$16 sm:$0xc0] %vm1427, %v1426
    %s1436 = scalar_lea.vmem [#allocation3], 224
    %v1437 = vld.sshfl [vmem:[%s1436] sm:$0xff pattern:$0x99999810]
    %s1438 = scalar_lea.vmem [#allocation3], 240
    %v1439 = vld.sshfl [vmem:[%s1438] sm:$0xff pattern:$0x98100000]
    %vm1440 = vcmask 1047556
    %v1441 = vsel %vm1440, %v1439, %v1437
    %1442 = vrot.lane.b32.xlu0 %v1441, 116
    %v1443 = vpop.permute.xlu0 %1442
    %vm1444 = vcmask 15360
    %s1445 = scalar_lea.vmem [#allocation2], 902
    %1446 = vst.msk [vmem:[%s1445] ss:$16 sm:$0x3] %vm1444, %v1443
    %s1447 = scalar_lea.vmem [#allocation2], 902
    %1448 = vst.msk [vmem:[%s1447] ss:$16 sm:$0xc] %vm1444, %v1443
    %s1449 = scalar_lea.vmem [#allocation2], 902
    %1450 = vst.msk [vmem:[%s1449] ss:$16 sm:$0x30] %vm1444, %v1443
    %s1451 = scalar_lea.vmem [#allocation2], 902
    %1452 = vst.msk [vmem:[%s1451] ss:$16 sm:$0xc0] %vm1444, %v1443
    %s1453 = scalar_lea.vmem [#allocation3], 256
    %v1454 = vld.sshfl [vmem:[%s1453] sm:$0xff pattern:$0x99999810]
    %s1455 = scalar_lea.vmem [#allocation3], 272
    %v1456 = vld.sshfl [vmem:[%s1455] sm:$0xff pattern:$0x98100000]
    %vm1457 = vcmask 1047556
    %v1458 = vsel %vm1457, %v1456, %v1454
    %1459 = vrot.lane.b32.xlu0 %v1458, 116
    %v1460 = vpop.permute.xlu0 %1459
    %vm1461 = vcmask 15360
    %s1462 = scalar_lea.vmem [#allocation2], 1030
    %1463 = vst.msk [vmem:[%s1462] ss:$16 sm:$0x3] %vm1461, %v1460
    %s1464 = scalar_lea.vmem [#allocation2], 1030
    %1465 = vst.msk [vmem:[%s1464] ss:$16 sm:$0xc] %vm1461, %v1460
    %s1466 = scalar_lea.vmem [#allocation2], 1030
    %1467 = vst.msk [vmem:[%s1466] ss:$16 sm:$0x30] %vm1461, %v1460
    %s1468 = scalar_lea.vmem [#allocation2], 1030
    %1469 = vst.msk [vmem:[%s1468] ss:$16 sm:$0xc0] %vm1461, %v1460
    %s1470 = scalar_lea.vmem [#allocation3], 288
    %v1471 = vld.sshfl [vmem:[%s1470] sm:$0xff pattern:$0x99999810]
    %s1472 = scalar_lea.vmem [#allocation3], 304
    %v1473 = vld.sshfl [vmem:[%s1472] sm:$0xff pattern:$0x98100000]
    %vm1474 = vcmask 1047556
    %v1475 = vsel %vm1474, %v1473, %v1471
    %1476 = vrot.lane.b32.xlu0 %v1475, 116
    %v1477 = vpop.permute.xlu0 %1476
    %vm1478 = vcmask 15360
    %s1479 = scalar_lea.vmem [#allocation2], 1158
    %1480 = vst.msk [vmem:[%s1479] ss:$16 sm:$0x3] %vm1478, %v1477
    %s1481 = scalar_lea.vmem [#allocation2], 1158
    %1482 = vst.msk [vmem:[%s1481] ss:$16 sm:$0xc] %vm1478, %v1477
    %s1483 = scalar_lea.vmem [#allocation2], 1158
    %1484 = vst.msk [vmem:[%s1483] ss:$16 sm:$0x30] %vm1478, %v1477
    %s1485 = scalar_lea.vmem [#allocation2], 1158
    %1486 = vst.msk [vmem:[%s1485] ss:$16 sm:$0xc0] %vm1478, %v1477
    %s1487 = scalar_lea.vmem [#allocation3], 320
    %v1488 = vld.sshfl [vmem:[%s1487] sm:$0xff pattern:$0x99999810]
    %1489 = vrot.lane.b32.xlu0 %v1488, 116
    %v1490 = vpop.permute.xlu0 %1489
    %vm1491 = vcmask 15360
    %s1492 = scalar_lea.vmem [#allocation2], 1286
    %1493 = vst.msk [vmem:[%s1492] ss:$16 sm:$0x3] %vm1491, %v1490
    %s1494 = scalar_lea.vmem [#allocation2], 1286
    %1495 = vst.msk [vmem:[%s1494] ss:$16 sm:$0xc] %vm1491, %v1490
    %v1496 = vld.sshfl [vmem:[#allocation3] sm:$0xff pattern:$0x99999810]
    %s1497 = scalar_lea.vmem [#allocation3], 16
    %v1498 = vld.sshfl [vmem:[%s1497] sm:$0xff pattern:$0x98100000]
    %vm1499 = vcmask 1047556
    %v1500 = vsel %vm1499, %v1498, %v1496
    %1501 = vrot.lane.b32.xlu0 %v1500, 114
    %v1502 = vpop.permute.xlu0 %1501
    %vm1503 = vcmask 15360
    %s1504 = scalar_lea.vmem [#allocation2], 7
    %1505 = vst.msk [vmem:[%s1504] ss:$16 sm:$0x3] %vm1503, %v1502
    %s1506 = scalar_lea.vmem [#allocation2], 7
    %1507 = vst.msk [vmem:[%s1506] ss:$16 sm:$0xc] %vm1503, %v1502
    %s1508 = scalar_lea.vmem [#allocation2], 7
    %1509 = vst.msk [vmem:[%s1508] ss:$16 sm:$0x30] %vm1503, %v1502
    %s1510 = scalar_lea.vmem [#allocation2], 7
    %1511 = vst.msk [vmem:[%s1510] ss:$16 sm:$0xc0] %vm1503, %v1502
    %s1512 = scalar_lea.vmem [#allocation3], 32
    %v1513 = vld.sshfl [vmem:[%s1512] sm:$0xff pattern:$0x99999810]
    %s1514 = scalar_lea.vmem [#allocation3], 48
    %v1515 = vld.sshfl [vmem:[%s1514] sm:$0xff pattern:$0x98100000]
    %vm1516 = vcmask 1047556
    %v1517 = vsel %vm1516, %v1515, %v1513
    %1518 = vrot.lane.b32.xlu0 %v1517, 114
    %v1519 = vpop.permute.xlu0 %1518
    %vm1520 = vcmask 15360
    %s1521 = scalar_lea.vmem [#allocation2], 135
    %1522 = vst.msk [vmem:[%s1521] ss:$16 sm:$0x3] %vm1520, %v1519
    %s1523 = scalar_lea.vmem [#allocation2], 135
    %1524 = vst.msk [vmem:[%s1523] ss:$16 sm:$0xc] %vm1520, %v1519
    %s1525 = scalar_lea.vmem [#allocation2], 135
    %1526 = vst.msk [vmem:[%s1525] ss:$16 sm:$0x30] %vm1520, %v1519
    %s1527 = scalar_lea.vmem [#allocation2], 135
    %1528 = vst.msk [vmem:[%s1527] ss:$16 sm:$0xc0] %vm1520, %v1519
    %s1529 = scalar_lea.vmem [#allocation3], 64
    %v1530 = vld.sshfl [vmem:[%s1529] sm:$0xff pattern:$0x99999810]
    %s1531 = scalar_lea.vmem [#allocation3], 80
    %v1532 = vld.sshfl [vmem:[%s1531] sm:$0xff pattern:$0x98100000]
    %vm1533 = vcmask 1047556
    %v1534 = vsel %vm1533, %v1532, %v1530
    %1535 = vrot.lane.b32.xlu0 %v1534, 114
    %v1536 = vpop.permute.xlu0 %1535
    %vm1537 = vcmask 15360
    %s1538 = scalar_lea.vmem [#allocation2], 263
    %1539 = vst.msk [vmem:[%s1538] ss:$16 sm:$0x3] %vm1537, %v1536
    %s1540 = scalar_lea.vmem [#allocation2], 263
    %1541 = vst.msk [vmem:[%s1540] ss:$16 sm:$0xc] %vm1537, %v1536
    %s1542 = scalar_lea.vmem [#allocation2], 263
    %1543 = vst.msk [vmem:[%s1542] ss:$16 sm:$0x30] %vm1537, %v1536
    %s1544 = scalar_lea.vmem [#allocation2], 263
    %1545 = vst.msk [vmem:[%s1544] ss:$16 sm:$0xc0] %vm1537, %v1536
    %s1546 = scalar_lea.vmem [#allocation3], 96
    %v1547 = vld.sshfl [vmem:[%s1546] sm:$0xff pattern:$0x99999810]
    %s1548 = scalar_lea.vmem [#allocation3], 112
    %v1549 = vld.sshfl [vmem:[%s1548] sm:$0xff pattern:$0x98100000]
    %vm1550 = vcmask 1047556
    %v1551 = vsel %vm1550, %v1549, %v1547
    %1552 = vrot.lane.b32.xlu0 %v1551, 114
    %v1553 = vpop.permute.xlu0 %1552
    %vm1554 = vcmask 15360
    %s1555 = scalar_lea.vmem [#allocation2], 391
    %1556 = vst.msk [vmem:[%s1555] ss:$16 sm:$0x3] %vm1554, %v1553
    %s1557 = scalar_lea.vmem [#allocation2], 391
    %1558 = vst.msk [vmem:[%s1557] ss:$16 sm:$0xc] %vm1554, %v1553
    %s1559 = scalar_lea.vmem [#allocation2], 391
    %1560 = vst.msk [vmem:[%s1559] ss:$16 sm:$0x30] %vm1554, %v1553
    %s1561 = scalar_lea.vmem [#allocation2], 391
    %1562 = vst.msk [vmem:[%s1561] ss:$16 sm:$0xc0] %vm1554, %v1553
    %s1563 = scalar_lea.vmem [#allocation3], 128
    %v1564 = vld.sshfl [vmem:[%s1563] sm:$0xff pattern:$0x99999810]
    %s1565 = scalar_lea.vmem [#allocation3], 144
    %v1566 = vld.sshfl [vmem:[%s1565] sm:$0xff pattern:$0x98100000]
    %vm1567 = vcmask 1047556
    %v1568 = vsel %vm1567, %v1566, %v1564
    %1569 = vrot.lane.b32.xlu0 %v1568, 114
    %v1570 = vpop.permute.xlu0 %1569
    %vm1571 = vcmask 15360
    %s1572 = scalar_lea.vmem [#allocation2], 519
    %1573 = vst.msk [vmem:[%s1572] ss:$16 sm:$0x3] %vm1571, %v1570
    %s1574 = scalar_lea.vmem [#allocation2], 519
    %1575 = vst.msk [vmem:[%s1574] ss:$16 sm:$0xc] %vm1571, %v1570
    %s1576 = scalar_lea.vmem [#allocation2], 519
    %1577 = vst.msk [vmem:[%s1576] ss:$16 sm:$0x30] %vm1571, %v1570
    %s1578 = scalar_lea.vmem [#allocation2], 519
    %1579 = vst.msk [vmem:[%s1578] ss:$16 sm:$0xc0] %vm1571, %v1570
    %s1580 = scalar_lea.vmem [#allocation3], 160
    %v1581 = vld.sshfl [vmem:[%s1580] sm:$0xff pattern:$0x99999810]
    %s1582 = scalar_lea.vmem [#allocation3], 176
    %v1583 = vld.sshfl [vmem:[%s1582] sm:$0xff pattern:$0x98100000]
    %vm1584 = vcmask 1047556
    %v1585 = vsel %vm1584, %v1583, %v1581
    %1586 = vrot.lane.b32.xlu0 %v1585, 114
    %v1587 = vpop.permute.xlu0 %1586
    %vm1588 = vcmask 15360
    %s1589 = scalar_lea.vmem [#allocation2], 647
    %1590 = vst.msk [vmem:[%s1589] ss:$16 sm:$0x3] %vm1588, %v1587
    %s1591 = scalar_lea.vmem [#allocation2], 647
    %1592 = vst.msk [vmem:[%s1591] ss:$16 sm:$0xc] %vm1588, %v1587
    %s1593 = scalar_lea.vmem [#allocation2], 647
    %1594 = vst.msk [vmem:[%s1593] ss:$16 sm:$0x30] %vm1588, %v1587
    %s1595 = scalar_lea.vmem [#allocation2], 647
    %1596 = vst.msk [vmem:[%s1595] ss:$16 sm:$0xc0] %vm1588, %v1587
    %s1597 = scalar_lea.vmem [#allocation3], 192
    %v1598 = vld.sshfl [vmem:[%s1597] sm:$0xff pattern:$0x99999810]
    %s1599 = scalar_lea.vmem [#allocation3], 208
    %v1600 = vld.sshfl [vmem:[%s1599] sm:$0xff pattern:$0x98100000]
    %vm1601 = vcmask 1047556
    %v1602 = vsel %vm1601, %v1600, %v1598
    %1603 = vrot.lane.b32.xlu0 %v1602, 114
    %v1604 = vpop.permute.xlu0 %1603
    %vm1605 = vcmask 15360
    %s1606 = scalar_lea.vmem [#allocation2], 775
    %1607 = vst.msk [vmem:[%s1606] ss:$16 sm:$0x3] %vm1605, %v1604
    %s1608 = scalar_lea.vmem [#allocation2], 775
    %1609 = vst.msk [vmem:[%s1608] ss:$16 sm:$0xc] %vm1605, %v1604
    %s1610 = scalar_lea.vmem [#allocation2], 775
    %1611 = vst.msk [vmem:[%s1610] ss:$16 sm:$0x30] %vm1605, %v1604
    %s1612 = scalar_lea.vmem [#allocation2], 775
    %1613 = vst.msk [vmem:[%s1612] ss:$16 sm:$0xc0] %vm1605, %v1604
    %s1614 = scalar_lea.vmem [#allocation3], 224
    %v1615 = vld.sshfl [vmem:[%s1614] sm:$0xff pattern:$0x99999810]
    %s1616 = scalar_lea.vmem [#allocation3], 240
    %v1617 = vld.sshfl [vmem:[%s1616] sm:$0xff pattern:$0x98100000]
    %vm1618 = vcmask 1047556
    %v1619 = vsel %vm1618, %v1617, %v1615
    %1620 = vrot.lane.b32.xlu0 %v1619, 114
    %v1621 = vpop.permute.xlu0 %1620
    %vm1622 = vcmask 15360
    %s1623 = scalar_lea.vmem [#allocation2], 903
    %1624 = vst.msk [vmem:[%s1623] ss:$16 sm:$0x3] %vm1622, %v1621
    %s1625 = scalar_lea.vmem [#allocation2], 903
    %1626 = vst.msk [vmem:[%s1625] ss:$16 sm:$0xc] %vm1622, %v1621
    %s1627 = scalar_lea.vmem [#allocation2], 903
    %1628 = vst.msk [vmem:[%s1627] ss:$16 sm:$0x30] %vm1622, %v1621
    %s1629 = scalar_lea.vmem [#allocation2], 903
    %1630 = vst.msk [vmem:[%s1629] ss:$16 sm:$0xc0] %vm1622, %v1621
    %s1631 = scalar_lea.vmem [#allocation3], 256
    %v1632 = vld.sshfl [vmem:[%s1631] sm:$0xff pattern:$0x99999810]
    %s1633 = scalar_lea.vmem [#allocation3], 272
    %v1634 = vld.sshfl [vmem:[%s1633] sm:$0xff pattern:$0x98100000]
    %vm1635 = vcmask 1047556
    %v1636 = vsel %vm1635, %v1634, %v1632
    %1637 = vrot.lane.b32.xlu0 %v1636, 114
    %v1638 = vpop.permute.xlu0 %1637
    %vm1639 = vcmask 15360
    %s1640 = scalar_lea.vmem [#allocation2], 1031
    %1641 = vst.msk [vmem:[%s1640] ss:$16 sm:$0x3] %vm1639, %v1638
    %s1642 = scalar_lea.vmem [#allocation2], 1031
    %1643 = vst.msk [vmem:[%s1642] ss:$16 sm:$0xc] %vm1639, %v1638
    %s1644 = scalar_lea.vmem [#allocation2], 1031
    %1645 = vst.msk [vmem:[%s1644] ss:$16 sm:$0x30] %vm1639, %v1638
    %s1646 = scalar_lea.vmem [#allocation2], 1031
    %1647 = vst.msk [vmem:[%s1646] ss:$16 sm:$0xc0] %vm1639, %v1638
    %s1648 = scalar_lea.vmem [#allocation3], 288
    %v1649 = vld.sshfl [vmem:[%s1648] sm:$0xff pattern:$0x99999810]
    %s1650 = scalar_lea.vmem [#allocation3], 304
    %v1651 = vld.sshfl [vmem:[%s1650] sm:$0xff pattern:$0x98100000]
    %vm1652 = vcmask 1047556
    %v1653 = vsel %vm1652, %v1651, %v1649
    %1654 = vrot.lane.b32.xlu0 %v1653, 114
    %v1655 = vpop.permute.xlu0 %1654
    %vm1656 = vcmask 15360
    %s1657 = scalar_lea.vmem [#allocation2], 1159
    %1658 = vst.msk [vmem:[%s1657] ss:$16 sm:$0x3] %vm1656, %v1655
    %s1659 = scalar_lea.vmem [#allocation2], 1159
    %1660 = vst.msk [vmem:[%s1659] ss:$16 sm:$0xc] %vm1656, %v1655
    %s1661 = scalar_lea.vmem [#allocation2], 1159
    %1662 = vst.msk [vmem:[%s1661] ss:$16 sm:$0x30] %vm1656, %v1655
    %s1663 = scalar_lea.vmem [#allocation2], 1159
    %1664 = vst.msk [vmem:[%s1663] ss:$16 sm:$0xc0] %vm1656, %v1655
    %s1665 = scalar_lea.vmem [#allocation3], 320
    %v1666 = vld.sshfl [vmem:[%s1665] sm:$0xff pattern:$0x99999810]
    %1667 = vrot.lane.b32.xlu0 %v1666, 114
    %v1668 = vpop.permute.xlu0 %1667
    %vm1669 = vcmask 15360
    %s1670 = scalar_lea.vmem [#allocation2], 1287
    %1671 = vst.msk [vmem:[%s1670] ss:$16 sm:$0x3] %vm1669, %v1668
    %s1672 = scalar_lea.vmem [#allocation2], 1287
    %1673 = vst.msk [vmem:[%s1672] ss:$16 sm:$0xc] %vm1669, %v1668
    %v1674 = vld.sshfl [vmem:[#allocation3] sm:$0xff pattern:$0x99999810]
    %s1675 = scalar_lea.vmem [#allocation3], 16
    %v1676 = vld.sshfl [vmem:[%s1675] sm:$0xff pattern:$0x98100000]
    %vm1677 = vcmask 1047556
    %v1678 = vsel %vm1677, %v1676, %v1674
    %1679 = vrot.lane.b32.xlu0 %v1678, 112
    %v1680 = vpop.permute.xlu0 %1679
    %vm1681 = vcmask 15360
    %s1682 = scalar_lea.vmem [#allocation2], 8
    %1683 = vst.msk [vmem:[%s1682] ss:$16 sm:$0x3] %vm1681, %v1680
    %s1684 = scalar_lea.vmem [#allocation2], 8
    %1685 = vst.msk [vmem:[%s1684] ss:$16 sm:$0xc] %vm1681, %v1680
    %s1686 = scalar_lea.vmem [#allocation2], 8
    %1687 = vst.msk [vmem:[%s1686] ss:$16 sm:$0x30] %vm1681, %v1680
    %s1688 = scalar_lea.vmem [#allocation2], 8
    %1689 = vst.msk [vmem:[%s1688] ss:$16 sm:$0xc0] %vm1681, %v1680
    %s1690 = scalar_lea.vmem [#allocation3], 32
    %v1691 = vld.sshfl [vmem:[%s1690] sm:$0xff pattern:$0x99999810]
    %s1692 = scalar_lea.vmem [#allocation3], 48
    %v1693 = vld.sshfl [vmem:[%s1692] sm:$0xff pattern:$0x98100000]
    %vm1694 = vcmask 1047556
    %v1695 = vsel %vm1694, %v1693, %v1691
    %1696 = vrot.lane.b32.xlu0 %v1695, 112
    %v1697 = vpop.permute.xlu0 %1696
    %vm1698 = vcmask 15360
    %s1699 = scalar_lea.vmem [#allocation2], 136
    %1700 = vst.msk [vmem:[%s1699] ss:$16 sm:$0x3] %vm1698, %v1697
    %s1701 = scalar_lea.vmem [#allocation2], 136
    %1702 = vst.msk [vmem:[%s1701] ss:$16 sm:$0xc] %vm1698, %v1697
    %s1703 = scalar_lea.vmem [#allocation2], 136
    %1704 = vst.msk [vmem:[%s1703] ss:$16 sm:$0x30] %vm1698, %v1697
    %s1705 = scalar_lea.vmem [#allocation2], 136
    %1706 = vst.msk [vmem:[%s1705] ss:$16 sm:$0xc0] %vm1698, %v1697
    %s1707 = scalar_lea.vmem [#allocation3], 64
    %v1708 = vld.sshfl [vmem:[%s1707] sm:$0xff pattern:$0x99999810]
    %s1709 = scalar_lea.vmem [#allocation3], 80
    %v1710 = vld.sshfl [vmem:[%s1709] sm:$0xff pattern:$0x98100000]
    %vm1711 = vcmask 1047556
    %v1712 = vsel %vm1711, %v1710, %v1708
    %1713 = vrot.lane.b32.xlu0 %v1712, 112
    %v1714 = vpop.permute.xlu0 %1713
    %vm1715 = vcmask 15360
    %s1716 = scalar_lea.vmem [#allocation2], 264
    %1717 = vst.msk [vmem:[%s1716] ss:$16 sm:$0x3] %vm1715, %v1714
    %s1718 = scalar_lea.vmem [#allocation2], 264
    %1719 = vst.msk [vmem:[%s1718] ss:$16 sm:$0xc] %vm1715, %v1714
    %s1720 = scalar_lea.vmem [#allocation2], 264
    %1721 = vst.msk [vmem:[%s1720] ss:$16 sm:$0x30] %vm1715, %v1714
    %s1722 = scalar_lea.vmem [#allocation2], 264
    %1723 = vst.msk [vmem:[%s1722] ss:$16 sm:$0xc0] %vm1715, %v1714
    %s1724 = scalar_lea.vmem [#allocation3], 96
    %v1725 = vld.sshfl [vmem:[%s1724] sm:$0xff pattern:$0x99999810]
    %s1726 = scalar_lea.vmem [#allocation3], 112
    %v1727 = vld.sshfl [vmem:[%s1726] sm:$0xff pattern:$0x98100000]
    %vm1728 = vcmask 1047556
    %v1729 = vsel %vm1728, %v1727, %v1725
    %1730 = vrot.lane.b32.xlu0 %v1729, 112
    %v1731 = vpop.permute.xlu0 %1730
    %vm1732 = vcmask 15360
    %s1733 = scalar_lea.vmem [#allocation2], 392
    %1734 = vst.msk [vmem:[%s1733] ss:$16 sm:$0x3] %vm1732, %v1731
    %s1735 = scalar_lea.vmem [#allocation2], 392
    %1736 = vst.msk [vmem:[%s1735] ss:$16 sm:$0xc] %vm1732, %v1731
    %s1737 = scalar_lea.vmem [#allocation2], 392
    %1738 = vst.msk [vmem:[%s1737] ss:$16 sm:$0x30] %vm1732, %v1731
    %s1739 = scalar_lea.vmem [#allocation2], 392
    %1740 = vst.msk [vmem:[%s1739] ss:$16 sm:$0xc0] %vm1732, %v1731
    %s1741 = scalar_lea.vmem [#allocation3], 128
    %v1742 = vld.sshfl [vmem:[%s1741] sm:$0xff pattern:$0x99999810]
    %s1743 = scalar_lea.vmem [#allocation3], 144
    %v1744 = vld.sshfl [vmem:[%s1743] sm:$0xff pattern:$0x98100000]
    %vm1745 = vcmask 1047556
    %v1746 = vsel %vm1745, %v1744, %v1742
    %1747 = vrot.lane.b32.xlu0 %v1746, 112
    %v1748 = vpop.permute.xlu0 %1747
    %vm1749 = vcmask 15360
    %s1750 = scalar_lea.vmem [#allocation2], 520
    %1751 = vst.msk [vmem:[%s1750] ss:$16 sm:$0x3] %vm1749, %v1748
    %s1752 = scalar_lea.vmem [#allocation2], 520
    %1753 = vst.msk [vmem:[%s1752] ss:$16 sm:$0xc] %vm1749, %v1748
    %s1754 = scalar_lea.vmem [#allocation2], 520
    %1755 = vst.msk [vmem:[%s1754] ss:$16 sm:$0x30] %vm1749, %v1748
    %s1756 = scalar_lea.vmem [#allocation2], 520
    %1757 = vst.msk [vmem:[%s1756] ss:$16 sm:$0xc0] %vm1749, %v1748
    %s1758 = scalar_lea.vmem [#allocation3], 160
    %v1759 = vld.sshfl [vmem:[%s1758] sm:$0xff pattern:$0x99999810]
    %s1760 = scalar_lea.vmem [#allocation3], 176
    %v1761 = vld.sshfl [vmem:[%s1760] sm:$0xff pattern:$0x98100000]
    %vm1762 = vcmask 1047556
    %v1763 = vsel %vm1762, %v1761, %v1759
    %1764 = vrot.lane.b32.xlu0 %v1763, 112
    %v1765 = vpop.permute.xlu0 %1764
    %vm1766 = vcmask 15360
    %s1767 = scalar_lea.vmem [#allocation2], 648
    %1768 = vst.msk [vmem:[%s1767] ss:$16 sm:$0x3] %vm1766, %v1765
    %s1769 = scalar_lea.vmem [#allocation2], 648
    %1770 = vst.msk [vmem:[%s1769] ss:$16 sm:$0xc] %vm1766, %v1765
    %s1771 = scalar_lea.vmem [#allocation2], 648
    %1772 = vst.msk [vmem:[%s1771] ss:$16 sm:$0x30] %vm1766, %v1765
    %s1773 = scalar_lea.vmem [#allocation2], 648
    %1774 = vst.msk [vmem:[%s1773] ss:$16 sm:$0xc0] %vm1766, %v1765
    %s1775 = scalar_lea.vmem [#allocation3], 192
    %v1776 = vld.sshfl [vmem:[%s1775] sm:$0xff pattern:$0x99999810]
    %s1777 = scalar_lea.vmem [#allocation3], 208
    %v1778 = vld.sshfl [vmem:[%s1777] sm:$0xff pattern:$0x98100000]
    %vm1779 = vcmask 1047556
    %v1780 = vsel %vm1779, %v1778, %v1776
    %1781 = vrot.lane.b32.xlu0 %v1780, 112
    %v1782 = vpop.permute.xlu0 %1781
    %vm1783 = vcmask 15360
    %s1784 = scalar_lea.vmem [#allocation2], 776
    %1785 = vst.msk [vmem:[%s1784] ss:$16 sm:$0x3] %vm1783, %v1782
    %s1786 = scalar_lea.vmem [#allocation2], 776
    %1787 = vst.msk [vmem:[%s1786] ss:$16 sm:$0xc] %vm1783, %v1782
    %s1788 = scalar_lea.vmem [#allocation2], 776
    %1789 = vst.msk [vmem:[%s1788] ss:$16 sm:$0x30] %vm1783, %v1782
    %s1790 = scalar_lea.vmem [#allocation2], 776
    %1791 = vst.msk [vmem:[%s1790] ss:$16 sm:$0xc0] %vm1783, %v1782
    %s1792 = scalar_lea.vmem [#allocation3], 224
    %v1793 = vld.sshfl [vmem:[%s1792] sm:$0xff pattern:$0x99999810]
    %s1794 = scalar_lea.vmem [#allocation3], 240
    %v1795 = vld.sshfl [vmem:[%s1794] sm:$0xff pattern:$0x98100000]
    %vm1796 = vcmask 1047556
    %v1797 = vsel %vm1796, %v1795, %v1793
    %1798 = vrot.lane.b32.xlu0 %v1797, 112
    %v1799 = vpop.permute.xlu0 %1798
    %vm1800 = vcmask 15360
    %s1801 = scalar_lea.vmem [#allocation2], 904
    %1802 = vst.msk [vmem:[%s1801] ss:$16 sm:$0x3] %vm1800, %v1799
    %s1803 = scalar_lea.vmem [#allocation2], 904
    %1804 = vst.msk [vmem:[%s1803] ss:$16 sm:$0xc] %vm1800, %v1799
    %s1805 = scalar_lea.vmem [#allocation2], 904
    %1806 = vst.msk [vmem:[%s1805] ss:$16 sm:$0x30] %vm1800, %v1799
    %s1807 = scalar_lea.vmem [#allocation2], 904
    %1808 = vst.msk [vmem:[%s1807] ss:$16 sm:$0xc0] %vm1800, %v1799
    %s1809 = scalar_lea.vmem [#allocation3], 256
    %v1810 = vld.sshfl [vmem:[%s1809] sm:$0xff pattern:$0x99999810]
    %s1811 = scalar_lea.vmem [#allocation3], 272
    %v1812 = vld.sshfl [vmem:[%s1811] sm:$0xff pattern:$0x98100000]
    %vm1813 = vcmask 1047556
    %v1814 = vsel %vm1813, %v1812, %v1810
    %1815 = vrot.lane.b32.xlu0 %v1814, 112
    %v1816 = vpop.permute.xlu0 %1815
    %vm1817 = vcmask 15360
    %s1818 = scalar_lea.vmem [#allocation2], 1032
    %1819 = vst.msk [vmem:[%s1818] ss:$16 sm:$0x3] %vm1817, %v1816
    %s1820 = scalar_lea.vmem [#allocation2], 1032
    %1821 = vst.msk [vmem:[%s1820] ss:$16 sm:$0xc] %vm1817, %v1816
    %s1822 = scalar_lea.vmem [#allocation2], 1032
    %1823 = vst.msk [vmem:[%s1822] ss:$16 sm:$0x30] %vm1817, %v1816
    %s1824 = scalar_lea.vmem [#allocation2], 1032
    %1825 = vst.msk [vmem:[%s1824] ss:$16 sm:$0xc0] %vm1817, %v1816
    %s1826 = scalar_lea.vmem [#allocation3], 288
    %v1827 = vld.sshfl [vmem:[%s1826] sm:$0xff pattern:$0x99999810]
    %s1828 = scalar_lea.vmem [#allocation3], 304
    %v1829 = vld.sshfl [vmem:[%s1828] sm:$0xff pattern:$0x98100000]
    %vm1830 = vcmask 1047556
    %v1831 = vsel %vm1830, %v1829, %v1827
    %1832 = vrot.lane.b32.xlu0 %v1831, 112
    %v1833 = vpop.permute.xlu0 %1832
    %vm1834 = vcmask 15360
    %s1835 = scalar_lea.vmem [#allocation2], 1160
    %1836 = vst.msk [vmem:[%s1835] ss:$16 sm:$0x3] %vm1834, %v1833
    %s1837 = scalar_lea.vmem [#allocation2], 1160
    %1838 = vst.msk [vmem:[%s1837] ss:$16 sm:$0xc] %vm1834, %v1833
    %s1839 = scalar_lea.vmem [#allocation2], 1160
    %1840 = vst.msk [vmem:[%s1839] ss:$16 sm:$0x30] %vm1834, %v1833
    %s1841 = scalar_lea.vmem [#allocation2], 1160
    %1842 = vst.msk [vmem:[%s1841] ss:$16 sm:$0xc0] %vm1834, %v1833
    %s1843 = scalar_lea.vmem [#allocation3], 320
    %v1844 = vld.sshfl [vmem:[%s1843] sm:$0xff pattern:$0x99999810]
    %1845 = vrot.lane.b32.xlu0 %v1844, 112
    %v1846 = vpop.permute.xlu0 %1845
    %vm1847 = vcmask 15360
    %s1848 = scalar_lea.vmem [#allocation2], 1288
    %1849 = vst.msk [vmem:[%s1848] ss:$16 sm:$0x3] %vm1847, %v1846
    %s1850 = scalar_lea.vmem [#allocation2], 1288
    %1851 = vst.msk [vmem:[%s1850] ss:$16 sm:$0xc] %vm1847, %v1846
    %v1852 = vld.sshfl [vmem:[#allocation3] sm:$0xff pattern:$0x99999810]
    %s1853 = scalar_lea.vmem [#allocation3], 16
    %v1854 = vld.sshfl [vmem:[%s1853] sm:$0xff pattern:$0x98100000]
    %vm1855 = vcmask 1047556
    %v1856 = vsel %vm1855, %v1854, %v1852
    %1857 = vrot.lane.b32.xlu0 %v1856, 110
    %v1858 = vpop.permute.xlu0 %1857
    %vm1859 = vcmask 15360
    %s1860 = scalar_lea.vmem [#allocation2], 9
    %1861 = vst.msk [vmem:[%s1860] ss:$16 sm:$0x3] %vm1859, %v1858
    %s1862 = scalar_lea.vmem [#allocation2], 9
    %1863 = vst.msk [vmem:[%s1862] ss:$16 sm:$0xc] %vm1859, %v1858
    %s1864 = scalar_lea.vmem [#allocation2], 9
    %1865 = vst.msk [vmem:[%s1864] ss:$16 sm:$0x30] %vm1859, %v1858
    %s1866 = scalar_lea.vmem [#allocation2], 9
    %1867 = vst.msk [vmem:[%s1866] ss:$16 sm:$0xc0] %vm1859, %v1858
    %s1868 = scalar_lea.vmem [#allocation3], 32
    %v1869 = vld.sshfl [vmem:[%s1868] sm:$0xff pattern:$0x99999810]
    %s1870 = scalar_lea.vmem [#allocation3], 48
    %v1871 = vld.sshfl [vmem:[%s1870] sm:$0xff pattern:$0x98100000]
    %vm1872 = vcmask 1047556
    %v1873 = vsel %vm1872, %v1871, %v1869
    %1874 = vrot.lane.b32.xlu0 %v1873, 110
    %v1875 = vpop.permute.xlu0 %1874
    %vm1876 = vcmask 15360
    %s1877 = scalar_lea.vmem [#allocation2], 137
    %1878 = vst.msk [vmem:[%s1877] ss:$16 sm:$0x3] %vm1876, %v1875
    %s1879 = scalar_lea.vmem [#allocation2], 137
    %1880 = vst.msk [vmem:[%s1879] ss:$16 sm:$0xc] %vm1876, %v1875
    %s1881 = scalar_lea.vmem [#allocation2], 137
    %1882 = vst.msk [vmem:[%s1881] ss:$16 sm:$0x30] %vm1876, %v1875
    %s1883 = scalar_lea.vmem [#allocation2], 137
    %1884 = vst.msk [vmem:[%s1883] ss:$16 sm:$0xc0] %vm1876, %v1875
    %s1885 = scalar_lea.vmem [#allocation3], 64
    %v1886 = vld.sshfl [vmem:[%s1885] sm:$0xff pattern:$0x99999810]
    %s1887 = scalar_lea.vmem [#allocation3], 80
    %v1888 = vld.sshfl [vmem:[%s1887] sm:$0xff pattern:$0x98100000]
    %vm1889 = vcmask 1047556
    %v1890 = vsel %vm1889, %v1888, %v1886
    %1891 = vrot.lane.b32.xlu0 %v1890, 110
    %v1892 = vpop.permute.xlu0 %1891
    %vm1893 = vcmask 15360
    %s1894 = scalar_lea.vmem [#allocation2], 265
    %1895 = vst.msk [vmem:[%s1894] ss:$16 sm:$0x3] %vm1893, %v1892
    %s1896 = scalar_lea.vmem [#allocation2], 265
    %1897 = vst.msk [vmem:[%s1896] ss:$16 sm:$0xc] %vm1893, %v1892
    %s1898 = scalar_lea.vmem [#allocation2], 265
    %1899 = vst.msk [vmem:[%s1898] ss:$16 sm:$0x30] %vm1893, %v1892
    %s1900 = scalar_lea.vmem [#allocation2], 265
    %1901 = vst.msk [vmem:[%s1900] ss:$16 sm:$0xc0] %vm1893, %v1892
    %s1902 = scalar_lea.vmem [#allocation3], 96
    %v1903 = vld.sshfl [vmem:[%s1902] sm:$0xff pattern:$0x99999810]
    %s1904 = scalar_lea.vmem [#allocation3], 112
    %v1905 = vld.sshfl [vmem:[%s1904] sm:$0xff pattern:$0x98100000]
    %vm1906 = vcmask 1047556
    %v1907 = vsel %vm1906, %v1905, %v1903
    %1908 = vrot.lane.b32.xlu0 %v1907, 110
    %v1909 = vpop.permute.xlu0 %1908
    %vm1910 = vcmask 15360
    %s1911 = scalar_lea.vmem [#allocation2], 393
    %1912 = vst.msk [vmem:[%s1911] ss:$16 sm:$0x3] %vm1910, %v1909
    %s1913 = scalar_lea.vmem [#allocation2], 393
    %1914 = vst.msk [vmem:[%s1913] ss:$16 sm:$0xc] %vm1910, %v1909
    %s1915 = scalar_lea.vmem [#allocation2], 393
    %1916 = vst.msk [vmem:[%s1915] ss:$16 sm:$0x30] %vm1910, %v1909
    %s1917 = scalar_lea.vmem [#allocation2], 393
    %1918 = vst.msk [vmem:[%s1917] ss:$16 sm:$0xc0] %vm1910, %v1909
    %s1919 = scalar_lea.vmem [#allocation3], 128
    %v1920 = vld.sshfl [vmem:[%s1919] sm:$0xff pattern:$0x99999810]
    %s1921 = scalar_lea.vmem [#allocation3], 144
    %v1922 = vld.sshfl [vmem:[%s1921] sm:$0xff pattern:$0x98100000]
    %vm1923 = vcmask 1047556
    %v1924 = vsel %vm1923, %v1922, %v1920
    %1925 = vrot.lane.b32.xlu0 %v1924, 110
    %v1926 = vpop.permute.xlu0 %1925
    %vm1927 = vcmask 15360
    %s1928 = scalar_lea.vmem [#allocation2], 521
    %1929 = vst.msk [vmem:[%s1928] ss:$16 sm:$0x3] %vm1927, %v1926
    %s1930 = scalar_lea.vmem [#allocation2], 521
    %1931 = vst.msk [vmem:[%s1930] ss:$16 sm:$0xc] %vm1927, %v1926
    %s1932 = scalar_lea.vmem [#allocation2], 521
    %1933 = vst.msk [vmem:[%s1932] ss:$16 sm:$0x30] %vm1927, %v1926
    %s1934 = scalar_lea.vmem [#allocation2], 521
    %1935 = vst.msk [vmem:[%s1934] ss:$16 sm:$0xc0] %vm1927, %v1926
    %s1936 = scalar_lea.vmem [#allocation3], 160
    %v1937 = vld.sshfl [vmem:[%s1936] sm:$0xff pattern:$0x99999810]
    %s1938 = scalar_lea.vmem [#allocation3], 176
    %v1939 = vld.sshfl [vmem:[%s1938] sm:$0xff pattern:$0x98100000]
    %vm1940 = vcmask 1047556
    %v1941 = vsel %vm1940, %v1939, %v1937
    %1942 = vrot.lane.b32.xlu0 %v1941, 110
    %v1943 = vpop.permute.xlu0 %1942
    %vm1944 = vcmask 15360
    %s1945 = scalar_lea.vmem [#allocation2], 649
    %1946 = vst.msk [vmem:[%s1945] ss:$16 sm:$0x3] %vm1944, %v1943
    %s1947 = scalar_lea.vmem [#allocation2], 649
    %1948 = vst.msk [vmem:[%s1947] ss:$16 sm:$0xc] %vm1944, %v1943
    %s1949 = scalar_lea.vmem [#allocation2], 649
    %1950 = vst.msk [vmem:[%s1949] ss:$16 sm:$0x30] %vm1944, %v1943
    %s1951 = scalar_lea.vmem [#allocation2], 649
    %1952 = vst.msk [vmem:[%s1951] ss:$16 sm:$0xc0] %vm1944, %v1943
    %s1953 = scalar_lea.vmem [#allocation3], 192
    %v1954 = vld.sshfl [vmem:[%s1953] sm:$0xff pattern:$0x99999810]
    %s1955 = scalar_lea.vmem [#allocation3], 208
    %v1956 = vld.sshfl [vmem:[%s1955] sm:$0xff pattern:$0x98100000]
    %vm1957 = vcmask 1047556
    %v1958 = vsel %vm1957, %v1956, %v1954
    %1959 = vrot.lane.b32.xlu0 %v1958, 110
    %v1960 = vpop.permute.xlu0 %1959
    %vm1961 = vcmask 15360
    %s1962 = scalar_lea.vmem [#allocation2], 777
    %1963 = vst.msk [vmem:[%s1962] ss:$16 sm:$0x3] %vm1961, %v1960
    %s1964 = scalar_lea.vmem [#allocation2], 777
    %1965 = vst.msk [vmem:[%s1964] ss:$16 sm:$0xc] %vm1961, %v1960
    %s1966 = scalar_lea.vmem [#allocation2], 777
    %1967 = vst.msk [vmem:[%s1966] ss:$16 sm:$0x30] %vm1961, %v1960
    %s1968 = scalar_lea.vmem [#allocation2], 777
    %1969 = vst.msk [vmem:[%s1968] ss:$16 sm:$0xc0] %vm1961, %v1960
    %s1970 = scalar_lea.vmem [#allocation3], 224
    %v1971 = vld.sshfl [vmem:[%s1970] sm:$0xff pattern:$0x99999810]
    %s1972 = scalar_lea.vmem [#allocation3], 240
    %v1973 = vld.sshfl [vmem:[%s1972] sm:$0xff pattern:$0x98100000]
    %vm1974 = vcmask 1047556
    %v1975 = vsel %vm1974, %v1973, %v1971
    %1976 = vrot.lane.b32.xlu0 %v1975, 110
    %v1977 = vpop.permute.xlu0 %1976
    %vm1978 = vcmask 15360
    %s1979 = scalar_lea.vmem [#allocation2], 905
    %1980 = vst.msk [vmem:[%s1979] ss:$16 sm:$0x3] %vm1978, %v1977
    %s1981 = scalar_lea.vmem [#allocation2], 905
    %1982 = vst.msk [vmem:[%s1981] ss:$16 sm:$0xc] %vm1978, %v1977
    %s1983 = scalar_lea.vmem [#allocation2], 905
    %1984 = vst.msk [vmem:[%s1983] ss:$16 sm:$0x30] %vm1978, %v1977
    %s1985 = scalar_lea.vmem [#allocation2], 905
    %1986 = vst.msk [vmem:[%s1985] ss:$16 sm:$0xc0] %vm1978, %v1977
    %s1987 = scalar_lea.vmem [#allocation3], 256
    %v1988 = vld.sshfl [vmem:[%s1987] sm:$0xff pattern:$0x99999810]
    %s1989 = scalar_lea.vmem [#allocation3], 272
    %v1990 = vld.sshfl [vmem:[%s1989] sm:$0xff pattern:$0x98100000]
    %vm1991 = vcmask 1047556
    %v1992 = vsel %vm1991, %v1990, %v1988
    %1993 = vrot.lane.b32.xlu0 %v1992, 110
    %v1994 = vpop.permute.xlu0 %1993
    %vm1995 = vcmask 15360
    %s1996 = scalar_lea.vmem [#allocation2], 1033
    %1997 = vst.msk [vmem:[%s1996] ss:$16 sm:$0x3] %vm1995, %v1994
    %s1998 = scalar_lea.vmem [#allocation2], 1033
    %1999 = vst.msk [vmem:[%s1998] ss:$16 sm:$0xc] %vm1995, %v1994
    %s2000 = scalar_lea.vmem [#allocation2], 1033
    %2001 = vst.msk [vmem:[%s2000] ss:$16 sm:$0x30] %vm1995, %v1994
    %s2002 = scalar_lea.vmem [#allocation2], 1033
    %2003 = vst.msk [vmem:[%s2002] ss:$16 sm:$0xc0] %vm1995, %v1994
    %s2004 = scalar_lea.vmem [#allocation3], 288
    %v2005 = vld.sshfl [vmem:[%s2004] sm:$0xff pattern:$0x99999810]
    %s2006 = scalar_lea.vmem [#allocation3], 304
    %v2007 = vld.sshfl [vmem:[%s2006] sm:$0xff pattern:$0x98100000]
    %vm2008 = vcmask 1047556
    %v2009 = vsel %vm2008, %v2007, %v2005
    %2010 = vrot.lane.b32.xlu0 %v2009, 110
    %v2011 = vpop.permute.xlu0 %2010
    %vm2012 = vcmask 15360
    %s2013 = scalar_lea.vmem [#allocation2], 1161
    %2014 = vst.msk [vmem:[%s2013] ss:$16 sm:$0x3] %vm2012, %v2011
    %s2015 = scalar_lea.vmem [#allocation2], 1161
    %2016 = vst.msk [vmem:[%s2015] ss:$16 sm:$0xc] %vm2012, %v2011
    %s2017 = scalar_lea.vmem [#allocation2], 1161
    %2018 = vst.msk [vmem:[%s2017] ss:$16 sm:$0x30] %vm2012, %v2011
    %s2019 = scalar_lea.vmem [#allocation2], 1161
    %2020 = vst.msk [vmem:[%s2019] ss:$16 sm:$0xc0] %vm2012, %v2011
    %s2021 = scalar_lea.vmem [#allocation3], 320
    %v2022 = vld.sshfl [vmem:[%s2021] sm:$0xff pattern:$0x99999810]
    %2023 = vrot.lane.b32.xlu0 %v2022, 110
    %v2024 = vpop.permute.xlu0 %2023
    %vm2025 = vcmask 15360
    %s2026 = scalar_lea.vmem [#allocation2], 1289
    %2027 = vst.msk [vmem:[%s2026] ss:$16 sm:$0x3] %vm2025, %v2024
    %s2028 = scalar_lea.vmem [#allocation2], 1289
    %2029 = vst.msk [vmem:[%s2028] ss:$16 sm:$0xc] %vm2025, %v2024
    %v2030 = vld.sshfl [vmem:[#allocation3] sm:$0xff pattern:$0x99999810]
    %s2031 = scalar_lea.vmem [#allocation3], 16
    %v2032 = vld.sshfl [vmem:[%s2031] sm:$0xff pattern:$0x98100000]
    %vm2033 = vcmask 1047556
    %v2034 = vsel %vm2033, %v2032, %v2030
    %2035 = vrot.lane.b32.xlu0 %v2034, 108
    %v2036 = vpop.permute.xlu0 %2035
    %vm2037 = vcmask 15360
    %s2038 = scalar_lea.vmem [#allocation2], 10
    %2039 = vst.msk [vmem:[%s2038] ss:$16 sm:$0x3] %vm2037, %v2036
    %s2040 = scalar_lea.vmem [#allocation2], 10
    %2041 = vst.msk [vmem:[%s2040] ss:$16 sm:$0xc] %vm2037, %v2036
    %s2042 = scalar_lea.vmem [#allocation2], 10
    %2043 = vst.msk [vmem:[%s2042] ss:$16 sm:$0x30] %vm2037, %v2036
    %s2044 = scalar_lea.vmem [#allocation2], 10
    %2045 = vst.msk [vmem:[%s2044] ss:$16 sm:$0xc0] %vm2037, %v2036
    %s2046 = scalar_lea.vmem [#allocation3], 32
    %v2047 = vld.sshfl [vmem:[%s2046] sm:$0xff pattern:$0x99999810]
    %s2048 = scalar_lea.vmem [#allocation3], 48
    %v2049 = vld.sshfl [vmem:[%s2048] sm:$0xff pattern:$0x98100000]
    %vm2050 = vcmask 1047556
    %v2051 = vsel %vm2050, %v2049, %v2047
    %2052 = vrot.lane.b32.xlu0 %v2051, 108
    %v2053 = vpop.permute.xlu0 %2052
    %vm2054 = vcmask 15360
    %s2055 = scalar_lea.vmem [#allocation2], 138
    %2056 = vst.msk [vmem:[%s2055] ss:$16 sm:$0x3] %vm2054, %v2053
    %s2057 = scalar_lea.vmem [#allocation2], 138
    %2058 = vst.msk [vmem:[%s2057] ss:$16 sm:$0xc] %vm2054, %v2053
    %s2059 = scalar_lea.vmem [#allocation2], 138
    %2060 = vst.msk [vmem:[%s2059] ss:$16 sm:$0x30] %vm2054, %v2053
    %s2061 = scalar_lea.vmem [#allocation2], 138
    %2062 = vst.msk [vmem:[%s2061] ss:$16 sm:$0xc0] %vm2054, %v2053
    %s2063 = scalar_lea.vmem [#allocation3], 64
    %v2064 = vld.sshfl [vmem:[%s2063] sm:$0xff pattern:$0x99999810]
    %s2065 = scalar_lea.vmem [#allocation3], 80
    %v2066 = vld.sshfl [vmem:[%s2065] sm:$0xff pattern:$0x98100000]
    %vm2067 = vcmask 1047556
    %v2068 = vsel %vm2067, %v2066, %v2064
    %2069 = vrot.lane.b32.xlu0 %v2068, 108
    %v2070 = vpop.permute.xlu0 %2069
    %vm2071 = vcmask 15360
    %s2072 = scalar_lea.vmem [#allocation2], 266
    %2073 = vst.msk [vmem:[%s2072] ss:$16 sm:$0x3] %vm2071, %v2070
    %s2074 = scalar_lea.vmem [#allocation2], 266
    %2075 = vst.msk [vmem:[%s2074] ss:$16 sm:$0xc] %vm2071, %v2070
    %s2076 = scalar_lea.vmem [#allocation2], 266
    %2077 = vst.msk [vmem:[%s2076] ss:$16 sm:$0x30] %vm2071, %v2070
    %s2078 = scalar_lea.vmem [#allocation2], 266
    %2079 = vst.msk [vmem:[%s2078] ss:$16 sm:$0xc0] %vm2071, %v2070
    %s2080 = scalar_lea.vmem [#allocation3], 96
    %v2081 = vld.sshfl [vmem:[%s2080] sm:$0xff pattern:$0x99999810]
    %s2082 = scalar_lea.vmem [#allocation3], 112
    %v2083 = vld.sshfl [vmem:[%s2082] sm:$0xff pattern:$0x98100000]
    %vm2084 = vcmask 1047556
    %v2085 = vsel %vm2084, %v2083, %v2081
    %2086 = vrot.lane.b32.xlu0 %v2085, 108
    %v2087 = vpop.permute.xlu0 %2086
    %vm2088 = vcmask 15360
    %s2089 = scalar_lea.vmem [#allocation2], 394
    %2090 = vst.msk [vmem:[%s2089] ss:$16 sm:$0x3] %vm2088, %v2087
    %s2091 = scalar_lea.vmem [#allocation2], 394
    %2092 = vst.msk [vmem:[%s2091] ss:$16 sm:$0xc] %vm2088, %v2087
    %s2093 = scalar_lea.vmem [#allocation2], 394
    %2094 = vst.msk [vmem:[%s2093] ss:$16 sm:$0x30] %vm2088, %v2087
    %s2095 = scalar_lea.vmem [#allocation2], 394
    %2096 = vst.msk [vmem:[%s2095] ss:$16 sm:$0xc0] %vm2088, %v2087
    %s2097 = scalar_lea.vmem [#allocation3], 128
    %v2098 = vld.sshfl [vmem:[%s2097] sm:$0xff pattern:$0x99999810]
    %s2099 = scalar_lea.vmem [#allocation3], 144
    %v2100 = vld.sshfl [vmem:[%s2099] sm:$0xff pattern:$0x98100000]
    %vm2101 = vcmask 1047556
    %v2102 = vsel %vm2101, %v2100, %v2098
    %2103 = vrot.lane.b32.xlu0 %v2102, 108
    %v2104 = vpop.permute.xlu0 %2103
    %vm2105 = vcmask 15360
    %s2106 = scalar_lea.vmem [#allocation2], 522
    %2107 = vst.msk [vmem:[%s2106] ss:$16 sm:$0x3] %vm2105, %v2104
    %s2108 = scalar_lea.vmem [#allocation2], 522
    %2109 = vst.msk [vmem:[%s2108] ss:$16 sm:$0xc] %vm2105, %v2104
    %s2110 = scalar_lea.vmem [#allocation2], 522
    %2111 = vst.msk [vmem:[%s2110] ss:$16 sm:$0x30] %vm2105, %v2104
    %s2112 = scalar_lea.vmem [#allocation2], 522
    %2113 = vst.msk [vmem:[%s2112] ss:$16 sm:$0xc0] %vm2105, %v2104
    %s2114 = scalar_lea.vmem [#allocation3], 160
    %v2115 = vld.sshfl [vmem:[%s2114] sm:$0xff pattern:$0x99999810]
    %s2116 = scalar_lea.vmem [#allocation3], 176
    %v2117 = vld.sshfl [vmem:[%s2116] sm:$0xff pattern:$0x98100000]
    %vm2118 = vcmask 1047556
    %v2119 = vsel %vm2118, %v2117, %v2115
    %2120 = vrot.lane.b32.xlu0 %v2119, 108
    %v2121 = vpop.permute.xlu0 %2120
    %vm2122 = vcmask 15360
    %s2123 = scalar_lea.vmem [#allocation2], 650
    %2124 = vst.msk [vmem:[%s2123] ss:$16 sm:$0x3] %vm2122, %v2121
    %s2125 = scalar_lea.vmem [#allocation2], 650
    %2126 = vst.msk [vmem:[%s2125] ss:$16 sm:$0xc] %vm2122, %v2121
    %s2127 = scalar_lea.vmem [#allocation2], 650
    %2128 = vst.msk [vmem:[%s2127] ss:$16 sm:$0x30] %vm2122, %v2121
    %s2129 = scalar_lea.vmem [#allocation2], 650
    %2130 = vst.msk [vmem:[%s2129] ss:$16 sm:$0xc0] %vm2122, %v2121
    %s2131 = scalar_lea.vmem [#allocation3], 192
    %v2132 = vld.sshfl [vmem:[%s2131] sm:$0xff pattern:$0x99999810]
    %s2133 = scalar_lea.vmem [#allocation3], 208
    %v2134 = vld.sshfl [vmem:[%s2133] sm:$0xff pattern:$0x98100000]
    %vm2135 = vcmask 1047556
    %v2136 = vsel %vm2135, %v2134, %v2132
    %2137 = vrot.lane.b32.xlu0 %v2136, 108
    %v2138 = vpop.permute.xlu0 %2137
    %vm2139 = vcmask 15360
    %s2140 = scalar_lea.vmem [#allocation2], 778
    %2141 = vst.msk [vmem:[%s2140] ss:$16 sm:$0x3] %vm2139, %v2138
    %s2142 = scalar_lea.vmem [#allocation2], 778
    %2143 = vst.msk [vmem:[%s2142] ss:$16 sm:$0xc] %vm2139, %v2138
    %s2144 = scalar_lea.vmem [#allocation2], 778
    %2145 = vst.msk [vmem:[%s2144] ss:$16 sm:$0x30] %vm2139, %v2138
    %s2146 = scalar_lea.vmem [#allocation2], 778
    %2147 = vst.msk [vmem:[%s2146] ss:$16 sm:$0xc0] %vm2139, %v2138
    %s2148 = scalar_lea.vmem [#allocation3], 224
    %v2149 = vld.sshfl [vmem:[%s2148] sm:$0xff pattern:$0x99999810]
    %s2150 = scalar_lea.vmem [#allocation3], 240
    %v2151 = vld.sshfl [vmem:[%s2150] sm:$0xff pattern:$0x98100000]
    %vm2152 = vcmask 1047556
    %v2153 = vsel %vm2152, %v2151, %v2149
    %2154 = vrot.lane.b32.xlu0 %v2153, 108
    %v2155 = vpop.permute.xlu0 %2154
    %vm2156 = vcmask 15360
    %s2157 = scalar_lea.vmem [#allocation2], 906
    %2158 = vst.msk [vmem:[%s2157] ss:$16 sm:$0x3] %vm2156, %v2155
    %s2159 = scalar_lea.vmem [#allocation2], 906
    %2160 = vst.msk [vmem:[%s2159] ss:$16 sm:$0xc] %vm2156, %v2155
    %s2161 = scalar_lea.vmem [#allocation2], 906
    %2162 = vst.msk [vmem:[%s2161] ss:$16 sm:$0x30] %vm2156, %v2155
    %s2163 = scalar_lea.vmem [#allocation2], 906
    %2164 = vst.msk [vmem:[%s2163] ss:$16 sm:$0xc0] %vm2156, %v2155
    %s2165 = scalar_lea.vmem [#allocation3], 256
    %v2166 = vld.sshfl [vmem:[%s2165] sm:$0xff pattern:$0x99999810]
    %s2167 = scalar_lea.vmem [#allocation3], 272
    %v2168 = vld.sshfl [vmem:[%s2167] sm:$0xff pattern:$0x98100000]
    %vm2169 = vcmask 1047556
    %v2170 = vsel %vm2169, %v2168, %v2166
    %2171 = vrot.lane.b32.xlu0 %v2170, 108
    %v2172 = vpop.permute.xlu0 %2171
    %vm2173 = vcmask 15360
    %s2174 = scalar_lea.vmem [#allocation2], 1034
    %2175 = vst.msk [vmem:[%s2174] ss:$16 sm:$0x3] %vm2173, %v2172
    %s2176 = scalar_lea.vmem [#allocation2], 1034
    %2177 = vst.msk [vmem:[%s2176] ss:$16 sm:$0xc] %vm2173, %v2172
    %s2178 = scalar_lea.vmem [#allocation2], 1034
    %2179 = vst.msk [vmem:[%s2178] ss:$16 sm:$0x30] %vm2173, %v2172
    %s2180 = scalar_lea.vmem [#allocation2], 1034
    %2181 = vst.msk [vmem:[%s2180] ss:$16 sm:$0xc0] %vm2173, %v2172
    %s2182 = scalar_lea.vmem [#allocation3], 288
    %v2183 = vld.sshfl [vmem:[%s2182] sm:$0xff pattern:$0x99999810]
    %s2184 = scalar_lea.vmem [#allocation3], 304
    %v2185 = vld.sshfl [vmem:[%s2184] sm:$0xff pattern:$0x98100000]
    %vm2186 = vcmask 1047556
    %v2187 = vsel %vm2186, %v2185, %v2183
    %2188 = vrot.lane.b32.xlu0 %v2187, 108
    %v2189 = vpop.permute.xlu0 %2188
    %vm2190 = vcmask 15360
    %s2191 = scalar_lea.vmem [#allocation2], 1162
    %2192 = vst.msk [vmem:[%s2191] ss:$16 sm:$0x3] %vm2190, %v2189
    %s2193 = scalar_lea.vmem [#allocation2], 1162
    %2194 = vst.msk [vmem:[%s2193] ss:$16 sm:$0xc] %vm2190, %v2189
    %s2195 = scalar_lea.vmem [#allocation2], 1162
    %2196 = vst.msk [vmem:[%s2195] ss:$16 sm:$0x30] %vm2190, %v2189
    %s2197 = scalar_lea.vmem [#allocation2], 1162
    %2198 = vst.msk [vmem:[%s2197] ss:$16 sm:$0xc0] %vm2190, %v2189
    %s2199 = scalar_lea.vmem [#allocation3], 320
    %v2200 = vld.sshfl [vmem:[%s2199] sm:$0xff pattern:$0x99999810]
    %2201 = vrot.lane.b32.xlu0 %v2200, 108
    %v2202 = vpop.permute.xlu0 %2201
    %vm2203 = vcmask 15360
    %s2204 = scalar_lea.vmem [#allocation2], 1290
    %2205 = vst.msk [vmem:[%s2204] ss:$16 sm:$0x3] %vm2203, %v2202
    %s2206 = scalar_lea.vmem [#allocation2], 1290
    %2207 = vst.msk [vmem:[%s2206] ss:$16 sm:$0xc] %vm2203, %v2202
    %v2208 = vld.sshfl [vmem:[#allocation3] sm:$0xff pattern:$0x99999810]
    %s2209 = scalar_lea.vmem [#allocation3], 16
    %v2210 = vld.sshfl [vmem:[%s2209] sm:$0xff pattern:$0x98100000]
    %vm2211 = vcmask 1047556
    %v2212 = vsel %vm2211, %v2210, %v2208
    %2213 = vrot.lane.b32.xlu0 %v2212, 106
    %v2214 = vpop.permute.xlu0 %2213
    %vm2215 = vcmask 15360
    %s2216 = scalar_lea.vmem [#allocation2], 11
    %2217 = vst.msk [vmem:[%s2216] ss:$16 sm:$0x3] %vm2215, %v2214
    %s2218 = scalar_lea.vmem [#allocation2], 11
    %2219 = vst.msk [vmem:[%s2218] ss:$16 sm:$0xc] %vm2215, %v2214
    %s2220 = scalar_lea.vmem [#allocation2], 11
    %2221 = vst.msk [vmem:[%s2220] ss:$16 sm:$0x30] %vm2215, %v2214
    %s2222 = scalar_lea.vmem [#allocation2], 11
    %2223 = vst.msk [vmem:[%s2222] ss:$16 sm:$0xc0] %vm2215, %v2214
    %s2224 = scalar_lea.vmem [#allocation3], 32
    %v2225 = vld.sshfl [vmem:[%s2224] sm:$0xff pattern:$0x99999810]
    %s2226 = scalar_lea.vmem [#allocation3], 48
    %v2227 = vld.sshfl [vmem:[%s2226] sm:$0xff pattern:$0x98100000]
    %vm2228 = vcmask 1047556
    %v2229 = vsel %vm2228, %v2227, %v2225
    %2230 = vrot.lane.b32.xlu0 %v2229, 106
    %v2231 = vpop.permute.xlu0 %2230
    %vm2232 = vcmask 15360
    %s2233 = scalar_lea.vmem [#allocation2], 139
    %2234 = vst.msk [vmem:[%s2233] ss:$16 sm:$0x3] %vm2232, %v2231
    %s2235 = scalar_lea.vmem [#allocation2], 139
    %2236 = vst.msk [vmem:[%s2235] ss:$16 sm:$0xc] %vm2232, %v2231
    %s2237 = scalar_lea.vmem [#allocation2], 139
    %2238 = vst.msk [vmem:[%s2237] ss:$16 sm:$0x30] %vm2232, %v2231
    %s2239 = scalar_lea.vmem [#allocation2], 139
    %2240 = vst.msk [vmem:[%s2239] ss:$16 sm:$0xc0] %vm2232, %v2231
    %s2241 = scalar_lea.vmem [#allocation3], 64
    %v2242 = vld.sshfl [vmem:[%s2241] sm:$0xff pattern:$0x99999810]
    %s2243 = scalar_lea.vmem [#allocation3], 80
    %v2244 = vld.sshfl [vmem:[%s2243] sm:$0xff pattern:$0x98100000]
    %vm2245 = vcmask 1047556
    %v2246 = vsel %vm2245, %v2244, %v2242
    %2247 = vrot.lane.b32.xlu0 %v2246, 106
    %v2248 = vpop.permute.xlu0 %2247
    %vm2249 = vcmask 15360
    %s2250 = scalar_lea.vmem [#allocation2], 267
    %2251 = vst.msk [vmem:[%s2250] ss:$16 sm:$0x3] %vm2249, %v2248
    %s2252 = scalar_lea.vmem [#allocation2], 267
    %2253 = vst.msk [vmem:[%s2252] ss:$16 sm:$0xc] %vm2249, %v2248
    %s2254 = scalar_lea.vmem [#allocation2], 267
    %2255 = vst.msk [vmem:[%s2254] ss:$16 sm:$0x30] %vm2249, %v2248
    %s2256 = scalar_lea.vmem [#allocation2], 267
    %2257 = vst.msk [vmem:[%s2256] ss:$16 sm:$0xc0] %vm2249, %v2248
    %s2258 = scalar_lea.vmem [#allocation3], 96
    %v2259 = vld.sshfl [vmem:[%s2258] sm:$0xff pattern:$0x99999810]
    %s2260 = scalar_lea.vmem [#allocation3], 112
    %v2261 = vld.sshfl [vmem:[%s2260] sm:$0xff pattern:$0x98100000]
    %vm2262 = vcmask 1047556
    %v2263 = vsel %vm2262, %v2261, %v2259
    %2264 = vrot.lane.b32.xlu0 %v2263, 106
    %v2265 = vpop.permute.xlu0 %2264
    %vm2266 = vcmask 15360
    %s2267 = scalar_lea.vmem [#allocation2], 395
    %2268 = vst.msk [vmem:[%s2267] ss:$16 sm:$0x3] %vm2266, %v2265
    %s2269 = scalar_lea.vmem [#allocation2], 395
    %2270 = vst.msk [vmem:[%s2269] ss:$16 sm:$0xc] %vm2266, %v2265
    %s2271 = scalar_lea.vmem [#allocation2], 395
    %2272 = vst.msk [vmem:[%s2271] ss:$16 sm:$0x30] %vm2266, %v2265
    %s2273 = scalar_lea.vmem [#allocation2], 395
    %2274 = vst.msk [vmem:[%s2273] ss:$16 sm:$0xc0] %vm2266, %v2265
    %s2275 = scalar_lea.vmem [#allocation3], 128
    %v2276 = vld.sshfl [vmem:[%s2275] sm:$0xff pattern:$0x99999810]
    %s2277 = scalar_lea.vmem [#allocation3], 144
    %v2278 = vld.sshfl [vmem:[%s2277] sm:$0xff pattern:$0x98100000]
    %vm2279 = vcmask 1047556
    %v2280 = vsel %vm2279, %v2278, %v2276
    %2281 = vrot.lane.b32.xlu0 %v2280, 106
    %v2282 = vpop.permute.xlu0 %2281
    %vm2283 = vcmask 15360
    %s2284 = scalar_lea.vmem [#allocation2], 523
    %2285 = vst.msk [vmem:[%s2284] ss:$16 sm:$0x3] %vm2283, %v2282
    %s2286 = scalar_lea.vmem [#allocation2], 523
    %2287 = vst.msk [vmem:[%s2286] ss:$16 sm:$0xc] %vm2283, %v2282
    %s2288 = scalar_lea.vmem [#allocation2], 523
    %2289 = vst.msk [vmem:[%s2288] ss:$16 sm:$0x30] %vm2283, %v2282
    %s2290 = scalar_lea.vmem [#allocation2], 523
    %2291 = vst.msk [vmem:[%s2290] ss:$16 sm:$0xc0] %vm2283, %v2282
    %s2292 = scalar_lea.vmem [#allocation3], 160
    %v2293 = vld.sshfl [vmem:[%s2292] sm:$0xff pattern:$0x99999810]
    %s2294 = scalar_lea.vmem [#allocation3], 176
    %v2295 = vld.sshfl [vmem:[%s2294] sm:$0xff pattern:$0x98100000]
    %vm2296 = vcmask 1047556
    %v2297 = vsel %vm2296, %v2295, %v2293
    %2298 = vrot.lane.b32.xlu0 %v2297, 106
    %v2299 = vpop.permute.xlu0 %2298
    %vm2300 = vcmask 15360
    %s2301 = scalar_lea.vmem [#allocation2], 651
    %2302 = vst.msk [vmem:[%s2301] ss:$16 sm:$0x3] %vm2300, %v2299
    %s2303 = scalar_lea.vmem [#allocation2], 651
    %2304 = vst.msk [vmem:[%s2303] ss:$16 sm:$0xc] %vm2300, %v2299
    %s2305 = scalar_lea.vmem [#allocation2], 651
    %2306 = vst.msk [vmem:[%s2305] ss:$16 sm:$0x30] %vm2300, %v2299
    %s2307 = scalar_lea.vmem [#allocation2], 651
    %2308 = vst.msk [vmem:[%s2307] ss:$16 sm:$0xc0] %vm2300, %v2299
    %s2309 = scalar_lea.vmem [#allocation3], 192
    %v2310 = vld.sshfl [vmem:[%s2309] sm:$0xff pattern:$0x99999810]
    %s2311 = scalar_lea.vmem [#allocation3], 208
    %v2312 = vld.sshfl [vmem:[%s2311] sm:$0xff pattern:$0x98100000]
    %vm2313 = vcmask 1047556
    %v2314 = vsel %vm2313, %v2312, %v2310
    %2315 = vrot.lane.b32.xlu0 %v2314, 106
    %v2316 = vpop.permute.xlu0 %2315
    %vm2317 = vcmask 15360
    %s2318 = scalar_lea.vmem [#allocation2], 779
    %2319 = vst.msk [vmem:[%s2318] ss:$16 sm:$0x3] %vm2317, %v2316
    %s2320 = scalar_lea.vmem [#allocation2], 779
    %2321 = vst.msk [vmem:[%s2320] ss:$16 sm:$0xc] %vm2317, %v2316
    %s2322 = scalar_lea.vmem [#allocation2], 779
    %2323 = vst.msk [vmem:[%s2322] ss:$16 sm:$0x30] %vm2317, %v2316
    %s2324 = scalar_lea.vmem [#allocation2], 779
    %2325 = vst.msk [vmem:[%s2324] ss:$16 sm:$0xc0] %vm2317, %v2316
    %s2326 = scalar_lea.vmem [#allocation3], 224
    %v2327 = vld.sshfl [vmem:[%s2326] sm:$0xff pattern:$0x99999810]
    %s2328 = scalar_lea.vmem [#allocation3], 240
    %v2329 = vld.sshfl [vmem:[%s2328] sm:$0xff pattern:$0x98100000]
    %vm2330 = vcmask 1047556
    %v2331 = vsel %vm2330, %v2329, %v2327
    %2332 = vrot.lane.b32.xlu0 %v2331, 106
    %v2333 = vpop.permute.xlu0 %2332
    %vm2334 = vcmask 15360
    %s2335 = scalar_lea.vmem [#allocation2], 907
    %2336 = vst.msk [vmem:[%s2335] ss:$16 sm:$0x3] %vm2334, %v2333
    %s2337 = scalar_lea.vmem [#allocation2], 907
    %2338 = vst.msk [vmem:[%s2337] ss:$16 sm:$0xc] %vm2334, %v2333
    %s2339 = scalar_lea.vmem [#allocation2], 907
    %2340 = vst.msk [vmem:[%s2339] ss:$16 sm:$0x30] %vm2334, %v2333
    %s2341 = scalar_lea.vmem [#allocation2], 907
    %2342 = vst.msk [vmem:[%s2341] ss:$16 sm:$0xc0] %vm2334, %v2333
    %s2343 = scalar_lea.vmem [#allocation3], 256
    %v2344 = vld.sshfl [vmem:[%s2343] sm:$0xff pattern:$0x99999810]
    %s2345 = scalar_lea.vmem [#allocation3], 272
    %v2346 = vld.sshfl [vmem:[%s2345] sm:$0xff pattern:$0x98100000]
    %vm2347 = vcmask 1047556
    %v2348 = vsel %vm2347, %v2346, %v2344
    %2349 = vrot.lane.b32.xlu0 %v2348, 106
    %v2350 = vpop.permute.xlu0 %2349
    %vm2351 = vcmask 15360
    %s2352 = scalar_lea.vmem [#allocation2], 1035
    %2353 = vst.msk [vmem:[%s2352] ss:$16 sm:$0x3] %vm2351, %v2350
    %s2354 = scalar_lea.vmem [#allocation2], 1035
    %2355 = vst.msk [vmem:[%s2354] ss:$16 sm:$0xc] %vm2351, %v2350
    %s2356 = scalar_lea.vmem [#allocation2], 1035
    %2357 = vst.msk [vmem:[%s2356] ss:$16 sm:$0x30] %vm2351, %v2350
    %s2358 = scalar_lea.vmem [#allocation2], 1035
    %2359 = vst.msk [vmem:[%s2358] ss:$16 sm:$0xc0] %vm2351, %v2350
    %s2360 = scalar_lea.vmem [#allocation3], 288
    %v2361 = vld.sshfl [vmem:[%s2360] sm:$0xff pattern:$0x99999810]
    %s2362 = scalar_lea.vmem [#allocation3], 304
    %v2363 = vld.sshfl [vmem:[%s2362] sm:$0xff pattern:$0x98100000]
    %vm2364 = vcmask 1047556
    %v2365 = vsel %vm2364, %v2363, %v2361
    %2366 = vrot.lane.b32.xlu0 %v2365, 106
    %v2367 = vpop.permute.xlu0 %2366
    %vm2368 = vcmask 15360
    %s2369 = scalar_lea.vmem [#allocation2], 1163
    %2370 = vst.msk [vmem:[%s2369] ss:$16 sm:$0x3] %vm2368, %v2367
    %s2371 = scalar_lea.vmem [#allocation2], 1163
    %2372 = vst.msk [vmem:[%s2371] ss:$16 sm:$0xc] %vm2368, %v2367
    %s2373 = scalar_lea.vmem [#allocation2], 1163
    %2374 = vst.msk [vmem:[%s2373] ss:$16 sm:$0x30] %vm2368, %v2367
    %s2375 = scalar_lea.vmem [#allocation2], 1163
    %2376 = vst.msk [vmem:[%s2375] ss:$16 sm:$0xc0] %vm2368, %v2367
    %s2377 = scalar_lea.vmem [#allocation3], 320
    %v2378 = vld.sshfl [vmem:[%s2377] sm:$0xff pattern:$0x99999810]
    %2379 = vrot.lane.b32.xlu0 %v2378, 106
    %v2380 = vpop.permute.xlu0 %2379
    %vm2381 = vcmask 15360
    %s2382 = scalar_lea.vmem [#allocation2], 1291
    %2383 = vst.msk [vmem:[%s2382] ss:$16 sm:$0x3] %vm2381, %v2380
    %s2384 = scalar_lea.vmem [#allocation2], 1291
    %2385 = vst.msk [vmem:[%s2384] ss:$16 sm:$0xc] %vm2381, %v2380
    %v2386 = vld.sshfl [vmem:[#allocation3] sm:$0xff pattern:$0x99999810]
    %s2387 = scalar_lea.vmem [#allocation3], 16
    %v2388 = vld.sshfl [vmem:[%s2387] sm:$0xff pattern:$0x98100000]
    %vm2389 = vcmask 1047556
    %v2390 = vsel %vm2389, %v2388, %v2386
    %2391 = vrot.lane.b32.xlu0 %v2390, 104
    %v2392 = vpop.permute.xlu0 %2391
    %vm2393 = vcmask 15360
    %s2394 = scalar_lea.vmem [#allocation2], 12
    %2395 = vst.msk [vmem:[%s2394] ss:$16 sm:$0x3] %vm2393, %v2392
    %s2396 = scalar_lea.vmem [#allocation2], 12
    %2397 = vst.msk [vmem:[%s2396] ss:$16 sm:$0xc] %vm2393, %v2392
    %s2398 = scalar_lea.vmem [#allocation2], 12
    %2399 = vst.msk [vmem:[%s2398] ss:$16 sm:$0x30] %vm2393, %v2392
    %s2400 = scalar_lea.vmem [#allocation2], 12
    %2401 = vst.msk [vmem:[%s2400] ss:$16 sm:$0xc0] %vm2393, %v2392
    %s2402 = scalar_lea.vmem [#allocation3], 32
    %v2403 = vld.sshfl [vmem:[%s2402] sm:$0xff pattern:$0x99999810]
    %s2404 = scalar_lea.vmem [#allocation3], 48
    %v2405 = vld.sshfl [vmem:[%s2404] sm:$0xff pattern:$0x98100000]
    %vm2406 = vcmask 1047556
    %v2407 = vsel %vm2406, %v2405, %v2403
    %2408 = vrot.lane.b32.xlu0 %v2407, 104
    %v2409 = vpop.permute.xlu0 %2408
    %vm2410 = vcmask 15360
    %s2411 = scalar_lea.vmem [#allocation2], 140
    %2412 = vst.msk [vmem:[%s2411] ss:$16 sm:$0x3] %vm2410, %v2409
    %s2413 = scalar_lea.vmem [#allocation2], 140
    %2414 = vst.msk [vmem:[%s2413] ss:$16 sm:$0xc] %vm2410, %v2409
    %s2415 = scalar_lea.vmem [#allocation2], 140
    %2416 = vst.msk [vmem:[%s2415] ss:$16 sm:$0x30] %vm2410, %v2409
    %s2417 = scalar_lea.vmem [#allocation2], 140
    %2418 = vst.msk [vmem:[%s2417] ss:$16 sm:$0xc0] %vm2410, %v2409
    %s2419 = scalar_lea.vmem [#allocation3], 64
    %v2420 = vld.sshfl [vmem:[%s2419] sm:$0xff pattern:$0x99999810]
    %s2421 = scalar_lea.vmem [#allocation3], 80
    %v2422 = vld.sshfl [vmem:[%s2421] sm:$0xff pattern:$0x98100000]
    %vm2423 = vcmask 1047556
    %v2424 = vsel %vm2423, %v2422, %v2420
    %2425 = vrot.lane.b32.xlu0 %v2424, 104
    %v2426 = vpop.permute.xlu0 %2425
    %vm2427 = vcmask 15360
    %s2428 = scalar_lea.vmem [#allocation2], 268
    %2429 = vst.msk [vmem:[%s2428] ss:$16 sm:$0x3] %vm2427, %v2426
    %s2430 = scalar_lea.vmem [#allocation2], 268
    %2431 = vst.msk [vmem:[%s2430] ss:$16 sm:$0xc] %vm2427, %v2426
    %s2432 = scalar_lea.vmem [#allocation2], 268
    %2433 = vst.msk [vmem:[%s2432] ss:$16 sm:$0x30] %vm2427, %v2426
    %s2434 = scalar_lea.vmem [#allocation2], 268
    %2435 = vst.msk [vmem:[%s2434] ss:$16 sm:$0xc0] %vm2427, %v2426
    %s2436 = scalar_lea.vmem [#allocation3], 96
    %v2437 = vld.sshfl [vmem:[%s2436] sm:$0xff pattern:$0x99999810]
    %s2438 = scalar_lea.vmem [#allocation3], 112
    %v2439 = vld.sshfl [vmem:[%s2438] sm:$0xff pattern:$0x98100000]
    %vm2440 = vcmask 1047556
    %v2441 = vsel %vm2440, %v2439, %v2437
    %2442 = vrot.lane.b32.xlu0 %v2441, 104
    %v2443 = vpop.permute.xlu0 %2442
    %vm2444 = vcmask 15360
    %s2445 = scalar_lea.vmem [#allocation2], 396
    %2446 = vst.msk [vmem:[%s2445] ss:$16 sm:$0x3] %vm2444, %v2443
    %s2447 = scalar_lea.vmem [#allocation2], 396
    %2448 = vst.msk [vmem:[%s2447] ss:$16 sm:$0xc] %vm2444, %v2443
    %s2449 = scalar_lea.vmem [#allocation2], 396
    %2450 = vst.msk [vmem:[%s2449] ss:$16 sm:$0x30] %vm2444, %v2443
    %s2451 = scalar_lea.vmem [#allocation2], 396
    %2452 = vst.msk [vmem:[%s2451] ss:$16 sm:$0xc0] %vm2444, %v2443
    %s2453 = scalar_lea.vmem [#allocation3], 128
    %v2454 = vld.sshfl [vmem:[%s2453] sm:$0xff pattern:$0x99999810]
    %s2455 = scalar_lea.vmem [#allocation3], 144
    %v2456 = vld.sshfl [vmem:[%s2455] sm:$0xff pattern:$0x98100000]
    %vm2457 = vcmask 1047556
    %v2458 = vsel %vm2457, %v2456, %v2454
    %2459 = vrot.lane.b32.xlu0 %v2458, 104
    %v2460 = vpop.permute.xlu0 %2459
    %vm2461 = vcmask 15360
    %s2462 = scalar_lea.vmem [#allocation2], 524
    %2463 = vst.msk [vmem:[%s2462] ss:$16 sm:$0x3] %vm2461, %v2460
    %s2464 = scalar_lea.vmem [#allocation2], 524
    %2465 = vst.msk [vmem:[%s2464] ss:$16 sm:$0xc] %vm2461, %v2460
    %s2466 = scalar_lea.vmem [#allocation2], 524
    %2467 = vst.msk [vmem:[%s2466] ss:$16 sm:$0x30] %vm2461, %v2460
    %s2468 = scalar_lea.vmem [#allocation2], 524
    %2469 = vst.msk [vmem:[%s2468] ss:$16 sm:$0xc0] %vm2461, %v2460
    %s2470 = scalar_lea.vmem [#allocation3], 160
    %v2471 = vld.sshfl [vmem:[%s2470] sm:$0xff pattern:$0x99999810]
    %s2472 = scalar_lea.vmem [#allocation3], 176
    %v2473 = vld.sshfl [vmem:[%s2472] sm:$0xff pattern:$0x98100000]
    %vm2474 = vcmask 1047556
    %v2475 = vsel %vm2474, %v2473, %v2471
    %2476 = vrot.lane.b32.xlu0 %v2475, 104
    %v2477 = vpop.permute.xlu0 %2476
    %vm2478 = vcmask 15360
    %s2479 = scalar_lea.vmem [#allocation2], 652
    %2480 = vst.msk [vmem:[%s2479] ss:$16 sm:$0x3] %vm2478, %v2477
    %s2481 = scalar_lea.vmem [#allocation2], 652
    %2482 = vst.msk [vmem:[%s2481] ss:$16 sm:$0xc] %vm2478, %v2477
    %s2483 = scalar_lea.vmem [#allocation2], 652
    %2484 = vst.msk [vmem:[%s2483] ss:$16 sm:$0x30] %vm2478, %v2477
    %s2485 = scalar_lea.vmem [#allocation2], 652
    %2486 = vst.msk [vmem:[%s2485] ss:$16 sm:$0xc0] %vm2478, %v2477
    %s2487 = scalar_lea.vmem [#allocation3], 192
    %v2488 = vld.sshfl [vmem:[%s2487] sm:$0xff pattern:$0x99999810]
    %s2489 = scalar_lea.vmem [#allocation3], 208
    %v2490 = vld.sshfl [vmem:[%s2489] sm:$0xff pattern:$0x98100000]
    %vm2491 = vcmask 1047556
    %v2492 = vsel %vm2491, %v2490, %v2488
    %2493 = vrot.lane.b32.xlu0 %v2492, 104
    %v2494 = vpop.permute.xlu0 %2493
    %vm2495 = vcmask 15360
    %s2496 = scalar_lea.vmem [#allocation2], 780
    %2497 = vst.msk [vmem:[%s2496] ss:$16 sm:$0x3] %vm2495, %v2494
    %s2498 = scalar_lea.vmem [#allocation2], 780
    %2499 = vst.msk [vmem:[%s2498] ss:$16 sm:$0xc] %vm2495, %v2494
    %s2500 = scalar_lea.vmem [#allocation2], 780
    %2501 = vst.msk [vmem:[%s2500] ss:$16 sm:$0x30] %vm2495, %v2494
    %s2502 = scalar_lea.vmem [#allocation2], 780
    %2503 = vst.msk [vmem:[%s2502] ss:$16 sm:$0xc0] %vm2495, %v2494
    %s2504 = scalar_lea.vmem [#allocation3], 224
    %v2505 = vld.sshfl [vmem:[%s2504] sm:$0xff pattern:$0x99999810]
    %s2506 = scalar_lea.vmem [#allocation3], 240
    %v2507 = vld.sshfl [vmem:[%s2506] sm:$0xff pattern:$0x98100000]
    %vm2508 = vcmask 1047556
    %v2509 = vsel %vm2508, %v2507, %v2505
    %2510 = vrot.lane.b32.xlu0 %v2509, 104
    %v2511 = vpop.permute.xlu0 %2510
    %vm2512 = vcmask 15360
    %s2513 = scalar_lea.vmem [#allocation2], 908
    %2514 = vst.msk [vmem:[%s2513] ss:$16 sm:$0x3] %vm2512, %v2511
    %s2515 = scalar_lea.vmem [#allocation2], 908
    %2516 = vst.msk [vmem:[%s2515] ss:$16 sm:$0xc] %vm2512, %v2511
    %s2517 = scalar_lea.vmem [#allocation2], 908
    %2518 = vst.msk [vmem:[%s2517] ss:$16 sm:$0x30] %vm2512, %v2511
    %s2519 = scalar_lea.vmem [#allocation2], 908
    %2520 = vst.msk [vmem:[%s2519] ss:$16 sm:$0xc0] %vm2512, %v2511
    %s2521 = scalar_lea.vmem [#allocation3], 256
    %v2522 = vld.sshfl [vmem:[%s2521] sm:$0xff pattern:$0x99999810]
    %s2523 = scalar_lea.vmem [#allocation3], 272
    %v2524 = vld.sshfl [vmem:[%s2523] sm:$0xff pattern:$0x98100000]
    %vm2525 = vcmask 1047556
    %v2526 = vsel %vm2525, %v2524, %v2522
    %2527 = vrot.lane.b32.xlu0 %v2526, 104
    %v2528 = vpop.permute.xlu0 %2527
    %vm2529 = vcmask 15360
    %s2530 = scalar_lea.vmem [#allocation2], 1036
    %2531 = vst.msk [vmem:[%s2530] ss:$16 sm:$0x3] %vm2529, %v2528
    %s2532 = scalar_lea.vmem [#allocation2], 1036
    %2533 = vst.msk [vmem:[%s2532] ss:$16 sm:$0xc] %vm2529, %v2528
    %s2534 = scalar_lea.vmem [#allocation2], 1036
    %2535 = vst.msk [vmem:[%s2534] ss:$16 sm:$0x30] %vm2529, %v2528
    %s2536 = scalar_lea.vmem [#allocation2], 1036
    %2537 = vst.msk [vmem:[%s2536] ss:$16 sm:$0xc0] %vm2529, %v2528
    %s2538 = scalar_lea.vmem [#allocation3], 288
    %v2539 = vld.sshfl [vmem:[%s2538] sm:$0xff pattern:$0x99999810]
    %s2540 = scalar_lea.vmem [#allocation3], 304
    %v2541 = vld.sshfl [vmem:[%s2540] sm:$0xff pattern:$0x98100000]
    %vm2542 = vcmask 1047556
    %v2543 = vsel %vm2542, %v2541, %v2539
    %2544 = vrot.lane.b32.xlu0 %v2543, 104
    %v2545 = vpop.permute.xlu0 %2544
    %vm2546 = vcmask 15360
    %s2547 = scalar_lea.vmem [#allocation2], 1164
    %2548 = vst.msk [vmem:[%s2547] ss:$16 sm:$0x3] %vm2546, %v2545
    %s2549 = scalar_lea.vmem [#allocation2], 1164
    %2550 = vst.msk [vmem:[%s2549] ss:$16 sm:$0xc] %vm2546, %v2545
    %s2551 = scalar_lea.vmem [#allocation2], 1164
    %2552 = vst.msk [vmem:[%s2551] ss:$16 sm:$0x30] %vm2546, %v2545
    %s2553 = scalar_lea.vmem [#allocation2], 1164
    %2554 = vst.msk [vmem:[%s2553] ss:$16 sm:$0xc0] %vm2546, %v2545
    %s2555 = scalar_lea.vmem [#allocation3], 320
    %v2556 = vld.sshfl [vmem:[%s2555] sm:$0xff pattern:$0x99999810]
    %2557 = vrot.lane.b32.xlu0 %v2556, 104
    %v2558 = vpop.permute.xlu0 %2557
    %vm2559 = vcmask 15360
    %s2560 = scalar_lea.vmem [#allocation2], 1292
    %2561 = vst.msk [vmem:[%s2560] ss:$16 sm:$0x3] %vm2559, %v2558
    %s2562 = scalar_lea.vmem [#allocation2], 1292
    %2563 = vst.msk [vmem:[%s2562] ss:$16 sm:$0xc] %vm2559, %v2558
    %v2564 = vld.sshfl [vmem:[#allocation3] sm:$0xff pattern:$0x99999810]
    %s2565 = scalar_lea.vmem [#allocation3], 16
    %v2566 = vld.sshfl [vmem:[%s2565] sm:$0xff pattern:$0x98100000]
    %vm2567 = vcmask 1047556
    %v2568 = vsel %vm2567, %v2566, %v2564
    %2569 = vrot.lane.b32.xlu0 %v2568, 102
    %v2570 = vpop.permute.xlu0 %2569
    %vm2571 = vcmask 15360
    %s2572 = scalar_lea.vmem [#allocation2], 13
    %2573 = vst.msk [vmem:[%s2572] ss:$16 sm:$0x3] %vm2571, %v2570
    %s2574 = scalar_lea.vmem [#allocation2], 13
    %2575 = vst.msk [vmem:[%s2574] ss:$16 sm:$0xc] %vm2571, %v2570
    %s2576 = scalar_lea.vmem [#allocation2], 13
    %2577 = vst.msk [vmem:[%s2576] ss:$16 sm:$0x30] %vm2571, %v2570
    %s2578 = scalar_lea.vmem [#allocation2], 13
    %2579 = vst.msk [vmem:[%s2578] ss:$16 sm:$0xc0] %vm2571, %v2570
    %s2580 = scalar_lea.vmem [#allocation3], 32
    %v2581 = vld.sshfl [vmem:[%s2580] sm:$0xff pattern:$0x99999810]
    %s2582 = scalar_lea.vmem [#allocation3], 48
    %v2583 = vld.sshfl [vmem:[%s2582] sm:$0xff pattern:$0x98100000]
    %vm2584 = vcmask 1047556
    %v2585 = vsel %vm2584, %v2583, %v2581
    %2586 = vrot.lane.b32.xlu0 %v2585, 102
    %v2587 = vpop.permute.xlu0 %2586
    %vm2588 = vcmask 15360
    %s2589 = scalar_lea.vmem [#allocation2], 141
    %2590 = vst.msk [vmem:[%s2589] ss:$16 sm:$0x3] %vm2588, %v2587
    %s2591 = scalar_lea.vmem [#allocation2], 141
    %2592 = vst.msk [vmem:[%s2591] ss:$16 sm:$0xc] %vm2588, %v2587
    %s2593 = scalar_lea.vmem [#allocation2], 141
    %2594 = vst.msk [vmem:[%s2593] ss:$16 sm:$0x30] %vm2588, %v2587
    %s2595 = scalar_lea.vmem [#allocation2], 141
    %2596 = vst.msk [vmem:[%s2595] ss:$16 sm:$0xc0] %vm2588, %v2587
    %s2597 = scalar_lea.vmem [#allocation3], 64
    %v2598 = vld.sshfl [vmem:[%s2597] sm:$0xff pattern:$0x99999810]
    %s2599 = scalar_lea.vmem [#allocation3], 80
    %v2600 = vld.sshfl [vmem:[%s2599] sm:$0xff pattern:$0x98100000]
    %vm2601 = vcmask 1047556
    %v2602 = vsel %vm2601, %v2600, %v2598
    %2603 = vrot.lane.b32.xlu0 %v2602, 102
    %v2604 = vpop.permute.xlu0 %2603
    %vm2605 = vcmask 15360
    %s2606 = scalar_lea.vmem [#allocation2], 269
    %2607 = vst.msk [vmem:[%s2606] ss:$16 sm:$0x3] %vm2605, %v2604
    %s2608 = scalar_lea.vmem [#allocation2], 269
    %2609 = vst.msk [vmem:[%s2608] ss:$16 sm:$0xc] %vm2605, %v2604
    %s2610 = scalar_lea.vmem [#allocation2], 269
    %2611 = vst.msk [vmem:[%s2610] ss:$16 sm:$0x30] %vm2605, %v2604
    %s2612 = scalar_lea.vmem [#allocation2], 269
    %2613 = vst.msk [vmem:[%s2612] ss:$16 sm:$0xc0] %vm2605, %v2604
    %s2614 = scalar_lea.vmem [#allocation3], 96
    %v2615 = vld.sshfl [vmem:[%s2614] sm:$0xff pattern:$0x99999810]
    %s2616 = scalar_lea.vmem [#allocation3], 112
    %v2617 = vld.sshfl [vmem:[%s2616] sm:$0xff pattern:$0x98100000]
    %vm2618 = vcmask 1047556
    %v2619 = vsel %vm2618, %v2617, %v2615
    %2620 = vrot.lane.b32.xlu0 %v2619, 102
    %v2621 = vpop.permute.xlu0 %2620
    %vm2622 = vcmask 15360
    %s2623 = scalar_lea.vmem [#allocation2], 397
    %2624 = vst.msk [vmem:[%s2623] ss:$16 sm:$0x3] %vm2622, %v2621
    %s2625 = scalar_lea.vmem [#allocation2], 397
    %2626 = vst.msk [vmem:[%s2625] ss:$16 sm:$0xc] %vm2622, %v2621
    %s2627 = scalar_lea.vmem [#allocation2], 397
    %2628 = vst.msk [vmem:[%s2627] ss:$16 sm:$0x30] %vm2622, %v2621
    %s2629 = scalar_lea.vmem [#allocation2], 397
    %2630 = vst.msk [vmem:[%s2629] ss:$16 sm:$0xc0] %vm2622, %v2621
    %s2631 = scalar_lea.vmem [#allocation3], 128
    %v2632 = vld.sshfl [vmem:[%s2631] sm:$0xff pattern:$0x99999810]
    %s2633 = scalar_lea.vmem [#allocation3], 144
    %v2634 = vld.sshfl [vmem:[%s2633] sm:$0xff pattern:$0x98100000]
    %vm2635 = vcmask 1047556
    %v2636 = vsel %vm2635, %v2634, %v2632
    %2637 = vrot.lane.b32.xlu0 %v2636, 102
    %v2638 = vpop.permute.xlu0 %2637
    %vm2639 = vcmask 15360
    %s2640 = scalar_lea.vmem [#allocation2], 525
    %2641 = vst.msk [vmem:[%s2640] ss:$16 sm:$0x3] %vm2639, %v2638
    %s2642 = scalar_lea.vmem [#allocation2], 525
    %2643 = vst.msk [vmem:[%s2642] ss:$16 sm:$0xc] %vm2639, %v2638
    %s2644 = scalar_lea.vmem [#allocation2], 525
    %2645 = vst.msk [vmem:[%s2644] ss:$16 sm:$0x30] %vm2639, %v2638
    %s2646 = scalar_lea.vmem [#allocation2], 525
    %2647 = vst.msk [vmem:[%s2646] ss:$16 sm:$0xc0] %vm2639, %v2638
    %s2648 = scalar_lea.vmem [#allocation3], 160
    %v2649 = vld.sshfl [vmem:[%s2648] sm:$0xff pattern:$0x99999810]
    %s2650 = scalar_lea.vmem [#allocation3], 176
    %v2651 = vld.sshfl [vmem:[%s2650] sm:$0xff pattern:$0x98100000]
    %vm2652 = vcmask 1047556
    %v2653 = vsel %vm2652, %v2651, %v2649
    %2654 = vrot.lane.b32.xlu0 %v2653, 102
    %v2655 = vpop.permute.xlu0 %2654
    %vm2656 = vcmask 15360
    %s2657 = scalar_lea.vmem [#allocation2], 653
    %2658 = vst.msk [vmem:[%s2657] ss:$16 sm:$0x3] %vm2656, %v2655
    %s2659 = scalar_lea.vmem [#allocation2], 653
    %2660 = vst.msk [vmem:[%s2659] ss:$16 sm:$0xc] %vm2656, %v2655
    %s2661 = scalar_lea.vmem [#allocation2], 653
    %2662 = vst.msk [vmem:[%s2661] ss:$16 sm:$0x30] %vm2656, %v2655
    %s2663 = scalar_lea.vmem [#allocation2], 653
    %2664 = vst.msk [vmem:[%s2663] ss:$16 sm:$0xc0] %vm2656, %v2655
    %s2665 = scalar_lea.vmem [#allocation3], 192
    %v2666 = vld.sshfl [vmem:[%s2665] sm:$0xff pattern:$0x99999810]
    %s2667 = scalar_lea.vmem [#allocation3], 208
    %v2668 = vld.sshfl [vmem:[%s2667] sm:$0xff pattern:$0x98100000]
    %vm2669 = vcmask 1047556
    %v2670 = vsel %vm2669, %v2668, %v2666
    %2671 = vrot.lane.b32.xlu0 %v2670, 102
    %v2672 = vpop.permute.xlu0 %2671
    %vm2673 = vcmask 15360
    %s2674 = scalar_lea.vmem [#allocation2], 781
    %2675 = vst.msk [vmem:[%s2674] ss:$16 sm:$0x3] %vm2673, %v2672
    %s2676 = scalar_lea.vmem [#allocation2], 781
    %2677 = vst.msk [vmem:[%s2676] ss:$16 sm:$0xc] %vm2673, %v2672
    %s2678 = scalar_lea.vmem [#allocation2], 781
    %2679 = vst.msk [vmem:[%s2678] ss:$16 sm:$0x30] %vm2673, %v2672
    %s2680 = scalar_lea.vmem [#allocation2], 781
    %2681 = vst.msk [vmem:[%s2680] ss:$16 sm:$0xc0] %vm2673, %v2672
    %s2682 = scalar_lea.vmem [#allocation3], 224
    %v2683 = vld.sshfl [vmem:[%s2682] sm:$0xff pattern:$0x99999810]
    %s2684 = scalar_lea.vmem [#allocation3], 240
    %v2685 = vld.sshfl [vmem:[%s2684] sm:$0xff pattern:$0x98100000]
    %vm2686 = vcmask 1047556
    %v2687 = vsel %vm2686, %v2685, %v2683
    %2688 = vrot.lane.b32.xlu0 %v2687, 102
    %v2689 = vpop.permute.xlu0 %2688
    %vm2690 = vcmask 15360
    %s2691 = scalar_lea.vmem [#allocation2], 909
    %2692 = vst.msk [vmem:[%s2691] ss:$16 sm:$0x3] %vm2690, %v2689
    %s2693 = scalar_lea.vmem [#allocation2], 909
    %2694 = vst.msk [vmem:[%s2693] ss:$16 sm:$0xc] %vm2690, %v2689
    %s2695 = scalar_lea.vmem [#allocation2], 909
    %2696 = vst.msk [vmem:[%s2695] ss:$16 sm:$0x30] %vm2690, %v2689
    %s2697 = scalar_lea.vmem [#allocation2], 909
    %2698 = vst.msk [vmem:[%s2697] ss:$16 sm:$0xc0] %vm2690, %v2689
    %s2699 = scalar_lea.vmem [#allocation3], 256
    %v2700 = vld.sshfl [vmem:[%s2699] sm:$0xff pattern:$0x99999810]
    %s2701 = scalar_lea.vmem [#allocation3], 272
    %v2702 = vld.sshfl [vmem:[%s2701] sm:$0xff pattern:$0x98100000]
    %vm2703 = vcmask 1047556
    %v2704 = vsel %vm2703, %v2702, %v2700
    %2705 = vrot.lane.b32.xlu0 %v2704, 102
    %v2706 = vpop.permute.xlu0 %2705
    %vm2707 = vcmask 15360
    %s2708 = scalar_lea.vmem [#allocation2], 1037
    %2709 = vst.msk [vmem:[%s2708] ss:$16 sm:$0x3] %vm2707, %v2706
    %s2710 = scalar_lea.vmem [#allocation2], 1037
    %2711 = vst.msk [vmem:[%s2710] ss:$16 sm:$0xc] %vm2707, %v2706
    %s2712 = scalar_lea.vmem [#allocation2], 1037
    %2713 = vst.msk [vmem:[%s2712] ss:$16 sm:$0x30] %vm2707, %v2706
    %s2714 = scalar_lea.vmem [#allocation2], 1037
    %2715 = vst.msk [vmem:[%s2714] ss:$16 sm:$0xc0] %vm2707, %v2706
    %s2716 = scalar_lea.vmem [#allocation3], 288
    %v2717 = vld.sshfl [vmem:[%s2716] sm:$0xff pattern:$0x99999810]
    %s2718 = scalar_lea.vmem [#allocation3], 304
    %v2719 = vld.sshfl [vmem:[%s2718] sm:$0xff pattern:$0x98100000]
    %vm2720 = vcmask 1047556
    %v2721 = vsel %vm2720, %v2719, %v2717
    %2722 = vrot.lane.b32.xlu0 %v2721, 102
    %v2723 = vpop.permute.xlu0 %2722
    %vm2724 = vcmask 15360
    %s2725 = scalar_lea.vmem [#allocation2], 1165
    %2726 = vst.msk [vmem:[%s2725] ss:$16 sm:$0x3] %vm2724, %v2723
    %s2727 = scalar_lea.vmem [#allocation2], 1165
    %2728 = vst.msk [vmem:[%s2727] ss:$16 sm:$0xc] %vm2724, %v2723
    %s2729 = scalar_lea.vmem [#allocation2], 1165
    %2730 = vst.msk [vmem:[%s2729] ss:$16 sm:$0x30] %vm2724, %v2723
    %s2731 = scalar_lea.vmem [#allocation2], 1165
    %2732 = vst.msk [vmem:[%s2731] ss:$16 sm:$0xc0] %vm2724, %v2723
    %s2733 = scalar_lea.vmem [#allocation3], 320
    %v2734 = vld.sshfl [vmem:[%s2733] sm:$0xff pattern:$0x99999810]
    %2735 = vrot.lane.b32.xlu0 %v2734, 102
    %v2736 = vpop.permute.xlu0 %2735
    %vm2737 = vcmask 15360
    %s2738 = scalar_lea.vmem [#allocation2], 1293
    %2739 = vst.msk [vmem:[%s2738] ss:$16 sm:$0x3] %vm2737, %v2736
    %s2740 = scalar_lea.vmem [#allocation2], 1293
    %2741 = vst.msk [vmem:[%s2740] ss:$16 sm:$0xc] %vm2737, %v2736
    %s2743 = smul.u32 4, 2
    %s2744 = sshllo.u32 0, %s2743
    %s2745 = sshrl.u32 %s2743, 1
    %v2746 = vld [vmem:[#allocation2] sm:%s2744]
    %v2747 = vpack.c.bf16 0.0, %v2746
    %s2748 = sshllo.u32 0, %s2745
    %2749 = vst [vmem:[%s1] sm:%s2748] %v2747
    %s2750 = scalar_lea.vmem [#allocation2], 8
    %v2751 = vld [vmem:[%s2750] sm:%s2744]
    %v2752 = vpack.c.bf16 0.0, %v2751
    %s2753 = sshllo.u32 0, %s2745
    %s2754 = scalar_lea.vmem %s1, 4
    %2755 = vst [vmem:[%s2754] sm:%s2753] %v2752
    %s2756 = scalar_lea.vmem [#allocation2], 16
    %v2757 = vld [vmem:[%s2756] sm:%s2744]
    %v2758 = vpack.c.bf16 0.0, %v2757
    %s2759 = sshllo.u32 0, %s2745
    %s2760 = smul.addr 4, 2
    %s2761 = scalar_lea.vmem %s1, %s2760
    %2762 = vst [vmem:[%s2761] sm:%s2759] %v2758
    %s2763 = scalar_lea.vmem [#allocation2], 24
    %v2764 = vld [vmem:[%s2763] sm:%s2744]
    %v2765 = vpack.c.bf16 0.0, %v2764
    %s2766 = sshllo.u32 0, %s2745
    %s2767 = smul.addr 4, 3
    %s2768 = scalar_lea.vmem %s1, %s2767
    %2769 = vst [vmem:[%s2768] sm:%s2766] %v2765
    %s2770 = scalar_lea.vmem [#allocation2], 32
    %v2771 = vld [vmem:[%s2770] sm:%s2744]
    %v2772 = vpack.c.bf16 0.0, %v2771
    %s2773 = sshllo.u32 0, %s2745
    %s2774 = smul.addr 4, 4
    %s2775 = scalar_lea.vmem %s1, %s2774
    %2776 = vst [vmem:[%s2775] sm:%s2773] %v2772
    %s2777 = scalar_lea.vmem [#allocation2], 40
    %v2778 = vld [vmem:[%s2777] sm:%s2744]
    %v2779 = vpack.c.bf16 0.0, %v2778
    %s2780 = sshllo.u32 0, %s2745
    %s2781 = smul.addr 4, 5
    %s2782 = scalar_lea.vmem %s1, %s2781
    %2783 = vst [vmem:[%s2782] sm:%s2780] %v2779
    %s2784 = scalar_lea.vmem [#allocation2], 48
    %v2785 = vld [vmem:[%s2784] sm:%s2744]
    %v2786 = vpack.c.bf16 0.0, %v2785
    %s2787 = sshllo.u32 0, %s2745
    %s2788 = smul.addr 4, 6
    %s2789 = scalar_lea.vmem %s1, %s2788
    %2790 = vst [vmem:[%s2789] sm:%s2787] %v2786
    %s2791 = scalar_lea.vmem [#allocation2], 56
    %v2792 = vld [vmem:[%s2791] sm:%s2744]
    %v2793 = vpack.c.bf16 0.0, %v2792
    %s2794 = sshllo.u32 0, %s2745
    %s2795 = smul.addr 4, 7
    %s2796 = scalar_lea.vmem %s1, %s2795
    %2797 = vst [vmem:[%s2796] sm:%s2794] %v2793
    %s2798 = scalar_lea.vmem [#allocation2], 64
    %v2799 = vld [vmem:[%s2798] sm:%s2744]
    %v2800 = vpack.c.bf16 0.0, %v2799
    %s2801 = sshllo.u32 0, %s2745
    %s2802 = smul.addr 4, 8
    %s2803 = scalar_lea.vmem %s1, %s2802
    %2804 = vst [vmem:[%s2803] sm:%s2801] %v2800
    %s2805 = scalar_lea.vmem [#allocation2], 72
    %v2806 = vld [vmem:[%s2805] sm:%s2744]
    %v2807 = vpack.c.bf16 0.0, %v2806
    %s2808 = sshllo.u32 0, %s2745
    %s2809 = smul.addr 4, 9
    %s2810 = scalar_lea.vmem %s1, %s2809
    %2811 = vst [vmem:[%s2810] sm:%s2808] %v2807
    %s2812 = scalar_lea.vmem [#allocation2], 80
    %v2813 = vld [vmem:[%s2812] sm:%s2744]
    %v2814 = vpack.c.bf16 0.0, %v2813
    %s2815 = sshllo.u32 0, %s2745
    %s2816 = smul.addr 4, 10
    %s2817 = scalar_lea.vmem %s1, %s2816
    %2818 = vst [vmem:[%s2817] sm:%s2815] %v2814
    %s2819 = scalar_lea.vmem [#allocation2], 88
    %v2820 = vld [vmem:[%s2819] sm:%s2744]
    %v2821 = vpack.c.bf16 0.0, %v2820
    %s2822 = sshllo.u32 0, %s2745
    %s2823 = smul.addr 4, 11
    %s2824 = scalar_lea.vmem %s1, %s2823
    %2825 = vst [vmem:[%s2824] sm:%s2822] %v2821
    %s2826 = scalar_lea.vmem [#allocation2], 96
    %v2827 = vld [vmem:[%s2826] sm:%s2744]
    %v2828 = vpack.c.bf16 0.0, %v2827
    %s2829 = sshllo.u32 0, %s2745
    %s2830 = smul.addr 4, 12
    %s2831 = scalar_lea.vmem %s1, %s2830
    %2832 = vst [vmem:[%s2831] sm:%s2829] %v2828
    %s2833 = scalar_lea.vmem [#allocation2], 104
    %v2834 = vld [vmem:[%s2833] sm:%s2744]
    %v2835 = vpack.c.bf16 0.0, %v2834
    %s2836 = sshllo.u32 0, %s2745
    %s2837 = smul.addr 4, 13
    %s2838 = scalar_lea.vmem %s1, %s2837
    %2839 = vst [vmem:[%s2838] sm:%s2836] %v2835
    %s2840 = scalar_lea.vmem [#allocation2], 112
    %v2841 = vld [vmem:[%s2840] sm:%s2744]
    %v2842 = vpack.c.bf16 0.0, %v2841
    %s2843 = sshllo.u32 0, %s2745
    %s2844 = smul.addr 4, 14
    %s2845 = scalar_lea.vmem %s1, %s2844
    %2846 = vst [vmem:[%s2845] sm:%s2843] %v2842
    %s2847 = scalar_lea.vmem [#allocation2], 120
    %v2848 = vld [vmem:[%s2847] sm:%s2744]
    %v2849 = vpack.c.bf16 0.0, %v2848
    %s2850 = sshllo.u32 0, %s2745
    %s2851 = smul.addr 4, 15
    %s2852 = scalar_lea.vmem %s1, %s2851
    %2853 = vst [vmem:[%s2852] sm:%s2850] %v2849
    %s2854 = scalar_lea.vmem [#allocation2], 128
    %v2855 = vld [vmem:[%s2854] sm:%s2744]
    %v2856 = vpack.c.bf16 0.0, %v2855
    %s2857 = sshllo.u32 0, %s2745
    %s2858 = smul.addr 4, 16
    %s2859 = scalar_lea.vmem %s1, %s2858
    %2860 = vst [vmem:[%s2859] sm:%s2857] %v2856
    %s2861 = scalar_lea.vmem [#allocation2], 136
    %v2862 = vld [vmem:[%s2861] sm:%s2744]
    %v2863 = vpack.c.bf16 0.0, %v2862
    %s2864 = sshllo.u32 0, %s2745
    %s2865 = smul.addr 4, 17
    %s2866 = scalar_lea.vmem %s1, %s2865
    %2867 = vst [vmem:[%s2866] sm:%s2864] %v2863
    %s2868 = scalar_lea.vmem [#allocation2], 144
    %v2869 = vld [vmem:[%s2868] sm:%s2744]
    %v2870 = vpack.c.bf16 0.0, %v2869
    %s2871 = sshllo.u32 0, %s2745
    %s2872 = smul.addr 4, 18
    %s2873 = scalar_lea.vmem %s1, %s2872
    %2874 = vst [vmem:[%s2873] sm:%s2871] %v2870
    %s2875 = scalar_lea.vmem [#allocation2], 152
    %v2876 = vld [vmem:[%s2875] sm:%s2744]
    %v2877 = vpack.c.bf16 0.0, %v2876
    %s2878 = sshllo.u32 0, %s2745
    %s2879 = smul.addr 4, 19
    %s2880 = scalar_lea.vmem %s1, %s2879
    %2881 = vst [vmem:[%s2880] sm:%s2878] %v2877
    %s2882 = scalar_lea.vmem [#allocation2], 160
    %v2883 = vld [vmem:[%s2882] sm:%s2744]
    %v2884 = vpack.c.bf16 0.0, %v2883
    %s2885 = sshllo.u32 0, %s2745
    %s2886 = smul.addr 4, 20
    %s2887 = scalar_lea.vmem %s1, %s2886
    %2888 = vst [vmem:[%s2887] sm:%s2885] %v2884
    %s2889 = scalar_lea.vmem [#allocation2], 168
    %v2890 = vld [vmem:[%s2889] sm:%s2744]
    %v2891 = vpack.c.bf16 0.0, %v2890
    %s2892 = sshllo.u32 0, %s2745
    %s2893 = smul.addr 4, 21
    %s2894 = scalar_lea.vmem %s1, %s2893
    %2895 = vst [vmem:[%s2894] sm:%s2892] %v2891
    %s2896 = scalar_lea.vmem [#allocation2], 176
    %v2897 = vld [vmem:[%s2896] sm:%s2744]
    %v2898 = vpack.c.bf16 0.0, %v2897
    %s2899 = sshllo.u32 0, %s2745
    %s2900 = smul.addr 4, 22
    %s2901 = scalar_lea.vmem %s1, %s2900
    %2902 = vst [vmem:[%s2901] sm:%s2899] %v2898
    %s2903 = scalar_lea.vmem [#allocation2], 184
    %v2904 = vld [vmem:[%s2903] sm:%s2744]
    %v2905 = vpack.c.bf16 0.0, %v2904
    %s2906 = sshllo.u32 0, %s2745
    %s2907 = smul.addr 4, 23
    %s2908 = scalar_lea.vmem %s1, %s2907
    %2909 = vst [vmem:[%s2908] sm:%s2906] %v2905
    %s2910 = scalar_lea.vmem [#allocation2], 192
    %v2911 = vld [vmem:[%s2910] sm:%s2744]
    %v2912 = vpack.c.bf16 0.0, %v2911
    %s2913 = sshllo.u32 0, %s2745
    %s2914 = smul.addr 4, 24
    %s2915 = scalar_lea.vmem %s1, %s2914
    %2916 = vst [vmem:[%s2915] sm:%s2913] %v2912
    %s2917 = scalar_lea.vmem [#allocation2], 200
    %v2918 = vld [vmem:[%s2917] sm:%s2744]
    %v2919 = vpack.c.bf16 0.0, %v2918
    %s2920 = sshllo.u32 0, %s2745
    %s2921 = smul.addr 4, 25
    %s2922 = scalar_lea.vmem %s1, %s2921
    %2923 = vst [vmem:[%s2922] sm:%s2920] %v2919
    %s2924 = scalar_lea.vmem [#allocation2], 208
    %v2925 = vld [vmem:[%s2924] sm:%s2744]
    %v2926 = vpack.c.bf16 0.0, %v2925
    %s2927 = sshllo.u32 0, %s2745
    %s2928 = smul.addr 4, 26
    %s2929 = scalar_lea.vmem %s1, %s2928
    %2930 = vst [vmem:[%s2929] sm:%s2927] %v2926
    %s2931 = scalar_lea.vmem [#allocation2], 216
    %v2932 = vld [vmem:[%s2931] sm:%s2744]
    %v2933 = vpack.c.bf16 0.0, %v2932
    %s2934 = sshllo.u32 0, %s2745
    %s2935 = smul.addr 4, 27
    %s2936 = scalar_lea.vmem %s1, %s2935
    %2937 = vst [vmem:[%s2936] sm:%s2934] %v2933
    %s2938 = scalar_lea.vmem [#allocation2], 224
    %v2939 = vld [vmem:[%s2938] sm:%s2744]
    %v2940 = vpack.c.bf16 0.0, %v2939
    %s2941 = sshllo.u32 0, %s2745
    %s2942 = smul.addr 4, 28
    %s2943 = scalar_lea.vmem %s1, %s2942
    %2944 = vst [vmem:[%s2943] sm:%s2941] %v2940
    %s2945 = scalar_lea.vmem [#allocation2], 232
    %v2946 = vld [vmem:[%s2945] sm:%s2744]
    %v2947 = vpack.c.bf16 0.0, %v2946
    %s2948 = sshllo.u32 0, %s2745
    %s2949 = smul.addr 4, 29
    %s2950 = scalar_lea.vmem %s1, %s2949
    %2951 = vst [vmem:[%s2950] sm:%s2948] %v2947
    %s2952 = scalar_lea.vmem [#allocation2], 240
    %v2953 = vld [vmem:[%s2952] sm:%s2744]
    %v2954 = vpack.c.bf16 0.0, %v2953
    %s2955 = sshllo.u32 0, %s2745
    %s2956 = smul.addr 4, 30
    %s2957 = scalar_lea.vmem %s1, %s2956
    %2958 = vst [vmem:[%s2957] sm:%s2955] %v2954
    %s2959 = scalar_lea.vmem [#allocation2], 248
    %v2960 = vld [vmem:[%s2959] sm:%s2744]
    %v2961 = vpack.c.bf16 0.0, %v2960
    %s2962 = sshllo.u32 0, %s2745
    %s2963 = smul.addr 4, 31
    %s2964 = scalar_lea.vmem %s1, %s2963
    %2965 = vst [vmem:[%s2964] sm:%s2962] %v2961
    %s2966 = scalar_lea.vmem [#allocation2], 256
    %v2967 = vld [vmem:[%s2966] sm:%s2744]
    %v2968 = vpack.c.bf16 0.0, %v2967
    %s2969 = sshllo.u32 0, %s2745
    %s2970 = smul.addr 4, 32
    %s2971 = scalar_lea.vmem %s1, %s2970
    %2972 = vst [vmem:[%s2971] sm:%s2969] %v2968
    %s2973 = scalar_lea.vmem [#allocation2], 264
    %v2974 = vld [vmem:[%s2973] sm:%s2744]
    %v2975 = vpack.c.bf16 0.0, %v2974
    %s2976 = sshllo.u32 0, %s2745
    %s2977 = smul.addr 4, 33
    %s2978 = scalar_lea.vmem %s1, %s2977
    %2979 = vst [vmem:[%s2978] sm:%s2976] %v2975
    %s2980 = scalar_lea.vmem [#allocation2], 272
    %v2981 = vld [vmem:[%s2980] sm:%s2744]
    %v2982 = vpack.c.bf16 0.0, %v2981
    %s2983 = sshllo.u32 0, %s2745
    %s2984 = smul.addr 4, 34
    %s2985 = scalar_lea.vmem %s1, %s2984
    %2986 = vst [vmem:[%s2985] sm:%s2983] %v2982
    %s2987 = scalar_lea.vmem [#allocation2], 280
    %v2988 = vld [vmem:[%s2987] sm:%s2744]
    %v2989 = vpack.c.bf16 0.0, %v2988
    %s2990 = sshllo.u32 0, %s2745
    %s2991 = smul.addr 4, 35
    %s2992 = scalar_lea.vmem %s1, %s2991
    %2993 = vst [vmem:[%s2992] sm:%s2990] %v2989
    %s2994 = scalar_lea.vmem [#allocation2], 288
    %v2995 = vld [vmem:[%s2994] sm:%s2744]
    %v2996 = vpack.c.bf16 0.0, %v2995
    %s2997 = sshllo.u32 0, %s2745
    %s2998 = smul.addr 4, 36
    %s2999 = scalar_lea.vmem %s1, %s2998
    %3000 = vst [vmem:[%s2999] sm:%s2997] %v2996
    %s3001 = scalar_lea.vmem [#allocation2], 296
    %v3002 = vld [vmem:[%s3001] sm:%s2744]
    %v3003 = vpack.c.bf16 0.0, %v3002
    %s3004 = sshllo.u32 0, %s2745
    %s3005 = smul.addr 4, 37
    %s3006 = scalar_lea.vmem %s1, %s3005
    %3007 = vst [vmem:[%s3006] sm:%s3004] %v3003
    %s3008 = scalar_lea.vmem [#allocation2], 304
    %v3009 = vld [vmem:[%s3008] sm:%s2744]
    %v3010 = vpack.c.bf16 0.0, %v3009
    %s3011 = sshllo.u32 0, %s2745
    %s3012 = smul.addr 4, 38
    %s3013 = scalar_lea.vmem %s1, %s3012
    %3014 = vst [vmem:[%s3013] sm:%s3011] %v3010
    %s3015 = scalar_lea.vmem [#allocation2], 312
    %v3016 = vld [vmem:[%s3015] sm:%s2744]
    %v3017 = vpack.c.bf16 0.0, %v3016
    %s3018 = sshllo.u32 0, %s2745
    %s3019 = smul.addr 4, 39
    %s3020 = scalar_lea.vmem %s1, %s3019
    %3021 = vst [vmem:[%s3020] sm:%s3018] %v3017
    %s3022 = scalar_lea.vmem [#allocation2], 320
    %v3023 = vld [vmem:[%s3022] sm:%s2744]
    %v3024 = vpack.c.bf16 0.0, %v3023
    %s3025 = sshllo.u32 0, %s2745
    %s3026 = smul.addr 4, 40
    %s3027 = scalar_lea.vmem %s1, %s3026
    %3028 = vst [vmem:[%s3027] sm:%s3025] %v3024
    %s3029 = scalar_lea.vmem [#allocation2], 328
    %v3030 = vld [vmem:[%s3029] sm:%s2744]
    %v3031 = vpack.c.bf16 0.0, %v3030
    %s3032 = sshllo.u32 0, %s2745
    %s3033 = smul.addr 4, 41
    %s3034 = scalar_lea.vmem %s1, %s3033
    %3035 = vst [vmem:[%s3034] sm:%s3032] %v3031
    %s3036 = scalar_lea.vmem [#allocation2], 336
    %v3037 = vld [vmem:[%s3036] sm:%s2744]
    %v3038 = vpack.c.bf16 0.0, %v3037
    %s3039 = sshllo.u32 0, %s2745
    %s3040 = smul.addr 4, 42
    %s3041 = scalar_lea.vmem %s1, %s3040
    %3042 = vst [vmem:[%s3041] sm:%s3039] %v3038
    %s3043 = scalar_lea.vmem [#allocation2], 344
    %v3044 = vld [vmem:[%s3043] sm:%s2744]
    %v3045 = vpack.c.bf16 0.0, %v3044
    %s3046 = sshllo.u32 0, %s2745
    %s3047 = smul.addr 4, 43
    %s3048 = scalar_lea.vmem %s1, %s3047
    %3049 = vst [vmem:[%s3048] sm:%s3046] %v3045
    %s3050 = scalar_lea.vmem [#allocation2], 352
    %v3051 = vld [vmem:[%s3050] sm:%s2744]
    %v3052 = vpack.c.bf16 0.0, %v3051
    %s3053 = sshllo.u32 0, %s2745
    %s3054 = smul.addr 4, 44
    %s3055 = scalar_lea.vmem %s1, %s3054
    %3056 = vst [vmem:[%s3055] sm:%s3053] %v3052
    %s3057 = scalar_lea.vmem [#allocation2], 360
    %v3058 = vld [vmem:[%s3057] sm:%s2744]
    %v3059 = vpack.c.bf16 0.0, %v3058
    %s3060 = sshllo.u32 0, %s2745
    %s3061 = smul.addr 4, 45
    %s3062 = scalar_lea.vmem %s1, %s3061
    %3063 = vst [vmem:[%s3062] sm:%s3060] %v3059
    %s3064 = scalar_lea.vmem [#allocation2], 368
    %v3065 = vld [vmem:[%s3064] sm:%s2744]
    %v3066 = vpack.c.bf16 0.0, %v3065
    %s3067 = sshllo.u32 0, %s2745
    %s3068 = smul.addr 4, 46
    %s3069 = scalar_lea.vmem %s1, %s3068
    %3070 = vst [vmem:[%s3069] sm:%s3067] %v3066
    %s3071 = scalar_lea.vmem [#allocation2], 376
    %v3072 = vld [vmem:[%s3071] sm:%s2744]
    %v3073 = vpack.c.bf16 0.0, %v3072
    %s3074 = sshllo.u32 0, %s2745
    %s3075 = smul.addr 4, 47
    %s3076 = scalar_lea.vmem %s1, %s3075
    %3077 = vst [vmem:[%s3076] sm:%s3074] %v3073
    %s3078 = scalar_lea.vmem [#allocation2], 384
    %v3079 = vld [vmem:[%s3078] sm:%s2744]
    %v3080 = vpack.c.bf16 0.0, %v3079
    %s3081 = sshllo.u32 0, %s2745
    %s3082 = smul.addr 4, 48
    %s3083 = scalar_lea.vmem %s1, %s3082
    %3084 = vst [vmem:[%s3083] sm:%s3081] %v3080
    %s3085 = scalar_lea.vmem [#allocation2], 392
    %v3086 = vld [vmem:[%s3085] sm:%s2744]
    %v3087 = vpack.c.bf16 0.0, %v3086
    %s3088 = sshllo.u32 0, %s2745
    %s3089 = smul.addr 4, 49
    %s3090 = scalar_lea.vmem %s1, %s3089
    %3091 = vst [vmem:[%s3090] sm:%s3088] %v3087
    %s3092 = scalar_lea.vmem [#allocation2], 400
    %v3093 = vld [vmem:[%s3092] sm:%s2744]
    %v3094 = vpack.c.bf16 0.0, %v3093
    %s3095 = sshllo.u32 0, %s2745
    %s3096 = smul.addr 4, 50
    %s3097 = scalar_lea.vmem %s1, %s3096
    %3098 = vst [vmem:[%s3097] sm:%s3095] %v3094
    %s3099 = scalar_lea.vmem [#allocation2], 408
    %v3100 = vld [vmem:[%s3099] sm:%s2744]
    %v3101 = vpack.c.bf16 0.0, %v3100
    %s3102 = sshllo.u32 0, %s2745
    %s3103 = smul.addr 4, 51
    %s3104 = scalar_lea.vmem %s1, %s3103
    %3105 = vst [vmem:[%s3104] sm:%s3102] %v3101
    %s3106 = scalar_lea.vmem [#allocation2], 416
    %v3107 = vld [vmem:[%s3106] sm:%s2744]
    %v3108 = vpack.c.bf16 0.0, %v3107
    %s3109 = sshllo.u32 0, %s2745
    %s3110 = smul.addr 4, 52
    %s3111 = scalar_lea.vmem %s1, %s3110
    %3112 = vst [vmem:[%s3111] sm:%s3109] %v3108
    %s3113 = scalar_lea.vmem [#allocation2], 424
    %v3114 = vld [vmem:[%s3113] sm:%s2744]
    %v3115 = vpack.c.bf16 0.0, %v3114
    %s3116 = sshllo.u32 0, %s2745
    %s3117 = smul.addr 4, 53
    %s3118 = scalar_lea.vmem %s1, %s3117
    %3119 = vst [vmem:[%s3118] sm:%s3116] %v3115
    %s3120 = scalar_lea.vmem [#allocation2], 432
    %v3121 = vld [vmem:[%s3120] sm:%s2744]
    %v3122 = vpack.c.bf16 0.0, %v3121
    %s3123 = sshllo.u32 0, %s2745
    %s3124 = smul.addr 4, 54
    %s3125 = scalar_lea.vmem %s1, %s3124
    %3126 = vst [vmem:[%s3125] sm:%s3123] %v3122
    %s3127 = scalar_lea.vmem [#allocation2], 440
    %v3128 = vld [vmem:[%s3127] sm:%s2744]
    %v3129 = vpack.c.bf16 0.0, %v3128
    %s3130 = sshllo.u32 0, %s2745
    %s3131 = smul.addr 4, 55
    %s3132 = scalar_lea.vmem %s1, %s3131
    %3133 = vst [vmem:[%s3132] sm:%s3130] %v3129
    %s3134 = scalar_lea.vmem [#allocation2], 448
    %v3135 = vld [vmem:[%s3134] sm:%s2744]
    %v3136 = vpack.c.bf16 0.0, %v3135
    %s3137 = sshllo.u32 0, %s2745
    %s3138 = smul.addr 4, 56
    %s3139 = scalar_lea.vmem %s1, %s3138
    %3140 = vst [vmem:[%s3139] sm:%s3137] %v3136
    %s3141 = scalar_lea.vmem [#allocation2], 456
    %v3142 = vld [vmem:[%s3141] sm:%s2744]
    %v3143 = vpack.c.bf16 0.0, %v3142
    %s3144 = sshllo.u32 0, %s2745
    %s3145 = smul.addr 4, 57
    %s3146 = scalar_lea.vmem %s1, %s3145
    %3147 = vst [vmem:[%s3146] sm:%s3144] %v3143
    %s3148 = scalar_lea.vmem [#allocation2], 464
    %v3149 = vld [vmem:[%s3148] sm:%s2744]
    %v3150 = vpack.c.bf16 0.0, %v3149
    %s3151 = sshllo.u32 0, %s2745
    %s3152 = smul.addr 4, 58
    %s3153 = scalar_lea.vmem %s1, %s3152
    %3154 = vst [vmem:[%s3153] sm:%s3151] %v3150
    %s3155 = scalar_lea.vmem [#allocation2], 472
    %v3156 = vld [vmem:[%s3155] sm:%s2744]
    %v3157 = vpack.c.bf16 0.0, %v3156
    %s3158 = sshllo.u32 0, %s2745
    %s3159 = smul.addr 4, 59
    %s3160 = scalar_lea.vmem %s1, %s3159
    %3161 = vst [vmem:[%s3160] sm:%s3158] %v3157
    %s3162 = scalar_lea.vmem [#allocation2], 480
    %v3163 = vld [vmem:[%s3162] sm:%s2744]
    %v3164 = vpack.c.bf16 0.0, %v3163
    %s3165 = sshllo.u32 0, %s2745
    %s3166 = smul.addr 4, 60
    %s3167 = scalar_lea.vmem %s1, %s3166
    %3168 = vst [vmem:[%s3167] sm:%s3165] %v3164
    %s3169 = scalar_lea.vmem [#allocation2], 488
    %v3170 = vld [vmem:[%s3169] sm:%s2744]
    %v3171 = vpack.c.bf16 0.0, %v3170
    %s3172 = sshllo.u32 0, %s2745
    %s3173 = smul.addr 4, 61
    %s3174 = scalar_lea.vmem %s1, %s3173
    %3175 = vst [vmem:[%s3174] sm:%s3172] %v3171
    %s3176 = scalar_lea.vmem [#allocation2], 496
    %v3177 = vld [vmem:[%s3176] sm:%s2744]
    %v3178 = vpack.c.bf16 0.0, %v3177
    %s3179 = sshllo.u32 0, %s2745
    %s3180 = smul.addr 4, 62
    %s3181 = scalar_lea.vmem %s1, %s3180
    %3182 = vst [vmem:[%s3181] sm:%s3179] %v3178
    %s3183 = scalar_lea.vmem [#allocation2], 504
    %v3184 = vld [vmem:[%s3183] sm:%s2744]
    %v3185 = vpack.c.bf16 0.0, %v3184
    %s3186 = sshllo.u32 0, %s2745
    %s3187 = smul.addr 4, 63
    %s3188 = scalar_lea.vmem %s1, %s3187
    %3189 = vst [vmem:[%s3188] sm:%s3186] %v3185
    %s3190 = scalar_lea.vmem [#allocation2], 512
    %v3191 = vld [vmem:[%s3190] sm:%s2744]
    %v3192 = vpack.c.bf16 0.0, %v3191
    %s3193 = sshllo.u32 0, %s2745
    %s3194 = smul.addr 4, 64
    %s3195 = scalar_lea.vmem %s1, %s3194
    %3196 = vst [vmem:[%s3195] sm:%s3193] %v3192
    %s3197 = scalar_lea.vmem [#allocation2], 520
    %v3198 = vld [vmem:[%s3197] sm:%s2744]
    %v3199 = vpack.c.bf16 0.0, %v3198
    %s3200 = sshllo.u32 0, %s2745
    %s3201 = smul.addr 4, 65
    %s3202 = scalar_lea.vmem %s1, %s3201
    %3203 = vst [vmem:[%s3202] sm:%s3200] %v3199
    %s3204 = scalar_lea.vmem [#allocation2], 528
    %v3205 = vld [vmem:[%s3204] sm:%s2744]
    %v3206 = vpack.c.bf16 0.0, %v3205
    %s3207 = sshllo.u32 0, %s2745
    %s3208 = smul.addr 4, 66
    %s3209 = scalar_lea.vmem %s1, %s3208
    %3210 = vst [vmem:[%s3209] sm:%s3207] %v3206
    %s3211 = scalar_lea.vmem [#allocation2], 536
    %v3212 = vld [vmem:[%s3211] sm:%s2744]
    %v3213 = vpack.c.bf16 0.0, %v3212
    %s3214 = sshllo.u32 0, %s2745
    %s3215 = smul.addr 4, 67
    %s3216 = scalar_lea.vmem %s1, %s3215
    %3217 = vst [vmem:[%s3216] sm:%s3214] %v3213
    %s3218 = scalar_lea.vmem [#allocation2], 544
    %v3219 = vld [vmem:[%s3218] sm:%s2744]
    %v3220 = vpack.c.bf16 0.0, %v3219
    %s3221 = sshllo.u32 0, %s2745
    %s3222 = smul.addr 4, 68
    %s3223 = scalar_lea.vmem %s1, %s3222
    %3224 = vst [vmem:[%s3223] sm:%s3221] %v3220
    %s3225 = scalar_lea.vmem [#allocation2], 552
    %v3226 = vld [vmem:[%s3225] sm:%s2744]
    %v3227 = vpack.c.bf16 0.0, %v3226
    %s3228 = sshllo.u32 0, %s2745
    %s3229 = smul.addr 4, 69
    %s3230 = scalar_lea.vmem %s1, %s3229
    %3231 = vst [vmem:[%s3230] sm:%s3228] %v3227
    %s3232 = scalar_lea.vmem [#allocation2], 560
    %v3233 = vld [vmem:[%s3232] sm:%s2744]
    %v3234 = vpack.c.bf16 0.0, %v3233
    %s3235 = sshllo.u32 0, %s2745
    %s3236 = smul.addr 4, 70
    %s3237 = scalar_lea.vmem %s1, %s3236
    %3238 = vst [vmem:[%s3237] sm:%s3235] %v3234
    %s3239 = scalar_lea.vmem [#allocation2], 568
    %v3240 = vld [vmem:[%s3239] sm:%s2744]
    %v3241 = vpack.c.bf16 0.0, %v3240
    %s3242 = sshllo.u32 0, %s2745
    %s3243 = smul.addr 4, 71
    %s3244 = scalar_lea.vmem %s1, %s3243
    %3245 = vst [vmem:[%s3244] sm:%s3242] %v3241
    %s3246 = scalar_lea.vmem [#allocation2], 576
    %v3247 = vld [vmem:[%s3246] sm:%s2744]
    %v3248 = vpack.c.bf16 0.0, %v3247
    %s3249 = sshllo.u32 0, %s2745
    %s3250 = smul.addr 4, 72
    %s3251 = scalar_lea.vmem %s1, %s3250
    %3252 = vst [vmem:[%s3251] sm:%s3249] %v3248
    %s3253 = scalar_lea.vmem [#allocation2], 584
    %v3254 = vld [vmem:[%s3253] sm:%s2744]
    %v3255 = vpack.c.bf16 0.0, %v3254
    %s3256 = sshllo.u32 0, %s2745
    %s3257 = smul.addr 4, 73
    %s3258 = scalar_lea.vmem %s1, %s3257
    %3259 = vst [vmem:[%s3258] sm:%s3256] %v3255
    %s3260 = scalar_lea.vmem [#allocation2], 592
    %v3261 = vld [vmem:[%s3260] sm:%s2744]
    %v3262 = vpack.c.bf16 0.0, %v3261
    %s3263 = sshllo.u32 0, %s2745
    %s3264 = smul.addr 4, 74
    %s3265 = scalar_lea.vmem %s1, %s3264
    %3266 = vst [vmem:[%s3265] sm:%s3263] %v3262
    %s3267 = scalar_lea.vmem [#allocation2], 600
    %v3268 = vld [vmem:[%s3267] sm:%s2744]
    %v3269 = vpack.c.bf16 0.0, %v3268
    %s3270 = sshllo.u32 0, %s2745
    %s3271 = smul.addr 4, 75
    %s3272 = scalar_lea.vmem %s1, %s3271
    %3273 = vst [vmem:[%s3272] sm:%s3270] %v3269
    %s3274 = scalar_lea.vmem [#allocation2], 608
    %v3275 = vld [vmem:[%s3274] sm:%s2744]
    %v3276 = vpack.c.bf16 0.0, %v3275
    %s3277 = sshllo.u32 0, %s2745
    %s3278 = smul.addr 4, 76
    %s3279 = scalar_lea.vmem %s1, %s3278
    %3280 = vst [vmem:[%s3279] sm:%s3277] %v3276
    %s3281 = scalar_lea.vmem [#allocation2], 616
    %v3282 = vld [vmem:[%s3281] sm:%s2744]
    %v3283 = vpack.c.bf16 0.0, %v3282
    %s3284 = sshllo.u32 0, %s2745
    %s3285 = smul.addr 4, 77
    %s3286 = scalar_lea.vmem %s1, %s3285
    %3287 = vst [vmem:[%s3286] sm:%s3284] %v3283
    %s3288 = scalar_lea.vmem [#allocation2], 624
    %v3289 = vld [vmem:[%s3288] sm:%s2744]
    %v3290 = vpack.c.bf16 0.0, %v3289
    %s3291 = sshllo.u32 0, %s2745
    %s3292 = smul.addr 4, 78
    %s3293 = scalar_lea.vmem %s1, %s3292
    %3294 = vst [vmem:[%s3293] sm:%s3291] %v3290
    %s3295 = scalar_lea.vmem [#allocation2], 632
    %v3296 = vld [vmem:[%s3295] sm:%s2744]
    %v3297 = vpack.c.bf16 0.0, %v3296
    %s3298 = sshllo.u32 0, %s2745
    %s3299 = smul.addr 4, 79
    %s3300 = scalar_lea.vmem %s1, %s3299
    %3301 = vst [vmem:[%s3300] sm:%s3298] %v3297
    %s3302 = scalar_lea.vmem [#allocation2], 640
    %v3303 = vld [vmem:[%s3302] sm:%s2744]
    %v3304 = vpack.c.bf16 0.0, %v3303
    %s3305 = sshllo.u32 0, %s2745
    %s3306 = smul.addr 4, 80
    %s3307 = scalar_lea.vmem %s1, %s3306
    %3308 = vst [vmem:[%s3307] sm:%s3305] %v3304
    %s3309 = scalar_lea.vmem [#allocation2], 648
    %v3310 = vld [vmem:[%s3309] sm:%s2744]
    %v3311 = vpack.c.bf16 0.0, %v3310
    %s3312 = sshllo.u32 0, %s2745
    %s3313 = smul.addr 4, 81
    %s3314 = scalar_lea.vmem %s1, %s3313
    %3315 = vst [vmem:[%s3314] sm:%s3312] %v3311
    %s3316 = scalar_lea.vmem [#allocation2], 656
    %v3317 = vld [vmem:[%s3316] sm:%s2744]
    %v3318 = vpack.c.bf16 0.0, %v3317
    %s3319 = sshllo.u32 0, %s2745
    %s3320 = smul.addr 4, 82
    %s3321 = scalar_lea.vmem %s1, %s3320
    %3322 = vst [vmem:[%s3321] sm:%s3319] %v3318
    %s3323 = scalar_lea.vmem [#allocation2], 664
    %v3324 = vld [vmem:[%s3323] sm:%s2744]
    %v3325 = vpack.c.bf16 0.0, %v3324
    %s3326 = sshllo.u32 0, %s2745
    %s3327 = smul.addr 4, 83
    %s3328 = scalar_lea.vmem %s1, %s3327
    %3329 = vst [vmem:[%s3328] sm:%s3326] %v3325
    %s3330 = scalar_lea.vmem [#allocation2], 672
    %v3331 = vld [vmem:[%s3330] sm:%s2744]
    %v3332 = vpack.c.bf16 0.0, %v3331
    %s3333 = sshllo.u32 0, %s2745
    %s3334 = smul.addr 4, 84
    %s3335 = scalar_lea.vmem %s1, %s3334
    %3336 = vst [vmem:[%s3335] sm:%s3333] %v3332
    %s3337 = scalar_lea.vmem [#allocation2], 680
    %v3338 = vld [vmem:[%s3337] sm:%s2744]
    %v3339 = vpack.c.bf16 0.0, %v3338
    %s3340 = sshllo.u32 0, %s2745
    %s3341 = smul.addr 4, 85
    %s3342 = scalar_lea.vmem %s1, %s3341
    %3343 = vst [vmem:[%s3342] sm:%s3340] %v3339
    %s3344 = scalar_lea.vmem [#allocation2], 688
    %v3345 = vld [vmem:[%s3344] sm:%s2744]
    %v3346 = vpack.c.bf16 0.0, %v3345
    %s3347 = sshllo.u32 0, %s2745
    %s3348 = smul.addr 4, 86
    %s3349 = scalar_lea.vmem %s1, %s3348
    %3350 = vst [vmem:[%s3349] sm:%s3347] %v3346
    %s3351 = scalar_lea.vmem [#allocation2], 696
    %v3352 = vld [vmem:[%s3351] sm:%s2744]
    %v3353 = vpack.c.bf16 0.0, %v3352
    %s3354 = sshllo.u32 0, %s2745
    %s3355 = smul.addr 4, 87
    %s3356 = scalar_lea.vmem %s1, %s3355
    %3357 = vst [vmem:[%s3356] sm:%s3354] %v3353
    %s3358 = scalar_lea.vmem [#allocation2], 704
    %v3359 = vld [vmem:[%s3358] sm:%s2744]
    %v3360 = vpack.c.bf16 0.0, %v3359
    %s3361 = sshllo.u32 0, %s2745
    %s3362 = smul.addr 4, 88
    %s3363 = scalar_lea.vmem %s1, %s3362
    %3364 = vst [vmem:[%s3363] sm:%s3361] %v3360
    %s3365 = scalar_lea.vmem [#allocation2], 712
    %v3366 = vld [vmem:[%s3365] sm:%s2744]
    %v3367 = vpack.c.bf16 0.0, %v3366
    %s3368 = sshllo.u32 0, %s2745
    %s3369 = smul.addr 4, 89
    %s3370 = scalar_lea.vmem %s1, %s3369
    %3371 = vst [vmem:[%s3370] sm:%s3368] %v3367
    %s3372 = scalar_lea.vmem [#allocation2], 720
    %v3373 = vld [vmem:[%s3372] sm:%s2744]
    %v3374 = vpack.c.bf16 0.0, %v3373
    %s3375 = sshllo.u32 0, %s2745
    %s3376 = smul.addr 4, 90
    %s3377 = scalar_lea.vmem %s1, %s3376
    %3378 = vst [vmem:[%s3377] sm:%s3375] %v3374
    %s3379 = scalar_lea.vmem [#allocation2], 728
    %v3380 = vld [vmem:[%s3379] sm:%s2744]
    %v3381 = vpack.c.bf16 0.0, %v3380
    %s3382 = sshllo.u32 0, %s2745
    %s3383 = smul.addr 4, 91
    %s3384 = scalar_lea.vmem %s1, %s3383
    %3385 = vst [vmem:[%s3384] sm:%s3382] %v3381
    %s3386 = scalar_lea.vmem [#allocation2], 736
    %v3387 = vld [vmem:[%s3386] sm:%s2744]
    %v3388 = vpack.c.bf16 0.0, %v3387
    %s3389 = sshllo.u32 0, %s2745
    %s3390 = smul.addr 4, 92
    %s3391 = scalar_lea.vmem %s1, %s3390
    %3392 = vst [vmem:[%s3391] sm:%s3389] %v3388
    %s3393 = scalar_lea.vmem [#allocation2], 744
    %v3394 = vld [vmem:[%s3393] sm:%s2744]
    %v3395 = vpack.c.bf16 0.0, %v3394
    %s3396 = sshllo.u32 0, %s2745
    %s3397 = smul.addr 4, 93
    %s3398 = scalar_lea.vmem %s1, %s3397
    %3399 = vst [vmem:[%s3398] sm:%s3396] %v3395
    %s3400 = scalar_lea.vmem [#allocation2], 752
    %v3401 = vld [vmem:[%s3400] sm:%s2744]
    %v3402 = vpack.c.bf16 0.0, %v3401
    %s3403 = sshllo.u32 0, %s2745
    %s3404 = smul.addr 4, 94
    %s3405 = scalar_lea.vmem %s1, %s3404
    %3406 = vst [vmem:[%s3405] sm:%s3403] %v3402
    %s3407 = scalar_lea.vmem [#allocation2], 760
    %v3408 = vld [vmem:[%s3407] sm:%s2744]
    %v3409 = vpack.c.bf16 0.0, %v3408
    %s3410 = sshllo.u32 0, %s2745
    %s3411 = smul.addr 4, 95
    %s3412 = scalar_lea.vmem %s1, %s3411
    %3413 = vst [vmem:[%s3412] sm:%s3410] %v3409
    %s3414 = scalar_lea.vmem [#allocation2], 768
    %v3415 = vld [vmem:[%s3414] sm:%s2744]
    %v3416 = vpack.c.bf16 0.0, %v3415
    %s3417 = sshllo.u32 0, %s2745
    %s3418 = smul.addr 4, 96
    %s3419 = scalar_lea.vmem %s1, %s3418
    %3420 = vst [vmem:[%s3419] sm:%s3417] %v3416
    %s3421 = scalar_lea.vmem [#allocation2], 776
    %v3422 = vld [vmem:[%s3421] sm:%s2744]
    %v3423 = vpack.c.bf16 0.0, %v3422
    %s3424 = sshllo.u32 0, %s2745
    %s3425 = smul.addr 4, 97
    %s3426 = scalar_lea.vmem %s1, %s3425
    %3427 = vst [vmem:[%s3426] sm:%s3424] %v3423
    %s3428 = scalar_lea.vmem [#allocation2], 784
    %v3429 = vld [vmem:[%s3428] sm:%s2744]
    %v3430 = vpack.c.bf16 0.0, %v3429
    %s3431 = sshllo.u32 0, %s2745
    %s3432 = smul.addr 4, 98
    %s3433 = scalar_lea.vmem %s1, %s3432
    %3434 = vst [vmem:[%s3433] sm:%s3431] %v3430
    %s3435 = scalar_lea.vmem [#allocation2], 792
    %v3436 = vld [vmem:[%s3435] sm:%s2744]
    %v3437 = vpack.c.bf16 0.0, %v3436
    %s3438 = sshllo.u32 0, %s2745
    %s3439 = smul.addr 4, 99
    %s3440 = scalar_lea.vmem %s1, %s3439
    %3441 = vst [vmem:[%s3440] sm:%s3438] %v3437
    %s3442 = scalar_lea.vmem [#allocation2], 800
    %v3443 = vld [vmem:[%s3442] sm:%s2744]
    %v3444 = vpack.c.bf16 0.0, %v3443
    %s3445 = sshllo.u32 0, %s2745
    %s3446 = smul.addr 4, 100
    %s3447 = scalar_lea.vmem %s1, %s3446
    %3448 = vst [vmem:[%s3447] sm:%s3445] %v3444
    %s3449 = scalar_lea.vmem [#allocation2], 808
    %v3450 = vld [vmem:[%s3449] sm:%s2744]
    %v3451 = vpack.c.bf16 0.0, %v3450
    %s3452 = sshllo.u32 0, %s2745
    %s3453 = smul.addr 4, 101
    %s3454 = scalar_lea.vmem %s1, %s3453
    %3455 = vst [vmem:[%s3454] sm:%s3452] %v3451
    %s3456 = scalar_lea.vmem [#allocation2], 816
    %v3457 = vld [vmem:[%s3456] sm:%s2744]
    %v3458 = vpack.c.bf16 0.0, %v3457
    %s3459 = sshllo.u32 0, %s2745
    %s3460 = smul.addr 4, 102
    %s3461 = scalar_lea.vmem %s1, %s3460
    %3462 = vst [vmem:[%s3461] sm:%s3459] %v3458
    %s3463 = scalar_lea.vmem [#allocation2], 824
    %v3464 = vld [vmem:[%s3463] sm:%s2744]
    %v3465 = vpack.c.bf16 0.0, %v3464
    %s3466 = sshllo.u32 0, %s2745
    %s3467 = smul.addr 4, 103
    %s3468 = scalar_lea.vmem %s1, %s3467
    %3469 = vst [vmem:[%s3468] sm:%s3466] %v3465
    %s3470 = scalar_lea.vmem [#allocation2], 832
    %v3471 = vld [vmem:[%s3470] sm:%s2744]
    %v3472 = vpack.c.bf16 0.0, %v3471
    %s3473 = sshllo.u32 0, %s2745
    %s3474 = smul.addr 4, 104
    %s3475 = scalar_lea.vmem %s1, %s3474
    %3476 = vst [vmem:[%s3475] sm:%s3473] %v3472
    %s3477 = scalar_lea.vmem [#allocation2], 840
    %v3478 = vld [vmem:[%s3477] sm:%s2744]
    %v3479 = vpack.c.bf16 0.0, %v3478
    %s3480 = sshllo.u32 0, %s2745
    %s3481 = smul.addr 4, 105
    %s3482 = scalar_lea.vmem %s1, %s3481
    %3483 = vst [vmem:[%s3482] sm:%s3480] %v3479
    %s3484 = scalar_lea.vmem [#allocation2], 848
    %v3485 = vld [vmem:[%s3484] sm:%s2744]
    %v3486 = vpack.c.bf16 0.0, %v3485
    %s3487 = sshllo.u32 0, %s2745
    %s3488 = smul.addr 4, 106
    %s3489 = scalar_lea.vmem %s1, %s3488
    %3490 = vst [vmem:[%s3489] sm:%s3487] %v3486
    %s3491 = scalar_lea.vmem [#allocation2], 856
    %v3492 = vld [vmem:[%s3491] sm:%s2744]
    %v3493 = vpack.c.bf16 0.0, %v3492
    %s3494 = sshllo.u32 0, %s2745
    %s3495 = smul.addr 4, 107
    %s3496 = scalar_lea.vmem %s1, %s3495
    %3497 = vst [vmem:[%s3496] sm:%s3494] %v3493
    %s3498 = scalar_lea.vmem [#allocation2], 864
    %v3499 = vld [vmem:[%s3498] sm:%s2744]
    %v3500 = vpack.c.bf16 0.0, %v3499
    %s3501 = sshllo.u32 0, %s2745
    %s3502 = smul.addr 4, 108
    %s3503 = scalar_lea.vmem %s1, %s3502
    %3504 = vst [vmem:[%s3503] sm:%s3501] %v3500
    %s3505 = scalar_lea.vmem [#allocation2], 872
    %v3506 = vld [vmem:[%s3505] sm:%s2744]
    %v3507 = vpack.c.bf16 0.0, %v3506
    %s3508 = sshllo.u32 0, %s2745
    %s3509 = smul.addr 4, 109
    %s3510 = scalar_lea.vmem %s1, %s3509
    %3511 = vst [vmem:[%s3510] sm:%s3508] %v3507
    %s3512 = scalar_lea.vmem [#allocation2], 880
    %v3513 = vld [vmem:[%s3512] sm:%s2744]
    %v3514 = vpack.c.bf16 0.0, %v3513
    %s3515 = sshllo.u32 0, %s2745
    %s3516 = smul.addr 4, 110
    %s3517 = scalar_lea.vmem %s1, %s3516
    %3518 = vst [vmem:[%s3517] sm:%s3515] %v3514
    %s3519 = scalar_lea.vmem [#allocation2], 888
    %v3520 = vld [vmem:[%s3519] sm:%s2744]
    %v3521 = vpack.c.bf16 0.0, %v3520
    %s3522 = sshllo.u32 0, %s2745
    %s3523 = smul.addr 4, 111
    %s3524 = scalar_lea.vmem %s1, %s3523
    %3525 = vst [vmem:[%s3524] sm:%s3522] %v3521
    %s3526 = scalar_lea.vmem [#allocation2], 896
    %v3527 = vld [vmem:[%s3526] sm:%s2744]
    %v3528 = vpack.c.bf16 0.0, %v3527
    %s3529 = sshllo.u32 0, %s2745
    %s3530 = smul.addr 4, 112
    %s3531 = scalar_lea.vmem %s1, %s3530
    %3532 = vst [vmem:[%s3531] sm:%s3529] %v3528
    %s3533 = scalar_lea.vmem [#allocation2], 904
    %v3534 = vld [vmem:[%s3533] sm:%s2744]
    %v3535 = vpack.c.bf16 0.0, %v3534
    %s3536 = sshllo.u32 0, %s2745
    %s3537 = smul.addr 4, 113
    %s3538 = scalar_lea.vmem %s1, %s3537
    %3539 = vst [vmem:[%s3538] sm:%s3536] %v3535
    %s3540 = scalar_lea.vmem [#allocation2], 912
    %v3541 = vld [vmem:[%s3540] sm:%s2744]
    %v3542 = vpack.c.bf16 0.0, %v3541
    %s3543 = sshllo.u32 0, %s2745
    %s3544 = smul.addr 4, 114
    %s3545 = scalar_lea.vmem %s1, %s3544
    %3546 = vst [vmem:[%s3545] sm:%s3543] %v3542
    %s3547 = scalar_lea.vmem [#allocation2], 920
    %v3548 = vld [vmem:[%s3547] sm:%s2744]
    %v3549 = vpack.c.bf16 0.0, %v3548
    %s3550 = sshllo.u32 0, %s2745
    %s3551 = smul.addr 4, 115
    %s3552 = scalar_lea.vmem %s1, %s3551
    %3553 = vst [vmem:[%s3552] sm:%s3550] %v3549
    %s3554 = scalar_lea.vmem [#allocation2], 928
    %v3555 = vld [vmem:[%s3554] sm:%s2744]
    %v3556 = vpack.c.bf16 0.0, %v3555
    %s3557 = sshllo.u32 0, %s2745
    %s3558 = smul.addr 4, 116
    %s3559 = scalar_lea.vmem %s1, %s3558
    %3560 = vst [vmem:[%s3559] sm:%s3557] %v3556
    %s3561 = scalar_lea.vmem [#allocation2], 936
    %v3562 = vld [vmem:[%s3561] sm:%s2744]
    %v3563 = vpack.c.bf16 0.0, %v3562
    %s3564 = sshllo.u32 0, %s2745
    %s3565 = smul.addr 4, 117
    %s3566 = scalar_lea.vmem %s1, %s3565
    %3567 = vst [vmem:[%s3566] sm:%s3564] %v3563
    %s3568 = scalar_lea.vmem [#allocation2], 944
    %v3569 = vld [vmem:[%s3568] sm:%s2744]
    %v3570 = vpack.c.bf16 0.0, %v3569
    %s3571 = sshllo.u32 0, %s2745
    %s3572 = smul.addr 4, 118
    %s3573 = scalar_lea.vmem %s1, %s3572
    %3574 = vst [vmem:[%s3573] sm:%s3571] %v3570
    %s3575 = scalar_lea.vmem [#allocation2], 952
    %v3576 = vld [vmem:[%s3575] sm:%s2744]
    %v3577 = vpack.c.bf16 0.0, %v3576
    %s3578 = sshllo.u32 0, %s2745
    %s3579 = smul.addr 4, 119
    %s3580 = scalar_lea.vmem %s1, %s3579
    %3581 = vst [vmem:[%s3580] sm:%s3578] %v3577
    %s3582 = scalar_lea.vmem [#allocation2], 960
    %v3583 = vld [vmem:[%s3582] sm:%s2744]
    %v3584 = vpack.c.bf16 0.0, %v3583
    %s3585 = sshllo.u32 0, %s2745
    %s3586 = smul.addr 4, 120
    %s3587 = scalar_lea.vmem %s1, %s3586
    %3588 = vst [vmem:[%s3587] sm:%s3585] %v3584
    %s3589 = scalar_lea.vmem [#allocation2], 968
    %v3590 = vld [vmem:[%s3589] sm:%s2744]
    %v3591 = vpack.c.bf16 0.0, %v3590
    %s3592 = sshllo.u32 0, %s2745
    %s3593 = smul.addr 4, 121
    %s3594 = scalar_lea.vmem %s1, %s3593
    %3595 = vst [vmem:[%s3594] sm:%s3592] %v3591
    %s3596 = scalar_lea.vmem [#allocation2], 976
    %v3597 = vld [vmem:[%s3596] sm:%s2744]
    %v3598 = vpack.c.bf16 0.0, %v3597
    %s3599 = sshllo.u32 0, %s2745
    %s3600 = smul.addr 4, 122
    %s3601 = scalar_lea.vmem %s1, %s3600
    %3602 = vst [vmem:[%s3601] sm:%s3599] %v3598
    %s3603 = scalar_lea.vmem [#allocation2], 984
    %v3604 = vld [vmem:[%s3603] sm:%s2744]
    %v3605 = vpack.c.bf16 0.0, %v3604
    %s3606 = sshllo.u32 0, %s2745
    %s3607 = smul.addr 4, 123
    %s3608 = scalar_lea.vmem %s1, %s3607
    %3609 = vst [vmem:[%s3608] sm:%s3606] %v3605
    %s3610 = scalar_lea.vmem [#allocation2], 992
    %v3611 = vld [vmem:[%s3610] sm:%s2744]
    %v3612 = vpack.c.bf16 0.0, %v3611
    %s3613 = sshllo.u32 0, %s2745
    %s3614 = smul.addr 4, 124
    %s3615 = scalar_lea.vmem %s1, %s3614
    %3616 = vst [vmem:[%s3615] sm:%s3613] %v3612
    %s3617 = scalar_lea.vmem [#allocation2], 1000
    %v3618 = vld [vmem:[%s3617] sm:%s2744]
    %v3619 = vpack.c.bf16 0.0, %v3618
    %s3620 = sshllo.u32 0, %s2745
    %s3621 = smul.addr 4, 125
    %s3622 = scalar_lea.vmem %s1, %s3621
    %3623 = vst [vmem:[%s3622] sm:%s3620] %v3619
    %s3624 = scalar_lea.vmem [#allocation2], 1008
    %v3625 = vld [vmem:[%s3624] sm:%s2744]
    %v3626 = vpack.c.bf16 0.0, %v3625
    %s3627 = sshllo.u32 0, %s2745
    %s3628 = smul.addr 4, 126
    %s3629 = scalar_lea.vmem %s1, %s3628
    %3630 = vst [vmem:[%s3629] sm:%s3627] %v3626
    %s3631 = scalar_lea.vmem [#allocation2], 1016
    %v3632 = vld [vmem:[%s3631] sm:%s2744]
    %v3633 = vpack.c.bf16 0.0, %v3632
    %s3634 = sshllo.u32 0, %s2745
    %s3635 = smul.addr 4, 127
    %s3636 = scalar_lea.vmem %s1, %s3635
    %3637 = vst [vmem:[%s3636] sm:%s3634] %v3633
    %s3638 = scalar_lea.vmem [#allocation2], 1024
    %v3639 = vld [vmem:[%s3638] sm:%s2744]
    %v3640 = vpack.c.bf16 0.0, %v3639
    %s3641 = sshllo.u32 0, %s2745
    %s3642 = smul.addr 4, 128
    %s3643 = scalar_lea.vmem %s1, %s3642
    %3644 = vst [vmem:[%s3643] sm:%s3641] %v3640
    %s3645 = scalar_lea.vmem [#allocation2], 1032
    %v3646 = vld [vmem:[%s3645] sm:%s2744]
    %v3647 = vpack.c.bf16 0.0, %v3646
    %s3648 = sshllo.u32 0, %s2745
    %s3649 = smul.addr 4, 129
    %s3650 = scalar_lea.vmem %s1, %s3649
    %3651 = vst [vmem:[%s3650] sm:%s3648] %v3647
    %s3652 = scalar_lea.vmem [#allocation2], 1040
    %v3653 = vld [vmem:[%s3652] sm:%s2744]
    %v3654 = vpack.c.bf16 0.0, %v3653
    %s3655 = sshllo.u32 0, %s2745
    %s3656 = smul.addr 4, 130
    %s3657 = scalar_lea.vmem %s1, %s3656
    %3658 = vst [vmem:[%s3657] sm:%s3655] %v3654
    %s3659 = scalar_lea.vmem [#allocation2], 1048
    %v3660 = vld [vmem:[%s3659] sm:%s2744]
    %v3661 = vpack.c.bf16 0.0, %v3660
    %s3662 = sshllo.u32 0, %s2745
    %s3663 = smul.addr 4, 131
    %s3664 = scalar_lea.vmem %s1, %s3663
    %3665 = vst [vmem:[%s3664] sm:%s3662] %v3661
    %s3666 = scalar_lea.vmem [#allocation2], 1056
    %v3667 = vld [vmem:[%s3666] sm:%s2744]
    %v3668 = vpack.c.bf16 0.0, %v3667
    %s3669 = sshllo.u32 0, %s2745
    %s3670 = smul.addr 4, 132
    %s3671 = scalar_lea.vmem %s1, %s3670
    %3672 = vst [vmem:[%s3671] sm:%s3669] %v3668
    %s3673 = scalar_lea.vmem [#allocation2], 1064
    %v3674 = vld [vmem:[%s3673] sm:%s2744]
    %v3675 = vpack.c.bf16 0.0, %v3674
    %s3676 = sshllo.u32 0, %s2745
    %s3677 = smul.addr 4, 133
    %s3678 = scalar_lea.vmem %s1, %s3677
    %3679 = vst [vmem:[%s3678] sm:%s3676] %v3675
    %s3680 = scalar_lea.vmem [#allocation2], 1072
    %v3681 = vld [vmem:[%s3680] sm:%s2744]
    %v3682 = vpack.c.bf16 0.0, %v3681
    %s3683 = sshllo.u32 0, %s2745
    %s3684 = smul.addr 4, 134
    %s3685 = scalar_lea.vmem %s1, %s3684
    %3686 = vst [vmem:[%s3685] sm:%s3683] %v3682
    %s3687 = scalar_lea.vmem [#allocation2], 1080
    %v3688 = vld [vmem:[%s3687] sm:%s2744]
    %v3689 = vpack.c.bf16 0.0, %v3688
    %s3690 = sshllo.u32 0, %s2745
    %s3691 = smul.addr 4, 135
    %s3692 = scalar_lea.vmem %s1, %s3691
    %3693 = vst [vmem:[%s3692] sm:%s3690] %v3689
    %s3694 = scalar_lea.vmem [#allocation2], 1088
    %v3695 = vld [vmem:[%s3694] sm:%s2744]
    %v3696 = vpack.c.bf16 0.0, %v3695
    %s3697 = sshllo.u32 0, %s2745
    %s3698 = smul.addr 4, 136
    %s3699 = scalar_lea.vmem %s1, %s3698
    %3700 = vst [vmem:[%s3699] sm:%s3697] %v3696
    %s3701 = scalar_lea.vmem [#allocation2], 1096
    %v3702 = vld [vmem:[%s3701] sm:%s2744]
    %v3703 = vpack.c.bf16 0.0, %v3702
    %s3704 = sshllo.u32 0, %s2745
    %s3705 = smul.addr 4, 137
    %s3706 = scalar_lea.vmem %s1, %s3705
    %3707 = vst [vmem:[%s3706] sm:%s3704] %v3703
    %s3708 = scalar_lea.vmem [#allocation2], 1104
    %v3709 = vld [vmem:[%s3708] sm:%s2744]
    %v3710 = vpack.c.bf16 0.0, %v3709
    %s3711 = sshllo.u32 0, %s2745
    %s3712 = smul.addr 4, 138
    %s3713 = scalar_lea.vmem %s1, %s3712
    %3714 = vst [vmem:[%s3713] sm:%s3711] %v3710
    %s3715 = scalar_lea.vmem [#allocation2], 1112
    %v3716 = vld [vmem:[%s3715] sm:%s2744]
    %v3717 = vpack.c.bf16 0.0, %v3716
    %s3718 = sshllo.u32 0, %s2745
    %s3719 = smul.addr 4, 139
    %s3720 = scalar_lea.vmem %s1, %s3719
    %3721 = vst [vmem:[%s3720] sm:%s3718] %v3717
    %s3722 = scalar_lea.vmem [#allocation2], 1120
    %v3723 = vld [vmem:[%s3722] sm:%s2744]
    %v3724 = vpack.c.bf16 0.0, %v3723
    %s3725 = sshllo.u32 0, %s2745
    %s3726 = smul.addr 4, 140
    %s3727 = scalar_lea.vmem %s1, %s3726
    %3728 = vst [vmem:[%s3727] sm:%s3725] %v3724
    %s3729 = scalar_lea.vmem [#allocation2], 1128
    %v3730 = vld [vmem:[%s3729] sm:%s2744]
    %v3731 = vpack.c.bf16 0.0, %v3730
    %s3732 = sshllo.u32 0, %s2745
    %s3733 = smul.addr 4, 141
    %s3734 = scalar_lea.vmem %s1, %s3733
    %3735 = vst [vmem:[%s3734] sm:%s3732] %v3731
    %s3736 = scalar_lea.vmem [#allocation2], 1136
    %v3737 = vld [vmem:[%s3736] sm:%s2744]
    %v3738 = vpack.c.bf16 0.0, %v3737
    %s3739 = sshllo.u32 0, %s2745
    %s3740 = smul.addr 4, 142
    %s3741 = scalar_lea.vmem %s1, %s3740
    %3742 = vst [vmem:[%s3741] sm:%s3739] %v3738
    %s3743 = scalar_lea.vmem [#allocation2], 1144
    %v3744 = vld [vmem:[%s3743] sm:%s2744]
    %v3745 = vpack.c.bf16 0.0, %v3744
    %s3746 = sshllo.u32 0, %s2745
    %s3747 = smul.addr 4, 143
    %s3748 = scalar_lea.vmem %s1, %s3747
    %3749 = vst [vmem:[%s3748] sm:%s3746] %v3745
    %s3750 = scalar_lea.vmem [#allocation2], 1152
    %v3751 = vld [vmem:[%s3750] sm:%s2744]
    %v3752 = vpack.c.bf16 0.0, %v3751
    %s3753 = sshllo.u32 0, %s2745
    %s3754 = smul.addr 4, 144
    %s3755 = scalar_lea.vmem %s1, %s3754
    %3756 = vst [vmem:[%s3755] sm:%s3753] %v3752
    %s3757 = scalar_lea.vmem [#allocation2], 1160
    %v3758 = vld [vmem:[%s3757] sm:%s2744]
    %v3759 = vpack.c.bf16 0.0, %v3758
    %s3760 = sshllo.u32 0, %s2745
    %s3761 = smul.addr 4, 145
    %s3762 = scalar_lea.vmem %s1, %s3761
    %3763 = vst [vmem:[%s3762] sm:%s3760] %v3759
    %s3764 = scalar_lea.vmem [#allocation2], 1168
    %v3765 = vld [vmem:[%s3764] sm:%s2744]
    %v3766 = vpack.c.bf16 0.0, %v3765
    %s3767 = sshllo.u32 0, %s2745
    %s3768 = smul.addr 4, 146
    %s3769 = scalar_lea.vmem %s1, %s3768
    %3770 = vst [vmem:[%s3769] sm:%s3767] %v3766
    %s3771 = scalar_lea.vmem [#allocation2], 1176
    %v3772 = vld [vmem:[%s3771] sm:%s2744]
    %v3773 = vpack.c.bf16 0.0, %v3772
    %s3774 = sshllo.u32 0, %s2745
    %s3775 = smul.addr 4, 147
    %s3776 = scalar_lea.vmem %s1, %s3775
    %3777 = vst [vmem:[%s3776] sm:%s3774] %v3773
    %s3778 = scalar_lea.vmem [#allocation2], 1184
    %v3779 = vld [vmem:[%s3778] sm:%s2744]
    %v3780 = vpack.c.bf16 0.0, %v3779
    %s3781 = sshllo.u32 0, %s2745
    %s3782 = smul.addr 4, 148
    %s3783 = scalar_lea.vmem %s1, %s3782
    %3784 = vst [vmem:[%s3783] sm:%s3781] %v3780
    %s3785 = scalar_lea.vmem [#allocation2], 1192
    %v3786 = vld [vmem:[%s3785] sm:%s2744]
    %v3787 = vpack.c.bf16 0.0, %v3786
    %s3788 = sshllo.u32 0, %s2745
    %s3789 = smul.addr 4, 149
    %s3790 = scalar_lea.vmem %s1, %s3789
    %3791 = vst [vmem:[%s3790] sm:%s3788] %v3787
    %s3792 = scalar_lea.vmem [#allocation2], 1200
    %v3793 = vld [vmem:[%s3792] sm:%s2744]
    %v3794 = vpack.c.bf16 0.0, %v3793
    %s3795 = sshllo.u32 0, %s2745
    %s3796 = smul.addr 4, 150
    %s3797 = scalar_lea.vmem %s1, %s3796
    %3798 = vst [vmem:[%s3797] sm:%s3795] %v3794
    %s3799 = scalar_lea.vmem [#allocation2], 1208
    %v3800 = vld [vmem:[%s3799] sm:%s2744]
    %v3801 = vpack.c.bf16 0.0, %v3800
    %s3802 = sshllo.u32 0, %s2745
    %s3803 = smul.addr 4, 151
    %s3804 = scalar_lea.vmem %s1, %s3803
    %3805 = vst [vmem:[%s3804] sm:%s3802] %v3801
    %s3806 = scalar_lea.vmem [#allocation2], 1216
    %v3807 = vld [vmem:[%s3806] sm:%s2744]
    %v3808 = vpack.c.bf16 0.0, %v3807
    %s3809 = sshllo.u32 0, %s2745
    %s3810 = smul.addr 4, 152
    %s3811 = scalar_lea.vmem %s1, %s3810
    %3812 = vst [vmem:[%s3811] sm:%s3809] %v3808
    %s3813 = scalar_lea.vmem [#allocation2], 1224
    %v3814 = vld [vmem:[%s3813] sm:%s2744]
    %v3815 = vpack.c.bf16 0.0, %v3814
    %s3816 = sshllo.u32 0, %s2745
    %s3817 = smul.addr 4, 153
    %s3818 = scalar_lea.vmem %s1, %s3817
    %3819 = vst [vmem:[%s3818] sm:%s3816] %v3815
    %s3820 = scalar_lea.vmem [#allocation2], 1232
    %v3821 = vld [vmem:[%s3820] sm:%s2744]
    %v3822 = vpack.c.bf16 0.0, %v3821
    %s3823 = sshllo.u32 0, %s2745
    %s3824 = smul.addr 4, 154
    %s3825 = scalar_lea.vmem %s1, %s3824
    %3826 = vst [vmem:[%s3825] sm:%s3823] %v3822
    %s3827 = scalar_lea.vmem [#allocation2], 1240
    %v3828 = vld [vmem:[%s3827] sm:%s2744]
    %v3829 = vpack.c.bf16 0.0, %v3828
    %s3830 = sshllo.u32 0, %s2745
    %s3831 = smul.addr 4, 155
    %s3832 = scalar_lea.vmem %s1, %s3831
    %3833 = vst [vmem:[%s3832] sm:%s3830] %v3829
    %s3834 = scalar_lea.vmem [#allocation2], 1248
    %v3835 = vld [vmem:[%s3834] sm:%s2744]
    %v3836 = vpack.c.bf16 0.0, %v3835
    %s3837 = sshllo.u32 0, %s2745
    %s3838 = smul.addr 4, 156
    %s3839 = scalar_lea.vmem %s1, %s3838
    %3840 = vst [vmem:[%s3839] sm:%s3837] %v3836
    %s3841 = scalar_lea.vmem [#allocation2], 1256
    %v3842 = vld [vmem:[%s3841] sm:%s2744]
    %v3843 = vpack.c.bf16 0.0, %v3842
    %s3844 = sshllo.u32 0, %s2745
    %s3845 = smul.addr 4, 157
    %s3846 = scalar_lea.vmem %s1, %s3845
    %3847 = vst [vmem:[%s3846] sm:%s3844] %v3843
    %s3848 = scalar_lea.vmem [#allocation2], 1264
    %v3849 = vld [vmem:[%s3848] sm:%s2744]
    %v3850 = vpack.c.bf16 0.0, %v3849
    %s3851 = sshllo.u32 0, %s2745
    %s3852 = smul.addr 4, 158
    %s3853 = scalar_lea.vmem %s1, %s3852
    %3854 = vst [vmem:[%s3853] sm:%s3851] %v3850
    %s3855 = scalar_lea.vmem [#allocation2], 1272
    %v3856 = vld [vmem:[%s3855] sm:%s2744]
    %v3857 = vpack.c.bf16 0.0, %v3856
    %s3858 = sshllo.u32 0, %s2745
    %s3859 = smul.addr 4, 159
    %s3860 = scalar_lea.vmem %s1, %s3859
    %3861 = vst [vmem:[%s3860] sm:%s3858] %v3857
    %s3862 = scalar_lea.vmem [#allocation2], 1280
    %v3863 = vld [vmem:[%s3862] sm:%s2744]
    %v3864 = vpack.c.bf16 0.0, %v3863
    %s3865 = sshllo.u32 0, %s2745
    %s3866 = smul.addr 4, 160
    %s3867 = scalar_lea.vmem %s1, %s3866
    %3868 = vst [vmem:[%s3867] sm:%s3865] %v3864
    %s3869 = scalar_lea.vmem [#allocation2], 1288
    %v3870 = vld [vmem:[%s3869] sm:%s2744]
    %v3871 = vpack.c.bf16 0.0, %v3870
    %s3872 = sshllo.u32 0, %s2745
    %s3873 = smul.addr 4, 161
    %s3874 = scalar_lea.vmem %s1, %s3873
    %3875 = vst [vmem:[%s3874] sm:%s3872] %v3871
    %s3876 = scalar_lea.vmem [#allocation2], 1296
    %v3877 = vld [vmem:[%s3876] sm:%s2744]
    %v3878 = vpack.c.bf16 0.0, %v3877
    %s3879 = sshllo.u32 0, %s2745
    %s3880 = smul.addr 4, 162
    %s3881 = scalar_lea.vmem %s1, %s3880
    %3882 = vst [vmem:[%s3881] sm:%s3879] %v3878
    %s3883 = scalar_lea.vmem [#allocation2], 1304
    %v3884 = vld [vmem:[%s3883] sm:%s2744]
    %v3885 = vpack.c.bf16 0.0, %v3884
    %s3886 = sshllo.u32 0, %s2745
    %s3887 = smul.addr 4, 163
    %s3888 = scalar_lea.vmem %s1, %s3887
    %3889 = vst [vmem:[%s3888] sm:%s3886] %v3885
    %s3890 = scalar_lea.vmem [#allocation2], 1312
    %v3891 = vld [vmem:[%s3890] sm:%s2744]
    %v3892 = vpack.c.bf16 0.0, %v3891
    %s3893 = sshllo.u32 0, %s2745
    %s3894 = smul.addr 4, 164
    %s3895 = scalar_lea.vmem %s1, %s3894
    %3896 = vst [vmem:[%s3895] sm:%s3893] %v3892
    %s3897 = scalar_lea.vmem [#allocation2], 1320
    %v3898 = vld [vmem:[%s3897] sm:%s2744]
    %v3899 = vpack.c.bf16 0.0, %v3898
    %s3900 = sshllo.u32 0, %s2745
    %s3901 = smul.addr 4, 165
    %s3902 = scalar_lea.vmem %s1, %s3901
    %3903 = vst [vmem:[%s3902] sm:%s3900] %v3899
    %s3904 = scalar_lea.vmem [#allocation2], 1328
    %v3905 = vld [vmem:[%s3904] sm:%s2744]
    %v3906 = vpack.c.bf16 0.0, %v3905
    %s3907 = sshllo.u32 0, %s2745
    %s3908 = smul.addr 4, 166
    %s3909 = scalar_lea.vmem %s1, %s3908
    %3910 = vst [vmem:[%s3909] sm:%s3907] %v3906
    %s3911 = scalar_lea.vmem [#allocation2], 1336
    %v3912 = vld [vmem:[%s3911] sm:%s2744]
    %v3913 = vpack.c.bf16 0.0, %v3912
    %s3914 = sshllo.u32 0, %s2745
    %s3915 = smul.addr 4, 167
    %s3916 = scalar_lea.vmem %s1, %s3915
    %3917 = vst [vmem:[%s3916] sm:%s3914] %v3913
    %3918 = vsyncpa [#allocation1], 1

// kernel: fnet_forward.2
$region0: #{fnet_forward.2}
  #allocation0 [shape = 'u32[]', space=smem, size = 0x4, offset = 0x4, fixed_abs, tag = 'smem constant byte address 0x4 - core index']
  #allocation1 [shape = 'u32[144,128]{1,0:T(1,128)}', space=vmem, size = 0x12000, scoped, tag = 'internal scratch']
  %s0 = inlined_call_operand.vmem [shape: bf16[128,32], index: 0, kind: input, shape index: {}]
  %s1 = inlined_call_operand.vmem [shape: bf16[32,6144], index: 1, kind: input, shape index: {}]
  %s2 = inlined_call_operand.vmem [shape: f32[128,1], index: 2, kind: input, shape index: {}]
  %s3 = inlined_call_operand.vmem [shape: bf16[128,6144], index: 3, kind: output, shape index: {}]
  %s4 = sld [smem:[#allocation0]]
  $region87: #{fnet_forward.2} parent=0
    _
  %s6 = ssub.s32 1, %s4
  %s7 = scalar_select 0, %s6, %s4
  $region1: #{fnet_forward.2} parent=0
    #allocation2 [shape = 'u8[98304]{0}', space=vmem, size = 0x18000, scoped, tag = 'input window, operand 1']
    #allocation3 [shape = 'u8[393216]{0}', space=vmem, size = 0x60000, scoped, tag = 'output window, operand 0']
    loop: start=0, step=1, limit=10
    $region2: #{fnet_forward.2} parent=1 // loop_pre_header
      _
    $region3: #{fnet_forward.2} parent=1 // loop_header
      %s9 = sphi 0, %s13
      %p10 = scmp.ge.s32.totalorder %s9, 10
      %s17 = sphi 0, %s17
      %s19 = sphi 0, %s17
      %s20 = sphi 0, %s19
      %s34 = sphi 0, %s20
      %s40 = sphi 0, %s42
      %s43 = sphi 0, %s40
      %s44 = sphi 0, %s43
      %s60 = sphi 0, %s44
      %s64 = sphi 0, %s64
      %s66 = sphi 0, %s64
      %s67 = sphi 0, %s66
      %s81 = sphi 0, %s67
      %s87 = sphi 0, %s89
      %s90 = sphi 0, %s87
      %s91 = sphi 0, %s90
      %s107 = sphi 0, %s91
    $region4: #{fnet_forward.2} parent=1 // loop_header_branch
      %12 = sbr.rel (%p10) target = $region8
    $region5: #{fnet_forward.2} parent=1 // loop_body
      %s14 = ssub.s32 %s9, 1
      %s15 = ssub.s32 %s9, 2
      %s16 = sadd.s32 %s9, 1
      %s18 = sadd.s32 %s17, 1
      %p21 = scmp.eq.s32.totalorder %s9, 7
      %p22 = scmp.ne.s32.totalorder %s17, %s19
      %p23 = scmp.eq.s32.totalorder %s9, 0
      %p24 = por %p22, %p23
      %p25 = scmp.ne.s32.totalorder %s17, %s19
      %p26 = scmp.eq.s32.totalorder %s14, 7
      %p27 = por %p25, %p26
      %p28 = scmp.ne.s32.totalorder %s19, %s20
      %p29 = scmp.eq.s32.totalorder %s14, 0
      %p30 = por %p28, %p29
      %p31 = scmp.ne.s32.totalorder %s19, %s20
      %p32 = scmp.eq.s32.totalorder %s15, 7
      %p33 = por %p31, %p32
      %p35 = scmp.ne.s32.totalorder %s20, %s34
      %p36 = scmp.eq.s32.totalorder %s15, 0
      %p37 = por %p35, %p36
      %s38 = ssub.s32 %s9, %s16
      %p39 = scmp.eq.s32.totalorder %s38, 0
      %s41 = sadd.s32 %s40, 1
      %s42 = scalar_select %p39, %s40, %s41
      %p45 = pneg %p39
      %p46 = scmp.eq.s32.totalorder %s9, 7
      %p47 = por %p45, %p46
      %p48 = scmp.ne.s32.totalorder %s40, %s43
      %p49 = scmp.eq.s32.totalorder %s9, 0
      %p50 = por %p48, %p49
      %p51 = scmp.ne.s32.totalorder %s40, %s43
      %p52 = scmp.eq.s32.totalorder %s14, 7
      %p53 = por %p51, %p52
      %p54 = scmp.ne.s32.totalorder %s43, %s44
      %p55 = scmp.eq.s32.totalorder %s14, 0
      %p56 = por %p54, %p55
      %p57 = scmp.ne.s32.totalorder %s43, %s44
      %p58 = scmp.eq.s32.totalorder %s15, 7
      %p59 = por %p57, %p58
      %p61 = scmp.ne.s32.totalorder %s44, %s60
      %p62 = scmp.eq.s32.totalorder %s15, 0
      %p63 = por %p61, %p62
      %s65 = sadd.s32 %s64, 1
      %p68 = scmp.eq.s32.totalorder %s9, 7
      %p69 = scmp.ne.s32.totalorder %s64, %s66
      %p70 = scmp.eq.s32.totalorder %s9, 0
      %p71 = por %p69, %p70
      %p72 = scmp.ne.s32.totalorder %s64, %s66
      %p73 = scmp.eq.s32.totalorder %s14, 7
      %p74 = por %p72, %p73
      %p75 = scmp.ne.s32.totalorder %s66, %s67
      %p76 = scmp.eq.s32.totalorder %s14, 0
      %p77 = por %p75, %p76
      %p78 = scmp.ne.s32.totalorder %s66, %s67
      %p79 = scmp.eq.s32.totalorder %s15, 7
      %p80 = por %p78, %p79
      %p82 = scmp.ne.s32.totalorder %s67, %s81
      %p83 = scmp.eq.s32.totalorder %s15, 0
      %p84 = por %p82, %p83
      %s85 = ssub.s32 %s9, %s16
      %p86 = scmp.eq.s32.totalorder %s85, 0
      %s88 = sadd.s32 %s87, 1
      %s89 = scalar_select %p86, %s87, %s88
      %p92 = pneg %p86
      %p93 = scmp.eq.s32.totalorder %s9, 7
      %p94 = por %p92, %p93
      %p95 = scmp.ne.s32.totalorder %s87, %s90
      %p96 = scmp.eq.s32.totalorder %s9, 0
      %p97 = por %p95, %p96
      %p98 = scmp.ne.s32.totalorder %s87, %s90
      %p99 = scmp.eq.s32.totalorder %s14, 7
      %p100 = por %p98, %p99
      %p101 = scmp.ne.s32.totalorder %s90, %s91
      %p102 = scmp.eq.s32.totalorder %s14, 0
      %p103 = por %p101, %p102
      %p104 = scmp.ne.s32.totalorder %s90, %s91
      %p105 = scmp.eq.s32.totalorder %s15, 7
      %p106 = por %p104, %p105
      %p108 = scmp.ne.s32.totalorder %s91, %s107
      %p109 = scmp.eq.s32.totalorder %s15, 0
      %p110 = por %p108, %p109
      %p111 = scmp.le.s32.totalorder 1, %s9
      %p112 = scmp.lt.s32.totalorder %s9, 9
      %p113 = pnand %p111, %p112
      %p114 = pneg %p113
      // Predicated region
      $region9: #{fnet_forward.2} parent=5 // pred_check
        _
      $region10: #{fnet_forward.2} parent=5 // pred_check_branch
        %116 = sbr.rel (%p113) target = $region12
      $region11: #{fnet_forward.2} parent=5 // pred_region
        %s117 = ssub.s32 %s9, 1
        // Predicated region
        $region13: #{fnet_forward.2} parent=11 // pred_check
          %p118 = pneg %p30
        $region14: #{fnet_forward.2} parent=11 // pred_check_branch
          %120 = sbr.rel (%p118) target = $region16
        $region15: #{fnet_forward.2} parent=11 // pred_region
          _
        $region16: #{fnet_forward.2} parent=11 // pred_fallthru
          _
        // Predicated region
        $region17: #{fnet_forward.2} parent=11 // pred_check
          %p121 = pneg %p77
        $region18: #{fnet_forward.2} parent=11 // pred_check_branch
          %123 = sbr.rel (%p121) target = $region20
        $region19: #{fnet_forward.2} parent=11 // pred_region
          _
        $region20: #{fnet_forward.2} parent=11 // pred_fallthru
          _
      $region12: #{fnet_forward.2} parent=5 // pred_fallthru
        _
      %p124 = scmp.lt.s32.totalorder %s9, 8
      // Predicated region
      $region21: #{fnet_forward.2} parent=5 // pred_check
        %p125 = pneg %p124
      $region22: #{fnet_forward.2} parent=5 // pred_check_branch
        %127 = sbr.rel (%p125) target = $region24
      $region23: #{fnet_forward.2} parent=5 // pred_region
        // Predicated region
        $region25: #{fnet_forward.2} parent=23 // pred_check
          %p128 = pneg %p50
        $region26: #{fnet_forward.2} parent=23 // pred_check_branch
          %130 = sbr.rel (%p128) target = $region28
        $region27: #{fnet_forward.2} parent=23 // pred_region
          %s131 = sand.u32 %s40, 1
          %s132 = sand.u32 %s40, 1
          %s133 = smul.addr %s132, 96
          %s134 = scalar_lea.vmem [#allocation2], %s133
          %s135 = smul.u32 6, %s9
          %s136 = smul.addr %s135, 4
          %s137 = scalar_lea.vmem %s1, %s136
          // Predicated region
          $region29: #{fnet_forward.2} parent=27 // pred_check
            _
          $region30: #{fnet_forward.2} parent=27 // pred_check_branch
            %139 = sbr.rel (0) target = $region32
          $region31: #{fnet_forward.2} parent=27 // pred_region
            // Predicated region
            $region33: #{fnet_forward.2} parent=31 // pred_check
              _
            $region34: #{fnet_forward.2} parent=31 // pred_check_branch
              %141 = sbr.rel (0) target = $region36
            $region35: #{fnet_forward.2} parent=31 // pred_region
              loop: start=0, step=1, limit=1
              $region37: #{fnet_forward.2} parent=35 // loop_pre_header
                _
              $region38: #{fnet_forward.2} parent=35 // loop_header
                %s143 = sphi 0, %s147
                %p144 = scmp.ge.s32.totalorder %s143, 1
                %s148 = sphi %s137, %s137
                %s149 = sphi %s134, %s134
              $region39: #{fnet_forward.2} parent=35 // loop_header_branch
                %146 = sbr.rel (%p144) target = $region43
              $region40: #{fnet_forward.2} parent=35 // loop_body
                %v150 = vld [vmem:[%s148] sm:$0xff]
                %151 = vst [vmem:[%s149] sm:$0xff] %v150
                %v152 = vld [vmem:[%s148 + $0x8] sm:$0xff]
                %153 = vst [vmem:[%s149 + $0x8] sm:$0xff] %v152
                %v154 = vld [vmem:[%s148 + $0x10] sm:$0xff]
                %155 = vst [vmem:[%s149 + $0x10] sm:$0xff] %v154
                %v156 = vld [vmem:[%s148 + $0xc0] sm:$0xff]
                %157 = vst [vmem:[%s149 + $0x18] sm:$0xff] %v156
                %v158 = vld [vmem:[%s148 + $0xc8] sm:$0xff]
                %159 = vst [vmem:[%s149 + $0x20] sm:$0xff] %v158
                %v160 = vld [vmem:[%s148 + $0xd0] sm:$0xff]
                %161 = vst [vmem:[%s149 + $0x28] sm:$0xff] %v160
                %v162 = vld [vmem:[%s148 + $0x180] sm:$0xff]
                %163 = vst [vmem:[%s149 + $0x30] sm:$0xff] %v162
                %v164 = vld [vmem:[%s148 + $0x188] sm:$0xff]
                %165 = vst [vmem:[%s149 + $0x38] sm:$0xff] %v164
                %v166 = vld [vmem:[%s148 + $0x190] sm:$0xff]
                %167 = vst [vmem:[%s149 + $0x40] sm:$0xff] %v166
                %v168 = vld [vmem:[%s148 + $0x240] sm:$0xff]
                %169 = vst [vmem:[%s149 + $0x48] sm:$0xff] %v168
                %v170 = vld [vmem:[%s148 + $0x248] sm:$0xff]
                %171 = vst [vmem:[%s149 + $0x50] sm:$0xff] %v170
                %v172 = vld [vmem:[%s148 + $0x250] sm:$0xff]
                %173 = vst [vmem:[%s149 + $0x58] sm:$0xff] %v172
              $region41: #{fnet_forward.2} parent=35 // loop_footer
                %s147 = sadd.s32 1, %s143
              $region42: #{fnet_forward.2} parent=35 // loop_footer_branch
                %142 = sbr.rel target = $region38
              $region43: #{fnet_forward.2} parent=35 // loop_exit
                _
            $region36: #{fnet_forward.2} parent=31 // pred_fallthru
              _
            // Predicated region
            $region44: #{fnet_forward.2} parent=31 // pred_check
              _
            $region45: #{fnet_forward.2} parent=31 // pred_check_branch
              %175 = sbr.rel target = $region47
            $region46: #{fnet_forward.2} parent=31 // pred_region
              _
            $region47: #{fnet_forward.2} parent=31 // pred_fallthru
              _
          $region32: #{fnet_forward.2} parent=27 // pred_fallthru
            _
          %176 = vnop
        $region28: #{fnet_forward.2} parent=23 // pred_fallthru
          _
      $region24: #{fnet_forward.2} parent=5 // pred_fallthru
        _
      %p177 = scmp.le.s32.totalorder 1, %s9
      %p178 = scmp.lt.s32.totalorder %s9, 9
      %p179 = pnand %p177, %p178
      %p180 = pneg %p179
      // Predicated region
      $region48: #{fnet_forward.2} parent=5 // pred_check
        _
      $region49: #{fnet_forward.2} parent=5 // pred_check_branch
        %182 = sbr.rel (%p179) target = $region51
      $region50: #{fnet_forward.2} parent=5 // pred_region
        %s183 = ssub.s32 %s9, 1
        %s184 = sand.u32 %s43, 1
        %s185 = sand.u32 %s43, 1
        %s186 = smul.addr %s185, 96
        %s187 = scalar_lea.vmem [#allocation2], %s186
        // Predicated region
        $region52: #{fnet_forward.2} parent=50 // pred_check
          %p188 = pneg %p56
        $region53: #{fnet_forward.2} parent=50 // pred_check_branch
          %190 = sbr.rel (%p188) target = $region55
        $region54: #{fnet_forward.2} parent=50 // pred_region
          _
        $region55: #{fnet_forward.2} parent=50 // pred_fallthru
          _
        %p191 = pneg %p30
        %p192 = pneg %p27
        %s193 = sand.u32 %s43, 1
        %s194 = sand.u32 %s43, 1
        %s195 = smul.addr %s194, 96
        %s196 = scalar_lea.vmem [#allocation2], %s195
        %p197 = pneg %p56
        %p198 = pneg %p53
        %p199 = pneg %p77
        %p200 = pneg %p74
        %p201 = pneg %p103
        %p202 = pneg %p100
        %s203 = sand.u32 %s90, 1
        %s204 = sand.u32 %s90, 1
        %s205 = smul.addr %s204, 384
        %s206 = scalar_lea.vmem [#allocation3], %s205
        %s207 = smul.u32 6, %s14
        %s208 = smul.u32 6, %s14
        %v210 = vld [vmem:[%s0] sm:$0xf]
        %v211 = vld [vmem:[%s0 + $0x4] sm:$0xf]
        %v212 = vld [vmem:[%s0 + $0x8] sm:$0xf]
        %v213 = vld [vmem:[%s0 + $0xc] sm:$0xf]
        %v214 = vld [vmem:[%s0 + $0x10] sm:$0xf]
        %v215 = vld [vmem:[%s0 + $0x14] sm:$0xf]
        %v216 = vld [vmem:[%s0 + $0x18] sm:$0xf]
        %v217 = vld [vmem:[%s0 + $0x1c] sm:$0xf]
        %v218 = vld [vmem:[%s0 + $0x20] sm:$0xf]
        %v219 = vld [vmem:[%s0 + $0x24] sm:$0xf]
        %v220 = vld [vmem:[%s0 + $0x28] sm:$0xf]
        %v221 = vld [vmem:[%s0 + $0x2c] sm:$0xf]
        %v222 = vld [vmem:[%s0 + $0x30] sm:$0xf]
        %v223 = vld [vmem:[%s0 + $0x34] sm:$0xf]
        %v224 = vld [vmem:[%s0 + $0x38] sm:$0xf]
        %v225 = vld [vmem:[%s0 + $0x3c] sm:$0xf]
        %v226 = vld [vmem:[%s187] sm:$0xff]
        %v227 = vld [vmem:[%s187 + $0x8] sm:$0xff]
        %v228 = vld [vmem:[%s187 + $0x10] sm:$0xff]
        %v229 = vld [vmem:[%s187 + $0x18] sm:$0xff]
        %v230 = vld [vmem:[%s187 + $0x20] sm:$0xff]
        %v231 = vld [vmem:[%s187 + $0x28] sm:$0xff]
        %v232 = vld [vmem:[%s187 + $0x30] sm:$0xff]
        %v233 = vld [vmem:[%s187 + $0x38] sm:$0xff]
        %v234 = vld [vmem:[%s187 + $0x40] sm:$0xff]
        %v235 = vld [vmem:[%s187 + $0x48] sm:$0xff]
        %v236 = vld [vmem:[%s187 + $0x50] sm:$0xff]
        %v237 = vld [vmem:[%s187 + $0x58] sm:$0xff]
        %v238 = vld [vmem:[%s2] sm:$0xff]
        %v239 = vld [vmem:[%s2 + $0x8] sm:$0xff]
        %v240 = vld [vmem:[%s2 + $0x10] sm:$0xff]
        %v241 = vld [vmem:[%s2 + $0x18] sm:$0xff]
        %v242 = vld [vmem:[%s2 + $0x20] sm:$0xff]
        %v243 = vld [vmem:[%s2 + $0x28] sm:$0xff]
        %v244 = vld [vmem:[%s2 + $0x30] sm:$0xff]
        %v245 = vld [vmem:[%s2 + $0x38] sm:$0xff]
        %v246 = vld [vmem:[%s2 + $0x40] sm:$0xff]
        %v247 = vld [vmem:[%s2 + $0x48] sm:$0xff]
        %v248 = vld [vmem:[%s2 + $0x50] sm:$0xff]
        %v249 = vld [vmem:[%s2 + $0x58] sm:$0xff]
        %v250 = vld [vmem:[%s2 + $0x60] sm:$0xff]
        %v251 = vld [vmem:[%s2 + $0x68] sm:$0xff]
        %v252 = vld [vmem:[%s2 + $0x70] sm:$0xff]
        %v253 = vld [vmem:[%s2 + $0x78] sm:$0xff]
        %255 = vset.pattern.permute.xlu0 0
        %256 = vperm.xlu0 %255, %v238
        %v257 = vpop.permute.xlu0 %256
        %260 = vset.pattern.permute.xlu0 0
        %261 = vperm.xlu0 %260, %v239
        %v262 = vpop.permute.xlu0 %261
        %265 = vset.pattern.permute.xlu0 0
        %266 = vperm.xlu0 %265, %v240
        %v267 = vpop.permute.xlu0 %266
        %270 = vset.pattern.permute.xlu0 0
        %271 = vperm.xlu0 %270, %v241
        %v272 = vpop.permute.xlu0 %271
        %275 = vset.pattern.permute.xlu0 0
        %276 = vperm.xlu0 %275, %v242
        %v277 = vpop.permute.xlu0 %276
        %280 = vset.pattern.permute.xlu0 0
        %281 = vperm.xlu0 %280, %v243
        %v282 = vpop.permute.xlu0 %281
        %285 = vset.pattern.permute.xlu0 0
        %286 = vperm.xlu0 %285, %v244
        %v287 = vpop.permute.xlu0 %286
        %290 = vset.pattern.permute.xlu0 0
        %291 = vperm.xlu0 %290, %v245
        %v292 = vpop.permute.xlu0 %291
        %295 = vset.pattern.permute.xlu0 0
        %296 = vperm.xlu0 %295, %v246
        %v297 = vpop.permute.xlu0 %296
        %300 = vset.pattern.permute.xlu0 0
        %301 = vperm.xlu0 %300, %v247
        %v302 = vpop.permute.xlu0 %301
        %305 = vset.pattern.permute.xlu0 0
        %306 = vperm.xlu0 %305, %v248
        %v307 = vpop.permute.xlu0 %306
        %310 = vset.pattern.permute.xlu0 0
        %311 = vperm.xlu0 %310, %v249
        %v312 = vpop.permute.xlu0 %311
        %315 = vset.pattern.permute.xlu0 0
        %316 = vperm.xlu0 %315, %v250
        %v317 = vpop.permute.xlu0 %316
        %320 = vset.pattern.permute.xlu0 0
        %321 = vperm.xlu0 %320, %v251
        %v322 = vpop.permute.xlu0 %321
        %325 = vset.pattern.permute.xlu0 0
        %326 = vperm.xlu0 %325, %v252
        %v327 = vpop.permute.xlu0 %326
        %330 = vset.pattern.permute.xlu0 0
        %331 = vperm.xlu0 %330, %v253
        %v332 = vpop.permute.xlu0 %331
        %v350 = vunpack.c.l.b16 %v210
        %v351 = vunpack.c.l.b16 %v211
        %v352 = vunpack.c.l.b16 %v212
        %v353 = vunpack.c.l.b16 %v213
        %v354 = vunpack.c.l.b16 %v214
        %v355 = vunpack.c.l.b16 %v215
        %v356 = vunpack.c.l.b16 %v216
        %v357 = vunpack.c.l.b16 %v217
        %v358 = vunpack.c.l.b16 %v218
        %v359 = vunpack.c.l.b16 %v219
        %v360 = vunpack.c.l.b16 %v220
        %v361 = vunpack.c.l.b16 %v221
        %v362 = vunpack.c.l.b16 %v222
        %v363 = vunpack.c.l.b16 %v223
        %v364 = vunpack.c.l.b16 %v224
        %v365 = vunpack.c.l.b16 %v225
        %v366 = vpack.c.b16 %v351, %v350
        %v367 = vpack.c.b16 %v353, %v352
        %v368 = vpack.c.b16 %v355, %v354
        %v369 = vpack.c.b16 %v357, %v356
        %v370 = vpack.c.b16 %v359, %v358
        %v371 = vpack.c.b16 %v361, %v360
        %v372 = vpack.c.b16 %v363, %v362
        %v373 = vpack.c.b16 %v365, %v364
        %v386 = vunpack.c.l.b16 %v226
        %v387 = vunpack.c.h.b16 %v226
        %v388 = vunpack.c.l.b16 %v227
        %v389 = vunpack.c.h.b16 %v227
        %v390 = vunpack.c.l.b16 %v228
        %v391 = vunpack.c.h.b16 %v228
        %v392 = vunpack.c.l.b16 %v229
        %v393 = vunpack.c.h.b16 %v229
        %v394 = vunpack.c.l.b16 %v230
        %v395 = vunpack.c.h.b16 %v230
        %v396 = vunpack.c.l.b16 %v231
        %v397 = vunpack.c.h.b16 %v231
        %v398 = vunpack.c.l.b16 %v232
        %v399 = vunpack.c.h.b16 %v232
        %v400 = vunpack.c.l.b16 %v233
        %v401 = vunpack.c.h.b16 %v233
        %v402 = vunpack.c.l.b16 %v234
        %v403 = vunpack.c.h.b16 %v234
        %v404 = vunpack.c.l.b16 %v235
        %v405 = vunpack.c.h.b16 %v235
        %v406 = vunpack.c.l.b16 %v236
        %v407 = vunpack.c.h.b16 %v236
        %v408 = vunpack.c.l.b16 %v237
        %v409 = vunpack.c.h.b16 %v237
        %v410 = vpack.c.b16 %v392, %v386
        %v411 = vpack.c.b16 %v393, %v387
        %v412 = vpack.c.b16 %v394, %v388
        %v413 = vpack.c.b16 %v395, %v389
        %v414 = vpack.c.b16 %v396, %v390
        %v415 = vpack.c.b16 %v397, %v391
        %v416 = vpack.c.b16 %v404, %v398
        %v417 = vpack.c.b16 %v405, %v399
        %v418 = vpack.c.b16 %v406, %v400
        %v419 = vpack.c.b16 %v407, %v401
        %v420 = vpack.c.b16 %v408, %v402
        %v421 = vpack.c.b16 %v409, %v403
        %vm434 = vcmask 261120
        %v436 = vsel %vm434, %v366, 0
        %v439 = vsel %vm434, %v367, 0
        %v442 = vsel %vm434, %v368, 0
        %v445 = vsel %vm434, %v369, 0
        %v448 = vsel %vm434, %v370, 0
        %v451 = vsel %vm434, %v371, 0
        %v454 = vsel %vm434, %v372, 0
        %v457 = vsel %vm434, %v373, 0
        %459 = vmatprep.subr.bf16.mxu0 %v411
        %460 = vmatpush1.bf16.msra.mxu0 %v410
        %461 = vmatprep.subr.bf16.mxu0 %v417
        %462 = vmatpush1.bf16.msra.mxu0 %v416
        %463 = vmatprep.subr.bf16.mxu0 0
        %464 = vmatpush1.bf16.msra.mxu0 0
        %465 = vmatprep.subr.bf16.mxu0 0
        %466 = vmatpush1.bf16.msra.mxu0 0
        %467 = vmatprep.subr.bf16.mxu0 0
        %468 = vmatpush1.bf16.msra.mxu0 0
        %469 = vmatprep.subr.bf16.mxu0 0
        %470 = vmatpush1.bf16.msra.mxu0 0
        %471 = vmatprep.subr.bf16.mxu0 0
        %472 = vmatpush1.bf16.msra.mxu0 0
        %473 = vmatprep.subr.bf16.mxu0 0
        %474 = vmatpush1.bf16.msra.mxu0 0
        %475 = vmatprep.subr.bf16.mxu0 0
        %476 = vmatpush1.bf16.msra.mxu0 0
        %477 = vmatprep.subr.bf16.mxu0 0
        %478 = vmatpush1.bf16.msra.mxu0 0
        %479 = vmatprep.subr.bf16.mxu0 0
        %480 = vmatpush1.bf16.msra.mxu0 0
        %481 = vmatprep.subr.bf16.mxu0 0
        %482 = vmatpush1.bf16.msra.mxu0 0
        %483 = vmatprep.subr.bf16.mxu0 0
        %484 = vmatpush1.bf16.msra.mxu0 0
        %485 = vmatprep.subr.bf16.mxu0 0
        %486 = vmatpush1.bf16.msra.mxu0 0
        %487 = vmatprep.subr.bf16.mxu0 0
        %488 = vmatpush1.bf16.msra.mxu0 0
        %489 = vmatprep.subr.bf16.mxu0 0
        %490 = vmatpush1.bf16.msra.mxu0 0
        %491 = vmatprep.mubr.bf16.mxu0 0
        %492 = vmatmul.mubr.bf16.gmra.mrb[0].mxu0 %v436
        %v493 = vpop.f32.mrb[0].mxu0
        %v494 = vadd.f32 %v257, %v493
        %v495 = vpop.f32.mrb[0].mxu0
        %v496 = vadd.f32 %v257, %v495
        %v497 = vpop.f32.mrb[0].mxu0
        %v498 = vadd.f32 %v262, %v497
        %v499 = vpop.f32.mrb[0].mxu0
        %v500 = vadd.f32 %v262, %v499
        %501 = vmatprep.mubr.bf16.mxu0 0
        %502 = vmatmul.mubr.bf16.gmra.mrb[0].mxu0 %v439
        %v503 = vpop.f32.mrb[0].mxu0
        %v504 = vadd.f32 %v267, %v503
        %v505 = vpop.f32.mrb[0].mxu0
        %v506 = vadd.f32 %v267, %v505
        %v507 = vpop.f32.mrb[0].mxu0
        %v508 = vadd.f32 %v272, %v507
        %v509 = vpop.f32.mrb[0].mxu0
        %v510 = vadd.f32 %v272, %v509
        %511 = vmatprep.mubr.bf16.mxu0 0
        %512 = vmatmul.mubr.bf16.gmra.mrb[0].mxu0 %v442
        %v513 = vpop.f32.mrb[0].mxu0
        %v514 = vadd.f32 %v277, %v513
        %v515 = vpop.f32.mrb[0].mxu0
        %v516 = vadd.f32 %v277, %v515
        %v517 = vpop.f32.mrb[0].mxu0
        %v518 = vadd.f32 %v282, %v517
        %v519 = vpop.f32.mrb[0].mxu0
        %v520 = vadd.f32 %v282, %v519
        %521 = vmatprep.mubr.bf16.mxu0 0
        %522 = vmatmul.mubr.bf16.gmra.mrb[0].mxu0 %v445
        %v523 = vpop.f32.mrb[0].mxu0
        %v524 = vadd.f32 %v287, %v523
        %v525 = vpop.f32.mrb[0].mxu0
        %v526 = vadd.f32 %v287, %v525
        %v527 = vpop.f32.mrb[0].mxu0
        %v528 = vadd.f32 %v292, %v527
        %v529 = vpop.f32.mrb[0].mxu0
        %v530 = vadd.f32 %v292, %v529
        %531 = vmatprep.mubr.bf16.mxu0 0
        %532 = vmatmul.mubr.bf16.gmra.mrb[0].mxu0 %v448
        %v533 = vpop.f32.mrb[0].mxu0
        %v534 = vadd.f32 %v297, %v533
        %v535 = vpop.f32.mrb[0].mxu0
        %v536 = vadd.f32 %v297, %v535
        %v537 = vpop.f32.mrb[0].mxu0
        %v538 = vadd.f32 %v302, %v537
        %v539 = vpop.f32.mrb[0].mxu0
        %v540 = vadd.f32 %v302, %v539
        %541 = vmatprep.mubr.bf16.mxu0 0
        %542 = vmatmul.mubr.bf16.gmra.mrb[0].mxu0 %v451
        %v543 = vpop.f32.mrb[0].mxu0
        %v544 = vadd.f32 %v307, %v543
        %v545 = vpop.f32.mrb[0].mxu0
        %v546 = vadd.f32 %v307, %v545
        %v547 = vpop.f32.mrb[0].mxu0
        %v548 = vadd.f32 %v312, %v547
        %v549 = vpop.f32.mrb[0].mxu0
        %v550 = vadd.f32 %v312, %v549
        %551 = vmatprep.mubr.bf16.mxu0 0
        %552 = vmatmul.mubr.bf16.gmra.mrb[0].mxu0 %v454
        %v553 = vpop.f32.mrb[0].mxu0
        %v554 = vadd.f32 %v317, %v553
        %v555 = vpop.f32.mrb[0].mxu0
        %v556 = vadd.f32 %v317, %v555
        %v557 = vpop.f32.mrb[0].mxu0
        %v558 = vadd.f32 %v322, %v557
        %v559 = vpop.f32.mrb[0].mxu0
        %v560 = vadd.f32 %v322, %v559
        %561 = vmatprep.mubr.bf16.mxu0 0
        %562 = vmatmul.mubr.bf16.gmra.mrb[0].mxu0 %v457
        %v563 = vpop.f32.mrb[0].mxu0
        %v564 = vadd.f32 %v327, %v563
        %v565 = vpop.f32.mrb[0].mxu0
        %v566 = vadd.f32 %v327, %v565
        %v567 = vpop.f32.mrb[0].mxu0
        %v568 = vadd.f32 %v332, %v567
        %v569 = vpop.f32.mrb[0].mxu0
        %v570 = vadd.f32 %v332, %v569
        %571 = vdwg.mxu0
        %572 = vmatprep.subr.bf16.mxu0 %v413
        %573 = vmatpush1.bf16.msra.mxu0 %v412
        %574 = vmatprep.subr.bf16.mxu0 %v419
        %575 = vmatpush1.bf16.msra.mxu0 %v418
        %576 = vmatprep.subr.bf16.mxu0 0
        %577 = vmatpush1.bf16.msra.mxu0 0
        %578 = vmatprep.subr.bf16.mxu0 0
        %579 = vmatpush1.bf16.msra.mxu0 0
        %580 = vmatprep.subr.bf16.mxu0 0
        %581 = vmatpush1.bf16.msra.mxu0 0
        %582 = vmatprep.subr.bf16.mxu0 0
        %583 = vmatpush1.bf16.msra.mxu0 0
        %584 = vmatprep.subr.bf16.mxu0 0
        %585 = vmatpush1.bf16.msra.mxu0 0
        %586 = vmatprep.subr.bf16.mxu0 0
        %587 = vmatpush1.bf16.msra.mxu0 0
        %588 = vmatprep.subr.bf16.mxu0 0
        %589 = vmatpush1.bf16.msra.mxu0 0
        %590 = vmatprep.subr.bf16.mxu0 0
        %591 = vmatpush1.bf16.msra.mxu0 0
        %592 = vmatprep.subr.bf16.mxu0 0
        %593 = vmatpush1.bf16.msra.mxu0 0
        %594 = vmatprep.subr.bf16.mxu0 0
        %595 = vmatpush1.bf16.msra.mxu0 0
        %596 = vmatprep.subr.bf16.mxu0 0
        %597 = vmatpush1.bf16.msra.mxu0 0
        %598 = vmatprep.subr.bf16.mxu0 0
        %599 = vmatpush1.bf16.msra.mxu0 0
        %600 = vmatprep.subr.bf16.mxu0 0
        %601 = vmatpush1.bf16.msra.mxu0 0
        %602 = vmatprep.subr.bf16.mxu0 0
        %603 = vmatpush1.bf16.msra.mxu0 0
        %604 = vmatprep.mubr.bf16.mxu0 0
        %605 = vmatmul.mubr.bf16.gmra.mrb[0].mxu0 %v436
        %v606 = vpop.f32.mrb[0].mxu0
        %v607 = vadd.f32 %v257, %v606
        %v608 = vpop.f32.mrb[0].mxu0
        %v609 = vadd.f32 %v257, %v608
        %v610 = vpop.f32.mrb[0].mxu0
        %v611 = vadd.f32 %v262, %v610
        %v612 = vpop.f32.mrb[0].mxu0
        %v613 = vadd.f32 %v262, %v612
        %614 = vmatprep.mubr.bf16.mxu0 0
        %615 = vmatmul.mubr.bf16.gmra.mrb[0].mxu0 %v439
        %v616 = vpop.f32.mrb[0].mxu0
        %v617 = vadd.f32 %v267, %v616
        %v618 = vpop.f32.mrb[0].mxu0
        %v619 = vadd.f32 %v267, %v618
        %v620 = vpop.f32.mrb[0].mxu0
        %v621 = vadd.f32 %v272, %v620
        %v622 = vpop.f32.mrb[0].mxu0
        %v623 = vadd.f32 %v272, %v622
        %624 = vmatprep.mubr.bf16.mxu0 0
        %625 = vmatmul.mubr.bf16.gmra.mrb[0].mxu0 %v442
        %v626 = vpop.f32.mrb[0].mxu0
        %v627 = vadd.f32 %v277, %v626
        %v628 = vpop.f32.mrb[0].mxu0
        %v629 = vadd.f32 %v277, %v628
        %v630 = vpop.f32.mrb[0].mxu0
        %v631 = vadd.f32 %v282, %v630
        %v632 = vpop.f32.mrb[0].mxu0
        %v633 = vadd.f32 %v282, %v632
        %634 = vmatprep.mubr.bf16.mxu0 0
        %635 = vmatmul.mubr.bf16.gmra.mrb[0].mxu0 %v445
        %v636 = vpop.f32.mrb[0].mxu0
        %v637 = vadd.f32 %v287, %v636
        %v638 = vpop.f32.mrb[0].mxu0
        %v639 = vadd.f32 %v287, %v638
        %v640 = vpop.f32.mrb[0].mxu0
        %v641 = vadd.f32 %v292, %v640
        %v642 = vpop.f32.mrb[0].mxu0
        %v643 = vadd.f32 %v292, %v642
        %644 = vmatprep.mubr.bf16.mxu0 0
        %645 = vmatmul.mubr.bf16.gmra.mrb[0].mxu0 %v448
        %v646 = vpop.f32.mrb[0].mxu0
        %v647 = vadd.f32 %v297, %v646
        %v648 = vpop.f32.mrb[0].mxu0
        %v649 = vadd.f32 %v297, %v648
        %v650 = vpop.f32.mrb[0].mxu0
        %v651 = vadd.f32 %v302, %v650
        %v652 = vpop.f32.mrb[0].mxu0
        %v653 = vadd.f32 %v302, %v652
        %654 = vmatprep.mubr.bf16.mxu0 0
        %655 = vmatmul.mubr.bf16.gmra.mrb[0].mxu0 %v451
        %v656 = vpop.f32.mrb[0].mxu0
        %v657 = vadd.f32 %v307, %v656
        %v658 = vpop.f32.mrb[0].mxu0
        %v659 = vadd.f32 %v307, %v658
        %v660 = vpop.f32.mrb[0].mxu0
        %v661 = vadd.f32 %v312, %v660
        %v662 = vpop.f32.mrb[0].mxu0
        %v663 = vadd.f32 %v312, %v662
        %664 = vmatprep.mubr.bf16.mxu0 0
        %665 = vmatmul.mubr.bf16.gmra.mrb[0].mxu0 %v454
        %v666 = vpop.f32.mrb[0].mxu0
        %v667 = vadd.f32 %v317, %v666
        %v668 = vpop.f32.mrb[0].mxu0
        %v669 = vadd.f32 %v317, %v668
        %v670 = vpop.f32.mrb[0].mxu0
        %v671 = vadd.f32 %v322, %v670
        %v672 = vpop.f32.mrb[0].mxu0
        %v673 = vadd.f32 %v322, %v672
        %674 = vmatprep.mubr.bf16.mxu0 0
        %675 = vmatmul.mubr.bf16.gmra.mrb[0].mxu0 %v457
        %v676 = vpop.f32.mrb[0].mxu0
        %v677 = vadd.f32 %v327, %v676
        %v678 = vpop.f32.mrb[0].mxu0
        %v679 = vadd.f32 %v327, %v678
        %v680 = vpop.f32.mrb[0].mxu0
        %v681 = vadd.f32 %v332, %v680
        %v682 = vpop.f32.mrb[0].mxu0
        %v683 = vadd.f32 %v332, %v682
        %684 = vdwg.mxu0
        %685 = vmatprep.subr.bf16.mxu0 %v415
        %686 = vmatpush1.bf16.msra.mxu0 %v414
        %687 = vmatprep.subr.bf16.mxu0 %v421
        %688 = vmatpush1.bf16.msra.mxu0 %v420
        %689 = vmatprep.subr.bf16.mxu0 0
        %690 = vmatpush1.bf16.msra.mxu0 0
        %691 = vmatprep.subr.bf16.mxu0 0
        %692 = vmatpush1.bf16.msra.mxu0 0
        %693 = vmatprep.subr.bf16.mxu0 0
        %694 = vmatpush1.bf16.msra.mxu0 0
        %695 = vmatprep.subr.bf16.mxu0 0
        %696 = vmatpush1.bf16.msra.mxu0 0
        %697 = vmatprep.subr.bf16.mxu0 0
        %698 = vmatpush1.bf16.msra.mxu0 0
        %699 = vmatprep.subr.bf16.mxu0 0
        %700 = vmatpush1.bf16.msra.mxu0 0
        %701 = vmatprep.subr.bf16.mxu0 0
        %702 = vmatpush1.bf16.msra.mxu0 0
        %703 = vmatprep.subr.bf16.mxu0 0
        %704 = vmatpush1.bf16.msra.mxu0 0
        %705 = vmatprep.subr.bf16.mxu0 0
        %706 = vmatpush1.bf16.msra.mxu0 0
        %707 = vmatprep.subr.bf16.mxu0 0
        %708 = vmatpush1.bf16.msra.mxu0 0
        %709 = vmatprep.subr.bf16.mxu0 0
        %710 = vmatpush1.bf16.msra.mxu0 0
        %711 = vmatprep.subr.bf16.mxu0 0
        %712 = vmatpush1.bf16.msra.mxu0 0
        %713 = vmatprep.subr.bf16.mxu0 0
        %714 = vmatpush1.bf16.msra.mxu0 0
        %715 = vmatprep.subr.bf16.mxu0 0
        %716 = vmatpush1.bf16.msra.mxu0 0
        %717 = vmatprep.mubr.bf16.mxu0 0
        %718 = vmatmul.mubr.bf16.gmra.mrb[0].mxu0 %v436
        %v719 = vpop.f32.mrb[0].mxu0
        %v720 = vadd.f32 %v257, %v719
        %v721 = vpop.f32.mrb[0].mxu0
        %v722 = vadd.f32 %v257, %v721
        %v723 = vpop.f32.mrb[0].mxu0
        %v724 = vadd.f32 %v262, %v723
        %v725 = vpop.f32.mrb[0].mxu0
        %v726 = vadd.f32 %v262, %v725
        %727 = vmatprep.mubr.bf16.mxu0 0
        %728 = vmatmul.mubr.bf16.gmra.mrb[0].mxu0 %v439
        %v729 = vpop.f32.mrb[0].mxu0
        %v730 = vadd.f32 %v267, %v729
        %v731 = vpop.f32.mrb[0].mxu0
        %v732 = vadd.f32 %v267, %v731
        %v733 = vpop.f32.mrb[0].mxu0
        %v734 = vadd.f32 %v272, %v733
        %v735 = vpop.f32.mrb[0].mxu0
        %v736 = vadd.f32 %v272, %v735
        %737 = vmatprep.mubr.bf16.mxu0 0
        %738 = vmatmul.mubr.bf16.gmra.mrb[0].mxu0 %v442
        %v739 = vpop.f32.mrb[0].mxu0
        %v740 = vadd.f32 %v277, %v739
        %v741 = vpop.f32.mrb[0].mxu0
        %v742 = vadd.f32 %v277, %v741
        %v743 = vpop.f32.mrb[0].mxu0
        %v744 = vadd.f32 %v282, %v743
        %v745 = vpop.f32.mrb[0].mxu0
        %v746 = vadd.f32 %v282, %v745
        %747 = vmatprep.mubr.bf16.mxu0 0
        %748 = vmatmul.mubr.bf16.gmra.mrb[0].mxu0 %v445
        %v749 = vpop.f32.mrb[0].mxu0
        %v750 = vadd.f32 %v287, %v749
        %v751 = vpop.f32.mrb[0].mxu0
        %v752 = vadd.f32 %v287, %v751
        %v753 = vpop.f32.mrb[0].mxu0
        %v754 = vadd.f32 %v292, %v753
        %v755 = vpop.f32.mrb[0].mxu0
        %v756 = vadd.f32 %v292, %v755
        %757 = vmatprep.mubr.bf16.mxu0 0
        %758 = vmatmul.mubr.bf16.gmra.mrb[0].mxu0 %v448
        %v759 = vpop.f32.mrb[0].mxu0
        %v760 = vadd.f32 %v297, %v759
        %v761 = vpop.f32.mrb[0].mxu0
        %v762 = vadd.f32 %v297, %v761
        %v763 = vpop.f32.mrb[0].mxu0
        %v764 = vadd.f32 %v302, %v763
        %v765 = vpop.f32.mrb[0].mxu0
        %v766 = vadd.f32 %v302, %v765
        %767 = vmatprep.mubr.bf16.mxu0 0
        %768 = vmatmul.mubr.bf16.gmra.mrb[0].mxu0 %v451
        %v769 = vpop.f32.mrb[0].mxu0
        %v770 = vadd.f32 %v307, %v769
        %v771 = vpop.f32.mrb[0].mxu0
        %v772 = vadd.f32 %v307, %v771
        %v773 = vpop.f32.mrb[0].mxu0
        %v774 = vadd.f32 %v312, %v773
        %v775 = vpop.f32.mrb[0].mxu0
        %v776 = vadd.f32 %v312, %v775
        %777 = vmatprep.mubr.bf16.mxu0 0
        %778 = vmatmul.mubr.bf16.gmra.mrb[0].mxu0 %v454
        %v779 = vpop.f32.mrb[0].mxu0
        %v780 = vadd.f32 %v317, %v779
        %v781 = vpop.f32.mrb[0].mxu0
        %v782 = vadd.f32 %v317, %v781
        %v783 = vpop.f32.mrb[0].mxu0
        %v784 = vadd.f32 %v322, %v783
        %v785 = vpop.f32.mrb[0].mxu0
        %v786 = vadd.f32 %v322, %v785
        %787 = vmatprep.mubr.bf16.mxu0 0
        %788 = vmatmul.mubr.bf16.gmra.mrb[0].mxu0 %v457
        %v789 = vpop.f32.mrb[0].mxu0
        %v790 = vadd.f32 %v327, %v789
        %v791 = vpop.f32.mrb[0].mxu0
        %v792 = vadd.f32 %v327, %v791
        %v793 = vpop.f32.mrb[0].mxu0
        %v794 = vadd.f32 %v332, %v793
        %v795 = vpop.f32.mrb[0].mxu0
        %v796 = vadd.f32 %v332, %v795
        %797 = vdwg.mxu0
        %v798 = vmax.f32 %v494, 0.0
        %v799 = vmax.f32 %v496, 0.0
        %v800 = vmax.f32 %v607, 0.0
        %v801 = vmax.f32 %v609, 0.0
        %v802 = vmax.f32 %v720, 0.0
        %v803 = vmax.f32 %v722, 0.0
        %v804 = vmax.f32 %v498, 0.0
        %v805 = vmax.f32 %v500, 0.0
        %v806 = vmax.f32 %v611, 0.0
        %v807 = vmax.f32 %v613, 0.0
        %v808 = vmax.f32 %v724, 0.0
        %v809 = vmax.f32 %v726, 0.0
        %v810 = vmax.f32 %v504, 0.0
        %v811 = vmax.f32 %v506, 0.0
        %v812 = vmax.f32 %v617, 0.0
        %v813 = vmax.f32 %v619, 0.0
        %v814 = vmax.f32 %v730, 0.0
        %v815 = vmax.f32 %v732, 0.0
        %v816 = vmax.f32 %v508, 0.0
        %v817 = vmax.f32 %v510, 0.0
        %v818 = vmax.f32 %v621, 0.0
        %v819 = vmax.f32 %v623, 0.0
        %v820 = vmax.f32 %v734, 0.0
        %v821 = vmax.f32 %v736, 0.0
        %v822 = vmax.f32 %v514, 0.0
        %v823 = vmax.f32 %v516, 0.0
        %v824 = vmax.f32 %v627, 0.0
        %v825 = vmax.f32 %v629, 0.0
        %v826 = vmax.f32 %v740, 0.0
        %v827 = vmax.f32 %v742, 0.0
        %v828 = vmax.f32 %v518, 0.0
        %v829 = vmax.f32 %v520, 0.0
        %v830 = vmax.f32 %v631, 0.0
        %v831 = vmax.f32 %v633, 0.0
        %v832 = vmax.f32 %v744, 0.0
        %v833 = vmax.f32 %v746, 0.0
        %v834 = vmax.f32 %v524, 0.0
        %v835 = vmax.f32 %v526, 0.0
        %v836 = vmax.f32 %v637, 0.0
        %v837 = vmax.f32 %v639, 0.0
        %v838 = vmax.f32 %v750, 0.0
        %v839 = vmax.f32 %v752, 0.0
        %v840 = vmax.f32 %v528, 0.0
        %v841 = vmax.f32 %v530, 0.0
        %v842 = vmax.f32 %v641, 0.0
        %v843 = vmax.f32 %v643, 0.0
        %v844 = vmax.f32 %v754, 0.0
        %v845 = vmax.f32 %v756, 0.0
        %v846 = vmax.f32 %v534, 0.0
        %v847 = vmax.f32 %v536, 0.0
        %v848 = vmax.f32 %v647, 0.0
        %v849 = vmax.f32 %v649, 0.0
        %v850 = vmax.f32 %v760, 0.0
        %v851 = vmax.f32 %v762, 0.0
        %v852 = vmax.f32 %v538, 0.0
        %v853 = vmax.f32 %v540, 0.0
        %v854 = vmax.f32 %v651, 0.0
        %v855 = vmax.f32 %v653, 0.0
        %v856 = vmax.f32 %v764, 0.0
        %v857 = vmax.f32 %v766, 0.0
        %v858 = vmax.f32 %v544, 0.0
        %v859 = vmax.f32 %v546, 0.0
        %v860 = vmax.f32 %v657, 0.0
        %v861 = vmax.f32 %v659, 0.0
        %v862 = vmax.f32 %v770, 0.0
        %v863 = vmax.f32 %v772, 0.0
        %v864 = vmax.f32 %v548, 0.0
        %v865 = vmax.f32 %v550, 0.0
        %v866 = vmax.f32 %v661, 0.0
        %v867 = vmax.f32 %v663, 0.0
        %v868 = vmax.f32 %v774, 0.0
        %v869 = vmax.f32 %v776, 0.0
        %v870 = vmax.f32 %v554, 0.0
        %v871 = vmax.f32 %v556, 0.0
        %v872 = vmax.f32 %v667, 0.0
        %v873 = vmax.f32 %v669, 0.0
        %v874 = vmax.f32 %v780, 0.0
        %v875 = vmax.f32 %v782, 0.0
        %v876 = vmax.f32 %v558, 0.0
        %v877 = vmax.f32 %v560, 0.0
        %v878 = vmax.f32 %v671, 0.0
        %v879 = vmax.f32 %v673, 0.0
        %v880 = vmax.f32 %v784, 0.0
        %v881 = vmax.f32 %v786, 0.0
        %v882 = vmax.f32 %v564, 0.0
        %v883 = vmax.f32 %v566, 0.0
        %v884 = vmax.f32 %v677, 0.0
        %v885 = vmax.f32 %v679, 0.0
        %v886 = vmax.f32 %v790, 0.0
        %v887 = vmax.f32 %v792, 0.0
        %v888 = vmax.f32 %v568, 0.0
        %v889 = vmax.f32 %v570, 0.0
        %v890 = vmax.f32 %v681, 0.0
        %v891 = vmax.f32 %v683, 0.0
        %v892 = vmax.f32 %v794, 0.0
        %v893 = vmax.f32 %v796, 0.0
        %v894 = vpack.c.bf16 %v804, %v798
        %v895 = vpack.c.bf16 %v805, %v799
        %v896 = vpack.c.bf16 %v806, %v800
        %v897 = vpack.c.bf16 %v807, %v801
        %v898 = vpack.c.bf16 %v808, %v802
        %v899 = vpack.c.bf16 %v809, %v803
        %v900 = vpack.c.bf16 %v816, %v810
        %v901 = vpack.c.bf16 %v817, %v811
        %v902 = vpack.c.bf16 %v818, %v812
        %v903 = vpack.c.bf16 %v819, %v813
        %v904 = vpack.c.bf16 %v820, %v814
        %v905 = vpack.c.bf16 %v821, %v815
        %v906 = vpack.c.bf16 %v828, %v822
        %v907 = vpack.c.bf16 %v829, %v823
        %v908 = vpack.c.bf16 %v830, %v824
        %v909 = vpack.c.bf16 %v831, %v825
        %v910 = vpack.c.bf16 %v832, %v826
        %v911 = vpack.c.bf16 %v833, %v827
        %v912 = vpack.c.bf16 %v840, %v834
        %v913 = vpack.c.bf16 %v841, %v835
        %v914 = vpack.c.bf16 %v842, %v836
        %v915 = vpack.c.bf16 %v843, %v837
        %v916 = vpack.c.bf16 %v844, %v838
        %v917 = vpack.c.bf16 %v845, %v839
        %v918 = vpack.c.bf16 %v852, %v846
        %v919 = vpack.c.bf16 %v853, %v847
        %v920 = vpack.c.bf16 %v854, %v848
        %v921 = vpack.c.bf16 %v855, %v849
        %v922 = vpack.c.bf16 %v856, %v850
        %v923 = vpack.c.bf16 %v857, %v851
        %v924 = vpack.c.bf16 %v864, %v858
        %v925 = vpack.c.bf16 %v865, %v859
        %v926 = vpack.c.bf16 %v866, %v860
        %v927 = vpack.c.bf16 %v867, %v861
        %v928 = vpack.c.bf16 %v868, %v862
        %v929 = vpack.c.bf16 %v869, %v863
        %v930 = vpack.c.bf16 %v876, %v870
        %v931 = vpack.c.bf16 %v877, %v871
        %v932 = vpack.c.bf16 %v878, %v872
        %v933 = vpack.c.bf16 %v879, %v873
        %v934 = vpack.c.bf16 %v880, %v874
        %v935 = vpack.c.bf16 %v881, %v875
        %v936 = vpack.c.bf16 %v888, %v882
        %v937 = vpack.c.bf16 %v889, %v883
        %v938 = vpack.c.bf16 %v890, %v884
        %v939 = vpack.c.bf16 %v891, %v885
        %v940 = vpack.c.bf16 %v892, %v886
        %v941 = vpack.c.bf16 %v893, %v887
        %v990 = vunpack.c.l.b16 %v894
        %v991 = vunpack.c.l.b16 %v895
        %v992 = vunpack.c.l.b16 %v896
        %v993 = vunpack.c.l.b16 %v897
        %v994 = vunpack.c.l.b16 %v898
        %v995 = vunpack.c.l.b16 %v899
        %v996 = vunpack.c.h.b16 %v894
        %v997 = vunpack.c.h.b16 %v895
        %v998 = vunpack.c.h.b16 %v896
        %v999 = vunpack.c.h.b16 %v897
        %v1000 = vunpack.c.h.b16 %v898
        %v1001 = vunpack.c.h.b16 %v899
        %v1002 = vunpack.c.l.b16 %v900
        %v1003 = vunpack.c.l.b16 %v901
        %v1004 = vunpack.c.l.b16 %v902
        %v1005 = vunpack.c.l.b16 %v903
        %v1006 = vunpack.c.l.b16 %v904
        %v1007 = vunpack.c.l.b16 %v905
        %v1008 = vunpack.c.h.b16 %v900
        %v1009 = vunpack.c.h.b16 %v901
        %v1010 = vunpack.c.h.b16 %v902
        %v1011 = vunpack.c.h.b16 %v903
        %v1012 = vunpack.c.h.b16 %v904
        %v1013 = vunpack.c.h.b16 %v905
        %v1014 = vunpack.c.l.b16 %v906
        %v1015 = vunpack.c.l.b16 %v907
        %v1016 = vunpack.c.l.b16 %v908
        %v1017 = vunpack.c.l.b16 %v909
        %v1018 = vunpack.c.l.b16 %v910
        %v1019 = vunpack.c.l.b16 %v911
        %v1020 = vunpack.c.h.b16 %v906
        %v1021 = vunpack.c.h.b16 %v907
        %v1022 = vunpack.c.h.b16 %v908
        %v1023 = vunpack.c.h.b16 %v909
        %v1024 = vunpack.c.h.b16 %v910
        %v1025 = vunpack.c.h.b16 %v911
        %v1026 = vunpack.c.l.b16 %v912
        %v1027 = vunpack.c.l.b16 %v913
        %v1028 = vunpack.c.l.b16 %v914
        %v1029 = vunpack.c.l.b16 %v915
        %v1030 = vunpack.c.l.b16 %v916
        %v1031 = vunpack.c.l.b16 %v917
        %v1032 = vunpack.c.h.b16 %v912
        %v1033 = vunpack.c.h.b16 %v913
        %v1034 = vunpack.c.h.b16 %v914
        %v1035 = vunpack.c.h.b16 %v915
        %v1036 = vunpack.c.h.b16 %v916
        %v1037 = vunpack.c.h.b16 %v917
        %v1038 = vunpack.c.l.b16 %v918
        %v1039 = vunpack.c.l.b16 %v919
        %v1040 = vunpack.c.l.b16 %v920
        %v1041 = vunpack.c.l.b16 %v921
        %v1042 = vunpack.c.l.b16 %v922
        %v1043 = vunpack.c.l.b16 %v923
        %v1044 = vunpack.c.h.b16 %v918
        %v1045 = vunpack.c.h.b16 %v919
        %v1046 = vunpack.c.h.b16 %v920
        %v1047 = vunpack.c.h.b16 %v921
        %v1048 = vunpack.c.h.b16 %v922
        %v1049 = vunpack.c.h.b16 %v923
        %v1050 = vunpack.c.l.b16 %v924
        %v1051 = vunpack.c.l.b16 %v925
        %v1052 = vunpack.c.l.b16 %v926
        %v1053 = vunpack.c.l.b16 %v927
        %v1054 = vunpack.c.l.b16 %v928
        %v1055 = vunpack.c.l.b16 %v929
        %v1056 = vunpack.c.h.b16 %v924
        %v1057 = vunpack.c.h.b16 %v925
        %v1058 = vunpack.c.h.b16 %v926
        %v1059 = vunpack.c.h.b16 %v927
        %v1060 = vunpack.c.h.b16 %v928
        %v1061 = vunpack.c.h.b16 %v929
        %v1062 = vunpack.c.l.b16 %v930
        %v1063 = vunpack.c.l.b16 %v931
        %v1064 = vunpack.c.l.b16 %v932
        %v1065 = vunpack.c.l.b16 %v933
        %v1066 = vunpack.c.l.b16 %v934
        %v1067 = vunpack.c.l.b16 %v935
        %v1068 = vunpack.c.h.b16 %v930
        %v1069 = vunpack.c.h.b16 %v931
        %v1070 = vunpack.c.h.b16 %v932
        %v1071 = vunpack.c.h.b16 %v933
        %v1072 = vunpack.c.h.b16 %v934
        %v1073 = vunpack.c.h.b16 %v935
        %v1074 = vunpack.c.l.b16 %v936
        %v1075 = vunpack.c.l.b16 %v937
        %v1076 = vunpack.c.l.b16 %v938
        %v1077 = vunpack.c.l.b16 %v939
        %v1078 = vunpack.c.l.b16 %v940
        %v1079 = vunpack.c.l.b16 %v941
        %v1080 = vunpack.c.h.b16 %v936
        %v1081 = vunpack.c.h.b16 %v937
        %v1082 = vunpack.c.h.b16 %v938
        %v1083 = vunpack.c.h.b16 %v939
        %v1084 = vunpack.c.h.b16 %v940
        %v1085 = vunpack.c.h.b16 %v941
        %v1086 = vpack.c.b16 %v991, %v990
        %v1087 = vpack.c.b16 %v993, %v992
        %v1088 = vpack.c.b16 %v995, %v994
        %v1089 = vpack.c.b16 %v997, %v996
        %v1090 = vpack.c.b16 %v999, %v998
        %v1091 = vpack.c.b16 %v1001, %v1000
        %v1092 = vpack.c.b16 %v1003, %v1002
        %v1093 = vpack.c.b16 %v1005, %v1004
        %v1094 = vpack.c.b16 %v1007, %v1006
        %v1095 = vpack.c.b16 %v1009, %v1008
        %v1096 = vpack.c.b16 %v1011, %v1010
        %v1097 = vpack.c.b16 %v1013, %v1012
        %v1098 = vpack.c.b16 %v1015, %v1014
        %v1099 = vpack.c.b16 %v1017, %v1016
        %v1100 = vpack.c.b16 %v1019, %v1018
        %v1101 = vpack.c.b16 %v1021, %v1020
        %v1102 = vpack.c.b16 %v1023, %v1022
        %v1103 = vpack.c.b16 %v1025, %v1024
        %v1104 = vpack.c.b16 %v1027, %v1026
        %v1105 = vpack.c.b16 %v1029, %v1028
        %v1106 = vpack.c.b16 %v1031, %v1030
        %v1107 = vpack.c.b16 %v1033, %v1032
        %v1108 = vpack.c.b16 %v1035, %v1034
        %v1109 = vpack.c.b16 %v1037, %v1036
        %v1110 = vpack.c.b16 %v1039, %v1038
        %v1111 = vpack.c.b16 %v1041, %v1040
        %v1112 = vpack.c.b16 %v1043, %v1042
        %v1113 = vpack.c.b16 %v1045, %v1044
        %v1114 = vpack.c.b16 %v1047, %v1046
        %v1115 = vpack.c.b16 %v1049, %v1048
        %v1116 = vpack.c.b16 %v1051, %v1050
        %v1117 = vpack.c.b16 %v1053, %v1052
        %v1118 = vpack.c.b16 %v1055, %v1054
        %v1119 = vpack.c.b16 %v1057, %v1056
        %v1120 = vpack.c.b16 %v1059, %v1058
        %v1121 = vpack.c.b16 %v1061, %v1060
        %v1122 = vpack.c.b16 %v1063, %v1062
        %v1123 = vpack.c.b16 %v1065, %v1064
        %v1124 = vpack.c.b16 %v1067, %v1066
        %v1125 = vpack.c.b16 %v1069, %v1068
        %v1126 = vpack.c.b16 %v1071, %v1070
        %v1127 = vpack.c.b16 %v1073, %v1072
        %v1128 = vpack.c.b16 %v1075, %v1074
        %v1129 = vpack.c.b16 %v1077, %v1076
        %v1130 = vpack.c.b16 %v1079, %v1078
        %v1131 = vpack.c.b16 %v1081, %v1080
        %v1132 = vpack.c.b16 %v1083, %v1082
        %v1133 = vpack.c.b16 %v1085, %v1084
        %1182 = vst [vmem:[%s206] sm:$0xff] %v1086
        %1183 = vst [vmem:[%s206 + $0x8] sm:$0xff] %v1087
        %1184 = vst [vmem:[%s206 + $0x10] sm:$0xff] %v1088
        %1185 = vst [vmem:[%s206 + $0x18] sm:$0xff] %v1089
        %1186 = vst [vmem:[%s206 + $0x20] sm:$0xff] %v1090
        %1187 = vst [vmem:[%s206 + $0x28] sm:$0xff] %v1091
        %1188 = vst [vmem:[%s206 + $0x30] sm:$0xff] %v1092
        %1189 = vst [vmem:[%s206 + $0x38] sm:$0xff] %v1093
        %1190 = vst [vmem:[%s206 + $0x40] sm:$0xff] %v1094
        %1191 = vst [vmem:[%s206 + $0x48] sm:$0xff] %v1095
        %1192 = vst [vmem:[%s206 + $0x50] sm:$0xff] %v1096
        %1193 = vst [vmem:[%s206 + $0x58] sm:$0xff] %v1097
        %1194 = vst [vmem:[%s206 + $0x60] sm:$0xff] %v1098
        %1195 = vst [vmem:[%s206 + $0x68] sm:$0xff] %v1099
        %1196 = vst [vmem:[%s206 + $0x70] sm:$0xff] %v1100
        %1197 = vst [vmem:[%s206 + $0x78] sm:$0xff] %v1101
        %1198 = vst [vmem:[%s206 + $0x80] sm:$0xff] %v1102
        %1199 = vst [vmem:[%s206 + $0x88] sm:$0xff] %v1103
        %1200 = vst [vmem:[%s206 + $0x90] sm:$0xff] %v1104
        %1201 = vst [vmem:[%s206 + $0x98] sm:$0xff] %v1105
        %1202 = vst [vmem:[%s206 + $0xa0] sm:$0xff] %v1106
        %1203 = vst [vmem:[%s206 + $0xa8] sm:$0xff] %v1107
        %1204 = vst [vmem:[%s206 + $0xb0] sm:$0xff] %v1108
        %1205 = vst [vmem:[%s206 + $0xb8] sm:$0xff] %v1109
        %1206 = vst [vmem:[%s206 + $0xc0] sm:$0xff] %v1110
        %1207 = vst [vmem:[%s206 + $0xc8] sm:$0xff] %v1111
        %1208 = vst [vmem:[%s206 + $0xd0] sm:$0xff] %v1112
        %1209 = vst [vmem:[%s206 + $0xd8] sm:$0xff] %v1113
        %1210 = vst [vmem:[%s206 + $0xe0] sm:$0xff] %v1114
        %1211 = vst [vmem:[%s206 + $0xe8] sm:$0xff] %v1115
        %1212 = vst [vmem:[%s206 + $0xf0] sm:$0xff] %v1116
        %1213 = vst [vmem:[%s206 + $0xf8] sm:$0xff] %v1117
        %1214 = vst [vmem:[%s206 + $0x100] sm:$0xff] %v1118
        %1215 = vst [vmem:[%s206 + $0x108] sm:$0xff] %v1119
        %1216 = vst [vmem:[%s206 + $0x110] sm:$0xff] %v1120
        %1217 = vst [vmem:[%s206 + $0x118] sm:$0xff] %v1121
        %1218 = vst [vmem:[%s206 + $0x120] sm:$0xff] %v1122
        %1219 = vst [vmem:[%s206 + $0x128] sm:$0xff] %v1123
        %1220 = vst [vmem:[%s206 + $0x130] sm:$0xff] %v1124
        %1221 = vst [vmem:[%s206 + $0x138] sm:$0xff] %v1125
        %1222 = vst [vmem:[%s206 + $0x140] sm:$0xff] %v1126
        %1223 = vst [vmem:[%s206 + $0x148] sm:$0xff] %v1127
        %1224 = vst [vmem:[%s206 + $0x150] sm:$0xff] %v1128
        %1225 = vst [vmem:[%s206 + $0x158] sm:$0xff] %v1129
        %1226 = vst [vmem:[%s206 + $0x160] sm:$0xff] %v1130
        %1227 = vst [vmem:[%s206 + $0x168] sm:$0xff] %v1131
        %1228 = vst [vmem:[%s206 + $0x170] sm:$0xff] %v1132
        %1229 = vst [vmem:[%s206 + $0x178] sm:$0xff] %v1133
        %s1230 = sand.u32 %s90, 1
        %s1231 = sand.u32 %s90, 1
        %s1232 = smul.addr %s1231, 384
        %s1233 = scalar_lea.vmem [#allocation3], %s1232
        // Predicated region
        $region56: #{fnet_forward.2} parent=50 // pred_check
          %p1234 = pneg %p100
        $region57: #{fnet_forward.2} parent=50 // pred_check_branch
          %1236 = sbr.rel (%p1234) target = $region59
        $region58: #{fnet_forward.2} parent=50 // pred_region
          %s1237 = smul.u32 6, %s14
          %s1238 = smul.addr %s1237, 4
          %s1239 = scalar_lea.vmem %s3, %s1238
          // Predicated region
          $region60: #{fnet_forward.2} parent=58 // pred_check
            _
          $region61: #{fnet_forward.2} parent=58 // pred_check_branch
            %1241 = sbr.rel (0) target = $region63
          $region62: #{fnet_forward.2} parent=58 // pred_region
            // Predicated region
            $region64: #{fnet_forward.2} parent=62 // pred_check
              _
            $region65: #{fnet_forward.2} parent=62 // pred_check_branch
              %1243 = sbr.rel (0) target = $region67
            $region66: #{fnet_forward.2} parent=62 // pred_region
              loop: start=0, step=1, limit=1
              $region68: #{fnet_forward.2} parent=66 // loop_pre_header
                _
              $region69: #{fnet_forward.2} parent=66 // loop_header
                %s1245 = sphi 0, %s1249
                %p1246 = scmp.ge.s32.totalorder %s1245, 1
                %s1250 = sphi %s1233, %s1233
                %s1251 = sphi %s1239, %s1239
              $region70: #{fnet_forward.2} parent=66 // loop_header_branch
                %1248 = sbr.rel (%p1246) target = $region74
              $region71: #{fnet_forward.2} parent=66 // loop_body
                %v1252 = vld [vmem:[%s1250] sm:$0xff]
                %1253 = vst [vmem:[%s1251] sm:$0xff] %v1252
                %v1254 = vld [vmem:[%s1250 + $0x8] sm:$0xff]
                %1255 = vst [vmem:[%s1251 + $0x8] sm:$0xff] %v1254
                %v1256 = vld [vmem:[%s1250 + $0x10] sm:$0xff]
                %1257 = vst [vmem:[%s1251 + $0x10] sm:$0xff] %v1256
                %v1258 = vld [vmem:[%s1250 + $0x18] sm:$0xff]
                %1259 = vst [vmem:[%s1251 + $0xc0] sm:$0xff] %v1258
                %v1260 = vld [vmem:[%s1250 + $0x20] sm:$0xff]
                %1261 = vst [vmem:[%s1251 + $0xc8] sm:$0xff] %v1260
                %v1262 = vld [vmem:[%s1250 + $0x28] sm:$0xff]
                %1263 = vst [vmem:[%s1251 + $0xd0] sm:$0xff] %v1262
                %v1264 = vld [vmem:[%s1250 + $0x30] sm:$0xff]
                %1265 = vst [vmem:[%s1251 + $0x180] sm:$0xff] %v1264
                %v1266 = vld [vmem:[%s1250 + $0x38] sm:$0xff]
                %1267 = vst [vmem:[%s1251 + $0x188] sm:$0xff] %v1266
                %v1268 = vld [vmem:[%s1250 + $0x40] sm:$0xff]
                %1269 = vst [vmem:[%s1251 + $0x190] sm:$0xff] %v1268
                %v1270 = vld [vmem:[%s1250 + $0x48] sm:$0xff]
                %1271 = vst [vmem:[%s1251 + $0x240] sm:$0xff] %v1270
                %v1272 = vld [vmem:[%s1250 + $0x50] sm:$0xff]
                %1273 = vst [vmem:[%s1251 + $0x248] sm:$0xff] %v1272
                %v1274 = vld [vmem:[%s1250 + $0x58] sm:$0xff]
                %1275 = vst [vmem:[%s1251 + $0x250] sm:$0xff] %v1274
                %v1276 = vld [vmem:[%s1250 + $0x60] sm:$0xff]
                %1277 = vst [vmem:[%s1251 + $0x300] sm:$0xff] %v1276
                %v1278 = vld [vmem:[%s1250 + $0x68] sm:$0xff]
                %1279 = vst [vmem:[%s1251 + $0x308] sm:$0xff] %v1278
                %v1280 = vld [vmem:[%s1250 + $0x70] sm:$0xff]
                %1281 = vst [vmem:[%s1251 + $0x310] sm:$0xff] %v1280
                %v1282 = vld [vmem:[%s1250 + $0x78] sm:$0xff]
                %1283 = vst [vmem:[%s1251 + $0x3c0] sm:$0xff] %v1282
                %v1284 = vld [vmem:[%s1250 + $0x80] sm:$0xff]
                %1285 = vst [vmem:[%s1251 + $0x3c8] sm:$0xff] %v1284
                %v1286 = vld [vmem:[%s1250 + $0x88] sm:$0xff]
                %1287 = vst [vmem:[%s1251 + $0x3d0] sm:$0xff] %v1286
                %v1288 = vld [vmem:[%s1250 + $0x90] sm:$0xff]
                %1289 = vst [vmem:[%s1251 + $0x480] sm:$0xff] %v1288
                %v1290 = vld [vmem:[%s1250 + $0x98] sm:$0xff]
                %1291 = vst [vmem:[%s1251 + $0x488] sm:$0xff] %v1290
                %v1292 = vld [vmem:[%s1250 + $0xa0] sm:$0xff]
                %1293 = vst [vmem:[%s1251 + $0x490] sm:$0xff] %v1292
                %v1294 = vld [vmem:[%s1250 + $0xa8] sm:$0xff]
                %1295 = vst [vmem:[%s1251 + $0x540] sm:$0xff] %v1294
                %v1296 = vld [vmem:[%s1250 + $0xb0] sm:$0xff]
                %1297 = vst [vmem:[%s1251 + $0x548] sm:$0xff] %v1296
                %v1298 = vld [vmem:[%s1250 + $0xb8] sm:$0xff]
                %1299 = vst [vmem:[%s1251 + $0x550] sm:$0xff] %v1298
                %v1300 = vld [vmem:[%s1250 + $0xc0] sm:$0xff]
                %1301 = vst [vmem:[%s1251 + $0x600] sm:$0xff] %v1300
                %v1302 = vld [vmem:[%s1250 + $0xc8] sm:$0xff]
                %1303 = vst [vmem:[%s1251 + $0x608] sm:$0xff] %v1302
                %v1304 = vld [vmem:[%s1250 + $0xd0] sm:$0xff]
                %1305 = vst [vmem:[%s1251 + $0x610] sm:$0xff] %v1304
                %v1306 = vld [vmem:[%s1250 + $0xd8] sm:$0xff]
                %1307 = vst [vmem:[%s1251 + $0x6c0] sm:$0xff] %v1306
                %v1308 = vld [vmem:[%s1250 + $0xe0] sm:$0xff]
                %1309 = vst [vmem:[%s1251 + $0x6c8] sm:$0xff] %v1308
                %v1310 = vld [vmem:[%s1250 + $0xe8] sm:$0xff]
                %1311 = vst [vmem:[%s1251 + $0x6d0] sm:$0xff] %v1310
                %v1312 = vld [vmem:[%s1250 + $0xf0] sm:$0xff]
                %1313 = vst [vmem:[%s1251 + $0x780] sm:$0xff] %v1312
                %v1314 = vld [vmem:[%s1250 + $0xf8] sm:$0xff]
                %1315 = vst [vmem:[%s1251 + $0x788] sm:$0xff] %v1314
                %v1316 = vld [vmem:[%s1250 + $0x100] sm:$0xff]
                %1317 = vst [vmem:[%s1251 + $0x790] sm:$0xff] %v1316
                %v1318 = vld [vmem:[%s1250 + $0x108] sm:$0xff]
                %1319 = vst [vmem:[%s1251 + $0x840] sm:$0xff] %v1318
                %v1320 = vld [vmem:[%s1250 + $0x110] sm:$0xff]
                %1321 = vst [vmem:[%s1251 + $0x848] sm:$0xff] %v1320
                %v1322 = vld [vmem:[%s1250 + $0x118] sm:$0xff]
                %1323 = vst [vmem:[%s1251 + $0x850] sm:$0xff] %v1322
                %v1324 = vld [vmem:[%s1250 + $0x120] sm:$0xff]
                %1325 = vst [vmem:[%s1251 + $0x900] sm:$0xff] %v1324
                %v1326 = vld [vmem:[%s1250 + $0x128] sm:$0xff]
                %1327 = vst [vmem:[%s1251 + $0x908] sm:$0xff] %v1326
                %v1328 = vld [vmem:[%s1250 + $0x130] sm:$0xff]
                %1329 = vst [vmem:[%s1251 + $0x910] sm:$0xff] %v1328
                %v1330 = vld [vmem:[%s1250 + $0x138] sm:$0xff]
                %1331 = vst [vmem:[%s1251 + $0x9c0] sm:$0xff] %v1330
                %v1332 = vld [vmem:[%s1250 + $0x140] sm:$0xff]
                %1333 = vst [vmem:[%s1251 + $0x9c8] sm:$0xff] %v1332
                %v1334 = vld [vmem:[%s1250 + $0x148] sm:$0xff]
                %1335 = vst [vmem:[%s1251 + $0x9d0] sm:$0xff] %v1334
                %v1336 = vld [vmem:[%s1250 + $0x150] sm:$0xff]
                %1337 = vst [vmem:[%s1251 + $0xa80] sm:$0xff] %v1336
                %v1338 = vld [vmem:[%s1250 + $0x158] sm:$0xff]
                %1339 = vst [vmem:[%s1251 + $0xa88] sm:$0xff] %v1338
                %v1340 = vld [vmem:[%s1250 + $0x160] sm:$0xff]
                %1341 = vst [vmem:[%s1251 + $0xa90] sm:$0xff] %v1340
                %v1342 = vld [vmem:[%s1250 + $0x168] sm:$0xff]
                %1343 = vst [vmem:[%s1251 + $0xb40] sm:$0xff] %v1342
                %v1344 = vld [vmem:[%s1250 + $0x170] sm:$0xff]
                %1345 = vst [vmem:[%s1251 + $0xb48] sm:$0xff] %v1344
                %v1346 = vld [vmem:[%s1250 + $0x178] sm:$0xff]
                %1347 = vst [vmem:[%s1251 + $0xb50] sm:$0xff] %v1346
              $region72: #{fnet_forward.2} parent=66 // loop_footer
                %s1249 = sadd.s32 1, %s1245
              $region73: #{fnet_forward.2} parent=66 // loop_footer_branch
                %1244 = sbr.rel target = $region69
              $region74: #{fnet_forward.2} parent=66 // loop_exit
                _
            $region67: #{fnet_forward.2} parent=62 // pred_fallthru
              _
            // Predicated region
            $region75: #{fnet_forward.2} parent=62 // pred_check
              _
            $region76: #{fnet_forward.2} parent=62 // pred_check_branch
              %1349 = sbr.rel target = $region78
            $region77: #{fnet_forward.2} parent=62 // pred_region
              _
            $region78: #{fnet_forward.2} parent=62 // pred_fallthru
              _
          $region63: #{fnet_forward.2} parent=58 // pred_fallthru
            _
          %1350 = vnop
        $region59: #{fnet_forward.2} parent=50 // pred_fallthru
          _
      $region51: #{fnet_forward.2} parent=5 // pred_fallthru
        _
      %p1351 = scmp.le.s32.totalorder 2, %s9
      // Predicated region
      $region79: #{fnet_forward.2} parent=5 // pred_check
        %p1352 = pneg %p1351
      $region80: #{fnet_forward.2} parent=5 // pred_check_branch
        %1354 = sbr.rel (%p1352) target = $region82
      $region81: #{fnet_forward.2} parent=5 // pred_region
        %s1355 = ssub.s32 %s9, 2
        // Predicated region
        $region83: #{fnet_forward.2} parent=81 // pred_check
          %p1356 = pneg %p106
        $region84: #{fnet_forward.2} parent=81 // pred_check_branch
          %1358 = sbr.rel (%p1356) target = $region86
        $region85: #{fnet_forward.2} parent=81 // pred_region
          %s1359 = sand.u32 %s91, 1
          %s1360 = sand.u32 %s91, 1
          %s1361 = smul.addr %s1360, 384
          %s1362 = scalar_lea.vmem [#allocation3], %s1361
        $region86: #{fnet_forward.2} parent=81 // pred_fallthru
          _
      $region82: #{fnet_forward.2} parent=5 // pred_fallthru
        _
    $region6: #{fnet_forward.2} parent=1 // loop_footer
      %s13 = sadd.s32 1, %s9
    $region7: #{fnet_forward.2} parent=1 // loop_footer_branch
      %8 = sbr.rel target = $region3
    $region8: #{fnet_forward.2} parent=1 // loop_exit
      _

// kernel: fnet_forward.3
$region0: #{fnet_forward.3}
  #allocation0 [shape = 'u32[]', space=smem, size = 0x4, offset = 0x4, fixed_abs, tag = 'smem constant byte address 0x4 - core index']
  #allocation1 [shape = 'u32[144,128]{1,0:T(1,128)}', space=vmem, size = 0x12000, scoped, tag = 'internal scratch']
  %s0 = inlined_call_operand.vmem [shape: bf16[128,32], index: 0, kind: input, shape index: {}]
  %s1 = inlined_call_operand.vmem [shape: bf16[32,32768], index: 1, kind: input, shape index: {}]
  %s2 = inlined_call_operand.vmem [shape: f32[128,1], index: 2, kind: input, shape index: {}]
  %s3 = inlined_call_operand.vmem [shape: f32[128,32768], index: 3, kind: output, shape index: {}]
  %s4 = sld [smem:[#allocation0]]
  $region87: #{fnet_forward.3} parent=0
    _
  %s6 = ssub.s32 1, %s4
  %s7 = scalar_select 0, %s6, %s4
  $region1: #{fnet_forward.3} parent=0
    #allocation2 [shape = 'u8[524288]{0}', space=vmem, size = 0x80000, scoped, tag = 'input window, operand 1']
    #allocation3 [shape = 'u8[4194304]{0}', space=vmem, size = 0x400000, scoped, tag = 'output window, operand 0']
    loop: start=0, step=1, limit=10
    $region2: #{fnet_forward.3} parent=1 // loop_pre_header
      _
    $region3: #{fnet_forward.3} parent=1 // loop_header
      %s9 = sphi 0, %s13
      %p10 = scmp.ge.s32.totalorder %s9, 10
      %s17 = sphi 0, %s17
      %s19 = sphi 0, %s17
      %s20 = sphi 0, %s19
      %s34 = sphi 0, %s20
      %s40 = sphi 0, %s42
      %s43 = sphi 0, %s40
      %s44 = sphi 0, %s43
      %s60 = sphi 0, %s44
      %s64 = sphi 0, %s64
      %s66 = sphi 0, %s64
      %s67 = sphi 0, %s66
      %s81 = sphi 0, %s67
      %s87 = sphi 0, %s89
      %s90 = sphi 0, %s87
      %s91 = sphi 0, %s90
      %s107 = sphi 0, %s91
    $region4: #{fnet_forward.3} parent=1 // loop_header_branch
      %12 = sbr.rel (%p10) target = $region8
    $region5: #{fnet_forward.3} parent=1 // loop_body
      %s14 = ssub.s32 %s9, 1
      %s15 = ssub.s32 %s9, 2
      %s16 = sadd.s32 %s9, 1
      %s18 = sadd.s32 %s17, 1
      %p21 = scmp.eq.s32.totalorder %s9, 7
      %p22 = scmp.ne.s32.totalorder %s17, %s19
      %p23 = scmp.eq.s32.totalorder %s9, 0
      %p24 = por %p22, %p23
      %p25 = scmp.ne.s32.totalorder %s17, %s19
      %p26 = scmp.eq.s32.totalorder %s14, 7
      %p27 = por %p25, %p26
      %p28 = scmp.ne.s32.totalorder %s19, %s20
      %p29 = scmp.eq.s32.totalorder %s14, 0
      %p30 = por %p28, %p29
      %p31 = scmp.ne.s32.totalorder %s19, %s20
      %p32 = scmp.eq.s32.totalorder %s15, 7
      %p33 = por %p31, %p32
      %p35 = scmp.ne.s32.totalorder %s20, %s34
      %p36 = scmp.eq.s32.totalorder %s15, 0
      %p37 = por %p35, %p36
      %s38 = ssub.s32 %s9, %s16
      %p39 = scmp.eq.s32.totalorder %s38, 0
      %s41 = sadd.s32 %s40, 1
      %s42 = scalar_select %p39, %s40, %s41
      %p45 = pneg %p39
      %p46 = scmp.eq.s32.totalorder %s9, 7
      %p47 = por %p45, %p46
      %p48 = scmp.ne.s32.totalorder %s40, %s43
      %p49 = scmp.eq.s32.totalorder %s9, 0
      %p50 = por %p48, %p49
      %p51 = scmp.ne.s32.totalorder %s40, %s43
      %p52 = scmp.eq.s32.totalorder %s14, 7
      %p53 = por %p51, %p52
      %p54 = scmp.ne.s32.totalorder %s43, %s44
      %p55 = scmp.eq.s32.totalorder %s14, 0
      %p56 = por %p54, %p55
      %p57 = scmp.ne.s32.totalorder %s43, %s44
      %p58 = scmp.eq.s32.totalorder %s15, 7
      %p59 = por %p57, %p58
      %p61 = scmp.ne.s32.totalorder %s44, %s60
      %p62 = scmp.eq.s32.totalorder %s15, 0
      %p63 = por %p61, %p62
      %s65 = sadd.s32 %s64, 1
      %p68 = scmp.eq.s32.totalorder %s9, 7
      %p69 = scmp.ne.s32.totalorder %s64, %s66
      %p70 = scmp.eq.s32.totalorder %s9, 0
      %p71 = por %p69, %p70
      %p72 = scmp.ne.s32.totalorder %s64, %s66
      %p73 = scmp.eq.s32.totalorder %s14, 7
      %p74 = por %p72, %p73
      %p75 = scmp.ne.s32.totalorder %s66, %s67
      %p76 = scmp.eq.s32.totalorder %s14, 0
      %p77 = por %p75, %p76
      %p78 = scmp.ne.s32.totalorder %s66, %s67
      %p79 = scmp.eq.s32.totalorder %s15, 7
      %p80 = por %p78, %p79
      %p82 = scmp.ne.s32.totalorder %s67, %s81
      %p83 = scmp.eq.s32.totalorder %s15, 0
      %p84 = por %p82, %p83
      %s85 = ssub.s32 %s9, %s16
      %p86 = scmp.eq.s32.totalorder %s85, 0
      %s88 = sadd.s32 %s87, 1
      %s89 = scalar_select %p86, %s87, %s88
      %p92 = pneg %p86
      %p93 = scmp.eq.s32.totalorder %s9, 7
      %p94 = por %p92, %p93
      %p95 = scmp.ne.s32.totalorder %s87, %s90
      %p96 = scmp.eq.s32.totalorder %s9, 0
      %p97 = por %p95, %p96
      %p98 = scmp.ne.s32.totalorder %s87, %s90
      %p99 = scmp.eq.s32.totalorder %s14, 7
      %p100 = por %p98, %p99
      %p101 = scmp.ne.s32.totalorder %s90, %s91
      %p102 = scmp.eq.s32.totalorder %s14, 0
      %p103 = por %p101, %p102
      %p104 = scmp.ne.s32.totalorder %s90, %s91
      %p105 = scmp.eq.s32.totalorder %s15, 7
      %p106 = por %p104, %p105
      %p108 = scmp.ne.s32.totalorder %s91, %s107
      %p109 = scmp.eq.s32.totalorder %s15, 0
      %p110 = por %p108, %p109
      %p111 = scmp.le.s32.totalorder 1, %s9
      %p112 = scmp.lt.s32.totalorder %s9, 9
      %p113 = pnand %p111, %p112
      %p114 = pneg %p113
      // Predicated region
      $region9: #{fnet_forward.3} parent=5 // pred_check
        _
      $region10: #{fnet_forward.3} parent=5 // pred_check_branch
        %116 = sbr.rel (%p113) target = $region12
      $region11: #{fnet_forward.3} parent=5 // pred_region
        %s117 = ssub.s32 %s9, 1
        // Predicated region
        $region13: #{fnet_forward.3} parent=11 // pred_check
          %p118 = pneg %p30
        $region14: #{fnet_forward.3} parent=11 // pred_check_branch
          %120 = sbr.rel (%p118) target = $region16
        $region15: #{fnet_forward.3} parent=11 // pred_region
          _
        $region16: #{fnet_forward.3} parent=11 // pred_fallthru
          _
        // Predicated region
        $region17: #{fnet_forward.3} parent=11 // pred_check
          %p121 = pneg %p77
        $region18: #{fnet_forward.3} parent=11 // pred_check_branch
          %123 = sbr.rel (%p121) target = $region20
        $region19: #{fnet_forward.3} parent=11 // pred_region
          _
        $region20: #{fnet_forward.3} parent=11 // pred_fallthru
          _
      $region12: #{fnet_forward.3} parent=5 // pred_fallthru
        _
      %p124 = scmp.lt.s32.totalorder %s9, 8
      // Predicated region
      $region21: #{fnet_forward.3} parent=5 // pred_check
        %p125 = pneg %p124
      $region22: #{fnet_forward.3} parent=5 // pred_check_branch
        %127 = sbr.rel (%p125) target = $region24
      $region23: #{fnet_forward.3} parent=5 // pred_region
        // Predicated region
        $region25: #{fnet_forward.3} parent=23 // pred_check
          %p128 = pneg %p50
        $region26: #{fnet_forward.3} parent=23 // pred_check_branch
          %130 = sbr.rel (%p128) target = $region28
        $region27: #{fnet_forward.3} parent=23 // pred_region
          %s131 = sand.u32 %s40, 1
          %s132 = sand.u32 %s40, 1
          %s133 = smul.addr %s132, 512
          %s134 = scalar_lea.vmem [#allocation2], %s133
          %s135 = smul.u32 32, %s9
          %s136 = smul.addr %s135, 4
          %s137 = scalar_lea.vmem %s1, %s136
          // Predicated region
          $region29: #{fnet_forward.3} parent=27 // pred_check
            _
          $region30: #{fnet_forward.3} parent=27 // pred_check_branch
            %139 = sbr.rel (0) target = $region32
          $region31: #{fnet_forward.3} parent=27 // pred_region
            // Predicated region
            $region33: #{fnet_forward.3} parent=31 // pred_check
              _
            $region34: #{fnet_forward.3} parent=31 // pred_check_branch
              %141 = sbr.rel (0) target = $region36
            $region35: #{fnet_forward.3} parent=31 // pred_region
              loop: start=0, step=1, limit=1
              $region37: #{fnet_forward.3} parent=35 // loop_pre_header
                _
              $region38: #{fnet_forward.3} parent=35 // loop_header
                %s143 = sphi 0, %s147
                %p144 = scmp.ge.s32.totalorder %s143, 1
                %s148 = sphi %s137, %s137
                %s149 = sphi %s134, %s134
              $region39: #{fnet_forward.3} parent=35 // loop_header_branch
                %146 = sbr.rel (%p144) target = $region43
              $region40: #{fnet_forward.3} parent=35 // loop_body
                %v150 = vld [vmem:[%s148] sm:$0xff]
                %151 = vst [vmem:[%s149] sm:$0xff] %v150
                %v152 = vld [vmem:[%s148 + $0x8] sm:$0xff]
                %153 = vst [vmem:[%s149 + $0x8] sm:$0xff] %v152
                %v154 = vld [vmem:[%s148 + $0x10] sm:$0xff]
                %155 = vst [vmem:[%s149 + $0x10] sm:$0xff] %v154
                %v156 = vld [vmem:[%s148 + $0x18] sm:$0xff]
                %157 = vst [vmem:[%s149 + $0x18] sm:$0xff] %v156
                %v158 = vld [vmem:[%s148 + $0x20] sm:$0xff]
                %159 = vst [vmem:[%s149 + $0x20] sm:$0xff] %v158
                %v160 = vld [vmem:[%s148 + $0x28] sm:$0xff]
                %161 = vst [vmem:[%s149 + $0x28] sm:$0xff] %v160
                %v162 = vld [vmem:[%s148 + $0x30] sm:$0xff]
                %163 = vst [vmem:[%s149 + $0x30] sm:$0xff] %v162
                %v164 = vld [vmem:[%s148 + $0x38] sm:$0xff]
                %165 = vst [vmem:[%s149 + $0x38] sm:$0xff] %v164
                %v166 = vld [vmem:[%s148 + $0x40] sm:$0xff]
                %167 = vst [vmem:[%s149 + $0x40] sm:$0xff] %v166
                %v168 = vld [vmem:[%s148 + $0x48] sm:$0xff]
                %169 = vst [vmem:[%s149 + $0x48] sm:$0xff] %v168
                %v170 = vld [vmem:[%s148 + $0x50] sm:$0xff]
                %171 = vst [vmem:[%s149 + $0x50] sm:$0xff] %v170
                %v172 = vld [vmem:[%s148 + $0x58] sm:$0xff]
                %173 = vst [vmem:[%s149 + $0x58] sm:$0xff] %v172
                %v174 = vld [vmem:[%s148 + $0x60] sm:$0xff]
                %175 = vst [vmem:[%s149 + $0x60] sm:$0xff] %v174
                %v176 = vld [vmem:[%s148 + $0x68] sm:$0xff]
                %177 = vst [vmem:[%s149 + $0x68] sm:$0xff] %v176
                %v178 = vld [vmem:[%s148 + $0x70] sm:$0xff]
                %179 = vst [vmem:[%s149 + $0x70] sm:$0xff] %v178
                %v180 = vld [vmem:[%s148 + $0x78] sm:$0xff]
                %181 = vst [vmem:[%s149 + $0x78] sm:$0xff] %v180
                %v182 = vld [vmem:[%s148 + $0x400] sm:$0xff]
                %183 = vst [vmem:[%s149 + $0x80] sm:$0xff] %v182
                %v184 = vld [vmem:[%s148 + $0x408] sm:$0xff]
                %185 = vst [vmem:[%s149 + $0x88] sm:$0xff] %v184
                %v186 = vld [vmem:[%s148 + $0x410] sm:$0xff]
                %187 = vst [vmem:[%s149 + $0x90] sm:$0xff] %v186
                %v188 = vld [vmem:[%s148 + $0x418] sm:$0xff]
                %189 = vst [vmem:[%s149 + $0x98] sm:$0xff] %v188
                %v190 = vld [vmem:[%s148 + $0x420] sm:$0xff]
                %191 = vst [vmem:[%s149 + $0xa0] sm:$0xff] %v190
                %v192 = vld [vmem:[%s148 + $0x428] sm:$0xff]
                %193 = vst [vmem:[%s149 + $0xa8] sm:$0xff] %v192
                %v194 = vld [vmem:[%s148 + $0x430] sm:$0xff]
                %195 = vst [vmem:[%s149 + $0xb0] sm:$0xff] %v194
                %v196 = vld [vmem:[%s148 + $0x438] sm:$0xff]
                %197 = vst [vmem:[%s149 + $0xb8] sm:$0xff] %v196
                %v198 = vld [vmem:[%s148 + $0x440] sm:$0xff]
                %199 = vst [vmem:[%s149 + $0xc0] sm:$0xff] %v198
                %v200 = vld [vmem:[%s148 + $0x448] sm:$0xff]
                %201 = vst [vmem:[%s149 + $0xc8] sm:$0xff] %v200
                %v202 = vld [vmem:[%s148 + $0x450] sm:$0xff]
                %203 = vst [vmem:[%s149 + $0xd0] sm:$0xff] %v202
                %v204 = vld [vmem:[%s148 + $0x458] sm:$0xff]
                %205 = vst [vmem:[%s149 + $0xd8] sm:$0xff] %v204
                %v206 = vld [vmem:[%s148 + $0x460] sm:$0xff]
                %207 = vst [vmem:[%s149 + $0xe0] sm:$0xff] %v206
                %v208 = vld [vmem:[%s148 + $0x468] sm:$0xff]
                %209 = vst [vmem:[%s149 + $0xe8] sm:$0xff] %v208
                %v210 = vld [vmem:[%s148 + $0x470] sm:$0xff]
                %211 = vst [vmem:[%s149 + $0xf0] sm:$0xff] %v210
                %v212 = vld [vmem:[%s148 + $0x478] sm:$0xff]
                %213 = vst [vmem:[%s149 + $0xf8] sm:$0xff] %v212
                %v214 = vld [vmem:[%s148 + $0x800] sm:$0xff]
                %215 = vst [vmem:[%s149 + $0x100] sm:$0xff] %v214
                %v216 = vld [vmem:[%s148 + $0x808] sm:$0xff]
                %217 = vst [vmem:[%s149 + $0x108] sm:$0xff] %v216
                %v218 = vld [vmem:[%s148 + $0x810] sm:$0xff]
                %219 = vst [vmem:[%s149 + $0x110] sm:$0xff] %v218
                %v220 = vld [vmem:[%s148 + $0x818] sm:$0xff]
                %221 = vst [vmem:[%s149 + $0x118] sm:$0xff] %v220
                %v222 = vld [vmem:[%s148 + $0x820] sm:$0xff]
                %223 = vst [vmem:[%s149 + $0x120] sm:$0xff] %v222
                %v224 = vld [vmem:[%s148 + $0x828] sm:$0xff]
                %225 = vst [vmem:[%s149 + $0x128] sm:$0xff] %v224
                %v226 = vld [vmem:[%s148 + $0x830] sm:$0xff]
                %227 = vst [vmem:[%s149 + $0x130] sm:$0xff] %v226
                %v228 = vld [vmem:[%s148 + $0x838] sm:$0xff]
                %229 = vst [vmem:[%s149 + $0x138] sm:$0xff] %v228
                %v230 = vld [vmem:[%s148 + $0x840] sm:$0xff]
                %231 = vst [vmem:[%s149 + $0x140] sm:$0xff] %v230
                %v232 = vld [vmem:[%s148 + $0x848] sm:$0xff]
                %233 = vst [vmem:[%s149 + $0x148] sm:$0xff] %v232
                %v234 = vld [vmem:[%s148 + $0x850] sm:$0xff]
                %235 = vst [vmem:[%s149 + $0x150] sm:$0xff] %v234
                %v236 = vld [vmem:[%s148 + $0x858] sm:$0xff]
                %237 = vst [vmem:[%s149 + $0x158] sm:$0xff] %v236
                %v238 = vld [vmem:[%s148 + $0x860] sm:$0xff]
                %239 = vst [vmem:[%s149 + $0x160] sm:$0xff] %v238
                %v240 = vld [vmem:[%s148 + $0x868] sm:$0xff]
                %241 = vst [vmem:[%s149 + $0x168] sm:$0xff] %v240
                %v242 = vld [vmem:[%s148 + $0x870] sm:$0xff]
                %243 = vst [vmem:[%s149 + $0x170] sm:$0xff] %v242
                %v244 = vld [vmem:[%s148 + $0x878] sm:$0xff]
                %245 = vst [vmem:[%s149 + $0x178] sm:$0xff] %v244
                %v246 = vld [vmem:[%s148 + $0xc00] sm:$0xff]
                %247 = vst [vmem:[%s149 + $0x180] sm:$0xff] %v246
                %v248 = vld [vmem:[%s148 + $0xc08] sm:$0xff]
                %249 = vst [vmem:[%s149 + $0x188] sm:$0xff] %v248
                %v250 = vld [vmem:[%s148 + $0xc10] sm:$0xff]
                %251 = vst [vmem:[%s149 + $0x190] sm:$0xff] %v250
                %v252 = vld [vmem:[%s148 + $0xc18] sm:$0xff]
                %253 = vst [vmem:[%s149 + $0x198] sm:$0xff] %v252
                %v254 = vld [vmem:[%s148 + $0xc20] sm:$0xff]
                %255 = vst [vmem:[%s149 + $0x1a0] sm:$0xff] %v254
                %v256 = vld [vmem:[%s148 + $0xc28] sm:$0xff]
                %257 = vst [vmem:[%s149 + $0x1a8] sm:$0xff] %v256
                %v258 = vld [vmem:[%s148 + $0xc30] sm:$0xff]
                %259 = vst [vmem:[%s149 + $0x1b0] sm:$0xff] %v258
                %v260 = vld [vmem:[%s148 + $0xc38] sm:$0xff]
                %261 = vst [vmem:[%s149 + $0x1b8] sm:$0xff] %v260
                %v262 = vld [vmem:[%s148 + $0xc40] sm:$0xff]
                %263 = vst [vmem:[%s149 + $0x1c0] sm:$0xff] %v262
                %v264 = vld [vmem:[%s148 + $0xc48] sm:$0xff]
                %265 = vst [vmem:[%s149 + $0x1c8] sm:$0xff] %v264
                %v266 = vld [vmem:[%s148 + $0xc50] sm:$0xff]
                %267 = vst [vmem:[%s149 + $0x1d0] sm:$0xff] %v266
                %v268 = vld [vmem:[%s148 + $0xc58] sm:$0xff]
                %269 = vst [vmem:[%s149 + $0x1d8] sm:$0xff] %v268
                %v270 = vld [vmem:[%s148 + $0xc60] sm:$0xff]
                %271 = vst [vmem:[%s149 + $0x1e0] sm:$0xff] %v270
                %v272 = vld [vmem:[%s148 + $0xc68] sm:$0xff]
                %273 = vst [vmem:[%s149 + $0x1e8] sm:$0xff] %v272
                %v274 = vld [vmem:[%s148 + $0xc70] sm:$0xff]
                %275 = vst [vmem:[%s149 + $0x1f0] sm:$0xff] %v274
                %v276 = vld [vmem:[%s148 + $0xc78] sm:$0xff]
                %277 = vst [vmem:[%s149 + $0x1f8] sm:$0xff] %v276
              $region41: #{fnet_forward.3} parent=35 // loop_footer
                %s147 = sadd.s32 1, %s143
              $region42: #{fnet_forward.3} parent=35 // loop_footer_branch
                %142 = sbr.rel target = $region38
              $region43: #{fnet_forward.3} parent=35 // loop_exit
                _
            $region36: #{fnet_forward.3} parent=31 // pred_fallthru
              _
            // Predicated region
            $region44: #{fnet_forward.3} parent=31 // pred_check
              _
            $region45: #{fnet_forward.3} parent=31 // pred_check_branch
              %279 = sbr.rel target = $region47
            $region46: #{fnet_forward.3} parent=31 // pred_region
              _
            $region47: #{fnet_forward.3} parent=31 // pred_fallthru
              _
          $region32: #{fnet_forward.3} parent=27 // pred_fallthru
            _
          %280 = vnop
        $region28: #{fnet_forward.3} parent=23 // pred_fallthru
          _
      $region24: #{fnet_forward.3} parent=5 // pred_fallthru
        _
      %p281 = scmp.le.s32.totalorder 1, %s9
      %p282 = scmp.lt.s32.totalorder %s9, 9
      %p283 = pnand %p281, %p282
      %p284 = pneg %p283
      // Predicated region
      $region48: #{fnet_forward.3} parent=5 // pred_check
        _
      $region49: #{fnet_forward.3} parent=5 // pred_check_branch
        %286 = sbr.rel (%p283) target = $region51
      $region50: #{fnet_forward.3} parent=5 // pred_region
        %s287 = ssub.s32 %s9, 1
        %s288 = sand.u32 %s43, 1
        %s289 = sand.u32 %s43, 1
        %s290 = smul.addr %s289, 512
        %s291 = scalar_lea.vmem [#allocation2], %s290
        // Predicated region
        $region52: #{fnet_forward.3} parent=50 // pred_check
          %p292 = pneg %p56
        $region53: #{fnet_forward.3} parent=50 // pred_check_branch
          %294 = sbr.rel (%p292) target = $region55
        $region54: #{fnet_forward.3} parent=50 // pred_region
          _
        $region55: #{fnet_forward.3} parent=50 // pred_fallthru
          _
        %p295 = pneg %p30
        %p296 = pneg %p27
        %s297 = sand.u32 %s43, 1
        %s298 = sand.u32 %s43, 1
        %s299 = smul.addr %s298, 512
        %s300 = scalar_lea.vmem [#allocation2], %s299
        %p301 = pneg %p56
        %p302 = pneg %p53
        %p303 = pneg %p77
        %p304 = pneg %p74
        %p305 = pneg %p103
        %p306 = pneg %p100
        %s307 = sand.u32 %s90, 1
        %s308 = sand.u32 %s90, 1
        %s309 = smul.addr %s308, 4096
        %s310 = scalar_lea.vmem [#allocation3], %s309
        %s311 = smul.u32 32, %s14
        %s312 = smul.u32 32, %s14
        %v314 = vld [vmem:[%s0] sm:$0xf]
        %v315 = vld [vmem:[%s0 + $0x4] sm:$0xf]
        %v316 = vld [vmem:[%s0 + $0x8] sm:$0xf]
        %v317 = vld [vmem:[%s0 + $0xc] sm:$0xf]
        %v318 = vld [vmem:[%s0 + $0x10] sm:$0xf]
        %v319 = vld [vmem:[%s0 + $0x14] sm:$0xf]
        %v320 = vld [vmem:[%s0 + $0x18] sm:$0xf]
        %v321 = vld [vmem:[%s0 + $0x1c] sm:$0xf]
        %v322 = vld [vmem:[%s0 + $0x20] sm:$0xf]
        %v323 = vld [vmem:[%s0 + $0x24] sm:$0xf]
        %v324 = vld [vmem:[%s0 + $0x28] sm:$0xf]
        %v325 = vld [vmem:[%s0 + $0x2c] sm:$0xf]
        %v326 = vld [vmem:[%s0 + $0x30] sm:$0xf]
        %v327 = vld [vmem:[%s0 + $0x34] sm:$0xf]
        %v328 = vld [vmem:[%s0 + $0x38] sm:$0xf]
        %v329 = vld [vmem:[%s0 + $0x3c] sm:$0xf]
        %v330 = vld [vmem:[%s291] sm:$0xff]
        %v331 = vld [vmem:[%s291 + $0x8] sm:$0xff]
        %v332 = vld [vmem:[%s291 + $0x10] sm:$0xff]
        %v333 = vld [vmem:[%s291 + $0x18] sm:$0xff]
        %v334 = vld [vmem:[%s291 + $0x20] sm:$0xff]
        %v335 = vld [vmem:[%s291 + $0x28] sm:$0xff]
        %v336 = vld [vmem:[%s291 + $0x30] sm:$0xff]
        %v337 = vld [vmem:[%s291 + $0x38] sm:$0xff]
        %v338 = vld [vmem:[%s291 + $0x40] sm:$0xff]
        %v339 = vld [vmem:[%s291 + $0x48] sm:$0xff]
        %v340 = vld [vmem:[%s291 + $0x50] sm:$0xff]
        %v341 = vld [vmem:[%s291 + $0x58] sm:$0xff]
        %v342 = vld [vmem:[%s291 + $0x60] sm:$0xff]
        %v343 = vld [vmem:[%s291 + $0x68] sm:$0xff]
        %v344 = vld [vmem:[%s291 + $0x70] sm:$0xff]
        %v345 = vld [vmem:[%s291 + $0x78] sm:$0xff]
        %v346 = vld [vmem:[%s291 + $0x80] sm:$0xff]
        %v347 = vld [vmem:[%s291 + $0x88] sm:$0xff]
        %v348 = vld [vmem:[%s291 + $0x90] sm:$0xff]
        %v349 = vld [vmem:[%s291 + $0x98] sm:$0xff]
        %v350 = vld [vmem:[%s291 + $0xa0] sm:$0xff]
        %v351 = vld [vmem:[%s291 + $0xa8] sm:$0xff]
        %v352 = vld [vmem:[%s291 + $0xb0] sm:$0xff]
        %v353 = vld [vmem:[%s291 + $0xb8] sm:$0xff]
        %v354 = vld [vmem:[%s291 + $0xc0] sm:$0xff]
        %v355 = vld [vmem:[%s291 + $0xc8] sm:$0xff]
        %v356 = vld [vmem:[%s291 + $0xd0] sm:$0xff]
        %v357 = vld [vmem:[%s291 + $0xd8] sm:$0xff]
        %v358 = vld [vmem:[%s291 + $0xe0] sm:$0xff]
        %v359 = vld [vmem:[%s291 + $0xe8] sm:$0xff]
        %v360 = vld [vmem:[%s291 + $0xf0] sm:$0xff]
        %v361 = vld [vmem:[%s291 + $0xf8] sm:$0xff]
        %v362 = vld [vmem:[%s291 + $0x100] sm:$0xff]
        %v363 = vld [vmem:[%s291 + $0x108] sm:$0xff]
        %v364 = vld [vmem:[%s291 + $0x110] sm:$0xff]
        %v365 = vld [vmem:[%s291 + $0x118] sm:$0xff]
        %v366 = vld [vmem:[%s291 + $0x120] sm:$0xff]
        %v367 = vld [vmem:[%s291 + $0x128] sm:$0xff]
        %v368 = vld [vmem:[%s291 + $0x130] sm:$0xff]
        %v369 = vld [vmem:[%s291 + $0x138] sm:$0xff]
        %v370 = vld [vmem:[%s291 + $0x140] sm:$0xff]
        %v371 = vld [vmem:[%s291 + $0x148] sm:$0xff]
        %v372 = vld [vmem:[%s291 + $0x150] sm:$0xff]
        %v373 = vld [vmem:[%s291 + $0x158] sm:$0xff]
        %v374 = vld [vmem:[%s291 + $0x160] sm:$0xff]
        %v375 = vld [vmem:[%s291 + $0x168] sm:$0xff]
        %v376 = vld [vmem:[%s291 + $0x170] sm:$0xff]
        %v377 = vld [vmem:[%s291 + $0x178] sm:$0xff]
        %v378 = vld [vmem:[%s291 + $0x180] sm:$0xff]
        %v379 = vld [vmem:[%s291 + $0x188] sm:$0xff]
        %v380 = vld [vmem:[%s291 + $0x190] sm:$0xff]
        %v381 = vld [vmem:[%s291 + $0x198] sm:$0xff]
        %v382 = vld [vmem:[%s291 + $0x1a0] sm:$0xff]
        %v383 = vld [vmem:[%s291 + $0x1a8] sm:$0xff]
        %v384 = vld [vmem:[%s291 + $0x1b0] sm:$0xff]
        %v385 = vld [vmem:[%s291 + $0x1b8] sm:$0xff]
        %v386 = vld [vmem:[%s291 + $0x1c0] sm:$0xff]
        %v387 = vld [vmem:[%s291 + $0x1c8] sm:$0xff]
        %v388 = vld [vmem:[%s291 + $0x1d0] sm:$0xff]
        %v389 = vld [vmem:[%s291 + $0x1d8] sm:$0xff]
        %v390 = vld [vmem:[%s291 + $0x1e0] sm:$0xff]
        %v391 = vld [vmem:[%s291 + $0x1e8] sm:$0xff]
        %v392 = vld [vmem:[%s291 + $0x1f0] sm:$0xff]
        %v393 = vld [vmem:[%s291 + $0x1f8] sm:$0xff]
        %v394 = vld [vmem:[%s2] sm:$0xff]
        %v395 = vld [vmem:[%s2 + $0x8] sm:$0xff]
        %v396 = vld [vmem:[%s2 + $0x10] sm:$0xff]
        %v397 = vld [vmem:[%s2 + $0x18] sm:$0xff]
        %v398 = vld [vmem:[%s2 + $0x20] sm:$0xff]
        %v399 = vld [vmem:[%s2 + $0x28] sm:$0xff]
        %v400 = vld [vmem:[%s2 + $0x30] sm:$0xff]
        %v401 = vld [vmem:[%s2 + $0x38] sm:$0xff]
        %v402 = vld [vmem:[%s2 + $0x40] sm:$0xff]
        %v403 = vld [vmem:[%s2 + $0x48] sm:$0xff]
        %v404 = vld [vmem:[%s2 + $0x50] sm:$0xff]
        %v405 = vld [vmem:[%s2 + $0x58] sm:$0xff]
        %v406 = vld [vmem:[%s2 + $0x60] sm:$0xff]
        %v407 = vld [vmem:[%s2 + $0x68] sm:$0xff]
        %v408 = vld [vmem:[%s2 + $0x70] sm:$0xff]
        %v409 = vld [vmem:[%s2 + $0x78] sm:$0xff]
        %411 = vset.pattern.permute.xlu0 0
        %412 = vperm.xlu0 %411, %v394
        %v413 = vpop.permute.xlu0 %412
        %416 = vset.pattern.permute.xlu0 0
        %417 = vperm.xlu0 %416, %v395
        %v418 = vpop.permute.xlu0 %417
        %421 = vset.pattern.permute.xlu0 0
        %422 = vperm.xlu0 %421, %v396
        %v423 = vpop.permute.xlu0 %422
        %426 = vset.pattern.permute.xlu0 0
        %427 = vperm.xlu0 %426, %v397
        %v428 = vpop.permute.xlu0 %427
        %431 = vset.pattern.permute.xlu0 0
        %432 = vperm.xlu0 %431, %v398
        %v433 = vpop.permute.xlu0 %432
        %436 = vset.pattern.permute.xlu0 0
        %437 = vperm.xlu0 %436, %v399
        %v438 = vpop.permute.xlu0 %437
        %441 = vset.pattern.permute.xlu0 0
        %442 = vperm.xlu0 %441, %v400
        %v443 = vpop.permute.xlu0 %442
        %446 = vset.pattern.permute.xlu0 0
        %447 = vperm.xlu0 %446, %v401
        %v448 = vpop.permute.xlu0 %447
        %451 = vset.pattern.permute.xlu0 0
        %452 = vperm.xlu0 %451, %v402
        %v453 = vpop.permute.xlu0 %452
        %456 = vset.pattern.permute.xlu0 0
        %457 = vperm.xlu0 %456, %v403
        %v458 = vpop.permute.xlu0 %457
        %461 = vset.pattern.permute.xlu0 0
        %462 = vperm.xlu0 %461, %v404
        %v463 = vpop.permute.xlu0 %462
        %466 = vset.pattern.permute.xlu0 0
        %467 = vperm.xlu0 %466, %v405
        %v468 = vpop.permute.xlu0 %467
        %471 = vset.pattern.permute.xlu0 0
        %472 = vperm.xlu0 %471, %v406
        %v473 = vpop.permute.xlu0 %472
        %476 = vset.pattern.permute.xlu0 0
        %477 = vperm.xlu0 %476, %v407
        %v478 = vpop.permute.xlu0 %477
        %481 = vset.pattern.permute.xlu0 0
        %482 = vperm.xlu0 %481, %v408
        %v483 = vpop.permute.xlu0 %482
        %486 = vset.pattern.permute.xlu0 0
        %487 = vperm.xlu0 %486, %v409
        %v488 = vpop.permute.xlu0 %487
        %v506 = vunpack.c.l.b16 %v314
        %v507 = vunpack.c.l.b16 %v315
        %v508 = vunpack.c.l.b16 %v316
        %v509 = vunpack.c.l.b16 %v317
        %v510 = vunpack.c.l.b16 %v318
        %v511 = vunpack.c.l.b16 %v319
        %v512 = vunpack.c.l.b16 %v320
        %v513 = vunpack.c.l.b16 %v321
        %v514 = vunpack.c.l.b16 %v322
        %v515 = vunpack.c.l.b16 %v323
        %v516 = vunpack.c.l.b16 %v324
        %v517 = vunpack.c.l.b16 %v325
        %v518 = vunpack.c.l.b16 %v326
        %v519 = vunpack.c.l.b16 %v327
        %v520 = vunpack.c.l.b16 %v328
        %v521 = vunpack.c.l.b16 %v329
        %v522 = vpack.c.b16 %v507, %v506
        %v523 = vpack.c.b16 %v509, %v508
        %v524 = vpack.c.b16 %v511, %v510
        %v525 = vpack.c.b16 %v513, %v512
        %v526 = vpack.c.b16 %v515, %v514
        %v527 = vpack.c.b16 %v517, %v516
        %v528 = vpack.c.b16 %v519, %v518
        %v529 = vpack.c.b16 %v521, %v520
        %v594 = vunpack.c.l.b16 %v330
        %v595 = vunpack.c.h.b16 %v330
        %v596 = vunpack.c.l.b16 %v331
        %v597 = vunpack.c.h.b16 %v331
        %v598 = vunpack.c.l.b16 %v332
        %v599 = vunpack.c.h.b16 %v332
        %v600 = vunpack.c.l.b16 %v333
        %v601 = vunpack.c.h.b16 %v333
        %v602 = vunpack.c.l.b16 %v334
        %v603 = vunpack.c.h.b16 %v334
        %v604 = vunpack.c.l.b16 %v335
        %v605 = vunpack.c.h.b16 %v335
        %v606 = vunpack.c.l.b16 %v336
        %v607 = vunpack.c.h.b16 %v336
        %v608 = vunpack.c.l.b16 %v337
        %v609 = vunpack.c.h.b16 %v337
        %v610 = vunpack.c.l.b16 %v338
        %v611 = vunpack.c.h.b16 %v338
        %v612 = vunpack.c.l.b16 %v339
        %v613 = vunpack.c.h.b16 %v339
        %v614 = vunpack.c.l.b16 %v340
        %v615 = vunpack.c.h.b16 %v340
        %v616 = vunpack.c.l.b16 %v341
        %v617 = vunpack.c.h.b16 %v341
        %v618 = vunpack.c.l.b16 %v342
        %v619 = vunpack.c.h.b16 %v342
        %v620 = vunpack.c.l.b16 %v343
        %v621 = vunpack.c.h.b16 %v343
        %v622 = vunpack.c.l.b16 %v344
        %v623 = vunpack.c.h.b16 %v344
        %v624 = vunpack.c.l.b16 %v345
        %v625 = vunpack.c.h.b16 %v345
        %v626 = vunpack.c.l.b16 %v346
        %v627 = vunpack.c.h.b16 %v346
        %v628 = vunpack.c.l.b16 %v347
        %v629 = vunpack.c.h.b16 %v347
        %v630 = vunpack.c.l.b16 %v348
        %v631 = vunpack.c.h.b16 %v348
        %v632 = vunpack.c.l.b16 %v349
        %v633 = vunpack.c.h.b16 %v349
        %v634 = vunpack.c.l.b16 %v350
        %v635 = vunpack.c.h.b16 %v350
        %v636 = vunpack.c.l.b16 %v351
        %v637 = vunpack.c.h.b16 %v351
        %v638 = vunpack.c.l.b16 %v352
        %v639 = vunpack.c.h.b16 %v352
        %v640 = vunpack.c.l.b16 %v353
        %v641 = vunpack.c.h.b16 %v353
        %v642 = vunpack.c.l.b16 %v354
        %v643 = vunpack.c.h.b16 %v354
        %v644 = vunpack.c.l.b16 %v355
        %v645 = vunpack.c.h.b16 %v355
        %v646 = vunpack.c.l.b16 %v356
        %v647 = vunpack.c.h.b16 %v356
        %v648 = vunpack.c.l.b16 %v357
        %v649 = vunpack.c.h.b16 %v357
        %v650 = vunpack.c.l.b16 %v358
        %v651 = vunpack.c.h.b16 %v358
        %v652 = vunpack.c.l.b16 %v359
        %v653 = vunpack.c.h.b16 %v359
        %v654 = vunpack.c.l.b16 %v360
        %v655 = vunpack.c.h.b16 %v360
        %v656 = vunpack.c.l.b16 %v361
        %v657 = vunpack.c.h.b16 %v361
        %v658 = vunpack.c.l.b16 %v362
        %v659 = vunpack.c.h.b16 %v362
        %v660 = vunpack.c.l.b16 %v363
        %v661 = vunpack.c.h.b16 %v363
        %v662 = vunpack.c.l.b16 %v364
        %v663 = vunpack.c.h.b16 %v364
        %v664 = vunpack.c.l.b16 %v365
        %v665 = vunpack.c.h.b16 %v365
        %v666 = vunpack.c.l.b16 %v366
        %v667 = vunpack.c.h.b16 %v366
        %v668 = vunpack.c.l.b16 %v367
        %v669 = vunpack.c.h.b16 %v367
        %v670 = vunpack.c.l.b16 %v368
        %v671 = vunpack.c.h.b16 %v368
        %v672 = vunpack.c.l.b16 %v369
        %v673 = vunpack.c.h.b16 %v369
        %v674 = vunpack.c.l.b16 %v370
        %v675 = vunpack.c.h.b16 %v370
        %v676 = vunpack.c.l.b16 %v371
        %v677 = vunpack.c.h.b16 %v371
        %v678 = vunpack.c.l.b16 %v372
        %v679 = vunpack.c.h.b16 %v372
        %v680 = vunpack.c.l.b16 %v373
        %v681 = vunpack.c.h.b16 %v373
        %v682 = vunpack.c.l.b16 %v374
        %v683 = vunpack.c.h.b16 %v374
        %v684 = vunpack.c.l.b16 %v375
        %v685 = vunpack.c.h.b16 %v375
        %v686 = vunpack.c.l.b16 %v376
        %v687 = vunpack.c.h.b16 %v376
        %v688 = vunpack.c.l.b16 %v377
        %v689 = vunpack.c.h.b16 %v377
        %v690 = vunpack.c.l.b16 %v378
        %v691 = vunpack.c.h.b16 %v378
        %v692 = vunpack.c.l.b16 %v379
        %v693 = vunpack.c.h.b16 %v379
        %v694 = vunpack.c.l.b16 %v380
        %v695 = vunpack.c.h.b16 %v380
        %v696 = vunpack.c.l.b16 %v381
        %v697 = vunpack.c.h.b16 %v381
        %v698 = vunpack.c.l.b16 %v382
        %v699 = vunpack.c.h.b16 %v382
        %v700 = vunpack.c.l.b16 %v383
        %v701 = vunpack.c.h.b16 %v383
        %v702 = vunpack.c.l.b16 %v384
        %v703 = vunpack.c.h.b16 %v384
        %v704 = vunpack.c.l.b16 %v385
        %v705 = vunpack.c.h.b16 %v385
        %v706 = vunpack.c.l.b16 %v386
        %v707 = vunpack.c.h.b16 %v386
        %v708 = vunpack.c.l.b16 %v387
        %v709 = vunpack.c.h.b16 %v387
        %v710 = vunpack.c.l.b16 %v388
        %v711 = vunpack.c.h.b16 %v388
        %v712 = vunpack.c.l.b16 %v389
        %v713 = vunpack.c.h.b16 %v389
        %v714 = vunpack.c.l.b16 %v390
        %v715 = vunpack.c.h.b16 %v390
        %v716 = vunpack.c.l.b16 %v391
        %v717 = vunpack.c.h.b16 %v391
        %v718 = vunpack.c.l.b16 %v392
        %v719 = vunpack.c.h.b16 %v392
        %v720 = vunpack.c.l.b16 %v393
        %v721 = vunpack.c.h.b16 %v393
        %v722 = vpack.c.b16 %v626, %v594
        %v723 = vpack.c.b16 %v627, %v595
        %v724 = vpack.c.b16 %v628, %v596
        %v725 = vpack.c.b16 %v629, %v597
        %v726 = vpack.c.b16 %v630, %v598
        %v727 = vpack.c.b16 %v631, %v599
        %v728 = vpack.c.b16 %v632, %v600
        %v729 = vpack.c.b16 %v633, %v601
        %v730 = vpack.c.b16 %v634, %v602
        %v731 = vpack.c.b16 %v635, %v603
        %v732 = vpack.c.b16 %v636, %v604
        %v733 = vpack.c.b16 %v637, %v605
        %v734 = vpack.c.b16 %v638, %v606
        %v735 = vpack.c.b16 %v639, %v607
        %v736 = vpack.c.b16 %v640, %v608
        %v737 = vpack.c.b16 %v641, %v609
        %v738 = vpack.c.b16 %v642, %v610
        %v739 = vpack.c.b16 %v643, %v611
        %v740 = vpack.c.b16 %v644, %v612
        %v741 = vpack.c.b16 %v645, %v613
        %v742 = vpack.c.b16 %v646, %v614
        %v743 = vpack.c.b16 %v647, %v615
        %v744 = vpack.c.b16 %v648, %v616
        %v745 = vpack.c.b16 %v649, %v617
        %v746 = vpack.c.b16 %v650, %v618
        %v747 = vpack.c.b16 %v651, %v619
        %v748 = vpack.c.b16 %v652, %v620
        %v749 = vpack.c.b16 %v653, %v621
        %v750 = vpack.c.b16 %v654, %v622
        %v751 = vpack.c.b16 %v655, %v623
        %v752 = vpack.c.b16 %v656, %v624
        %v753 = vpack.c.b16 %v657, %v625
        %v754 = vpack.c.b16 %v690, %v658
        %v755 = vpack.c.b16 %v691, %v659
        %v756 = vpack.c.b16 %v692, %v660
        %v757 = vpack.c.b16 %v693, %v661
        %v758 = vpack.c.b16 %v694, %v662
        %v759 = vpack.c.b16 %v695, %v663
        %v760 = vpack.c.b16 %v696, %v664
        %v761 = vpack.c.b16 %v697, %v665
        %v762 = vpack.c.b16 %v698, %v666
        %v763 = vpack.c.b16 %v699, %v667
        %v764 = vpack.c.b16 %v700, %v668
        %v765 = vpack.c.b16 %v701, %v669
        %v766 = vpack.c.b16 %v702, %v670
        %v767 = vpack.c.b16 %v703, %v671
        %v768 = vpack.c.b16 %v704, %v672
        %v769 = vpack.c.b16 %v705, %v673
        %v770 = vpack.c.b16 %v706, %v674
        %v771 = vpack.c.b16 %v707, %v675
        %v772 = vpack.c.b16 %v708, %v676
        %v773 = vpack.c.b16 %v709, %v677
        %v774 = vpack.c.b16 %v710, %v678
        %v775 = vpack.c.b16 %v711, %v679
        %v776 = vpack.c.b16 %v712, %v680
        %v777 = vpack.c.b16 %v713, %v681
        %v778 = vpack.c.b16 %v714, %v682
        %v779 = vpack.c.b16 %v715, %v683
        %v780 = vpack.c.b16 %v716, %v684
        %v781 = vpack.c.b16 %v717, %v685
        %v782 = vpack.c.b16 %v718, %v686
        %v783 = vpack.c.b16 %v719, %v687
        %v784 = vpack.c.b16 %v720, %v688
        %v785 = vpack.c.b16 %v721, %v689
        %vm850 = vcmask 261120
        %v852 = vsel %vm850, %v522, 0
        %v855 = vsel %vm850, %v523, 0
        %v858 = vsel %vm850, %v524, 0
        %v861 = vsel %vm850, %v525, 0
        %v864 = vsel %vm850, %v526, 0
        %v867 = vsel %vm850, %v527, 0
        %v870 = vsel %vm850, %v528, 0
        %v873 = vsel %vm850, %v529, 0
        %875 = vmatprep.subr.bf16.mxu0 %v723
        %876 = vmatpush1.bf16.msra.mxu0 %v722
        %877 = vmatprep.subr.bf16.mxu0 %v755
        %878 = vmatpush1.bf16.msra.mxu0 %v754
        %879 = vmatprep.subr.bf16.mxu0 0
        %880 = vmatpush1.bf16.msra.mxu0 0
        %881 = vmatprep.subr.bf16.mxu0 0
        %882 = vmatpush1.bf16.msra.mxu0 0
        %883 = vmatprep.subr.bf16.mxu0 0
        %884 = vmatpush1.bf16.msra.mxu0 0
        %885 = vmatprep.subr.bf16.mxu0 0
        %886 = vmatpush1.bf16.msra.mxu0 0
        %887 = vmatprep.subr.bf16.mxu0 0
        %888 = vmatpush1.bf16.msra.mxu0 0
        %889 = vmatprep.subr.bf16.mxu0 0
        %890 = vmatpush1.bf16.msra.mxu0 0
        %891 = vmatprep.subr.bf16.mxu0 0
        %892 = vmatpush1.bf16.msra.mxu0 0
        %893 = vmatprep.subr.bf16.mxu0 0
        %894 = vmatpush1.bf16.msra.mxu0 0
        %895 = vmatprep.subr.bf16.mxu0 0
        %896 = vmatpush1.bf16.msra.mxu0 0
        %897 = vmatprep.subr.bf16.mxu0 0
        %898 = vmatpush1.bf16.msra.mxu0 0
        %899 = vmatprep.subr.bf16.mxu0 0
        %900 = vmatpush1.bf16.msra.mxu0 0
        %901 = vmatprep.subr.bf16.mxu0 0
        %902 = vmatpush1.bf16.msra.mxu0 0
        %903 = vmatprep.subr.bf16.mxu0 0
        %904 = vmatpush1.bf16.msra.mxu0 0
        %905 = vmatprep.subr.bf16.mxu0 0
        %906 = vmatpush1.bf16.msra.mxu0 0
        %907 = vmatprep.mubr.bf16.mxu0 0
        %908 = vmatmul.mubr.bf16.gmra.mrb[0].mxu0 %v852
        %v909 = vpop.f32.mrb[0].mxu0
        %v910 = vadd.f32 %v413, %v909
        %v911 = vpop.f32.mrb[0].mxu0
        %v912 = vadd.f32 %v413, %v911
        %v913 = vpop.f32.mrb[0].mxu0
        %v914 = vadd.f32 %v418, %v913
        %v915 = vpop.f32.mrb[0].mxu0
        %v916 = vadd.f32 %v418, %v915
        %917 = vmatprep.mubr.bf16.mxu0 0
        %918 = vmatmul.mubr.bf16.gmra.mrb[0].mxu0 %v855
        %v919 = vpop.f32.mrb[0].mxu0
        %v920 = vadd.f32 %v423, %v919
        %v921 = vpop.f32.mrb[0].mxu0
        %v922 = vadd.f32 %v423, %v921
        %v923 = vpop.f32.mrb[0].mxu0
        %v924 = vadd.f32 %v428, %v923
        %v925 = vpop.f32.mrb[0].mxu0
        %v926 = vadd.f32 %v428, %v925
        %927 = vmatprep.mubr.bf16.mxu0 0
        %928 = vmatmul.mubr.bf16.gmra.mrb[0].mxu0 %v858
        %v929 = vpop.f32.mrb[0].mxu0
        %v930 = vadd.f32 %v433, %v929
        %v931 = vpop.f32.mrb[0].mxu0
        %v932 = vadd.f32 %v433, %v931
        %v933 = vpop.f32.mrb[0].mxu0
        %v934 = vadd.f32 %v438, %v933
        %v935 = vpop.f32.mrb[0].mxu0
        %v936 = vadd.f32 %v438, %v935
        %937 = vmatprep.mubr.bf16.mxu0 0
        %938 = vmatmul.mubr.bf16.gmra.mrb[0].mxu0 %v861
        %v939 = vpop.f32.mrb[0].mxu0
        %v940 = vadd.f32 %v443, %v939
        %v941 = vpop.f32.mrb[0].mxu0
        %v942 = vadd.f32 %v443, %v941
        %v943 = vpop.f32.mrb[0].mxu0
        %v944 = vadd.f32 %v448, %v943
        %v945 = vpop.f32.mrb[0].mxu0
        %v946 = vadd.f32 %v448, %v945
        %947 = vmatprep.mubr.bf16.mxu0 0
        %948 = vmatmul.mubr.bf16.gmra.mrb[0].mxu0 %v864
        %v949 = vpop.f32.mrb[0].mxu0
        %v950 = vadd.f32 %v453, %v949
        %v951 = vpop.f32.mrb[0].mxu0
        %v952 = vadd.f32 %v453, %v951
        %v953 = vpop.f32.mrb[0].mxu0
        %v954 = vadd.f32 %v458, %v953
        %v955 = vpop.f32.mrb[0].mxu0
        %v956 = vadd.f32 %v458, %v955
        %957 = vmatprep.mubr.bf16.mxu0 0
        %958 = vmatmul.mubr.bf16.gmra.mrb[0].mxu0 %v867
        %v959 = vpop.f32.mrb[0].mxu0
        %v960 = vadd.f32 %v463, %v959
        %v961 = vpop.f32.mrb[0].mxu0
        %v962 = vadd.f32 %v463, %v961
        %v963 = vpop.f32.mrb[0].mxu0
        %v964 = vadd.f32 %v468, %v963
        %v965 = vpop.f32.mrb[0].mxu0
        %v966 = vadd.f32 %v468, %v965
        %967 = vmatprep.mubr.bf16.mxu0 0
        %968 = vmatmul.mubr.bf16.gmra.mrb[0].mxu0 %v870
        %v969 = vpop.f32.mrb[0].mxu0
        %v970 = vadd.f32 %v473, %v969
        %v971 = vpop.f32.mrb[0].mxu0
        %v972 = vadd.f32 %v473, %v971
        %v973 = vpop.f32.mrb[0].mxu0
        %v974 = vadd.f32 %v478, %v973
        %v975 = vpop.f32.mrb[0].mxu0
        %v976 = vadd.f32 %v478, %v975
        %977 = vmatprep.mubr.bf16.mxu0 0
        %978 = vmatmul.mubr.bf16.gmra.mrb[0].mxu0 %v873
        %v979 = vpop.f32.mrb[0].mxu0
        %v980 = vadd.f32 %v483, %v979
        %v981 = vpop.f32.mrb[0].mxu0
        %v982 = vadd.f32 %v483, %v981
        %v983 = vpop.f32.mrb[0].mxu0
        %v984 = vadd.f32 %v488, %v983
        %v985 = vpop.f32.mrb[0].mxu0
        %v986 = vadd.f32 %v488, %v985
        %987 = vdwg.mxu0
        %988 = vmatprep.subr.bf16.mxu0 %v725
        %989 = vmatpush1.bf16.msra.mxu0 %v724
        %990 = vmatprep.subr.bf16.mxu0 %v757
        %991 = vmatpush1.bf16.msra.mxu0 %v756
        %992 = vmatprep.subr.bf16.mxu0 0
        %993 = vmatpush1.bf16.msra.mxu0 0
        %994 = vmatprep.subr.bf16.mxu0 0
        %995 = vmatpush1.bf16.msra.mxu0 0
        %996 = vmatprep.subr.bf16.mxu0 0
        %997 = vmatpush1.bf16.msra.mxu0 0
        %998 = vmatprep.subr.bf16.mxu0 0
        %999 = vmatpush1.bf16.msra.mxu0 0
        %1000 = vmatprep.subr.bf16.mxu0 0
        %1001 = vmatpush1.bf16.msra.mxu0 0
        %1002 = vmatprep.subr.bf16.mxu0 0
        %1003 = vmatpush1.bf16.msra.mxu0 0
        %1004 = vmatprep.subr.bf16.mxu0 0
        %1005 = vmatpush1.bf16.msra.mxu0 0
        %1006 = vmatprep.subr.bf16.mxu0 0
        %1007 = vmatpush1.bf16.msra.mxu0 0
        %1008 = vmatprep.subr.bf16.mxu0 0
        %1009 = vmatpush1.bf16.msra.mxu0 0
        %1010 = vmatprep.subr.bf16.mxu0 0
        %1011 = vmatpush1.bf16.msra.mxu0 0
        %1012 = vmatprep.subr.bf16.mxu0 0
        %1013 = vmatpush1.bf16.msra.mxu0 0
        %1014 = vmatprep.subr.bf16.mxu0 0
        %1015 = vmatpush1.bf16.msra.mxu0 0
        %1016 = vmatprep.subr.bf16.mxu0 0
        %1017 = vmatpush1.bf16.msra.mxu0 0
        %1018 = vmatprep.subr.bf16.mxu0 0
        %1019 = vmatpush1.bf16.msra.mxu0 0
        %1020 = vmatprep.mubr.bf16.mxu0 0
        %1021 = vmatmul.mubr.bf16.gmra.mrb[0].mxu0 %v852
        %v1022 = vpop.f32.mrb[0].mxu0
        %v1023 = vadd.f32 %v413, %v1022
        %v1024 = vpop.f32.mrb[0].mxu0
        %v1025 = vadd.f32 %v413, %v1024
        %v1026 = vpop.f32.mrb[0].mxu0
        %v1027 = vadd.f32 %v418, %v1026
        %v1028 = vpop.f32.mrb[0].mxu0
        %v1029 = vadd.f32 %v418, %v1028
        %1030 = vmatprep.mubr.bf16.mxu0 0
        %1031 = vmatmul.mubr.bf16.gmra.mrb[0].mxu0 %v855
        %v1032 = vpop.f32.mrb[0].mxu0
        %v1033 = vadd.f32 %v423, %v1032
        %v1034 = vpop.f32.mrb[0].mxu0
        %v1035 = vadd.f32 %v423, %v1034
        %v1036 = vpop.f32.mrb[0].mxu0
        %v1037 = vadd.f32 %v428, %v1036
        %v1038 = vpop.f32.mrb[0].mxu0
        %v1039 = vadd.f32 %v428, %v1038
        %1040 = vmatprep.mubr.bf16.mxu0 0
        %1041 = vmatmul.mubr.bf16.gmra.mrb[0].mxu0 %v858
        %v1042 = vpop.f32.mrb[0].mxu0
        %v1043 = vadd.f32 %v433, %v1042
        %v1044 = vpop.f32.mrb[0].mxu0
        %v1045 = vadd.f32 %v433, %v1044
        %v1046 = vpop.f32.mrb[0].mxu0
        %v1047 = vadd.f32 %v438, %v1046
        %v1048 = vpop.f32.mrb[0].mxu0
        %v1049 = vadd.f32 %v438, %v1048
        %1050 = vmatprep.mubr.bf16.mxu0 0
        %1051 = vmatmul.mubr.bf16.gmra.mrb[0].mxu0 %v861
        %v1052 = vpop.f32.mrb[0].mxu0
        %v1053 = vadd.f32 %v443, %v1052
        %v1054 = vpop.f32.mrb[0].mxu0
        %v1055 = vadd.f32 %v443, %v1054
        %v1056 = vpop.f32.mrb[0].mxu0
        %v1057 = vadd.f32 %v448, %v1056
        %v1058 = vpop.f32.mrb[0].mxu0
        %v1059 = vadd.f32 %v448, %v1058
        %1060 = vmatprep.mubr.bf16.mxu0 0
        %1061 = vmatmul.mubr.bf16.gmra.mrb[0].mxu0 %v864
        %v1062 = vpop.f32.mrb[0].mxu0
        %v1063 = vadd.f32 %v453, %v1062
        %v1064 = vpop.f32.mrb[0].mxu0
        %v1065 = vadd.f32 %v453, %v1064
        %v1066 = vpop.f32.mrb[0].mxu0
        %v1067 = vadd.f32 %v458, %v1066
        %v1068 = vpop.f32.mrb[0].mxu0
        %v1069 = vadd.f32 %v458, %v1068
        %1070 = vmatprep.mubr.bf16.mxu0 0
        %1071 = vmatmul.mubr.bf16.gmra.mrb[0].mxu0 %v867
        %v1072 = vpop.f32.mrb[0].mxu0
        %v1073 = vadd.f32 %v463, %v1072
        %v1074 = vpop.f32.mrb[0].mxu0
        %v1075 = vadd.f32 %v463, %v1074
        %v1076 = vpop.f32.mrb[0].mxu0
        %v1077 = vadd.f32 %v468, %v1076
        %v1078 = vpop.f32.mrb[0].mxu0
        %v1079 = vadd.f32 %v468, %v1078
        %1080 = vmatprep.mubr.bf16.mxu0 0
        %1081 = vmatmul.mubr.bf16.gmra.mrb[0].mxu0 %v870
        %v1082 = vpop.f32.mrb[0].mxu0
        %v1083 = vadd.f32 %v473, %v1082
        %v1084 = vpop.f32.mrb[0].mxu0
        %v1085 = vadd.f32 %v473, %v1084
        %v1086 = vpop.f32.mrb[0].mxu0
        %v1087 = vadd.f32 %v478, %v1086
        %v1088 = vpop.f32.mrb[0].mxu0
        %v1089 = vadd.f32 %v478, %v1088
        %1090 = vmatprep.mubr.bf16.mxu0 0
        %1091 = vmatmul.mubr.bf16.gmra.mrb[0].mxu0 %v873
        %v1092 = vpop.f32.mrb[0].mxu0
        %v1093 = vadd.f32 %v483, %v1092
        %v1094 = vpop.f32.mrb[0].mxu0
        %v1095 = vadd.f32 %v483, %v1094
        %v1096 = vpop.f32.mrb[0].mxu0
        %v1097 = vadd.f32 %v488, %v1096
        %v1098 = vpop.f32.mrb[0].mxu0
        %v1099 = vadd.f32 %v488, %v1098
        %1100 = vdwg.mxu0
        %1101 = vmatprep.subr.bf16.mxu0 %v727
        %1102 = vmatpush1.bf16.msra.mxu0 %v726
        %1103 = vmatprep.subr.bf16.mxu0 %v759
        %1104 = vmatpush1.bf16.msra.mxu0 %v758
        %1105 = vmatprep.subr.bf16.mxu0 0
        %1106 = vmatpush1.bf16.msra.mxu0 0
        %1107 = vmatprep.subr.bf16.mxu0 0
        %1108 = vmatpush1.bf16.msra.mxu0 0
        %1109 = vmatprep.subr.bf16.mxu0 0
        %1110 = vmatpush1.bf16.msra.mxu0 0
        %1111 = vmatprep.subr.bf16.mxu0 0
        %1112 = vmatpush1.bf16.msra.mxu0 0
        %1113 = vmatprep.subr.bf16.mxu0 0
        %1114 = vmatpush1.bf16.msra.mxu0 0
        %1115 = vmatprep.subr.bf16.mxu0 0
        %1116 = vmatpush1.bf16.msra.mxu0 0
        %1117 = vmatprep.subr.bf16.mxu0 0
        %1118 = vmatpush1.bf16.msra.mxu0 0
        %1119 = vmatprep.subr.bf16.mxu0 0
        %1120 = vmatpush1.bf16.msra.mxu0 0
        %1121 = vmatprep.subr.bf16.mxu0 0
        %1122 = vmatpush1.bf16.msra.mxu0 0
        %1123 = vmatprep.subr.bf16.mxu0 0
        %1124 = vmatpush1.bf16.msra.mxu0 0
        %1125 = vmatprep.subr.bf16.mxu0 0
        %1126 = vmatpush1.bf16.msra.mxu0 0
        %1127 = vmatprep.subr.bf16.mxu0 0
        %1128 = vmatpush1.bf16.msra.mxu0 0
        %1129 = vmatprep.subr.bf16.mxu0 0
        %1130 = vmatpush1.bf16.msra.mxu0 0
        %1131 = vmatprep.subr.bf16.mxu0 0
        %1132 = vmatpush1.bf16.msra.mxu0 0
        %1133 = vmatprep.mubr.bf16.mxu0 0
        %1134 = vmatmul.mubr.bf16.gmra.mrb[0].mxu0 %v852
        %v1135 = vpop.f32.mrb[0].mxu0
        %v1136 = vadd.f32 %v413, %v1135
        %v1137 = vpop.f32.mrb[0].mxu0
        %v1138 = vadd.f32 %v413, %v1137
        %v1139 = vpop.f32.mrb[0].mxu0
        %v1140 = vadd.f32 %v418, %v1139
        %v1141 = vpop.f32.mrb[0].mxu0
        %v1142 = vadd.f32 %v418, %v1141
        %1143 = vmatprep.mubr.bf16.mxu0 0
        %1144 = vmatmul.mubr.bf16.gmra.mrb[0].mxu0 %v855
        %v1145 = vpop.f32.mrb[0].mxu0
        %v1146 = vadd.f32 %v423, %v1145
        %v1147 = vpop.f32.mrb[0].mxu0
        %v1148 = vadd.f32 %v423, %v1147
        %v1149 = vpop.f32.mrb[0].mxu0
        %v1150 = vadd.f32 %v428, %v1149
        %v1151 = vpop.f32.mrb[0].mxu0
        %v1152 = vadd.f32 %v428, %v1151
        %1153 = vmatprep.mubr.bf16.mxu0 0
        %1154 = vmatmul.mubr.bf16.gmra.mrb[0].mxu0 %v858
        %v1155 = vpop.f32.mrb[0].mxu0
        %v1156 = vadd.f32 %v433, %v1155
        %v1157 = vpop.f32.mrb[0].mxu0
        %v1158 = vadd.f32 %v433, %v1157
        %v1159 = vpop.f32.mrb[0].mxu0
        %v1160 = vadd.f32 %v438, %v1159
        %v1161 = vpop.f32.mrb[0].mxu0
        %v1162 = vadd.f32 %v438, %v1161
        %1163 = vmatprep.mubr.bf16.mxu0 0
        %1164 = vmatmul.mubr.bf16.gmra.mrb[0].mxu0 %v861
        %v1165 = vpop.f32.mrb[0].mxu0
        %v1166 = vadd.f32 %v443, %v1165
        %v1167 = vpop.f32.mrb[0].mxu0
        %v1168 = vadd.f32 %v443, %v1167
        %v1169 = vpop.f32.mrb[0].mxu0
        %v1170 = vadd.f32 %v448, %v1169
        %v1171 = vpop.f32.mrb[0].mxu0
        %v1172 = vadd.f32 %v448, %v1171
        %1173 = vmatprep.mubr.bf16.mxu0 0
        %1174 = vmatmul.mubr.bf16.gmra.mrb[0].mxu0 %v864
        %v1175 = vpop.f32.mrb[0].mxu0
        %v1176 = vadd.f32 %v453, %v1175
        %v1177 = vpop.f32.mrb[0].mxu0
        %v1178 = vadd.f32 %v453, %v1177
        %v1179 = vpop.f32.mrb[0].mxu0
        %v1180 = vadd.f32 %v458, %v1179
        %v1181 = vpop.f32.mrb[0].mxu0
        %v1182 = vadd.f32 %v458, %v1181
        %1183 = vmatprep.mubr.bf16.mxu0 0
        %1184 = vmatmul.mubr.bf16.gmra.mrb[0].mxu0 %v867
        %v1185 = vpop.f32.mrb[0].mxu0
        %v1186 = vadd.f32 %v463, %v1185
        %v1187 = vpop.f32.mrb[0].mxu0
        %v1188 = vadd.f32 %v463, %v1187
        %v1189 = vpop.f32.mrb[0].mxu0
        %v1190 = vadd.f32 %v468, %v1189
        %v1191 = vpop.f32.mrb[0].mxu0
        %v1192 = vadd.f32 %v468, %v1191
        %1193 = vmatprep.mubr.bf16.mxu0 0
        %1194 = vmatmul.mubr.bf16.gmra.mrb[0].mxu0 %v870
        %v1195 = vpop.f32.mrb[0].mxu0
        %v1196 = vadd.f32 %v473, %v1195
        %v1197 = vpop.f32.mrb[0].mxu0
        %v1198 = vadd.f32 %v473, %v1197
        %v1199 = vpop.f32.mrb[0].mxu0
        %v1200 = vadd.f32 %v478, %v1199
        %v1201 = vpop.f32.mrb[0].mxu0
        %v1202 = vadd.f32 %v478, %v1201
        %1203 = vmatprep.mubr.bf16.mxu0 0
        %1204 = vmatmul.mubr.bf16.gmra.mrb[0].mxu0 %v873
        %v1205 = vpop.f32.mrb[0].mxu0
        %v1206 = vadd.f32 %v483, %v1205
        %v1207 = vpop.f32.mrb[0].mxu0
        %v1208 = vadd.f32 %v483, %v1207
        %v1209 = vpop.f32.mrb[0].mxu0
        %v1210 = vadd.f32 %v488, %v1209
        %v1211 = vpop.f32.mrb[0].mxu0
        %v1212 = vadd.f32 %v488, %v1211
        %1213 = vdwg.mxu0
        %1214 = vmatprep.subr.bf16.mxu0 %v729
        %1215 = vmatpush1.bf16.msra.mxu0 %v728
        %1216 = vmatprep.subr.bf16.mxu0 %v761
        %1217 = vmatpush1.bf16.msra.mxu0 %v760
        %1218 = vmatprep.subr.bf16.mxu0 0
        %1219 = vmatpush1.bf16.msra.mxu0 0
        %1220 = vmatprep.subr.bf16.mxu0 0
        %1221 = vmatpush1.bf16.msra.mxu0 0
        %1222 = vmatprep.subr.bf16.mxu0 0
        %1223 = vmatpush1.bf16.msra.mxu0 0
        %1224 = vmatprep.subr.bf16.mxu0 0
        %1225 = vmatpush1.bf16.msra.mxu0 0
        %1226 = vmatprep.subr.bf16.mxu0 0
        %1227 = vmatpush1.bf16.msra.mxu0 0
        %1228 = vmatprep.subr.bf16.mxu0 0
        %1229 = vmatpush1.bf16.msra.mxu0 0
        %1230 = vmatprep.subr.bf16.mxu0 0
        %1231 = vmatpush1.bf16.msra.mxu0 0
        %1232 = vmatprep.subr.bf16.mxu0 0
        %1233 = vmatpush1.bf16.msra.mxu0 0
        %1234 = vmatprep.subr.bf16.mxu0 0
        %1235 = vmatpush1.bf16.msra.mxu0 0
        %1236 = vmatprep.subr.bf16.mxu0 0
        %1237 = vmatpush1.bf16.msra.mxu0 0
        %1238 = vmatprep.subr.bf16.mxu0 0
        %1239 = vmatpush1.bf16.msra.mxu0 0
        %1240 = vmatprep.subr.bf16.mxu0 0
        %1241 = vmatpush1.bf16.msra.mxu0 0
        %1242 = vmatprep.subr.bf16.mxu0 0
        %1243 = vmatpush1.bf16.msra.mxu0 0
        %1244 = vmatprep.subr.bf16.mxu0 0
        %1245 = vmatpush1.bf16.msra.mxu0 0
        %1246 = vmatprep.mubr.bf16.mxu0 0
        %1247 = vmatmul.mubr.bf16.gmra.mrb[0].mxu0 %v852
        %v1248 = vpop.f32.mrb[0].mxu0
        %v1249 = vadd.f32 %v413, %v1248
        %v1250 = vpop.f32.mrb[0].mxu0
        %v1251 = vadd.f32 %v413, %v1250
        %v1252 = vpop.f32.mrb[0].mxu0
        %v1253 = vadd.f32 %v418, %v1252
        %v1254 = vpop.f32.mrb[0].mxu0
        %v1255 = vadd.f32 %v418, %v1254
        %1256 = vmatprep.mubr.bf16.mxu0 0
        %1257 = vmatmul.mubr.bf16.gmra.mrb[0].mxu0 %v855
        %v1258 = vpop.f32.mrb[0].mxu0
        %v1259 = vadd.f32 %v423, %v1258
        %v1260 = vpop.f32.mrb[0].mxu0
        %v1261 = vadd.f32 %v423, %v1260
        %v1262 = vpop.f32.mrb[0].mxu0
        %v1263 = vadd.f32 %v428, %v1262
        %v1264 = vpop.f32.mrb[0].mxu0
        %v1265 = vadd.f32 %v428, %v1264
        %1266 = vmatprep.mubr.bf16.mxu0 0
        %1267 = vmatmul.mubr.bf16.gmra.mrb[0].mxu0 %v858
        %v1268 = vpop.f32.mrb[0].mxu0
        %v1269 = vadd.f32 %v433, %v1268
        %v1270 = vpop.f32.mrb[0].mxu0
        %v1271 = vadd.f32 %v433, %v1270
        %v1272 = vpop.f32.mrb[0].mxu0
        %v1273 = vadd.f32 %v438, %v1272
        %v1274 = vpop.f32.mrb[0].mxu0
        %v1275 = vadd.f32 %v438, %v1274
        %1276 = vmatprep.mubr.bf16.mxu0 0
        %1277 = vmatmul.mubr.bf16.gmra.mrb[0].mxu0 %v861
        %v1278 = vpop.f32.mrb[0].mxu0
        %v1279 = vadd.f32 %v443, %v1278
        %v1280 = vpop.f32.mrb[0].mxu0
        %v1281 = vadd.f32 %v443, %v1280
        %v1282 = vpop.f32.mrb[0].mxu0
        %v1283 = vadd.f32 %v448, %v1282
        %v1284 = vpop.f32.mrb[0].mxu0
        %v1285 = vadd.f32 %v448, %v1284
        %1286 = vmatprep.mubr.bf16.mxu0 0
        %1287 = vmatmul.mubr.bf16.gmra.mrb[0].mxu0 %v864
        %v1288 = vpop.f32.mrb[0].mxu0
        %v1289 = vadd.f32 %v453, %v1288
        %v1290 = vpop.f32.mrb[0].mxu0
        %v1291 = vadd.f32 %v453, %v1290
        %v1292 = vpop.f32.mrb[0].mxu0
        %v1293 = vadd.f32 %v458, %v1292
        %v1294 = vpop.f32.mrb[0].mxu0
        %v1295 = vadd.f32 %v458, %v1294
        %1296 = vmatprep.mubr.bf16.mxu0 0
        %1297 = vmatmul.mubr.bf16.gmra.mrb[0].mxu0 %v867
        %v1298 = vpop.f32.mrb[0].mxu0
        %v1299 = vadd.f32 %v463, %v1298
        %v1300 = vpop.f32.mrb[0].mxu0
        %v1301 = vadd.f32 %v463, %v1300
        %v1302 = vpop.f32.mrb[0].mxu0
        %v1303 = vadd.f32 %v468, %v1302
        %v1304 = vpop.f32.mrb[0].mxu0
        %v1305 = vadd.f32 %v468, %v1304
        %1306 = vmatprep.mubr.bf16.mxu0 0
        %1307 = vmatmul.mubr.bf16.gmra.mrb[0].mxu0 %v870
        %v1308 = vpop.f32.mrb[0].mxu0
        %v1309 = vadd.f32 %v473, %v1308
        %v1310 = vpop.f32.mrb[0].mxu0
        %v1311 = vadd.f32 %v473, %v1310
        %v1312 = vpop.f32.mrb[0].mxu0
        %v1313 = vadd.f32 %v478, %v1312
        %v1314 = vpop.f32.mrb[0].mxu0
        %v1315 = vadd.f32 %v478, %v1314
        %1316 = vmatprep.mubr.bf16.mxu0 0
        %1317 = vmatmul.mubr.bf16.gmra.mrb[0].mxu0 %v873
        %v1318 = vpop.f32.mrb[0].mxu0
        %v1319 = vadd.f32 %v483, %v1318
        %v1320 = vpop.f32.mrb[0].mxu0
        %v1321 = vadd.f32 %v483, %v1320
        %v1322 = vpop.f32.mrb[0].mxu0
        %v1323 = vadd.f32 %v488, %v1322
        %v1324 = vpop.f32.mrb[0].mxu0
        %v1325 = vadd.f32 %v488, %v1324
        %1326 = vdwg.mxu0
        %1327 = vmatprep.subr.bf16.mxu0 %v731
        %1328 = vmatpush1.bf16.msra.mxu0 %v730
        %1329 = vmatprep.subr.bf16.mxu0 %v763
        %1330 = vmatpush1.bf16.msra.mxu0 %v762
        %1331 = vmatprep.subr.bf16.mxu0 0
        %1332 = vmatpush1.bf16.msra.mxu0 0
        %1333 = vmatprep.subr.bf16.mxu0 0
        %1334 = vmatpush1.bf16.msra.mxu0 0
        %1335 = vmatprep.subr.bf16.mxu0 0
        %1336 = vmatpush1.bf16.msra.mxu0 0
        %1337 = vmatprep.subr.bf16.mxu0 0
        %1338 = vmatpush1.bf16.msra.mxu0 0
        %1339 = vmatprep.subr.bf16.mxu0 0
        %1340 = vmatpush1.bf16.msra.mxu0 0
        %1341 = vmatprep.subr.bf16.mxu0 0
        %1342 = vmatpush1.bf16.msra.mxu0 0
        %1343 = vmatprep.subr.bf16.mxu0 0
        %1344 = vmatpush1.bf16.msra.mxu0 0
        %1345 = vmatprep.subr.bf16.mxu0 0
        %1346 = vmatpush1.bf16.msra.mxu0 0
        %1347 = vmatprep.subr.bf16.mxu0 0
        %1348 = vmatpush1.bf16.msra.mxu0 0
        %1349 = vmatprep.subr.bf16.mxu0 0
        %1350 = vmatpush1.bf16.msra.mxu0 0
        %1351 = vmatprep.subr.bf16.mxu0 0
        %1352 = vmatpush1.bf16.msra.mxu0 0
        %1353 = vmatprep.subr.bf16.mxu0 0
        %1354 = vmatpush1.bf16.msra.mxu0 0
        %1355 = vmatprep.subr.bf16.mxu0 0
        %1356 = vmatpush1.bf16.msra.mxu0 0
        %1357 = vmatprep.subr.bf16.mxu0 0
        %1358 = vmatpush1.bf16.msra.mxu0 0
        %1359 = vmatprep.mubr.bf16.mxu0 0
        %1360 = vmatmul.mubr.bf16.gmra.mrb[0].mxu0 %v852
        %v1361 = vpop.f32.mrb[0].mxu0
        %v1362 = vadd.f32 %v413, %v1361
        %v1363 = vpop.f32.mrb[0].mxu0
        %v1364 = vadd.f32 %v413, %v1363
        %v1365 = vpop.f32.mrb[0].mxu0
        %v1366 = vadd.f32 %v418, %v1365
        %v1367 = vpop.f32.mrb[0].mxu0
        %v1368 = vadd.f32 %v418, %v1367
        %1369 = vmatprep.mubr.bf16.mxu0 0
        %1370 = vmatmul.mubr.bf16.gmra.mrb[0].mxu0 %v855
        %v1371 = vpop.f32.mrb[0].mxu0
        %v1372 = vadd.f32 %v423, %v1371
        %v1373 = vpop.f32.mrb[0].mxu0
        %v1374 = vadd.f32 %v423, %v1373
        %v1375 = vpop.f32.mrb[0].mxu0
        %v1376 = vadd.f32 %v428, %v1375
        %v1377 = vpop.f32.mrb[0].mxu0
        %v1378 = vadd.f32 %v428, %v1377
        %1379 = vmatprep.mubr.bf16.mxu0 0
        %1380 = vmatmul.mubr.bf16.gmra.mrb[0].mxu0 %v858
        %v1381 = vpop.f32.mrb[0].mxu0
        %v1382 = vadd.f32 %v433, %v1381
        %v1383 = vpop.f32.mrb[0].mxu0
        %v1384 = vadd.f32 %v433, %v1383
        %v1385 = vpop.f32.mrb[0].mxu0
        %v1386 = vadd.f32 %v438, %v1385
        %v1387 = vpop.f32.mrb[0].mxu0
        %v1388 = vadd.f32 %v438, %v1387
        %1389 = vmatprep.mubr.bf16.mxu0 0
        %1390 = vmatmul.mubr.bf16.gmra.mrb[0].mxu0 %v861
        %v1391 = vpop.f32.mrb[0].mxu0
        %v1392 = vadd.f32 %v443, %v1391
        %v1393 = vpop.f32.mrb[0].mxu0
        %v1394 = vadd.f32 %v443, %v1393
        %v1395 = vpop.f32.mrb[0].mxu0
        %v1396 = vadd.f32 %v448, %v1395
        %v1397 = vpop.f32.mrb[0].mxu0
        %v1398 = vadd.f32 %v448, %v1397
        %1399 = vmatprep.mubr.bf16.mxu0 0
        %1400 = vmatmul.mubr.bf16.gmra.mrb[0].mxu0 %v864
        %v1401 = vpop.f32.mrb[0].mxu0
        %v1402 = vadd.f32 %v453, %v1401
        %v1403 = vpop.f32.mrb[0].mxu0
        %v1404 = vadd.f32 %v453, %v1403
        %v1405 = vpop.f32.mrb[0].mxu0
        %v1406 = vadd.f32 %v458, %v1405
        %v1407 = vpop.f32.mrb[0].mxu0
        %v1408 = vadd.f32 %v458, %v1407
        %1409 = vmatprep.mubr.bf16.mxu0 0
        %1410 = vmatmul.mubr.bf16.gmra.mrb[0].mxu0 %v867
        %v1411 = vpop.f32.mrb[0].mxu0
        %v1412 = vadd.f32 %v463, %v1411
        %v1413 = vpop.f32.mrb[0].mxu0
        %v1414 = vadd.f32 %v463, %v1413
        %v1415 = vpop.f32.mrb[0].mxu0
        %v1416 = vadd.f32 %v468, %v1415
        %v1417 = vpop.f32.mrb[0].mxu0
        %v1418 = vadd.f32 %v468, %v1417
        %1419 = vmatprep.mubr.bf16.mxu0 0
        %1420 = vmatmul.mubr.bf16.gmra.mrb[0].mxu0 %v870
        %v1421 = vpop.f32.mrb[0].mxu0
        %v1422 = vadd.f32 %v473, %v1421
        %v1423 = vpop.f32.mrb[0].mxu0
        %v1424 = vadd.f32 %v473, %v1423
        %v1425 = vpop.f32.mrb[0].mxu0
        %v1426 = vadd.f32 %v478, %v1425
        %v1427 = vpop.f32.mrb[0].mxu0
        %v1428 = vadd.f32 %v478, %v1427
        %1429 = vmatprep.mubr.bf16.mxu0 0
        %1430 = vmatmul.mubr.bf16.gmra.mrb[0].mxu0 %v873
        %v1431 = vpop.f32.mrb[0].mxu0
        %v1432 = vadd.f32 %v483, %v1431
        %v1433 = vpop.f32.mrb[0].mxu0
        %v1434 = vadd.f32 %v483, %v1433
        %v1435 = vpop.f32.mrb[0].mxu0
        %v1436 = vadd.f32 %v488, %v1435
        %v1437 = vpop.f32.mrb[0].mxu0
        %v1438 = vadd.f32 %v488, %v1437
        %1439 = vdwg.mxu0
        %1440 = vmatprep.subr.bf16.mxu0 %v733
        %1441 = vmatpush1.bf16.msra.mxu0 %v732
        %1442 = vmatprep.subr.bf16.mxu0 %v765
        %1443 = vmatpush1.bf16.msra.mxu0 %v764
        %1444 = vmatprep.subr.bf16.mxu0 0
        %1445 = vmatpush1.bf16.msra.mxu0 0
        %1446 = vmatprep.subr.bf16.mxu0 0
        %1447 = vmatpush1.bf16.msra.mxu0 0
        %1448 = vmatprep.subr.bf16.mxu0 0
        %1449 = vmatpush1.bf16.msra.mxu0 0
        %1450 = vmatprep.subr.bf16.mxu0 0
        %1451 = vmatpush1.bf16.msra.mxu0 0
        %1452 = vmatprep.subr.bf16.mxu0 0
        %1453 = vmatpush1.bf16.msra.mxu0 0
        %1454 = vmatprep.subr.bf16.mxu0 0
        %1455 = vmatpush1.bf16.msra.mxu0 0
        %1456 = vmatprep.subr.bf16.mxu0 0
        %1457 = vmatpush1.bf16.msra.mxu0 0
        %1458 = vmatprep.subr.bf16.mxu0 0
        %1459 = vmatpush1.bf16.msra.mxu0 0
        %1460 = vmatprep.subr.bf16.mxu0 0
        %1461 = vmatpush1.bf16.msra.mxu0 0
        %1462 = vmatprep.subr.bf16.mxu0 0
        %1463 = vmatpush1.bf16.msra.mxu0 0
        %1464 = vmatprep.subr.bf16.mxu0 0
        %1465 = vmatpush1.bf16.msra.mxu0 0
        %1466 = vmatprep.subr.bf16.mxu0 0
        %1467 = vmatpush1.bf16.msra.mxu0 0
        %1468 = vmatprep.subr.bf16.mxu0 0
        %1469 = vmatpush1.bf16.msra.mxu0 0
        %1470 = vmatprep.subr.bf16.mxu0 0
        %1471 = vmatpush1.bf16.msra.mxu0 0
        %1472 = vmatprep.mubr.bf16.mxu0 0
        %1473 = vmatmul.mubr.bf16.gmra.mrb[0].mxu0 %v852
        %v1474 = vpop.f32.mrb[0].mxu0
        %v1475 = vadd.f32 %v413, %v1474
        %v1476 = vpop.f32.mrb[0].mxu0
        %v1477 = vadd.f32 %v413, %v1476
        %v1478 = vpop.f32.mrb[0].mxu0
        %v1479 = vadd.f32 %v418, %v1478
        %v1480 = vpop.f32.mrb[0].mxu0
        %v1481 = vadd.f32 %v418, %v1480
        %1482 = vmatprep.mubr.bf16.mxu0 0
        %1483 = vmatmul.mubr.bf16.gmra.mrb[0].mxu0 %v855
        %v1484 = vpop.f32.mrb[0].mxu0
        %v1485 = vadd.f32 %v423, %v1484
        %v1486 = vpop.f32.mrb[0].mxu0
        %v1487 = vadd.f32 %v423, %v1486
        %v1488 = vpop.f32.mrb[0].mxu0
        %v1489 = vadd.f32 %v428, %v1488
        %v1490 = vpop.f32.mrb[0].mxu0
        %v1491 = vadd.f32 %v428, %v1490
        %1492 = vmatprep.mubr.bf16.mxu0 0
        %1493 = vmatmul.mubr.bf16.gmra.mrb[0].mxu0 %v858
        %v1494 = vpop.f32.mrb[0].mxu0
        %v1495 = vadd.f32 %v433, %v1494
        %v1496 = vpop.f32.mrb[0].mxu0
        %v1497 = vadd.f32 %v433, %v1496
        %v1498 = vpop.f32.mrb[0].mxu0
        %v1499 = vadd.f32 %v438, %v1498
        %v1500 = vpop.f32.mrb[0].mxu0
        %v1501 = vadd.f32 %v438, %v1500
        %1502 = vmatprep.mubr.bf16.mxu0 0
        %1503 = vmatmul.mubr.bf16.gmra.mrb[0].mxu0 %v861
        %v1504 = vpop.f32.mrb[0].mxu0
        %v1505 = vadd.f32 %v443, %v1504
        %v1506 = vpop.f32.mrb[0].mxu0
        %v1507 = vadd.f32 %v443, %v1506
        %v1508 = vpop.f32.mrb[0].mxu0
        %v1509 = vadd.f32 %v448, %v1508
        %v1510 = vpop.f32.mrb[0].mxu0
        %v1511 = vadd.f32 %v448, %v1510
        %1512 = vmatprep.mubr.bf16.mxu0 0
        %1513 = vmatmul.mubr.bf16.gmra.mrb[0].mxu0 %v864
        %v1514 = vpop.f32.mrb[0].mxu0
        %v1515 = vadd.f32 %v453, %v1514
        %v1516 = vpop.f32.mrb[0].mxu0
        %v1517 = vadd.f32 %v453, %v1516
        %v1518 = vpop.f32.mrb[0].mxu0
        %v1519 = vadd.f32 %v458, %v1518
        %v1520 = vpop.f32.mrb[0].mxu0
        %v1521 = vadd.f32 %v458, %v1520
        %1522 = vmatprep.mubr.bf16.mxu0 0
        %1523 = vmatmul.mubr.bf16.gmra.mrb[0].mxu0 %v867
        %v1524 = vpop.f32.mrb[0].mxu0
        %v1525 = vadd.f32 %v463, %v1524
        %v1526 = vpop.f32.mrb[0].mxu0
        %v1527 = vadd.f32 %v463, %v1526
        %v1528 = vpop.f32.mrb[0].mxu0
        %v1529 = vadd.f32 %v468, %v1528
        %v1530 = vpop.f32.mrb[0].mxu0
        %v1531 = vadd.f32 %v468, %v1530
        %1532 = vmatprep.mubr.bf16.mxu0 0
        %1533 = vmatmul.mubr.bf16.gmra.mrb[0].mxu0 %v870
        %v1534 = vpop.f32.mrb[0].mxu0
        %v1535 = vadd.f32 %v473, %v1534
        %v1536 = vpop.f32.mrb[0].mxu0
        %v1537 = vadd.f32 %v473, %v1536
        %v1538 = vpop.f32.mrb[0].mxu0
        %v1539 = vadd.f32 %v478, %v1538
        %v1540 = vpop.f32.mrb[0].mxu0
        %v1541 = vadd.f32 %v478, %v1540
        %1542 = vmatprep.mubr.bf16.mxu0 0
        %1543 = vmatmul.mubr.bf16.gmra.mrb[0].mxu0 %v873
        %v1544 = vpop.f32.mrb[0].mxu0
        %v1545 = vadd.f32 %v483, %v1544
        %v1546 = vpop.f32.mrb[0].mxu0
        %v1547 = vadd.f32 %v483, %v1546
        %v1548 = vpop.f32.mrb[0].mxu0
        %v1549 = vadd.f32 %v488, %v1548
        %v1550 = vpop.f32.mrb[0].mxu0
        %v1551 = vadd.f32 %v488, %v1550
        %1552 = vdwg.mxu0
        %1553 = vmatprep.subr.bf16.mxu0 %v735
        %1554 = vmatpush1.bf16.msra.mxu0 %v734
        %1555 = vmatprep.subr.bf16.mxu0 %v767
        %1556 = vmatpush1.bf16.msra.mxu0 %v766
        %1557 = vmatprep.subr.bf16.mxu0 0
        %1558 = vmatpush1.bf16.msra.mxu0 0
        %1559 = vmatprep.subr.bf16.mxu0 0
        %1560 = vmatpush1.bf16.msra.mxu0 0
        %1561 = vmatprep.subr.bf16.mxu0 0
        %1562 = vmatpush1.bf16.msra.mxu0 0
        %1563 = vmatprep.subr.bf16.mxu0 0
        %1564 = vmatpush1.bf16.msra.mxu0 0
        %1565 = vmatprep.subr.bf16.mxu0 0
        %1566 = vmatpush1.bf16.msra.mxu0 0
        %1567 = vmatprep.subr.bf16.mxu0 0
        %1568 = vmatpush1.bf16.msra.mxu0 0
        %1569 = vmatprep.subr.bf16.mxu0 0
        %1570 = vmatpush1.bf16.msra.mxu0 0
        %1571 = vmatprep.subr.bf16.mxu0 0
        %1572 = vmatpush1.bf16.msra.mxu0 0
        %1573 = vmatprep.subr.bf16.mxu0 0
        %1574 = vmatpush1.bf16.msra.mxu0 0
        %1575 = vmatprep.subr.bf16.mxu0 0
        %1576 = vmatpush1.bf16.msra.mxu0 0
        %1577 = vmatprep.subr.bf16.mxu0 0
        %1578 = vmatpush1.bf16.msra.mxu0 0
        %1579 = vmatprep.subr.bf16.mxu0 0
        %1580 = vmatpush1.bf16.msra.mxu0 0
        %1581 = vmatprep.subr.bf16.mxu0 0
        %1582 = vmatpush1.bf16.msra.mxu0 0
        %1583 = vmatprep.subr.bf16.mxu0 0
        %1584 = vmatpush1.bf16.msra.mxu0 0
        %1585 = vmatprep.mubr.bf16.mxu0 0
        %1586 = vmatmul.mubr.bf16.gmra.mrb[0].mxu0 %v852
        %v1587 = vpop.f32.mrb[0].mxu0
        %v1588 = vadd.f32 %v413, %v1587
        %v1589 = vpop.f32.mrb[0].mxu0
        %v1590 = vadd.f32 %v413, %v1589
        %v1591 = vpop.f32.mrb[0].mxu0
        %v1592 = vadd.f32 %v418, %v1591
        %v1593 = vpop.f32.mrb[0].mxu0
        %v1594 = vadd.f32 %v418, %v1593
        %1595 = vmatprep.mubr.bf16.mxu0 0
        %1596 = vmatmul.mubr.bf16.gmra.mrb[0].mxu0 %v855
        %v1597 = vpop.f32.mrb[0].mxu0
        %v1598 = vadd.f32 %v423, %v1597
        %v1599 = vpop.f32.mrb[0].mxu0
        %v1600 = vadd.f32 %v423, %v1599
        %v1601 = vpop.f32.mrb[0].mxu0
        %v1602 = vadd.f32 %v428, %v1601
        %v1603 = vpop.f32.mrb[0].mxu0
        %v1604 = vadd.f32 %v428, %v1603
        %1605 = vmatprep.mubr.bf16.mxu0 0
        %1606 = vmatmul.mubr.bf16.gmra.mrb[0].mxu0 %v858
        %v1607 = vpop.f32.mrb[0].mxu0
        %v1608 = vadd.f32 %v433, %v1607
        %v1609 = vpop.f32.mrb[0].mxu0
        %v1610 = vadd.f32 %v433, %v1609
        %v1611 = vpop.f32.mrb[0].mxu0
        %v1612 = vadd.f32 %v438, %v1611
        %v1613 = vpop.f32.mrb[0].mxu0
        %v1614 = vadd.f32 %v438, %v1613
        %1615 = vmatprep.mubr.bf16.mxu0 0
        %1616 = vmatmul.mubr.bf16.gmra.mrb[0].mxu0 %v861
        %v1617 = vpop.f32.mrb[0].mxu0
        %v1618 = vadd.f32 %v443, %v1617
        %v1619 = vpop.f32.mrb[0].mxu0
        %v1620 = vadd.f32 %v443, %v1619
        %v1621 = vpop.f32.mrb[0].mxu0
        %v1622 = vadd.f32 %v448, %v1621
        %v1623 = vpop.f32.mrb[0].mxu0
        %v1624 = vadd.f32 %v448, %v1623
        %1625 = vmatprep.mubr.bf16.mxu0 0
        %1626 = vmatmul.mubr.bf16.gmra.mrb[0].mxu0 %v864
        %v1627 = vpop.f32.mrb[0].mxu0
        %v1628 = vadd.f32 %v453, %v1627
        %v1629 = vpop.f32.mrb[0].mxu0
        %v1630 = vadd.f32 %v453, %v1629
        %v1631 = vpop.f32.mrb[0].mxu0
        %v1632 = vadd.f32 %v458, %v1631
        %v1633 = vpop.f32.mrb[0].mxu0
        %v1634 = vadd.f32 %v458, %v1633
        %1635 = vmatprep.mubr.bf16.mxu0 0
        %1636 = vmatmul.mubr.bf16.gmra.mrb[0].mxu0 %v867
        %v1637 = vpop.f32.mrb[0].mxu0
        %v1638 = vadd.f32 %v463, %v1637
        %v1639 = vpop.f32.mrb[0].mxu0
        %v1640 = vadd.f32 %v463, %v1639
        %v1641 = vpop.f32.mrb[0].mxu0
        %v1642 = vadd.f32 %v468, %v1641
        %v1643 = vpop.f32.mrb[0].mxu0
        %v1644 = vadd.f32 %v468, %v1643
        %1645 = vmatprep.mubr.bf16.mxu0 0
        %1646 = vmatmul.mubr.bf16.gmra.mrb[0].mxu0 %v870
        %v1647 = vpop.f32.mrb[0].mxu0
        %v1648 = vadd.f32 %v473, %v1647
        %v1649 = vpop.f32.mrb[0].mxu0
        %v1650 = vadd.f32 %v473, %v1649
        %v1651 = vpop.f32.mrb[0].mxu0
        %v1652 = vadd.f32 %v478, %v1651
        %v1653 = vpop.f32.mrb[0].mxu0
        %v1654 = vadd.f32 %v478, %v1653
        %1655 = vmatprep.mubr.bf16.mxu0 0
        %1656 = vmatmul.mubr.bf16.gmra.mrb[0].mxu0 %v873
        %v1657 = vpop.f32.mrb[0].mxu0
        %v1658 = vadd.f32 %v483, %v1657
        %v1659 = vpop.f32.mrb[0].mxu0
        %v1660 = vadd.f32 %v483, %v1659
        %v1661 = vpop.f32.mrb[0].mxu0
        %v1662 = vadd.f32 %v488, %v1661
        %v1663 = vpop.f32.mrb[0].mxu0
        %v1664 = vadd.f32 %v488, %v1663
        %1665 = vdwg.mxu0
        %1666 = vmatprep.subr.bf16.mxu0 %v737
        %1667 = vmatpush1.bf16.msra.mxu0 %v736
        %1668 = vmatprep.subr.bf16.mxu0 %v769
        %1669 = vmatpush1.bf16.msra.mxu0 %v768
        %1670 = vmatprep.subr.bf16.mxu0 0
        %1671 = vmatpush1.bf16.msra.mxu0 0
        %1672 = vmatprep.subr.bf16.mxu0 0
        %1673 = vmatpush1.bf16.msra.mxu0 0
        %1674 = vmatprep.subr.bf16.mxu0 0
        %1675 = vmatpush1.bf16.msra.mxu0 0
        %1676 = vmatprep.subr.bf16.mxu0 0
        %1677 = vmatpush1.bf16.msra.mxu0 0
        %1678 = vmatprep.subr.bf16.mxu0 0
        %1679 = vmatpush1.bf16.msra.mxu0 0
        %1680 = vmatprep.subr.bf16.mxu0 0
        %1681 = vmatpush1.bf16.msra.mxu0 0
        %1682 = vmatprep.subr.bf16.mxu0 0
        %1683 = vmatpush1.bf16.msra.mxu0 0
        %1684 = vmatprep.subr.bf16.mxu0 0
        %1685 = vmatpush1.bf16.msra.mxu0 0
        %1686 = vmatprep.subr.bf16.mxu0 0
        %1687 = vmatpush1.bf16.msra.mxu0 0
        %1688 = vmatprep.subr.bf16.mxu0 0
        %1689 = vmatpush1.bf16.msra.mxu0 0
        %1690 = vmatprep.subr.bf16.mxu0 0
        %1691 = vmatpush1.bf16.msra.mxu0 0
        %1692 = vmatprep.subr.bf16.mxu0 0
        %1693 = vmatpush1.bf16.msra.mxu0 0
        %1694 = vmatprep.subr.bf16.mxu0 0
        %1695 = vmatpush1.bf16.msra.mxu0 0
        %1696 = vmatprep.subr.bf16.mxu0 0
        %1697 = vmatpush1.bf16.msra.mxu0 0
        %1698 = vmatprep.mubr.bf16.mxu0 0
        %1699 = vmatmul.mubr.bf16.gmra.mrb[0].mxu0 %v852
        %v1700 = vpop.f32.mrb[0].mxu0
        %v1701 = vadd.f32 %v413, %v1700
        %v1702 = vpop.f32.mrb[0].mxu0
        %v1703 = vadd.f32 %v413, %v1702
        %v1704 = vpop.f32.mrb[0].mxu0
        %v1705 = vadd.f32 %v418, %v1704
        %v1706 = vpop.f32.mrb[0].mxu0
        %v1707 = vadd.f32 %v418, %v1706
        %1708 = vmatprep.mubr.bf16.mxu0 0
        %1709 = vmatmul.mubr.bf16.gmra.mrb[0].mxu0 %v855
        %v1710 = vpop.f32.mrb[0].mxu0
        %v1711 = vadd.f32 %v423, %v1710
        %v1712 = vpop.f32.mrb[0].mxu0
        %v1713 = vadd.f32 %v423, %v1712
        %v1714 = vpop.f32.mrb[0].mxu0
        %v1715 = vadd.f32 %v428, %v1714
        %v1716 = vpop.f32.mrb[0].mxu0
        %v1717 = vadd.f32 %v428, %v1716
        %1718 = vmatprep.mubr.bf16.mxu0 0
        %1719 = vmatmul.mubr.bf16.gmra.mrb[0].mxu0 %v858
        %v1720 = vpop.f32.mrb[0].mxu0
        %v1721 = vadd.f32 %v433, %v1720
        %v1722 = vpop.f32.mrb[0].mxu0
        %v1723 = vadd.f32 %v433, %v1722
        %v1724 = vpop.f32.mrb[0].mxu0
        %v1725 = vadd.f32 %v438, %v1724
        %v1726 = vpop.f32.mrb[0].mxu0
        %v1727 = vadd.f32 %v438, %v1726
        %1728 = vmatprep.mubr.bf16.mxu0 0
        %1729 = vmatmul.mubr.bf16.gmra.mrb[0].mxu0 %v861
        %v1730 = vpop.f32.mrb[0].mxu0
        %v1731 = vadd.f32 %v443, %v1730
        %v1732 = vpop.f32.mrb[0].mxu0
        %v1733 = vadd.f32 %v443, %v1732
        %v1734 = vpop.f32.mrb[0].mxu0
        %v1735 = vadd.f32 %v448, %v1734
        %v1736 = vpop.f32.mrb[0].mxu0
        %v1737 = vadd.f32 %v448, %v1736
        %1738 = vmatprep.mubr.bf16.mxu0 0
        %1739 = vmatmul.mubr.bf16.gmra.mrb[0].mxu0 %v864
        %v1740 = vpop.f32.mrb[0].mxu0
        %v1741 = vadd.f32 %v453, %v1740
        %v1742 = vpop.f32.mrb[0].mxu0
        %v1743 = vadd.f32 %v453, %v1742
        %v1744 = vpop.f32.mrb[0].mxu0
        %v1745 = vadd.f32 %v458, %v1744
        %v1746 = vpop.f32.mrb[0].mxu0
        %v1747 = vadd.f32 %v458, %v1746
        %1748 = vmatprep.mubr.bf16.mxu0 0
        %1749 = vmatmul.mubr.bf16.gmra.mrb[0].mxu0 %v867
        %v1750 = vpop.f32.mrb[0].mxu0
        %v1751 = vadd.f32 %v463, %v1750
        %v1752 = vpop.f32.mrb[0].mxu0
        %v1753 = vadd.f32 %v463, %v1752
        %v1754 = vpop.f32.mrb[0].mxu0
        %v1755 = vadd.f32 %v468, %v1754
        %v1756 = vpop.f32.mrb[0].mxu0
        %v1757 = vadd.f32 %v468, %v1756
        %1758 = vmatprep.mubr.bf16.mxu0 0
        %1759 = vmatmul.mubr.bf16.gmra.mrb[0].mxu0 %v870
        %v1760 = vpop.f32.mrb[0].mxu0
        %v1761 = vadd.f32 %v473, %v1760
        %v1762 = vpop.f32.mrb[0].mxu0
        %v1763 = vadd.f32 %v473, %v1762
        %v1764 = vpop.f32.mrb[0].mxu0
        %v1765 = vadd.f32 %v478, %v1764
        %v1766 = vpop.f32.mrb[0].mxu0
        %v1767 = vadd.f32 %v478, %v1766
        %1768 = vmatprep.mubr.bf16.mxu0 0
        %1769 = vmatmul.mubr.bf16.gmra.mrb[0].mxu0 %v873
        %v1770 = vpop.f32.mrb[0].mxu0
        %v1771 = vadd.f32 %v483, %v1770
        %v1772 = vpop.f32.mrb[0].mxu0
        %v1773 = vadd.f32 %v483, %v1772
        %v1774 = vpop.f32.mrb[0].mxu0
        %v1775 = vadd.f32 %v488, %v1774
        %v1776 = vpop.f32.mrb[0].mxu0
        %v1777 = vadd.f32 %v488, %v1776
        %1778 = vdwg.mxu0
        %1779 = vmatprep.subr.bf16.mxu0 %v739
        %1780 = vmatpush1.bf16.msra.mxu0 %v738
        %1781 = vmatprep.subr.bf16.mxu0 %v771
        %1782 = vmatpush1.bf16.msra.mxu0 %v770
        %1783 = vmatprep.subr.bf16.mxu0 0
        %1784 = vmatpush1.bf16.msra.mxu0 0
        %1785 = vmatprep.subr.bf16.mxu0 0
        %1786 = vmatpush1.bf16.msra.mxu0 0
        %1787 = vmatprep.subr.bf16.mxu0 0
        %1788 = vmatpush1.bf16.msra.mxu0 0
        %1789 = vmatprep.subr.bf16.mxu0 0
        %1790 = vmatpush1.bf16.msra.mxu0 0
        %1791 = vmatprep.subr.bf16.mxu0 0
        %1792 = vmatpush1.bf16.msra.mxu0 0
        %1793 = vmatprep.subr.bf16.mxu0 0
        %1794 = vmatpush1.bf16.msra.mxu0 0
        %1795 = vmatprep.subr.bf16.mxu0 0
        %1796 = vmatpush1.bf16.msra.mxu0 0
        %1797 = vmatprep.subr.bf16.mxu0 0
        %1798 = vmatpush1.bf16.msra.mxu0 0
        %1799 = vmatprep.subr.bf16.mxu0 0
        %1800 = vmatpush1.bf16.msra.mxu0 0
        %1801 = vmatprep.subr.bf16.mxu0 0
        %1802 = vmatpush1.bf16.msra.mxu0 0
        %1803 = vmatprep.subr.bf16.mxu0 0
        %1804 = vmatpush1.bf16.msra.mxu0 0
        %1805 = vmatprep.subr.bf16.mxu0 0
        %1806 = vmatpush1.bf16.msra.mxu0 0
        %1807 = vmatprep.subr.bf16.mxu0 0
        %1808 = vmatpush1.bf16.msra.mxu0 0
        %1809 = vmatprep.subr.bf16.mxu0 0
        %1810 = vmatpush1.bf16.msra.mxu0 0
        %1811 = vmatprep.mubr.bf16.mxu0 0
        %1812 = vmatmul.mubr.bf16.gmra.mrb[0].mxu0 %v852
        %v1813 = vpop.f32.mrb[0].mxu0
        %v1814 = vadd.f32 %v413, %v1813
        %v1815 = vpop.f32.mrb[0].mxu0
        %v1816 = vadd.f32 %v413, %v1815
        %v1817 = vpop.f32.mrb[0].mxu0
        %v1818 = vadd.f32 %v418, %v1817
        %v1819 = vpop.f32.mrb[0].mxu0
        %v1820 = vadd.f32 %v418, %v1819
        %1821 = vmatprep.mubr.bf16.mxu0 0
        %1822 = vmatmul.mubr.bf16.gmra.mrb[0].mxu0 %v855
        %v1823 = vpop.f32.mrb[0].mxu0
        %v1824 = vadd.f32 %v423, %v1823
        %v1825 = vpop.f32.mrb[0].mxu0
        %v1826 = vadd.f32 %v423, %v1825
        %v1827 = vpop.f32.mrb[0].mxu0
        %v1828 = vadd.f32 %v428, %v1827
        %v1829 = vpop.f32.mrb[0].mxu0
        %v1830 = vadd.f32 %v428, %v1829
        %1831 = vmatprep.mubr.bf16.mxu0 0
        %1832 = vmatmul.mubr.bf16.gmra.mrb[0].mxu0 %v858
        %v1833 = vpop.f32.mrb[0].mxu0
        %v1834 = vadd.f32 %v433, %v1833
        %v1835 = vpop.f32.mrb[0].mxu0
        %v1836 = vadd.f32 %v433, %v1835
        %v1837 = vpop.f32.mrb[0].mxu0
        %v1838 = vadd.f32 %v438, %v1837
        %v1839 = vpop.f32.mrb[0].mxu0
        %v1840 = vadd.f32 %v438, %v1839
        %1841 = vmatprep.mubr.bf16.mxu0 0
        %1842 = vmatmul.mubr.bf16.gmra.mrb[0].mxu0 %v861
        %v1843 = vpop.f32.mrb[0].mxu0
        %v1844 = vadd.f32 %v443, %v1843
        %v1845 = vpop.f32.mrb[0].mxu0
        %v1846 = vadd.f32 %v443, %v1845
        %v1847 = vpop.f32.mrb[0].mxu0
        %v1848 = vadd.f32 %v448, %v1847
        %v1849 = vpop.f32.mrb[0].mxu0
        %v1850 = vadd.f32 %v448, %v1849
        %1851 = vmatprep.mubr.bf16.mxu0 0
        %1852 = vmatmul.mubr.bf16.gmra.mrb[0].mxu0 %v864
        %v1853 = vpop.f32.mrb[0].mxu0
        %v1854 = vadd.f32 %v453, %v1853
        %v1855 = vpop.f32.mrb[0].mxu0
        %v1856 = vadd.f32 %v453, %v1855
        %v1857 = vpop.f32.mrb[0].mxu0
        %v1858 = vadd.f32 %v458, %v1857
        %v1859 = vpop.f32.mrb[0].mxu0
        %v1860 = vadd.f32 %v458, %v1859
        %1861 = vmatprep.mubr.bf16.mxu0 0
        %1862 = vmatmul.mubr.bf16.gmra.mrb[0].mxu0 %v867
        %v1863 = vpop.f32.mrb[0].mxu0
        %v1864 = vadd.f32 %v463, %v1863
        %v1865 = vpop.f32.mrb[0].mxu0
        %v1866 = vadd.f32 %v463, %v1865
        %v1867 = vpop.f32.mrb[0].mxu0
        %v1868 = vadd.f32 %v468, %v1867
        %v1869 = vpop.f32.mrb[0].mxu0
        %v1870 = vadd.f32 %v468, %v1869
        %1871 = vmatprep.mubr.bf16.mxu0 0
        %1872 = vmatmul.mubr.bf16.gmra.mrb[0].mxu0 %v870
        %v1873 = vpop.f32.mrb[0].mxu0
        %v1874 = vadd.f32 %v473, %v1873
        %v1875 = vpop.f32.mrb[0].mxu0
        %v1876 = vadd.f32 %v473, %v1875
        %v1877 = vpop.f32.mrb[0].mxu0
        %v1878 = vadd.f32 %v478, %v1877
        %v1879 = vpop.f32.mrb[0].mxu0
        %v1880 = vadd.f32 %v478, %v1879
        %1881 = vmatprep.mubr.bf16.mxu0 0
        %1882 = vmatmul.mubr.bf16.gmra.mrb[0].mxu0 %v873
        %v1883 = vpop.f32.mrb[0].mxu0
        %v1884 = vadd.f32 %v483, %v1883
        %v1885 = vpop.f32.mrb[0].mxu0
        %v1886 = vadd.f32 %v483, %v1885
        %v1887 = vpop.f32.mrb[0].mxu0
        %v1888 = vadd.f32 %v488, %v1887
        %v1889 = vpop.f32.mrb[0].mxu0
        %v1890 = vadd.f32 %v488, %v1889
        %1891 = vdwg.mxu0
        %1892 = vmatprep.subr.bf16.mxu0 %v741
        %1893 = vmatpush1.bf16.msra.mxu0 %v740
        %1894 = vmatprep.subr.bf16.mxu0 %v773
        %1895 = vmatpush1.bf16.msra.mxu0 %v772
        %1896 = vmatprep.subr.bf16.mxu0 0
        %1897 = vmatpush1.bf16.msra.mxu0 0
        %1898 = vmatprep.subr.bf16.mxu0 0
        %1899 = vmatpush1.bf16.msra.mxu0 0
        %1900 = vmatprep.subr.bf16.mxu0 0
        %1901 = vmatpush1.bf16.msra.mxu0 0
        %1902 = vmatprep.subr.bf16.mxu0 0
        %1903 = vmatpush1.bf16.msra.mxu0 0
        %1904 = vmatprep.subr.bf16.mxu0 0
        %1905 = vmatpush1.bf16.msra.mxu0 0
        %1906 = vmatprep.subr.bf16.mxu0 0
        %1907 = vmatpush1.bf16.msra.mxu0 0
        %1908 = vmatprep.subr.bf16.mxu0 0
        %1909 = vmatpush1.bf16.msra.mxu0 0
        %1910 = vmatprep.subr.bf16.mxu0 0
        %1911 = vmatpush1.bf16.msra.mxu0 0
        %1912 = vmatprep.subr.bf16.mxu0 0
        %1913 = vmatpush1.bf16.msra.mxu0 0
        %1914 = vmatprep.subr.bf16.mxu0 0
        %1915 = vmatpush1.bf16.msra.mxu0 0
        %1916 = vmatprep.subr.bf16.mxu0 0
        %1917 = vmatpush1.bf16.msra.mxu0 0
        %1918 = vmatprep.subr.bf16.mxu0 0
        %1919 = vmatpush1.bf16.msra.mxu0 0
        %1920 = vmatprep.subr.bf16.mxu0 0
        %1921 = vmatpush1.bf16.msra.mxu0 0
        %1922 = vmatprep.subr.bf16.mxu0 0
        %1923 = vmatpush1.bf16.msra.mxu0 0
        %1924 = vmatprep.mubr.bf16.mxu0 0
        %1925 = vmatmul.mubr.bf16.gmra.mrb[0].mxu0 %v852
        %v1926 = vpop.f32.mrb[0].mxu0
        %v1927 = vadd.f32 %v413, %v1926
        %v1928 = vpop.f32.mrb[0].mxu0
        %v1929 = vadd.f32 %v413, %v1928
        %v1930 = vpop.f32.mrb[0].mxu0
        %v1931 = vadd.f32 %v418, %v1930
        %v1932 = vpop.f32.mrb[0].mxu0
        %v1933 = vadd.f32 %v418, %v1932
        %1934 = vmatprep.mubr.bf16.mxu0 0
        %1935 = vmatmul.mubr.bf16.gmra.mrb[0].mxu0 %v855
        %v1936 = vpop.f32.mrb[0].mxu0
        %v1937 = vadd.f32 %v423, %v1936
        %v1938 = vpop.f32.mrb[0].mxu0
        %v1939 = vadd.f32 %v423, %v1938
        %v1940 = vpop.f32.mrb[0].mxu0
        %v1941 = vadd.f32 %v428, %v1940
        %v1942 = vpop.f32.mrb[0].mxu0
        %v1943 = vadd.f32 %v428, %v1942
        %1944 = vmatprep.mubr.bf16.mxu0 0
        %1945 = vmatmul.mubr.bf16.gmra.mrb[0].mxu0 %v858
        %v1946 = vpop.f32.mrb[0].mxu0
        %v1947 = vadd.f32 %v433, %v1946
        %v1948 = vpop.f32.mrb[0].mxu0
        %v1949 = vadd.f32 %v433, %v1948
        %v1950 = vpop.f32.mrb[0].mxu0
        %v1951 = vadd.f32 %v438, %v1950
        %v1952 = vpop.f32.mrb[0].mxu0
        %v1953 = vadd.f32 %v438, %v1952
        %1954 = vmatprep.mubr.bf16.mxu0 0
        %1955 = vmatmul.mubr.bf16.gmra.mrb[0].mxu0 %v861
        %v1956 = vpop.f32.mrb[0].mxu0
        %v1957 = vadd.f32 %v443, %v1956
        %v1958 = vpop.f32.mrb[0].mxu0
        %v1959 = vadd.f32 %v443, %v1958
        %v1960 = vpop.f32.mrb[0].mxu0
        %v1961 = vadd.f32 %v448, %v1960
        %v1962 = vpop.f32.mrb[0].mxu0
        %v1963 = vadd.f32 %v448, %v1962
        %1964 = vmatprep.mubr.bf16.mxu0 0
        %1965 = vmatmul.mubr.bf16.gmra.mrb[0].mxu0 %v864
        %v1966 = vpop.f32.mrb[0].mxu0
        %v1967 = vadd.f32 %v453, %v1966
        %v1968 = vpop.f32.mrb[0].mxu0
        %v1969 = vadd.f32 %v453, %v1968
        %v1970 = vpop.f32.mrb[0].mxu0
        %v1971 = vadd.f32 %v458, %v1970
        %v1972 = vpop.f32.mrb[0].mxu0
        %v1973 = vadd.f32 %v458, %v1972
        %1974 = vmatprep.mubr.bf16.mxu0 0
        %1975 = vmatmul.mubr.bf16.gmra.mrb[0].mxu0 %v867
        %v1976 = vpop.f32.mrb[0].mxu0
        %v1977 = vadd.f32 %v463, %v1976
        %v1978 = vpop.f32.mrb[0].mxu0
        %v1979 = vadd.f32 %v463, %v1978
        %v1980 = vpop.f32.mrb[0].mxu0
        %v1981 = vadd.f32 %v468, %v1980
        %v1982 = vpop.f32.mrb[0].mxu0
        %v1983 = vadd.f32 %v468, %v1982
        %1984 = vmatprep.mubr.bf16.mxu0 0
        %1985 = vmatmul.mubr.bf16.gmra.mrb[0].mxu0 %v870
        %v1986 = vpop.f32.mrb[0].mxu0
        %v1987 = vadd.f32 %v473, %v1986
        %v1988 = vpop.f32.mrb[0].mxu0
        %v1989 = vadd.f32 %v473, %v1988
        %v1990 = vpop.f32.mrb[0].mxu0
        %v1991 = vadd.f32 %v478, %v1990
        %v1992 = vpop.f32.mrb[0].mxu0
        %v1993 = vadd.f32 %v478, %v1992
        %1994 = vmatprep.mubr.bf16.mxu0 0
        %1995 = vmatmul.mubr.bf16.gmra.mrb[0].mxu0 %v873
        %v1996 = vpop.f32.mrb[0].mxu0
        %v1997 = vadd.f32 %v483, %v1996
        %v1998 = vpop.f32.mrb[0].mxu0
        %v1999 = vadd.f32 %v483, %v1998
        %v2000 = vpop.f32.mrb[0].mxu0
        %v2001 = vadd.f32 %v488, %v2000
        %v2002 = vpop.f32.mrb[0].mxu0
        %v2003 = vadd.f32 %v488, %v2002
        %2004 = vdwg.mxu0
        %2005 = vmatprep.subr.bf16.mxu0 %v743
        %2006 = vmatpush1.bf16.msra.mxu0 %v742
        %2007 = vmatprep.subr.bf16.mxu0 %v775
        %2008 = vmatpush1.bf16.msra.mxu0 %v774
        %2009 = vmatprep.subr.bf16.mxu0 0
        %2010 = vmatpush1.bf16.msra.mxu0 0
        %2011 = vmatprep.subr.bf16.mxu0 0
        %2012 = vmatpush1.bf16.msra.mxu0 0
        %2013 = vmatprep.subr.bf16.mxu0 0
        %2014 = vmatpush1.bf16.msra.mxu0 0
        %2015 = vmatprep.subr.bf16.mxu0 0
        %2016 = vmatpush1.bf16.msra.mxu0 0
        %2017 = vmatprep.subr.bf16.mxu0 0
        %2018 = vmatpush1.bf16.msra.mxu0 0
        %2019 = vmatprep.subr.bf16.mxu0 0
        %2020 = vmatpush1.bf16.msra.mxu0 0
        %2021 = vmatprep.subr.bf16.mxu0 0
        %2022 = vmatpush1.bf16.msra.mxu0 0
        %2023 = vmatprep.subr.bf16.mxu0 0
        %2024 = vmatpush1.bf16.msra.mxu0 0
        %2025 = vmatprep.subr.bf16.mxu0 0
        %2026 = vmatpush1.bf16.msra.mxu0 0
        %2027 = vmatprep.subr.bf16.mxu0 0
        %2028 = vmatpush1.bf16.msra.mxu0 0
        %2029 = vmatprep.subr.bf16.mxu0 0
        %2030 = vmatpush1.bf16.msra.mxu0 0
        %2031 = vmatprep.subr.bf16.mxu0 0
        %2032 = vmatpush1.bf16.msra.mxu0 0
        %2033 = vmatprep.subr.bf16.mxu0 0
        %2034 = vmatpush1.bf16.msra.mxu0 0
        %2035 = vmatprep.subr.bf16.mxu0 0
        %2036 = vmatpush1.bf16.msra.mxu0 0
        %2037 = vmatprep.mubr.bf16.mxu0 0
        %2038 = vmatmul.mubr.bf16.gmra.mrb[0].mxu0 %v852
        %v2039 = vpop.f32.mrb[0].mxu0
        %v2040 = vadd.f32 %v413, %v2039
        %v2041 = vpop.f32.mrb[0].mxu0
        %v2042 = vadd.f32 %v413, %v2041
        %v2043 = vpop.f32.mrb[0].mxu0
        %v2044 = vadd.f32 %v418, %v2043
        %v2045 = vpop.f32.mrb[0].mxu0
        %v2046 = vadd.f32 %v418, %v2045
        %2047 = vmatprep.mubr.bf16.mxu0 0
        %2048 = vmatmul.mubr.bf16.gmra.mrb[0].mxu0 %v855
        %v2049 = vpop.f32.mrb[0].mxu0
        %v2050 = vadd.f32 %v423, %v2049
        %v2051 = vpop.f32.mrb[0].mxu0
        %v2052 = vadd.f32 %v423, %v2051
        %v2053 = vpop.f32.mrb[0].mxu0
        %v2054 = vadd.f32 %v428, %v2053
        %v2055 = vpop.f32.mrb[0].mxu0
        %v2056 = vadd.f32 %v428, %v2055
        %2057 = vmatprep.mubr.bf16.mxu0 0
        %2058 = vmatmul.mubr.bf16.gmra.mrb[0].mxu0 %v858
        %v2059 = vpop.f32.mrb[0].mxu0
        %v2060 = vadd.f32 %v433, %v2059
        %v2061 = vpop.f32.mrb[0].mxu0
        %v2062 = vadd.f32 %v433, %v2061
        %v2063 = vpop.f32.mrb[0].mxu0
        %v2064 = vadd.f32 %v438, %v2063
        %v2065 = vpop.f32.mrb[0].mxu0
        %v2066 = vadd.f32 %v438, %v2065
        %2067 = vmatprep.mubr.bf16.mxu0 0
        %2068 = vmatmul.mubr.bf16.gmra.mrb[0].mxu0 %v861
        %v2069 = vpop.f32.mrb[0].mxu0
        %v2070 = vadd.f32 %v443, %v2069
        %v2071 = vpop.f32.mrb[0].mxu0
        %v2072 = vadd.f32 %v443, %v2071
        %v2073 = vpop.f32.mrb[0].mxu0
        %v2074 = vadd.f32 %v448, %v2073
        %v2075 = vpop.f32.mrb[0].mxu0
        %v2076 = vadd.f32 %v448, %v2075
        %2077 = vmatprep.mubr.bf16.mxu0 0
        %2078 = vmatmul.mubr.bf16.gmra.mrb[0].mxu0 %v864
        %v2079 = vpop.f32.mrb[0].mxu0
        %v2080 = vadd.f32 %v453, %v2079
        %v2081 = vpop.f32.mrb[0].mxu0
        %v2082 = vadd.f32 %v453, %v2081
        %v2083 = vpop.f32.mrb[0].mxu0
        %v2084 = vadd.f32 %v458, %v2083
        %v2085 = vpop.f32.mrb[0].mxu0
        %v2086 = vadd.f32 %v458, %v2085
        %2087 = vmatprep.mubr.bf16.mxu0 0
        %2088 = vmatmul.mubr.bf16.gmra.mrb[0].mxu0 %v867
        %v2089 = vpop.f32.mrb[0].mxu0
        %v2090 = vadd.f32 %v463, %v2089
        %v2091 = vpop.f32.mrb[0].mxu0
        %v2092 = vadd.f32 %v463, %v2091
        %v2093 = vpop.f32.mrb[0].mxu0
        %v2094 = vadd.f32 %v468, %v2093
        %v2095 = vpop.f32.mrb[0].mxu0
        %v2096 = vadd.f32 %v468, %v2095
        %2097 = vmatprep.mubr.bf16.mxu0 0
        %2098 = vmatmul.mubr.bf16.gmra.mrb[0].mxu0 %v870
        %v2099 = vpop.f32.mrb[0].mxu0
        %v2100 = vadd.f32 %v473, %v2099
        %v2101 = vpop.f32.mrb[0].mxu0
        %v2102 = vadd.f32 %v473, %v2101
        %v2103 = vpop.f32.mrb[0].mxu0
        %v2104 = vadd.f32 %v478, %v2103
        %v2105 = vpop.f32.mrb[0].mxu0
        %v2106 = vadd.f32 %v478, %v2105
        %2107 = vmatprep.mubr.bf16.mxu0 0
        %2108 = vmatmul.mubr.bf16.gmra.mrb[0].mxu0 %v873
        %v2109 = vpop.f32.mrb[0].mxu0
        %v2110 = vadd.f32 %v483, %v2109
        %v2111 = vpop.f32.mrb[0].mxu0
        %v2112 = vadd.f32 %v483, %v2111
        %v2113 = vpop.f32.mrb[0].mxu0
        %v2114 = vadd.f32 %v488, %v2113
        %v2115 = vpop.f32.mrb[0].mxu0
        %v2116 = vadd.f32 %v488, %v2115
        %2117 = vdwg.mxu0
        %2118 = vmatprep.subr.bf16.mxu0 %v745
        %2119 = vmatpush1.bf16.msra.mxu0 %v744
        %2120 = vmatprep.subr.bf16.mxu0 %v777
        %2121 = vmatpush1.bf16.msra.mxu0 %v776
        %2122 = vmatprep.subr.bf16.mxu0 0
        %2123 = vmatpush1.bf16.msra.mxu0 0
        %2124 = vmatprep.subr.bf16.mxu0 0
        %2125 = vmatpush1.bf16.msra.mxu0 0
        %2126 = vmatprep.subr.bf16.mxu0 0
        %2127 = vmatpush1.bf16.msra.mxu0 0
        %2128 = vmatprep.subr.bf16.mxu0 0
        %2129 = vmatpush1.bf16.msra.mxu0 0
        %2130 = vmatprep.subr.bf16.mxu0 0
        %2131 = vmatpush1.bf16.msra.mxu0 0
        %2132 = vmatprep.subr.bf16.mxu0 0
        %2133 = vmatpush1.bf16.msra.mxu0 0
        %2134 = vmatprep.subr.bf16.mxu0 0
        %2135 = vmatpush1.bf16.msra.mxu0 0
        %2136 = vmatprep.subr.bf16.mxu0 0
        %2137 = vmatpush1.bf16.msra.mxu0 0
        %2138 = vmatprep.subr.bf16.mxu0 0
        %2139 = vmatpush1.bf16.msra.mxu0 0
        %2140 = vmatprep.subr.bf16.mxu0 0
        %2141 = vmatpush1.bf16.msra.mxu0 0
        %2142 = vmatprep.subr.bf16.mxu0 0
        %2143 = vmatpush1.bf16.msra.mxu0 0
        %2144 = vmatprep.subr.bf16.mxu0 0
        %2145 = vmatpush1.bf16.msra.mxu0 0
        %2146 = vmatprep.subr.bf16.mxu0 0
        %2147 = vmatpush1.bf16.msra.mxu0 0
        %2148 = vmatprep.subr.bf16.mxu0 0
        %2149 = vmatpush1.bf16.msra.mxu0 0
        %2150 = vmatprep.mubr.bf16.mxu0 0
        %2151 = vmatmul.mubr.bf16.gmra.mrb[0].mxu0 %v852
        %v2152 = vpop.f32.mrb[0].mxu0
        %v2153 = vadd.f32 %v413, %v2152
        %v2154 = vpop.f32.mrb[0].mxu0
        %v2155 = vadd.f32 %v413, %v2154
        %v2156 = vpop.f32.mrb[0].mxu0
        %v2157 = vadd.f32 %v418, %v2156
        %v2158 = vpop.f32.mrb[0].mxu0
        %v2159 = vadd.f32 %v418, %v2158
        %2160 = vmatprep.mubr.bf16.mxu0 0
        %2161 = vmatmul.mubr.bf16.gmra.mrb[0].mxu0 %v855
        %v2162 = vpop.f32.mrb[0].mxu0
        %v2163 = vadd.f32 %v423, %v2162
        %v2164 = vpop.f32.mrb[0].mxu0
        %v2165 = vadd.f32 %v423, %v2164
        %v2166 = vpop.f32.mrb[0].mxu0
        %v2167 = vadd.f32 %v428, %v2166
        %v2168 = vpop.f32.mrb[0].mxu0
        %v2169 = vadd.f32 %v428, %v2168
        %2170 = vmatprep.mubr.bf16.mxu0 0
        %2171 = vmatmul.mubr.bf16.gmra.mrb[0].mxu0 %v858
        %v2172 = vpop.f32.mrb[0].mxu0
        %v2173 = vadd.f32 %v433, %v2172
        %v2174 = vpop.f32.mrb[0].mxu0
        %v2175 = vadd.f32 %v433, %v2174
        %v2176 = vpop.f32.mrb[0].mxu0
        %v2177 = vadd.f32 %v438, %v2176
        %v2178 = vpop.f32.mrb[0].mxu0
        %v2179 = vadd.f32 %v438, %v2178
        %2180 = vmatprep.mubr.bf16.mxu0 0
        %2181 = vmatmul.mubr.bf16.gmra.mrb[0].mxu0 %v861
        %v2182 = vpop.f32.mrb[0].mxu0
        %v2183 = vadd.f32 %v443, %v2182
        %v2184 = vpop.f32.mrb[0].mxu0
        %v2185 = vadd.f32 %v443, %v2184
        %v2186 = vpop.f32.mrb[0].mxu0
        %v2187 = vadd.f32 %v448, %v2186
        %v2188 = vpop.f32.mrb[0].mxu0
        %v2189 = vadd.f32 %v448, %v2188
        %2190 = vmatprep.mubr.bf16.mxu0 0
        %2191 = vmatmul.mubr.bf16.gmra.mrb[0].mxu0 %v864
        %v2192 = vpop.f32.mrb[0].mxu0
        %v2193 = vadd.f32 %v453, %v2192
        %v2194 = vpop.f32.mrb[0].mxu0
        %v2195 = vadd.f32 %v453, %v2194
        %v2196 = vpop.f32.mrb[0].mxu0
        %v2197 = vadd.f32 %v458, %v2196
        %v2198 = vpop.f32.mrb[0].mxu0
        %v2199 = vadd.f32 %v458, %v2198
        %2200 = vmatprep.mubr.bf16.mxu0 0
        %2201 = vmatmul.mubr.bf16.gmra.mrb[0].mxu0 %v867
        %v2202 = vpop.f32.mrb[0].mxu0
        %v2203 = vadd.f32 %v463, %v2202
        %v2204 = vpop.f32.mrb[0].mxu0
        %v2205 = vadd.f32 %v463, %v2204
        %v2206 = vpop.f32.mrb[0].mxu0
        %v2207 = vadd.f32 %v468, %v2206
        %v2208 = vpop.f32.mrb[0].mxu0
        %v2209 = vadd.f32 %v468, %v2208
        %2210 = vmatprep.mubr.bf16.mxu0 0
        %2211 = vmatmul.mubr.bf16.gmra.mrb[0].mxu0 %v870
        %v2212 = vpop.f32.mrb[0].mxu0
        %v2213 = vadd.f32 %v473, %v2212
        %v2214 = vpop.f32.mrb[0].mxu0
        %v2215 = vadd.f32 %v473, %v2214
        %v2216 = vpop.f32.mrb[0].mxu0
        %v2217 = vadd.f32 %v478, %v2216
        %v2218 = vpop.f32.mrb[0].mxu0
        %v2219 = vadd.f32 %v478, %v2218
        %2220 = vmatprep.mubr.bf16.mxu0 0
        %2221 = vmatmul.mubr.bf16.gmra.mrb[0].mxu0 %v873
        %v2222 = vpop.f32.mrb[0].mxu0
        %v2223 = vadd.f32 %v483, %v2222
        %v2224 = vpop.f32.mrb[0].mxu0
        %v2225 = vadd.f32 %v483, %v2224
        %v2226 = vpop.f32.mrb[0].mxu0
        %v2227 = vadd.f32 %v488, %v2226
        %v2228 = vpop.f32.mrb[0].mxu0
        %v2229 = vadd.f32 %v488, %v2228
        %2230 = vdwg.mxu0
        %2231 = vmatprep.subr.bf16.mxu0 %v747
        %2232 = vmatpush1.bf16.msra.mxu0 %v746
        %2233 = vmatprep.subr.bf16.mxu0 %v779
        %2234 = vmatpush1.bf16.msra.mxu0 %v778
        %2235 = vmatprep.subr.bf16.mxu0 0
        %2236 = vmatpush1.bf16.msra.mxu0 0
        %2237 = vmatprep.subr.bf16.mxu0 0
        %2238 = vmatpush1.bf16.msra.mxu0 0
        %2239 = vmatprep.subr.bf16.mxu0 0
        %2240 = vmatpush1.bf16.msra.mxu0 0
        %2241 = vmatprep.subr.bf16.mxu0 0
        %2242 = vmatpush1.bf16.msra.mxu0 0
        %2243 = vmatprep.subr.bf16.mxu0 0
        %2244 = vmatpush1.bf16.msra.mxu0 0
        %2245 = vmatprep.subr.bf16.mxu0 0
        %2246 = vmatpush1.bf16.msra.mxu0 0
        %2247 = vmatprep.subr.bf16.mxu0 0
        %2248 = vmatpush1.bf16.msra.mxu0 0
        %2249 = vmatprep.subr.bf16.mxu0 0
        %2250 = vmatpush1.bf16.msra.mxu0 0
        %2251 = vmatprep.subr.bf16.mxu0 0
        %2252 = vmatpush1.bf16.msra.mxu0 0
        %2253 = vmatprep.subr.bf16.mxu0 0
        %2254 = vmatpush1.bf16.msra.mxu0 0
        %2255 = vmatprep.subr.bf16.mxu0 0
        %2256 = vmatpush1.bf16.msra.mxu0 0
        %2257 = vmatprep.subr.bf16.mxu0 0
        %2258 = vmatpush1.bf16.msra.mxu0 0
        %2259 = vmatprep.subr.bf16.mxu0 0
        %2260 = vmatpush1.bf16.msra.mxu0 0
        %2261 = vmatprep.subr.bf16.mxu0 0
        %2262 = vmatpush1.bf16.msra.mxu0 0
        %2263 = vmatprep.mubr.bf16.mxu0 0
        %2264 = vmatmul.mubr.bf16.gmra.mrb[0].mxu0 %v852
        %v2265 = vpop.f32.mrb[0].mxu0
        %v2266 = vadd.f32 %v413, %v2265
        %v2267 = vpop.f32.mrb[0].mxu0
        %v2268 = vadd.f32 %v413, %v2267
        %v2269 = vpop.f32.mrb[0].mxu0
        %v2270 = vadd.f32 %v418, %v2269
        %v2271 = vpop.f32.mrb[0].mxu0
        %v2272 = vadd.f32 %v418, %v2271
        %2273 = vmatprep.mubr.bf16.mxu0 0
        %2274 = vmatmul.mubr.bf16.gmra.mrb[0].mxu0 %v855
        %v2275 = vpop.f32.mrb[0].mxu0
        %v2276 = vadd.f32 %v423, %v2275
        %v2277 = vpop.f32.mrb[0].mxu0
        %v2278 = vadd.f32 %v423, %v2277
        %v2279 = vpop.f32.mrb[0].mxu0
        %v2280 = vadd.f32 %v428, %v2279
        %v2281 = vpop.f32.mrb[0].mxu0
        %v2282 = vadd.f32 %v428, %v2281
        %2283 = vmatprep.mubr.bf16.mxu0 0
        %2284 = vmatmul.mubr.bf16.gmra.mrb[0].mxu0 %v858
        %v2285 = vpop.f32.mrb[0].mxu0
        %v2286 = vadd.f32 %v433, %v2285
        %v2287 = vpop.f32.mrb[0].mxu0
        %v2288 = vadd.f32 %v433, %v2287
        %v2289 = vpop.f32.mrb[0].mxu0
        %v2290 = vadd.f32 %v438, %v2289
        %v2291 = vpop.f32.mrb[0].mxu0
        %v2292 = vadd.f32 %v438, %v2291
        %2293 = vmatprep.mubr.bf16.mxu0 0
        %2294 = vmatmul.mubr.bf16.gmra.mrb[0].mxu0 %v861
        %v2295 = vpop.f32.mrb[0].mxu0
        %v2296 = vadd.f32 %v443, %v2295
        %v2297 = vpop.f32.mrb[0].mxu0
        %v2298 = vadd.f32 %v443, %v2297
        %v2299 = vpop.f32.mrb[0].mxu0
        %v2300 = vadd.f32 %v448, %v2299
        %v2301 = vpop.f32.mrb[0].mxu0
        %v2302 = vadd.f32 %v448, %v2301
        %2303 = vmatprep.mubr.bf16.mxu0 0
        %2304 = vmatmul.mubr.bf16.gmra.mrb[0].mxu0 %v864
        %v2305 = vpop.f32.mrb[0].mxu0
        %v2306 = vadd.f32 %v453, %v2305
        %v2307 = vpop.f32.mrb[0].mxu0
        %v2308 = vadd.f32 %v453, %v2307
        %v2309 = vpop.f32.mrb[0].mxu0
        %v2310 = vadd.f32 %v458, %v2309
        %v2311 = vpop.f32.mrb[0].mxu0
        %v2312 = vadd.f32 %v458, %v2311
        %2313 = vmatprep.mubr.bf16.mxu0 0
        %2314 = vmatmul.mubr.bf16.gmra.mrb[0].mxu0 %v867
        %v2315 = vpop.f32.mrb[0].mxu0
        %v2316 = vadd.f32 %v463, %v2315
        %v2317 = vpop.f32.mrb[0].mxu0
        %v2318 = vadd.f32 %v463, %v2317
        %v2319 = vpop.f32.mrb[0].mxu0
        %v2320 = vadd.f32 %v468, %v2319
        %v2321 = vpop.f32.mrb[0].mxu0
        %v2322 = vadd.f32 %v468, %v2321
        %2323 = vmatprep.mubr.bf16.mxu0 0
        %2324 = vmatmul.mubr.bf16.gmra.mrb[0].mxu0 %v870
        %v2325 = vpop.f32.mrb[0].mxu0
        %v2326 = vadd.f32 %v473, %v2325
        %v2327 = vpop.f32.mrb[0].mxu0
        %v2328 = vadd.f32 %v473, %v2327
        %v2329 = vpop.f32.mrb[0].mxu0
        %v2330 = vadd.f32 %v478, %v2329
        %v2331 = vpop.f32.mrb[0].mxu0
        %v2332 = vadd.f32 %v478, %v2331
        %2333 = vmatprep.mubr.bf16.mxu0 0
        %2334 = vmatmul.mubr.bf16.gmra.mrb[0].mxu0 %v873
        %v2335 = vpop.f32.mrb[0].mxu0
        %v2336 = vadd.f32 %v483, %v2335
        %v2337 = vpop.f32.mrb[0].mxu0
        %v2338 = vadd.f32 %v483, %v2337
        %v2339 = vpop.f32.mrb[0].mxu0
        %v2340 = vadd.f32 %v488, %v2339
        %v2341 = vpop.f32.mrb[0].mxu0
        %v2342 = vadd.f32 %v488, %v2341
        %2343 = vdwg.mxu0
        %2344 = vmatprep.subr.bf16.mxu0 %v749
        %2345 = vmatpush1.bf16.msra.mxu0 %v748
        %2346 = vmatprep.subr.bf16.mxu0 %v781
        %2347 = vmatpush1.bf16.msra.mxu0 %v780
        %2348 = vmatprep.subr.bf16.mxu0 0
        %2349 = vmatpush1.bf16.msra.mxu0 0
        %2350 = vmatprep.subr.bf16.mxu0 0
        %2351 = vmatpush1.bf16.msra.mxu0 0
        %2352 = vmatprep.subr.bf16.mxu0 0
        %2353 = vmatpush1.bf16.msra.mxu0 0
        %2354 = vmatprep.subr.bf16.mxu0 0
        %2355 = vmatpush1.bf16.msra.mxu0 0
        %2356 = vmatprep.subr.bf16.mxu0 0
        %2357 = vmatpush1.bf16.msra.mxu0 0
        %2358 = vmatprep.subr.bf16.mxu0 0
        %2359 = vmatpush1.bf16.msra.mxu0 0
        %2360 = vmatprep.subr.bf16.mxu0 0
        %2361 = vmatpush1.bf16.msra.mxu0 0
        %2362 = vmatprep.subr.bf16.mxu0 0
        %2363 = vmatpush1.bf16.msra.mxu0 0
        %2364 = vmatprep.subr.bf16.mxu0 0
        %2365 = vmatpush1.bf16.msra.mxu0 0
        %2366 = vmatprep.subr.bf16.mxu0 0
        %2367 = vmatpush1.bf16.msra.mxu0 0
        %2368 = vmatprep.subr.bf16.mxu0 0
        %2369 = vmatpush1.bf16.msra.mxu0 0
        %2370 = vmatprep.subr.bf16.mxu0 0
        %2371 = vmatpush1.bf16.msra.mxu0 0
        %2372 = vmatprep.subr.bf16.mxu0 0
        %2373 = vmatpush1.bf16.msra.mxu0 0
        %2374 = vmatprep.subr.bf16.mxu0 0
        %2375 = vmatpush1.bf16.msra.mxu0 0
        %2376 = vmatprep.mubr.bf16.mxu0 0
        %2377 = vmatmul.mubr.bf16.gmra.mrb[0].mxu0 %v852
        %v2378 = vpop.f32.mrb[0].mxu0
        %v2379 = vadd.f32 %v413, %v2378
        %v2380 = vpop.f32.mrb[0].mxu0
        %v2381 = vadd.f32 %v413, %v2380
        %v2382 = vpop.f32.mrb[0].mxu0
        %v2383 = vadd.f32 %v418, %v2382
        %v2384 = vpop.f32.mrb[0].mxu0
        %v2385 = vadd.f32 %v418, %v2384
        %2386 = vmatprep.mubr.bf16.mxu0 0
        %2387 = vmatmul.mubr.bf16.gmra.mrb[0].mxu0 %v855
        %v2388 = vpop.f32.mrb[0].mxu0
        %v2389 = vadd.f32 %v423, %v2388
        %v2390 = vpop.f32.mrb[0].mxu0
        %v2391 = vadd.f32 %v423, %v2390
        %v2392 = vpop.f32.mrb[0].mxu0
        %v2393 = vadd.f32 %v428, %v2392
        %v2394 = vpop.f32.mrb[0].mxu0
        %v2395 = vadd.f32 %v428, %v2394
        %2396 = vmatprep.mubr.bf16.mxu0 0
        %2397 = vmatmul.mubr.bf16.gmra.mrb[0].mxu0 %v858
        %v2398 = vpop.f32.mrb[0].mxu0
        %v2399 = vadd.f32 %v433, %v2398
        %v2400 = vpop.f32.mrb[0].mxu0
        %v2401 = vadd.f32 %v433, %v2400
        %v2402 = vpop.f32.mrb[0].mxu0
        %v2403 = vadd.f32 %v438, %v2402
        %v2404 = vpop.f32.mrb[0].mxu0
        %v2405 = vadd.f32 %v438, %v2404
        %2406 = vmatprep.mubr.bf16.mxu0 0
        %2407 = vmatmul.mubr.bf16.gmra.mrb[0].mxu0 %v861
        %v2408 = vpop.f32.mrb[0].mxu0
        %v2409 = vadd.f32 %v443, %v2408
        %v2410 = vpop.f32.mrb[0].mxu0
        %v2411 = vadd.f32 %v443, %v2410
        %v2412 = vpop.f32.mrb[0].mxu0
        %v2413 = vadd.f32 %v448, %v2412
        %v2414 = vpop.f32.mrb[0].mxu0
        %v2415 = vadd.f32 %v448, %v2414
        %2416 = vmatprep.mubr.bf16.mxu0 0
        %2417 = vmatmul.mubr.bf16.gmra.mrb[0].mxu0 %v864
        %v2418 = vpop.f32.mrb[0].mxu0
        %v2419 = vadd.f32 %v453, %v2418
        %v2420 = vpop.f32.mrb[0].mxu0
        %v2421 = vadd.f32 %v453, %v2420
        %v2422 = vpop.f32.mrb[0].mxu0
        %v2423 = vadd.f32 %v458, %v2422
        %v2424 = vpop.f32.mrb[0].mxu0
        %v2425 = vadd.f32 %v458, %v2424
        %2426 = vmatprep.mubr.bf16.mxu0 0
        %2427 = vmatmul.mubr.bf16.gmra.mrb[0].mxu0 %v867
        %v2428 = vpop.f32.mrb[0].mxu0
        %v2429 = vadd.f32 %v463, %v2428
        %v2430 = vpop.f32.mrb[0].mxu0
        %v2431 = vadd.f32 %v463, %v2430
        %v2432 = vpop.f32.mrb[0].mxu0
        %v2433 = vadd.f32 %v468, %v2432
        %v2434 = vpop.f32.mrb[0].mxu0
        %v2435 = vadd.f32 %v468, %v2434
        %2436 = vmatprep.mubr.bf16.mxu0 0
        %2437 = vmatmul.mubr.bf16.gmra.mrb[0].mxu0 %v870
        %v2438 = vpop.f32.mrb[0].mxu0
        %v2439 = vadd.f32 %v473, %v2438
        %v2440 = vpop.f32.mrb[0].mxu0
        %v2441 = vadd.f32 %v473, %v2440
        %v2442 = vpop.f32.mrb[0].mxu0
        %v2443 = vadd.f32 %v478, %v2442
        %v2444 = vpop.f32.mrb[0].mxu0
        %v2445 = vadd.f32 %v478, %v2444
        %2446 = vmatprep.mubr.bf16.mxu0 0
        %2447 = vmatmul.mubr.bf16.gmra.mrb[0].mxu0 %v873
        %v2448 = vpop.f32.mrb[0].mxu0
        %v2449 = vadd.f32 %v483, %v2448
        %v2450 = vpop.f32.mrb[0].mxu0
        %v2451 = vadd.f32 %v483, %v2450
        %v2452 = vpop.f32.mrb[0].mxu0
        %v2453 = vadd.f32 %v488, %v2452
        %v2454 = vpop.f32.mrb[0].mxu0
        %v2455 = vadd.f32 %v488, %v2454
        %2456 = vdwg.mxu0
        %2457 = vmatprep.subr.bf16.mxu0 %v751
        %2458 = vmatpush1.bf16.msra.mxu0 %v750
        %2459 = vmatprep.subr.bf16.mxu0 %v783
        %2460 = vmatpush1.bf16.msra.mxu0 %v782
        %2461 = vmatprep.subr.bf16.mxu0 0
        %2462 = vmatpush1.bf16.msra.mxu0 0
        %2463 = vmatprep.subr.bf16.mxu0 0
        %2464 = vmatpush1.bf16.msra.mxu0 0
        %2465 = vmatprep.subr.bf16.mxu0 0
        %2466 = vmatpush1.bf16.msra.mxu0 0
        %2467 = vmatprep.subr.bf16.mxu0 0
        %2468 = vmatpush1.bf16.msra.mxu0 0
        %2469 = vmatprep.subr.bf16.mxu0 0
        %2470 = vmatpush1.bf16.msra.mxu0 0
        %2471 = vmatprep.subr.bf16.mxu0 0
        %2472 = vmatpush1.bf16.msra.mxu0 0
        %2473 = vmatprep.subr.bf16.mxu0 0
        %2474 = vmatpush1.bf16.msra.mxu0 0
        %2475 = vmatprep.subr.bf16.mxu0 0
        %2476 = vmatpush1.bf16.msra.mxu0 0
        %2477 = vmatprep.subr.bf16.mxu0 0
        %2478 = vmatpush1.bf16.msra.mxu0 0
        %2479 = vmatprep.subr.bf16.mxu0 0
        %2480 = vmatpush1.bf16.msra.mxu0 0
        %2481 = vmatprep.subr.bf16.mxu0 0
        %2482 = vmatpush1.bf16.msra.mxu0 0
        %2483 = vmatprep.subr.bf16.mxu0 0
        %2484 = vmatpush1.bf16.msra.mxu0 0
        %2485 = vmatprep.subr.bf16.mxu0 0
        %2486 = vmatpush1.bf16.msra.mxu0 0
        %2487 = vmatprep.subr.bf16.mxu0 0
        %2488 = vmatpush1.bf16.msra.mxu0 0
        %2489 = vmatprep.mubr.bf16.mxu0 0
        %2490 = vmatmul.mubr.bf16.gmra.mrb[0].mxu0 %v852
        %v2491 = vpop.f32.mrb[0].mxu0
        %v2492 = vadd.f32 %v413, %v2491
        %v2493 = vpop.f32.mrb[0].mxu0
        %v2494 = vadd.f32 %v413, %v2493
        %v2495 = vpop.f32.mrb[0].mxu0
        %v2496 = vadd.f32 %v418, %v2495
        %v2497 = vpop.f32.mrb[0].mxu0
        %v2498 = vadd.f32 %v418, %v2497
        %2499 = vmatprep.mubr.bf16.mxu0 0
        %2500 = vmatmul.mubr.bf16.gmra.mrb[0].mxu0 %v855
        %v2501 = vpop.f32.mrb[0].mxu0
        %v2502 = vadd.f32 %v423, %v2501
        %v2503 = vpop.f32.mrb[0].mxu0
        %v2504 = vadd.f32 %v423, %v2503
        %v2505 = vpop.f32.mrb[0].mxu0
        %v2506 = vadd.f32 %v428, %v2505
        %v2507 = vpop.f32.mrb[0].mxu0
        %v2508 = vadd.f32 %v428, %v2507
        %2509 = vmatprep.mubr.bf16.mxu0 0
        %2510 = vmatmul.mubr.bf16.gmra.mrb[0].mxu0 %v858
        %v2511 = vpop.f32.mrb[0].mxu0
        %v2512 = vadd.f32 %v433, %v2511
        %v2513 = vpop.f32.mrb[0].mxu0
        %v2514 = vadd.f32 %v433, %v2513
        %v2515 = vpop.f32.mrb[0].mxu0
        %v2516 = vadd.f32 %v438, %v2515
        %v2517 = vpop.f32.mrb[0].mxu0
        %v2518 = vadd.f32 %v438, %v2517
        %2519 = vmatprep.mubr.bf16.mxu0 0
        %2520 = vmatmul.mubr.bf16.gmra.mrb[0].mxu0 %v861
        %v2521 = vpop.f32.mrb[0].mxu0
        %v2522 = vadd.f32 %v443, %v2521
        %v2523 = vpop.f32.mrb[0].mxu0
        %v2524 = vadd.f32 %v443, %v2523
        %v2525 = vpop.f32.mrb[0].mxu0
        %v2526 = vadd.f32 %v448, %v2525
        %v2527 = vpop.f32.mrb[0].mxu0
        %v2528 = vadd.f32 %v448, %v2527
        %2529 = vmatprep.mubr.bf16.mxu0 0
        %2530 = vmatmul.mubr.bf16.gmra.mrb[0].mxu0 %v864
        %v2531 = vpop.f32.mrb[0].mxu0
        %v2532 = vadd.f32 %v453, %v2531
        %v2533 = vpop.f32.mrb[0].mxu0
        %v2534 = vadd.f32 %v453, %v2533
        %v2535 = vpop.f32.mrb[0].mxu0
        %v2536 = vadd.f32 %v458, %v2535
        %v2537 = vpop.f32.mrb[0].mxu0
        %v2538 = vadd.f32 %v458, %v2537
        %2539 = vmatprep.mubr.bf16.mxu0 0
        %2540 = vmatmul.mubr.bf16.gmra.mrb[0].mxu0 %v867
        %v2541 = vpop.f32.mrb[0].mxu0
        %v2542 = vadd.f32 %v463, %v2541
        %v2543 = vpop.f32.mrb[0].mxu0
        %v2544 = vadd.f32 %v463, %v2543
        %v2545 = vpop.f32.mrb[0].mxu0
        %v2546 = vadd.f32 %v468, %v2545
        %v2547 = vpop.f32.mrb[0].mxu0
        %v2548 = vadd.f32 %v468, %v2547
        %2549 = vmatprep.mubr.bf16.mxu0 0
        %2550 = vmatmul.mubr.bf16.gmra.mrb[0].mxu0 %v870
        %v2551 = vpop.f32.mrb[0].mxu0
        %v2552 = vadd.f32 %v473, %v2551
        %v2553 = vpop.f32.mrb[0].mxu0
        %v2554 = vadd.f32 %v473, %v2553
        %v2555 = vpop.f32.mrb[0].mxu0
        %v2556 = vadd.f32 %v478, %v2555
        %v2557 = vpop.f32.mrb[0].mxu0
        %v2558 = vadd.f32 %v478, %v2557
        %2559 = vmatprep.mubr.bf16.mxu0 0
        %2560 = vmatmul.mubr.bf16.gmra.mrb[0].mxu0 %v873
        %v2561 = vpop.f32.mrb[0].mxu0
        %v2562 = vadd.f32 %v483, %v2561
        %v2563 = vpop.f32.mrb[0].mxu0
        %v2564 = vadd.f32 %v483, %v2563
        %v2565 = vpop.f32.mrb[0].mxu0
        %v2566 = vadd.f32 %v488, %v2565
        %v2567 = vpop.f32.mrb[0].mxu0
        %v2568 = vadd.f32 %v488, %v2567
        %2569 = vdwg.mxu0
        %2570 = vmatprep.subr.bf16.mxu0 %v753
        %2571 = vmatpush1.bf16.msra.mxu0 %v752
        %2572 = vmatprep.subr.bf16.mxu0 %v785
        %2573 = vmatpush1.bf16.msra.mxu0 %v784
        %2574 = vmatprep.subr.bf16.mxu0 0
        %2575 = vmatpush1.bf16.msra.mxu0 0
        %2576 = vmatprep.subr.bf16.mxu0 0
        %2577 = vmatpush1.bf16.msra.mxu0 0
        %2578 = vmatprep.subr.bf16.mxu0 0
        %2579 = vmatpush1.bf16.msra.mxu0 0
        %2580 = vmatprep.subr.bf16.mxu0 0
        %2581 = vmatpush1.bf16.msra.mxu0 0
        %2582 = vmatprep.subr.bf16.mxu0 0
        %2583 = vmatpush1.bf16.msra.mxu0 0
        %2584 = vmatprep.subr.bf16.mxu0 0
        %2585 = vmatpush1.bf16.msra.mxu0 0
        %2586 = vmatprep.subr.bf16.mxu0 0
        %2587 = vmatpush1.bf16.msra.mxu0 0
        %2588 = vmatprep.subr.bf16.mxu0 0
        %2589 = vmatpush1.bf16.msra.mxu0 0
        %2590 = vmatprep.subr.bf16.mxu0 0
        %2591 = vmatpush1.bf16.msra.mxu0 0
        %2592 = vmatprep.subr.bf16.mxu0 0
        %2593 = vmatpush1.bf16.msra.mxu0 0
        %2594 = vmatprep.subr.bf16.mxu0 0
        %2595 = vmatpush1.bf16.msra.mxu0 0
        %2596 = vmatprep.subr.bf16.mxu0 0
        %2597 = vmatpush1.bf16.msra.mxu0 0
        %2598 = vmatprep.subr.bf16.mxu0 0
        %2599 = vmatpush1.bf16.msra.mxu0 0
        %2600 = vmatprep.subr.bf16.mxu0 0
        %2601 = vmatpush1.bf16.msra.mxu0 0
        %2602 = vmatprep.mubr.bf16.mxu0 0
        %2603 = vmatmul.mubr.bf16.gmra.mrb[0].mxu0 %v852
        %v2604 = vpop.f32.mrb[0].mxu0
        %v2605 = vadd.f32 %v413, %v2604
        %v2606 = vpop.f32.mrb[0].mxu0
        %v2607 = vadd.f32 %v413, %v2606
        %v2608 = vpop.f32.mrb[0].mxu0
        %v2609 = vadd.f32 %v418, %v2608
        %v2610 = vpop.f32.mrb[0].mxu0
        %v2611 = vadd.f32 %v418, %v2610
        %2612 = vmatprep.mubr.bf16.mxu0 0
        %2613 = vmatmul.mubr.bf16.gmra.mrb[0].mxu0 %v855
        %v2614 = vpop.f32.mrb[0].mxu0
        %v2615 = vadd.f32 %v423, %v2614
        %v2616 = vpop.f32.mrb[0].mxu0
        %v2617 = vadd.f32 %v423, %v2616
        %v2618 = vpop.f32.mrb[0].mxu0
        %v2619 = vadd.f32 %v428, %v2618
        %v2620 = vpop.f32.mrb[0].mxu0
        %v2621 = vadd.f32 %v428, %v2620
        %2622 = vmatprep.mubr.bf16.mxu0 0
        %2623 = vmatmul.mubr.bf16.gmra.mrb[0].mxu0 %v858
        %v2624 = vpop.f32.mrb[0].mxu0
        %v2625 = vadd.f32 %v433, %v2624
        %v2626 = vpop.f32.mrb[0].mxu0
        %v2627 = vadd.f32 %v433, %v2626
        %v2628 = vpop.f32.mrb[0].mxu0
        %v2629 = vadd.f32 %v438, %v2628
        %v2630 = vpop.f32.mrb[0].mxu0
        %v2631 = vadd.f32 %v438, %v2630
        %2632 = vmatprep.mubr.bf16.mxu0 0
        %2633 = vmatmul.mubr.bf16.gmra.mrb[0].mxu0 %v861
        %v2634 = vpop.f32.mrb[0].mxu0
        %v2635 = vadd.f32 %v443, %v2634
        %v2636 = vpop.f32.mrb[0].mxu0
        %v2637 = vadd.f32 %v443, %v2636
        %v2638 = vpop.f32.mrb[0].mxu0
        %v2639 = vadd.f32 %v448, %v2638
        %v2640 = vpop.f32.mrb[0].mxu0
        %v2641 = vadd.f32 %v448, %v2640
        %2642 = vmatprep.mubr.bf16.mxu0 0
        %2643 = vmatmul.mubr.bf16.gmra.mrb[0].mxu0 %v864
        %v2644 = vpop.f32.mrb[0].mxu0
        %v2645 = vadd.f32 %v453, %v2644
        %v2646 = vpop.f32.mrb[0].mxu0
        %v2647 = vadd.f32 %v453, %v2646
        %v2648 = vpop.f32.mrb[0].mxu0
        %v2649 = vadd.f32 %v458, %v2648
        %v2650 = vpop.f32.mrb[0].mxu0
        %v2651 = vadd.f32 %v458, %v2650
        %2652 = vmatprep.mubr.bf16.mxu0 0
        %2653 = vmatmul.mubr.bf16.gmra.mrb[0].mxu0 %v867
        %v2654 = vpop.f32.mrb[0].mxu0
        %v2655 = vadd.f32 %v463, %v2654
        %v2656 = vpop.f32.mrb[0].mxu0
        %v2657 = vadd.f32 %v463, %v2656
        %v2658 = vpop.f32.mrb[0].mxu0
        %v2659 = vadd.f32 %v468, %v2658
        %v2660 = vpop.f32.mrb[0].mxu0
        %v2661 = vadd.f32 %v468, %v2660
        %2662 = vmatprep.mubr.bf16.mxu0 0
        %2663 = vmatmul.mubr.bf16.gmra.mrb[0].mxu0 %v870
        %v2664 = vpop.f32.mrb[0].mxu0
        %v2665 = vadd.f32 %v473, %v2664
        %v2666 = vpop.f32.mrb[0].mxu0
        %v2667 = vadd.f32 %v473, %v2666
        %v2668 = vpop.f32.mrb[0].mxu0
        %v2669 = vadd.f32 %v478, %v2668
        %v2670 = vpop.f32.mrb[0].mxu0
        %v2671 = vadd.f32 %v478, %v2670
        %2672 = vmatprep.mubr.bf16.mxu0 0
        %2673 = vmatmul.mubr.bf16.gmra.mrb[0].mxu0 %v873
        %v2674 = vpop.f32.mrb[0].mxu0
        %v2675 = vadd.f32 %v483, %v2674
        %v2676 = vpop.f32.mrb[0].mxu0
        %v2677 = vadd.f32 %v483, %v2676
        %v2678 = vpop.f32.mrb[0].mxu0
        %v2679 = vadd.f32 %v488, %v2678
        %v2680 = vpop.f32.mrb[0].mxu0
        %v2681 = vadd.f32 %v488, %v2680
        %2682 = vdwg.mxu0
        %v2683 = vmax.f32 %v910, 0.0
        %v2684 = vmax.f32 %v912, 0.0
        %v2685 = vmax.f32 %v1023, 0.0
        %v2686 = vmax.f32 %v1025, 0.0
        %v2687 = vmax.f32 %v1136, 0.0
        %v2688 = vmax.f32 %v1138, 0.0
        %v2689 = vmax.f32 %v1249, 0.0
        %v2690 = vmax.f32 %v1251, 0.0
        %v2691 = vmax.f32 %v1362, 0.0
        %v2692 = vmax.f32 %v1364, 0.0
        %v2693 = vmax.f32 %v1475, 0.0
        %v2694 = vmax.f32 %v1477, 0.0
        %v2695 = vmax.f32 %v1588, 0.0
        %v2696 = vmax.f32 %v1590, 0.0
        %v2697 = vmax.f32 %v1701, 0.0
        %v2698 = vmax.f32 %v1703, 0.0
        %v2699 = vmax.f32 %v1814, 0.0
        %v2700 = vmax.f32 %v1816, 0.0
        %v2701 = vmax.f32 %v1927, 0.0
        %v2702 = vmax.f32 %v1929, 0.0
        %v2703 = vmax.f32 %v2040, 0.0
        %v2704 = vmax.f32 %v2042, 0.0
        %v2705 = vmax.f32 %v2153, 0.0
        %v2706 = vmax.f32 %v2155, 0.0
        %v2707 = vmax.f32 %v2266, 0.0
        %v2708 = vmax.f32 %v2268, 0.0
        %v2709 = vmax.f32 %v2379, 0.0
        %v2710 = vmax.f32 %v2381, 0.0
        %v2711 = vmax.f32 %v2492, 0.0
        %v2712 = vmax.f32 %v2494, 0.0
        %v2713 = vmax.f32 %v2605, 0.0
        %v2714 = vmax.f32 %v2607, 0.0
        %v2715 = vmax.f32 %v914, 0.0
        %v2716 = vmax.f32 %v916, 0.0
        %v2717 = vmax.f32 %v1027, 0.0
        %v2718 = vmax.f32 %v1029, 0.0
        %v2719 = vmax.f32 %v1140, 0.0
        %v2720 = vmax.f32 %v1142, 0.0
        %v2721 = vmax.f32 %v1253, 0.0
        %v2722 = vmax.f32 %v1255, 0.0
        %v2723 = vmax.f32 %v1366, 0.0
        %v2724 = vmax.f32 %v1368, 0.0
        %v2725 = vmax.f32 %v1479, 0.0
        %v2726 = vmax.f32 %v1481, 0.0
        %v2727 = vmax.f32 %v1592, 0.0
        %v2728 = vmax.f32 %v1594, 0.0
        %v2729 = vmax.f32 %v1705, 0.0
        %v2730 = vmax.f32 %v1707, 0.0
        %v2731 = vmax.f32 %v1818, 0.0
        %v2732 = vmax.f32 %v1820, 0.0
        %v2733 = vmax.f32 %v1931, 0.0
        %v2734 = vmax.f32 %v1933, 0.0
        %v2735 = vmax.f32 %v2044, 0.0
        %v2736 = vmax.f32 %v2046, 0.0
        %v2737 = vmax.f32 %v2157, 0.0
        %v2738 = vmax.f32 %v2159, 0.0
        %v2739 = vmax.f32 %v2270, 0.0
        %v2740 = vmax.f32 %v2272, 0.0
        %v2741 = vmax.f32 %v2383, 0.0
        %v2742 = vmax.f32 %v2385, 0.0
        %v2743 = vmax.f32 %v2496, 0.0
        %v2744 = vmax.f32 %v2498, 0.0
        %v2745 = vmax.f32 %v2609, 0.0
        %v2746 = vmax.f32 %v2611, 0.0
        %v2747 = vmax.f32 %v920, 0.0
        %v2748 = vmax.f32 %v922, 0.0
        %v2749 = vmax.f32 %v1033, 0.0
        %v2750 = vmax.f32 %v1035, 0.0
        %v2751 = vmax.f32 %v1146, 0.0
        %v2752 = vmax.f32 %v1148, 0.0
        %v2753 = vmax.f32 %v1259, 0.0
        %v2754 = vmax.f32 %v1261, 0.0
        %v2755 = vmax.f32 %v1372, 0.0
        %v2756 = vmax.f32 %v1374, 0.0
        %v2757 = vmax.f32 %v1485, 0.0
        %v2758 = vmax.f32 %v1487, 0.0
        %v2759 = vmax.f32 %v1598, 0.0
        %v2760 = vmax.f32 %v1600, 0.0
        %v2761 = vmax.f32 %v1711, 0.0
        %v2762 = vmax.f32 %v1713, 0.0
        %v2763 = vmax.f32 %v1824, 0.0
        %v2764 = vmax.f32 %v1826, 0.0
        %v2765 = vmax.f32 %v1937, 0.0
        %v2766 = vmax.f32 %v1939, 0.0
        %v2767 = vmax.f32 %v2050, 0.0
        %v2768 = vmax.f32 %v2052, 0.0
        %v2769 = vmax.f32 %v2163, 0.0
        %v2770 = vmax.f32 %v2165, 0.0
        %v2771 = vmax.f32 %v2276, 0.0
        %v2772 = vmax.f32 %v2278, 0.0
        %v2773 = vmax.f32 %v2389, 0.0
        %v2774 = vmax.f32 %v2391, 0.0
        %v2775 = vmax.f32 %v2502, 0.0
        %v2776 = vmax.f32 %v2504, 0.0
        %v2777 = vmax.f32 %v2615, 0.0
        %v2778 = vmax.f32 %v2617, 0.0
        %v2779 = vmax.f32 %v924, 0.0
        %v2780 = vmax.f32 %v926, 0.0
        %v2781 = vmax.f32 %v1037, 0.0
        %v2782 = vmax.f32 %v1039, 0.0
        %v2783 = vmax.f32 %v1150, 0.0
        %v2784 = vmax.f32 %v1152, 0.0
        %v2785 = vmax.f32 %v1263, 0.0
        %v2786 = vmax.f32 %v1265, 0.0
        %v2787 = vmax.f32 %v1376, 0.0
        %v2788 = vmax.f32 %v1378, 0.0
        %v2789 = vmax.f32 %v1489, 0.0
        %v2790 = vmax.f32 %v1491, 0.0
        %v2791 = vmax.f32 %v1602, 0.0
        %v2792 = vmax.f32 %v1604, 0.0
        %v2793 = vmax.f32 %v1715, 0.0
        %v2794 = vmax.f32 %v1717, 0.0
        %v2795 = vmax.f32 %v1828, 0.0
        %v2796 = vmax.f32 %v1830, 0.0
        %v2797 = vmax.f32 %v1941, 0.0
        %v2798 = vmax.f32 %v1943, 0.0
        %v2799 = vmax.f32 %v2054, 0.0
        %v2800 = vmax.f32 %v2056, 0.0
        %v2801 = vmax.f32 %v2167, 0.0
        %v2802 = vmax.f32 %v2169, 0.0
        %v2803 = vmax.f32 %v2280, 0.0
        %v2804 = vmax.f32 %v2282, 0.0
        %v2805 = vmax.f32 %v2393, 0.0
        %v2806 = vmax.f32 %v2395, 0.0
        %v2807 = vmax.f32 %v2506, 0.0
        %v2808 = vmax.f32 %v2508, 0.0
        %v2809 = vmax.f32 %v2619, 0.0
        %v2810 = vmax.f32 %v2621, 0.0
        %v2811 = vmax.f32 %v930, 0.0
        %v2812 = vmax.f32 %v932, 0.0
        %v2813 = vmax.f32 %v1043, 0.0
        %v2814 = vmax.f32 %v1045, 0.0
        %v2815 = vmax.f32 %v1156, 0.0
        %v2816 = vmax.f32 %v1158, 0.0
        %v2817 = vmax.f32 %v1269, 0.0
        %v2818 = vmax.f32 %v1271, 0.0
        %v2819 = vmax.f32 %v1382, 0.0
        %v2820 = vmax.f32 %v1384, 0.0
        %v2821 = vmax.f32 %v1495, 0.0
        %v2822 = vmax.f32 %v1497, 0.0
        %v2823 = vmax.f32 %v1608, 0.0
        %v2824 = vmax.f32 %v1610, 0.0
        %v2825 = vmax.f32 %v1721, 0.0
        %v2826 = vmax.f32 %v1723, 0.0
        %v2827 = vmax.f32 %v1834, 0.0
        %v2828 = vmax.f32 %v1836, 0.0
        %v2829 = vmax.f32 %v1947, 0.0
        %v2830 = vmax.f32 %v1949, 0.0
        %v2831 = vmax.f32 %v2060, 0.0
        %v2832 = vmax.f32 %v2062, 0.0
        %v2833 = vmax.f32 %v2173, 0.0
        %v2834 = vmax.f32 %v2175, 0.0
        %v2835 = vmax.f32 %v2286, 0.0
        %v2836 = vmax.f32 %v2288, 0.0
        %v2837 = vmax.f32 %v2399, 0.0
        %v2838 = vmax.f32 %v2401, 0.0
        %v2839 = vmax.f32 %v2512, 0.0
        %v2840 = vmax.f32 %v2514, 0.0
        %v2841 = vmax.f32 %v2625, 0.0
        %v2842 = vmax.f32 %v2627, 0.0
        %v2843 = vmax.f32 %v934, 0.0
        %v2844 = vmax.f32 %v936, 0.0
        %v2845 = vmax.f32 %v1047, 0.0
        %v2846 = vmax.f32 %v1049, 0.0
        %v2847 = vmax.f32 %v1160, 0.0
        %v2848 = vmax.f32 %v1162, 0.0
        %v2849 = vmax.f32 %v1273, 0.0
        %v2850 = vmax.f32 %v1275, 0.0
        %v2851 = vmax.f32 %v1386, 0.0
        %v2852 = vmax.f32 %v1388, 0.0
        %v2853 = vmax.f32 %v1499, 0.0
        %v2854 = vmax.f32 %v1501, 0.0
        %v2855 = vmax.f32 %v1612, 0.0
        %v2856 = vmax.f32 %v1614, 0.0
        %v2857 = vmax.f32 %v1725, 0.0
        %v2858 = vmax.f32 %v1727, 0.0
        %v2859 = vmax.f32 %v1838, 0.0
        %v2860 = vmax.f32 %v1840, 0.0
        %v2861 = vmax.f32 %v1951, 0.0
        %v2862 = vmax.f32 %v1953, 0.0
        %v2863 = vmax.f32 %v2064, 0.0
        %v2864 = vmax.f32 %v2066, 0.0
        %v2865 = vmax.f32 %v2177, 0.0
        %v2866 = vmax.f32 %v2179, 0.0
        %v2867 = vmax.f32 %v2290, 0.0
        %v2868 = vmax.f32 %v2292, 0.0
        %v2869 = vmax.f32 %v2403, 0.0
        %v2870 = vmax.f32 %v2405, 0.0
        %v2871 = vmax.f32 %v2516, 0.0
        %v2872 = vmax.f32 %v2518, 0.0
        %v2873 = vmax.f32 %v2629, 0.0
        %v2874 = vmax.f32 %v2631, 0.0
        %v2875 = vmax.f32 %v940, 0.0
        %v2876 = vmax.f32 %v942, 0.0
        %v2877 = vmax.f32 %v1053, 0.0
        %v2878 = vmax.f32 %v1055, 0.0
        %v2879 = vmax.f32 %v1166, 0.0
        %v2880 = vmax.f32 %v1168, 0.0
        %v2881 = vmax.f32 %v1279, 0.0
        %v2882 = vmax.f32 %v1281, 0.0
        %v2883 = vmax.f32 %v1392, 0.0
        %v2884 = vmax.f32 %v1394, 0.0
        %v2885 = vmax.f32 %v1505, 0.0
        %v2886 = vmax.f32 %v1507, 0.0
        %v2887 = vmax.f32 %v1618, 0.0
        %v2888 = vmax.f32 %v1620, 0.0
        %v2889 = vmax.f32 %v1731, 0.0
        %v2890 = vmax.f32 %v1733, 0.0
        %v2891 = vmax.f32 %v1844, 0.0
        %v2892 = vmax.f32 %v1846, 0.0
        %v2893 = vmax.f32 %v1957, 0.0
        %v2894 = vmax.f32 %v1959, 0.0
        %v2895 = vmax.f32 %v2070, 0.0
        %v2896 = vmax.f32 %v2072, 0.0
        %v2897 = vmax.f32 %v2183, 0.0
        %v2898 = vmax.f32 %v2185, 0.0
        %v2899 = vmax.f32 %v2296, 0.0
        %v2900 = vmax.f32 %v2298, 0.0
        %v2901 = vmax.f32 %v2409, 0.0
        %v2902 = vmax.f32 %v2411, 0.0
        %v2903 = vmax.f32 %v2522, 0.0
        %v2904 = vmax.f32 %v2524, 0.0
        %v2905 = vmax.f32 %v2635, 0.0
        %v2906 = vmax.f32 %v2637, 0.0
        %v2907 = vmax.f32 %v944, 0.0
        %v2908 = vmax.f32 %v946, 0.0
        %v2909 = vmax.f32 %v1057, 0.0
        %v2910 = vmax.f32 %v1059, 0.0
        %v2911 = vmax.f32 %v1170, 0.0
        %v2912 = vmax.f32 %v1172, 0.0
        %v2913 = vmax.f32 %v1283, 0.0
        %v2914 = vmax.f32 %v1285, 0.0
        %v2915 = vmax.f32 %v1396, 0.0
        %v2916 = vmax.f32 %v1398, 0.0
        %v2917 = vmax.f32 %v1509, 0.0
        %v2918 = vmax.f32 %v1511, 0.0
        %v2919 = vmax.f32 %v1622, 0.0
        %v2920 = vmax.f32 %v1624, 0.0
        %v2921 = vmax.f32 %v1735, 0.0
        %v2922 = vmax.f32 %v1737, 0.0
        %v2923 = vmax.f32 %v1848, 0.0
        %v2924 = vmax.f32 %v1850, 0.0
        %v2925 = vmax.f32 %v1961, 0.0
        %v2926 = vmax.f32 %v1963, 0.0
        %v2927 = vmax.f32 %v2074, 0.0
        %v2928 = vmax.f32 %v2076, 0.0
        %v2929 = vmax.f32 %v2187, 0.0
        %v2930 = vmax.f32 %v2189, 0.0
        %v2931 = vmax.f32 %v2300, 0.0
        %v2932 = vmax.f32 %v2302, 0.0
        %v2933 = vmax.f32 %v2413, 0.0
        %v2934 = vmax.f32 %v2415, 0.0
        %v2935 = vmax.f32 %v2526, 0.0
        %v2936 = vmax.f32 %v2528, 0.0
        %v2937 = vmax.f32 %v2639, 0.0
        %v2938 = vmax.f32 %v2641, 0.0
        %v2939 = vmax.f32 %v950, 0.0
        %v2940 = vmax.f32 %v952, 0.0
        %v2941 = vmax.f32 %v1063, 0.0
        %v2942 = vmax.f32 %v1065, 0.0
        %v2943 = vmax.f32 %v1176, 0.0
        %v2944 = vmax.f32 %v1178, 0.0
        %v2945 = vmax.f32 %v1289, 0.0
        %v2946 = vmax.f32 %v1291, 0.0
        %v2947 = vmax.f32 %v1402, 0.0
        %v2948 = vmax.f32 %v1404, 0.0
        %v2949 = vmax.f32 %v1515, 0.0
        %v2950 = vmax.f32 %v1517, 0.0
        %v2951 = vmax.f32 %v1628, 0.0
        %v2952 = vmax.f32 %v1630, 0.0
        %v2953 = vmax.f32 %v1741, 0.0
        %v2954 = vmax.f32 %v1743, 0.0
        %v2955 = vmax.f32 %v1854, 0.0
        %v2956 = vmax.f32 %v1856, 0.0
        %v2957 = vmax.f32 %v1967, 0.0
        %v2958 = vmax.f32 %v1969, 0.0
        %v2959 = vmax.f32 %v2080, 0.0
        %v2960 = vmax.f32 %v2082, 0.0
        %v2961 = vmax.f32 %v2193, 0.0
        %v2962 = vmax.f32 %v2195, 0.0
        %v2963 = vmax.f32 %v2306, 0.0
        %v2964 = vmax.f32 %v2308, 0.0
        %v2965 = vmax.f32 %v2419, 0.0
        %v2966 = vmax.f32 %v2421, 0.0
        %v2967 = vmax.f32 %v2532, 0.0
        %v2968 = vmax.f32 %v2534, 0.0
        %v2969 = vmax.f32 %v2645, 0.0
        %v2970 = vmax.f32 %v2647, 0.0
        %v2971 = vmax.f32 %v954, 0.0
        %v2972 = vmax.f32 %v956, 0.0
        %v2973 = vmax.f32 %v1067, 0.0
        %v2974 = vmax.f32 %v1069, 0.0
        %v2975 = vmax.f32 %v1180, 0.0
        %v2976 = vmax.f32 %v1182, 0.0
        %v2977 = vmax.f32 %v1293, 0.0
        %v2978 = vmax.f32 %v1295, 0.0
        %v2979 = vmax.f32 %v1406, 0.0
        %v2980 = vmax.f32 %v1408, 0.0
        %v2981 = vmax.f32 %v1519, 0.0
        %v2982 = vmax.f32 %v1521, 0.0
        %v2983 = vmax.f32 %v1632, 0.0
        %v2984 = vmax.f32 %v1634, 0.0
        %v2985 = vmax.f32 %v1745, 0.0
        %v2986 = vmax.f32 %v1747, 0.0
        %v2987 = vmax.f32 %v1858, 0.0
        %v2988 = vmax.f32 %v1860, 0.0
        %v2989 = vmax.f32 %v1971, 0.0
        %v2990 = vmax.f32 %v1973, 0.0
        %v2991 = vmax.f32 %v2084, 0.0
        %v2992 = vmax.f32 %v2086, 0.0
        %v2993 = vmax.f32 %v2197, 0.0
        %v2994 = vmax.f32 %v2199, 0.0
        %v2995 = vmax.f32 %v2310, 0.0
        %v2996 = vmax.f32 %v2312, 0.0
        %v2997 = vmax.f32 %v2423, 0.0
        %v2998 = vmax.f32 %v2425, 0.0
        %v2999 = vmax.f32 %v2536, 0.0
        %v3000 = vmax.f32 %v2538, 0.0
        %v3001 = vmax.f32 %v2649, 0.0
        %v3002 = vmax.f32 %v2651, 0.0
        %v3003 = vmax.f32 %v960, 0.0
        %v3004 = vmax.f32 %v962, 0.0
        %v3005 = vmax.f32 %v1073, 0.0
        %v3006 = vmax.f32 %v1075, 0.0
        %v3007 = vmax.f32 %v1186, 0.0
        %v3008 = vmax.f32 %v1188, 0.0
        %v3009 = vmax.f32 %v1299, 0.0
        %v3010 = vmax.f32 %v1301, 0.0
        %v3011 = vmax.f32 %v1412, 0.0
        %v3012 = vmax.f32 %v1414, 0.0
        %v3013 = vmax.f32 %v1525, 0.0
        %v3014 = vmax.f32 %v1527, 0.0
        %v3015 = vmax.f32 %v1638, 0.0
        %v3016 = vmax.f32 %v1640, 0.0
        %v3017 = vmax.f32 %v1751, 0.0
        %v3018 = vmax.f32 %v1753, 0.0
        %v3019 = vmax.f32 %v1864, 0.0
        %v3020 = vmax.f32 %v1866, 0.0
        %v3021 = vmax.f32 %v1977, 0.0
        %v3022 = vmax.f32 %v1979, 0.0
        %v3023 = vmax.f32 %v2090, 0.0
        %v3024 = vmax.f32 %v2092, 0.0
        %v3025 = vmax.f32 %v2203, 0.0
        %v3026 = vmax.f32 %v2205, 0.0
        %v3027 = vmax.f32 %v2316, 0.0
        %v3028 = vmax.f32 %v2318, 0.0
        %v3029 = vmax.f32 %v2429, 0.0
        %v3030 = vmax.f32 %v2431, 0.0
        %v3031 = vmax.f32 %v2542, 0.0
        %v3032 = vmax.f32 %v2544, 0.0
        %v3033 = vmax.f32 %v2655, 0.0
        %v3034 = vmax.f32 %v2657, 0.0
        %v3035 = vmax.f32 %v964, 0.0
        %v3036 = vmax.f32 %v966, 0.0
        %v3037 = vmax.f32 %v1077, 0.0
        %v3038 = vmax.f32 %v1079, 0.0
        %v3039 = vmax.f32 %v1190, 0.0
        %v3040 = vmax.f32 %v1192, 0.0
        %v3041 = vmax.f32 %v1303, 0.0
        %v3042 = vmax.f32 %v1305, 0.0
        %v3043 = vmax.f32 %v1416, 0.0
        %v3044 = vmax.f32 %v1418, 0.0
        %v3045 = vmax.f32 %v1529, 0.0
        %v3046 = vmax.f32 %v1531, 0.0
        %v3047 = vmax.f32 %v1642, 0.0
        %v3048 = vmax.f32 %v1644, 0.0
        %v3049 = vmax.f32 %v1755, 0.0
        %v3050 = vmax.f32 %v1757, 0.0
        %v3051 = vmax.f32 %v1868, 0.0
        %v3052 = vmax.f32 %v1870, 0.0
        %v3053 = vmax.f32 %v1981, 0.0
        %v3054 = vmax.f32 %v1983, 0.0
        %v3055 = vmax.f32 %v2094, 0.0
        %v3056 = vmax.f32 %v2096, 0.0
        %v3057 = vmax.f32 %v2207, 0.0
        %v3058 = vmax.f32 %v2209, 0.0
        %v3059 = vmax.f32 %v2320, 0.0
        %v3060 = vmax.f32 %v2322, 0.0
        %v3061 = vmax.f32 %v2433, 0.0
        %v3062 = vmax.f32 %v2435, 0.0
        %v3063 = vmax.f32 %v2546, 0.0
        %v3064 = vmax.f32 %v2548, 0.0
        %v3065 = vmax.f32 %v2659, 0.0
        %v3066 = vmax.f32 %v2661, 0.0
        %v3067 = vmax.f32 %v970, 0.0
        %v3068 = vmax.f32 %v972, 0.0
        %v3069 = vmax.f32 %v1083, 0.0
        %v3070 = vmax.f32 %v1085, 0.0
        %v3071 = vmax.f32 %v1196, 0.0
        %v3072 = vmax.f32 %v1198, 0.0
        %v3073 = vmax.f32 %v1309, 0.0
        %v3074 = vmax.f32 %v1311, 0.0
        %v3075 = vmax.f32 %v1422, 0.0
        %v3076 = vmax.f32 %v1424, 0.0
        %v3077 = vmax.f32 %v1535, 0.0
        %v3078 = vmax.f32 %v1537, 0.0
        %v3079 = vmax.f32 %v1648, 0.0
        %v3080 = vmax.f32 %v1650, 0.0
        %v3081 = vmax.f32 %v1761, 0.0
        %v3082 = vmax.f32 %v1763, 0.0
        %v3083 = vmax.f32 %v1874, 0.0
        %v3084 = vmax.f32 %v1876, 0.0
        %v3085 = vmax.f32 %v1987, 0.0
        %v3086 = vmax.f32 %v1989, 0.0
        %v3087 = vmax.f32 %v2100, 0.0
        %v3088 = vmax.f32 %v2102, 0.0
        %v3089 = vmax.f32 %v2213, 0.0
        %v3090 = vmax.f32 %v2215, 0.0
        %v3091 = vmax.f32 %v2326, 0.0
        %v3092 = vmax.f32 %v2328, 0.0
        %v3093 = vmax.f32 %v2439, 0.0
        %v3094 = vmax.f32 %v2441, 0.0
        %v3095 = vmax.f32 %v2552, 0.0
        %v3096 = vmax.f32 %v2554, 0.0
        %v3097 = vmax.f32 %v2665, 0.0
        %v3098 = vmax.f32 %v2667, 0.0
        %v3099 = vmax.f32 %v974, 0.0
        %v3100 = vmax.f32 %v976, 0.0
        %v3101 = vmax.f32 %v1087, 0.0
        %v3102 = vmax.f32 %v1089, 0.0
        %v3103 = vmax.f32 %v1200, 0.0
        %v3104 = vmax.f32 %v1202, 0.0
        %v3105 = vmax.f32 %v1313, 0.0
        %v3106 = vmax.f32 %v1315, 0.0
        %v3107 = vmax.f32 %v1426, 0.0
        %v3108 = vmax.f32 %v1428, 0.0
        %v3109 = vmax.f32 %v1539, 0.0
        %v3110 = vmax.f32 %v1541, 0.0
        %v3111 = vmax.f32 %v1652, 0.0
        %v3112 = vmax.f32 %v1654, 0.0
        %v3113 = vmax.f32 %v1765, 0.0
        %v3114 = vmax.f32 %v1767, 0.0
        %v3115 = vmax.f32 %v1878, 0.0
        %v3116 = vmax.f32 %v1880, 0.0
        %v3117 = vmax.f32 %v1991, 0.0
        %v3118 = vmax.f32 %v1993, 0.0
        %v3119 = vmax.f32 %v2104, 0.0
        %v3120 = vmax.f32 %v2106, 0.0
        %v3121 = vmax.f32 %v2217, 0.0
        %v3122 = vmax.f32 %v2219, 0.0
        %v3123 = vmax.f32 %v2330, 0.0
        %v3124 = vmax.f32 %v2332, 0.0
        %v3125 = vmax.f32 %v2443, 0.0
        %v3126 = vmax.f32 %v2445, 0.0
        %v3127 = vmax.f32 %v2556, 0.0
        %v3128 = vmax.f32 %v2558, 0.0
        %v3129 = vmax.f32 %v2669, 0.0
        %v3130 = vmax.f32 %v2671, 0.0
        %v3131 = vmax.f32 %v980, 0.0
        %v3132 = vmax.f32 %v982, 0.0
        %v3133 = vmax.f32 %v1093, 0.0
        %v3134 = vmax.f32 %v1095, 0.0
        %v3135 = vmax.f32 %v1206, 0.0
        %v3136 = vmax.f32 %v1208, 0.0
        %v3137 = vmax.f32 %v1319, 0.0
        %v3138 = vmax.f32 %v1321, 0.0
        %v3139 = vmax.f32 %v1432, 0.0
        %v3140 = vmax.f32 %v1434, 0.0
        %v3141 = vmax.f32 %v1545, 0.0
        %v3142 = vmax.f32 %v1547, 0.0
        %v3143 = vmax.f32 %v1658, 0.0
        %v3144 = vmax.f32 %v1660, 0.0
        %v3145 = vmax.f32 %v1771, 0.0
        %v3146 = vmax.f32 %v1773, 0.0
        %v3147 = vmax.f32 %v1884, 0.0
        %v3148 = vmax.f32 %v1886, 0.0
        %v3149 = vmax.f32 %v1997, 0.0
        %v3150 = vmax.f32 %v1999, 0.0
        %v3151 = vmax.f32 %v2110, 0.0
        %v3152 = vmax.f32 %v2112, 0.0
        %v3153 = vmax.f32 %v2223, 0.0
        %v3154 = vmax.f32 %v2225, 0.0
        %v3155 = vmax.f32 %v2336, 0.0
        %v3156 = vmax.f32 %v2338, 0.0
        %v3157 = vmax.f32 %v2449, 0.0
        %v3158 = vmax.f32 %v2451, 0.0
        %v3159 = vmax.f32 %v2562, 0.0
        %v3160 = vmax.f32 %v2564, 0.0
        %v3161 = vmax.f32 %v2675, 0.0
        %v3162 = vmax.f32 %v2677, 0.0
        %v3163 = vmax.f32 %v984, 0.0
        %v3164 = vmax.f32 %v986, 0.0
        %v3165 = vmax.f32 %v1097, 0.0
        %v3166 = vmax.f32 %v1099, 0.0
        %v3167 = vmax.f32 %v1210, 0.0
        %v3168 = vmax.f32 %v1212, 0.0
        %v3169 = vmax.f32 %v1323, 0.0
        %v3170 = vmax.f32 %v1325, 0.0
        %v3171 = vmax.f32 %v1436, 0.0
        %v3172 = vmax.f32 %v1438, 0.0
        %v3173 = vmax.f32 %v1549, 0.0
        %v3174 = vmax.f32 %v1551, 0.0
        %v3175 = vmax.f32 %v1662, 0.0
        %v3176 = vmax.f32 %v1664, 0.0
        %v3177 = vmax.f32 %v1775, 0.0
        %v3178 = vmax.f32 %v1777, 0.0
        %v3179 = vmax.f32 %v1888, 0.0
        %v3180 = vmax.f32 %v1890, 0.0
        %v3181 = vmax.f32 %v2001, 0.0
        %v3182 = vmax.f32 %v2003, 0.0
        %v3183 = vmax.f32 %v2114, 0.0
        %v3184 = vmax.f32 %v2116, 0.0
        %v3185 = vmax.f32 %v2227, 0.0
        %v3186 = vmax.f32 %v2229, 0.0
        %v3187 = vmax.f32 %v2340, 0.0
        %v3188 = vmax.f32 %v2342, 0.0
        %v3189 = vmax.f32 %v2453, 0.0
        %v3190 = vmax.f32 %v2455, 0.0
        %v3191 = vmax.f32 %v2566, 0.0
        %v3192 = vmax.f32 %v2568, 0.0
        %v3193 = vmax.f32 %v2679, 0.0
        %v3194 = vmax.f32 %v2681, 0.0
        %3195 = vst [vmem:[%s310] sm:$0xff] %v2683
        %3196 = vst [vmem:[%s310 + $0x8] sm:$0xff] %v2684
        %3197 = vst [vmem:[%s310 + $0x10] sm:$0xff] %v2685
        %3198 = vst [vmem:[%s310 + $0x18] sm:$0xff] %v2686
        %3199 = vst [vmem:[%s310 + $0x20] sm:$0xff] %v2687
        %3200 = vst [vmem:[%s310 + $0x28] sm:$0xff] %v2688
        %3201 = vst [vmem:[%s310 + $0x30] sm:$0xff] %v2689
        %3202 = vst [vmem:[%s310 + $0x38] sm:$0xff] %v2690
        %3203 = vst [vmem:[%s310 + $0x40] sm:$0xff] %v2691
        %3204 = vst [vmem:[%s310 + $0x48] sm:$0xff] %v2692
        %3205 = vst [vmem:[%s310 + $0x50] sm:$0xff] %v2693
        %3206 = vst [vmem:[%s310 + $0x58] sm:$0xff] %v2694
        %3207 = vst [vmem:[%s310 + $0x60] sm:$0xff] %v2695
        %3208 = vst [vmem:[%s310 + $0x68] sm:$0xff] %v2696
        %3209 = vst [vmem:[%s310 + $0x70] sm:$0xff] %v2697
        %3210 = vst [vmem:[%s310 + $0x78] sm:$0xff] %v2698
        %3211 = vst [vmem:[%s310 + $0x80] sm:$0xff] %v2699
        %3212 = vst [vmem:[%s310 + $0x88] sm:$0xff] %v2700
        %3213 = vst [vmem:[%s310 + $0x90] sm:$0xff] %v2701
        %3214 = vst [vmem:[%s310 + $0x98] sm:$0xff] %v2702
        %3215 = vst [vmem:[%s310 + $0xa0] sm:$0xff] %v2703
        %3216 = vst [vmem:[%s310 + $0xa8] sm:$0xff] %v2704
        %3217 = vst [vmem:[%s310 + $0xb0] sm:$0xff] %v2705
        %3218 = vst [vmem:[%s310 + $0xb8] sm:$0xff] %v2706
        %3219 = vst [vmem:[%s310 + $0xc0] sm:$0xff] %v2707
        %3220 = vst [vmem:[%s310 + $0xc8] sm:$0xff] %v2708
        %3221 = vst [vmem:[%s310 + $0xd0] sm:$0xff] %v2709
        %3222 = vst [vmem:[%s310 + $0xd8] sm:$0xff] %v2710
        %3223 = vst [vmem:[%s310 + $0xe0] sm:$0xff] %v2711
        %3224 = vst [vmem:[%s310 + $0xe8] sm:$0xff] %v2712
        %3225 = vst [vmem:[%s310 + $0xf0] sm:$0xff] %v2713
        %3226 = vst [vmem:[%s310 + $0xf8] sm:$0xff] %v2714
        %3227 = vst [vmem:[%s310 + $0x100] sm:$0xff] %v2715
        %3228 = vst [vmem:[%s310 + $0x108] sm:$0xff] %v2716
        %3229 = vst [vmem:[%s310 + $0x110] sm:$0xff] %v2717
        %3230 = vst [vmem:[%s310 + $0x118] sm:$0xff] %v2718
        %3231 = vst [vmem:[%s310 + $0x120] sm:$0xff] %v2719
        %3232 = vst [vmem:[%s310 + $0x128] sm:$0xff] %v2720
        %3233 = vst [vmem:[%s310 + $0x130] sm:$0xff] %v2721
        %3234 = vst [vmem:[%s310 + $0x138] sm:$0xff] %v2722
        %3235 = vst [vmem:[%s310 + $0x140] sm:$0xff] %v2723
        %3236 = vst [vmem:[%s310 + $0x148] sm:$0xff] %v2724
        %3237 = vst [vmem:[%s310 + $0x150] sm:$0xff] %v2725
        %3238 = vst [vmem:[%s310 + $0x158] sm:$0xff] %v2726
        %3239 = vst [vmem:[%s310 + $0x160] sm:$0xff] %v2727
        %3240 = vst [vmem:[%s310 + $0x168] sm:$0xff] %v2728
        %3241 = vst [vmem:[%s310 + $0x170] sm:$0xff] %v2729
        %3242 = vst [vmem:[%s310 + $0x178] sm:$0xff] %v2730
        %3243 = vst [vmem:[%s310 + $0x180] sm:$0xff] %v2731
        %3244 = vst [vmem:[%s310 + $0x188] sm:$0xff] %v2732
        %3245 = vst [vmem:[%s310 + $0x190] sm:$0xff] %v2733
        %3246 = vst [vmem:[%s310 + $0x198] sm:$0xff] %v2734
        %3247 = vst [vmem:[%s310 + $0x1a0] sm:$0xff] %v2735
        %3248 = vst [vmem:[%s310 + $0x1a8] sm:$0xff] %v2736
        %3249 = vst [vmem:[%s310 + $0x1b0] sm:$0xff] %v2737
        %3250 = vst [vmem:[%s310 + $0x1b8] sm:$0xff] %v2738
        %3251 = vst [vmem:[%s310 + $0x1c0] sm:$0xff] %v2739
        %3252 = vst [vmem:[%s310 + $0x1c8] sm:$0xff] %v2740
        %3253 = vst [vmem:[%s310 + $0x1d0] sm:$0xff] %v2741
        %3254 = vst [vmem:[%s310 + $0x1d8] sm:$0xff] %v2742
        %3255 = vst [vmem:[%s310 + $0x1e0] sm:$0xff] %v2743
        %3256 = vst [vmem:[%s310 + $0x1e8] sm:$0xff] %v2744
        %3257 = vst [vmem:[%s310 + $0x1f0] sm:$0xff] %v2745
        %3258 = vst [vmem:[%s310 + $0x1f8] sm:$0xff] %v2746
        %3259 = vst [vmem:[%s310 + $0x200] sm:$0xff] %v2747
        %3260 = vst [vmem:[%s310 + $0x208] sm:$0xff] %v2748
        %3261 = vst [vmem:[%s310 + $0x210] sm:$0xff] %v2749
        %3262 = vst [vmem:[%s310 + $0x218] sm:$0xff] %v2750
        %3263 = vst [vmem:[%s310 + $0x220] sm:$0xff] %v2751
        %3264 = vst [vmem:[%s310 + $0x228] sm:$0xff] %v2752
        %3265 = vst [vmem:[%s310 + $0x230] sm:$0xff] %v2753
        %3266 = vst [vmem:[%s310 + $0x238] sm:$0xff] %v2754
        %3267 = vst [vmem:[%s310 + $0x240] sm:$0xff] %v2755
        %3268 = vst [vmem:[%s310 + $0x248] sm:$0xff] %v2756
        %3269 = vst [vmem:[%s310 + $0x250] sm:$0xff] %v2757
        %3270 = vst [vmem:[%s310 + $0x258] sm:$0xff] %v2758
        %3271 = vst [vmem:[%s310 + $0x260] sm:$0xff] %v2759
        %3272 = vst [vmem:[%s310 + $0x268] sm:$0xff] %v2760
        %3273 = vst [vmem:[%s310 + $0x270] sm:$0xff] %v2761
        %3274 = vst [vmem:[%s310 + $0x278] sm:$0xff] %v2762
        %3275 = vst [vmem:[%s310 + $0x280] sm:$0xff] %v2763
        %3276 = vst [vmem:[%s310 + $0x288] sm:$0xff] %v2764
        %3277 = vst [vmem:[%s310 + $0x290] sm:$0xff] %v2765
        %3278 = vst [vmem:[%s310 + $0x298] sm:$0xff] %v2766
        %3279 = vst [vmem:[%s310 + $0x2a0] sm:$0xff] %v2767
        %3280 = vst [vmem:[%s310 + $0x2a8] sm:$0xff] %v2768
        %3281 = vst [vmem:[%s310 + $0x2b0] sm:$0xff] %v2769
        %3282 = vst [vmem:[%s310 + $0x2b8] sm:$0xff] %v2770
        %3283 = vst [vmem:[%s310 + $0x2c0] sm:$0xff] %v2771
        %3284 = vst [vmem:[%s310 + $0x2c8] sm:$0xff] %v2772
        %3285 = vst [vmem:[%s310 + $0x2d0] sm:$0xff] %v2773
        %3286 = vst [vmem:[%s310 + $0x2d8] sm:$0xff] %v2774
        %3287 = vst [vmem:[%s310 + $0x2e0] sm:$0xff] %v2775
        %3288 = vst [vmem:[%s310 + $0x2e8] sm:$0xff] %v2776
        %3289 = vst [vmem:[%s310 + $0x2f0] sm:$0xff] %v2777
        %3290 = vst [vmem:[%s310 + $0x2f8] sm:$0xff] %v2778
        %3291 = vst [vmem:[%s310 + $0x300] sm:$0xff] %v2779
        %3292 = vst [vmem:[%s310 + $0x308] sm:$0xff] %v2780
        %3293 = vst [vmem:[%s310 + $0x310] sm:$0xff] %v2781
        %3294 = vst [vmem:[%s310 + $0x318] sm:$0xff] %v2782
        %3295 = vst [vmem:[%s310 + $0x320] sm:$0xff] %v2783
        %3296 = vst [vmem:[%s310 + $0x328] sm:$0xff] %v2784
        %3297 = vst [vmem:[%s310 + $0x330] sm:$0xff] %v2785
        %3298 = vst [vmem:[%s310 + $0x338] sm:$0xff] %v2786
        %3299 = vst [vmem:[%s310 + $0x340] sm:$0xff] %v2787
        %3300 = vst [vmem:[%s310 + $0x348] sm:$0xff] %v2788
        %3301 = vst [vmem:[%s310 + $0x350] sm:$0xff] %v2789
        %3302 = vst [vmem:[%s310 + $0x358] sm:$0xff] %v2790
        %3303 = vst [vmem:[%s310 + $0x360] sm:$0xff] %v2791
        %3304 = vst [vmem:[%s310 + $0x368] sm:$0xff] %v2792
        %3305 = vst [vmem:[%s310 + $0x370] sm:$0xff] %v2793
        %3306 = vst [vmem:[%s310 + $0x378] sm:$0xff] %v2794
        %3307 = vst [vmem:[%s310 + $0x380] sm:$0xff] %v2795
        %3308 = vst [vmem:[%s310 + $0x388] sm:$0xff] %v2796
        %3309 = vst [vmem:[%s310 + $0x390] sm:$0xff] %v2797
        %3310 = vst [vmem:[%s310 + $0x398] sm:$0xff] %v2798
        %3311 = vst [vmem:[%s310 + $0x3a0] sm:$0xff] %v2799
        %3312 = vst [vmem:[%s310 + $0x3a8] sm:$0xff] %v2800
        %3313 = vst [vmem:[%s310 + $0x3b0] sm:$0xff] %v2801
        %3314 = vst [vmem:[%s310 + $0x3b8] sm:$0xff] %v2802
        %3315 = vst [vmem:[%s310 + $0x3c0] sm:$0xff] %v2803
        %3316 = vst [vmem:[%s310 + $0x3c8] sm:$0xff] %v2804
        %3317 = vst [vmem:[%s310 + $0x3d0] sm:$0xff] %v2805
        %3318 = vst [vmem:[%s310 + $0x3d8] sm:$0xff] %v2806
        %3319 = vst [vmem:[%s310 + $0x3e0] sm:$0xff] %v2807
        %3320 = vst [vmem:[%s310 + $0x3e8] sm:$0xff] %v2808
        %3321 = vst [vmem:[%s310 + $0x3f0] sm:$0xff] %v2809
        %3322 = vst [vmem:[%s310 + $0x3f8] sm:$0xff] %v2810
        %3323 = vst [vmem:[%s310 + $0x400] sm:$0xff] %v2811
        %3324 = vst [vmem:[%s310 + $0x408] sm:$0xff] %v2812
        %3325 = vst [vmem:[%s310 + $0x410] sm:$0xff] %v2813
        %3326 = vst [vmem:[%s310 + $0x418] sm:$0xff] %v2814
        %3327 = vst [vmem:[%s310 + $0x420] sm:$0xff] %v2815
        %3328 = vst [vmem:[%s310 + $0x428] sm:$0xff] %v2816
        %3329 = vst [vmem:[%s310 + $0x430] sm:$0xff] %v2817
        %3330 = vst [vmem:[%s310 + $0x438] sm:$0xff] %v2818
        %3331 = vst [vmem:[%s310 + $0x440] sm:$0xff] %v2819
        %3332 = vst [vmem:[%s310 + $0x448] sm:$0xff] %v2820
        %3333 = vst [vmem:[%s310 + $0x450] sm:$0xff] %v2821
        %3334 = vst [vmem:[%s310 + $0x458] sm:$0xff] %v2822
        %3335 = vst [vmem:[%s310 + $0x460] sm:$0xff] %v2823
        %3336 = vst [vmem:[%s310 + $0x468] sm:$0xff] %v2824
        %3337 = vst [vmem:[%s310 + $0x470] sm:$0xff] %v2825
        %3338 = vst [vmem:[%s310 + $0x478] sm:$0xff] %v2826
        %3339 = vst [vmem:[%s310 + $0x480] sm:$0xff] %v2827
        %3340 = vst [vmem:[%s310 + $0x488] sm:$0xff] %v2828
        %3341 = vst [vmem:[%s310 + $0x490] sm:$0xff] %v2829
        %3342 = vst [vmem:[%s310 + $0x498] sm:$0xff] %v2830
        %3343 = vst [vmem:[%s310 + $0x4a0] sm:$0xff] %v2831
        %3344 = vst [vmem:[%s310 + $0x4a8] sm:$0xff] %v2832
        %3345 = vst [vmem:[%s310 + $0x4b0] sm:$0xff] %v2833
        %3346 = vst [vmem:[%s310 + $0x4b8] sm:$0xff] %v2834
        %3347 = vst [vmem:[%s310 + $0x4c0] sm:$0xff] %v2835
        %3348 = vst [vmem:[%s310 + $0x4c8] sm:$0xff] %v2836
        %3349 = vst [vmem:[%s310 + $0x4d0] sm:$0xff] %v2837
        %3350 = vst [vmem:[%s310 + $0x4d8] sm:$0xff] %v2838
        %3351 = vst [vmem:[%s310 + $0x4e0] sm:$0xff] %v2839
        %3352 = vst [vmem:[%s310 + $0x4e8] sm:$0xff] %v2840
        %3353 = vst [vmem:[%s310 + $0x4f0] sm:$0xff] %v2841
        %3354 = vst [vmem:[%s310 + $0x4f8] sm:$0xff] %v2842
        %3355 = vst [vmem:[%s310 + $0x500] sm:$0xff] %v2843
        %3356 = vst [vmem:[%s310 + $0x508] sm:$0xff] %v2844
        %3357 = vst [vmem:[%s310 + $0x510] sm:$0xff] %v2845
        %3358 = vst [vmem:[%s310 + $0x518] sm:$0xff] %v2846
        %3359 = vst [vmem:[%s310 + $0x520] sm:$0xff] %v2847
        %3360 = vst [vmem:[%s310 + $0x528] sm:$0xff] %v2848
        %3361 = vst [vmem:[%s310 + $0x530] sm:$0xff] %v2849
        %3362 = vst [vmem:[%s310 + $0x538] sm:$0xff] %v2850
        %3363 = vst [vmem:[%s310 + $0x540] sm:$0xff] %v2851
        %3364 = vst [vmem:[%s310 + $0x548] sm:$0xff] %v2852
        %3365 = vst [vmem:[%s310 + $0x550] sm:$0xff] %v2853
        %3366 = vst [vmem:[%s310 + $0x558] sm:$0xff] %v2854
        %3367 = vst [vmem:[%s310 + $0x560] sm:$0xff] %v2855
        %3368 = vst [vmem:[%s310 + $0x568] sm:$0xff] %v2856
        %3369 = vst [vmem:[%s310 + $0x570] sm:$0xff] %v2857
        %3370 = vst [vmem:[%s310 + $0x578] sm:$0xff] %v2858
        %3371 = vst [vmem:[%s310 + $0x580] sm:$0xff] %v2859
        %3372 = vst [vmem:[%s310 + $0x588] sm:$0xff] %v2860
        %3373 = vst [vmem:[%s310 + $0x590] sm:$0xff] %v2861
        %3374 = vst [vmem:[%s310 + $0x598] sm:$0xff] %v2862
        %3375 = vst [vmem:[%s310 + $0x5a0] sm:$0xff] %v2863
        %3376 = vst [vmem:[%s310 + $0x5a8] sm:$0xff] %v2864
        %3377 = vst [vmem:[%s310 + $0x5b0] sm:$0xff] %v2865
        %3378 = vst [vmem:[%s310 + $0x5b8] sm:$0xff] %v2866
        %3379 = vst [vmem:[%s310 + $0x5c0] sm:$0xff] %v2867
        %3380 = vst [vmem:[%s310 + $0x5c8] sm:$0xff] %v2868
        %3381 = vst [vmem:[%s310 + $0x5d0] sm:$0xff] %v2869
        %3382 = vst [vmem:[%s310 + $0x5d8] sm:$0xff] %v2870
        %3383 = vst [vmem:[%s310 + $0x5e0] sm:$0xff] %v2871
        %3384 = vst [vmem:[%s310 + $0x5e8] sm:$0xff] %v2872
        %3385 = vst [vmem:[%s310 + $0x5f0] sm:$0xff] %v2873
        %3386 = vst [vmem:[%s310 + $0x5f8] sm:$0xff] %v2874
        %3387 = vst [vmem:[%s310 + $0x600] sm:$0xff] %v2875
        %3388 = vst [vmem:[%s310 + $0x608] sm:$0xff] %v2876
        %3389 = vst [vmem:[%s310 + $0x610] sm:$0xff] %v2877
        %3390 = vst [vmem:[%s310 + $0x618] sm:$0xff] %v2878
        %3391 = vst [vmem:[%s310 + $0x620] sm:$0xff] %v2879
        %3392 = vst [vmem:[%s310 + $0x628] sm:$0xff] %v2880
        %3393 = vst [vmem:[%s310 + $0x630] sm:$0xff] %v2881
        %3394 = vst [vmem:[%s310 + $0x638] sm:$0xff] %v2882
        %3395 = vst [vmem:[%s310 + $0x640] sm:$0xff] %v2883
        %3396 = vst [vmem:[%s310 + $0x648] sm:$0xff] %v2884
        %3397 = vst [vmem:[%s310 + $0x650] sm:$0xff] %v2885
        %3398 = vst [vmem:[%s310 + $0x658] sm:$0xff] %v2886
        %3399 = vst [vmem:[%s310 + $0x660] sm:$0xff] %v2887
        %3400 = vst [vmem:[%s310 + $0x668] sm:$0xff] %v2888
        %3401 = vst [vmem:[%s310 + $0x670] sm:$0xff] %v2889
        %3402 = vst [vmem:[%s310 + $0x678] sm:$0xff] %v2890
        %3403 = vst [vmem:[%s310 + $0x680] sm:$0xff] %v2891
        %3404 = vst [vmem:[%s310 + $0x688] sm:$0xff] %v2892
        %3405 = vst [vmem:[%s310 + $0x690] sm:$0xff] %v2893
        %3406 = vst [vmem:[%s310 + $0x698] sm:$0xff] %v2894
        %3407 = vst [vmem:[%s310 + $0x6a0] sm:$0xff] %v2895
        %3408 = vst [vmem:[%s310 + $0x6a8] sm:$0xff] %v2896
        %3409 = vst [vmem:[%s310 + $0x6b0] sm:$0xff] %v2897
        %3410 = vst [vmem:[%s310 + $0x6b8] sm:$0xff] %v2898
        %3411 = vst [vmem:[%s310 + $0x6c0] sm:$0xff] %v2899
        %3412 = vst [vmem:[%s310 + $0x6c8] sm:$0xff] %v2900
        %3413 = vst [vmem:[%s310 + $0x6d0] sm:$0xff] %v2901
        %3414 = vst [vmem:[%s310 + $0x6d8] sm:$0xff] %v2902
        %3415 = vst [vmem:[%s310 + $0x6e0] sm:$0xff] %v2903
        %3416 = vst [vmem:[%s310 + $0x6e8] sm:$0xff] %v2904
        %3417 = vst [vmem:[%s310 + $0x6f0] sm:$0xff] %v2905
        %3418 = vst [vmem:[%s310 + $0x6f8] sm:$0xff] %v2906
        %3419 = vst [vmem:[%s310 + $0x700] sm:$0xff] %v2907
        %3420 = vst [vmem:[%s310 + $0x708] sm:$0xff] %v2908
        %3421 = vst [vmem:[%s310 + $0x710] sm:$0xff] %v2909
        %3422 = vst [vmem:[%s310 + $0x718] sm:$0xff] %v2910
        %3423 = vst [vmem:[%s310 + $0x720] sm:$0xff] %v2911
        %3424 = vst [vmem:[%s310 + $0x728] sm:$0xff] %v2912
        %3425 = vst [vmem:[%s310 + $0x730] sm:$0xff] %v2913
        %3426 = vst [vmem:[%s310 + $0x738] sm:$0xff] %v2914
        %3427 = vst [vmem:[%s310 + $0x740] sm:$0xff] %v2915
        %3428 = vst [vmem:[%s310 + $0x748] sm:$0xff] %v2916
        %3429 = vst [vmem:[%s310 + $0x750] sm:$0xff] %v2917
        %3430 = vst [vmem:[%s310 + $0x758] sm:$0xff] %v2918
        %3431 = vst [vmem:[%s310 + $0x760] sm:$0xff] %v2919
        %3432 = vst [vmem:[%s310 + $0x768] sm:$0xff] %v2920
        %3433 = vst [vmem:[%s310 + $0x770] sm:$0xff] %v2921
        %3434 = vst [vmem:[%s310 + $0x778] sm:$0xff] %v2922
        %3435 = vst [vmem:[%s310 + $0x780] sm:$0xff] %v2923
        %3436 = vst [vmem:[%s310 + $0x788] sm:$0xff] %v2924
        %3437 = vst [vmem:[%s310 + $0x790] sm:$0xff] %v2925
        %3438 = vst [vmem:[%s310 + $0x798] sm:$0xff] %v2926
        %3439 = vst [vmem:[%s310 + $0x7a0] sm:$0xff] %v2927
        %3440 = vst [vmem:[%s310 + $0x7a8] sm:$0xff] %v2928
        %3441 = vst [vmem:[%s310 + $0x7b0] sm:$0xff] %v2929
        %3442 = vst [vmem:[%s310 + $0x7b8] sm:$0xff] %v2930
        %3443 = vst [vmem:[%s310 + $0x7c0] sm:$0xff] %v2931
        %3444 = vst [vmem:[%s310 + $0x7c8] sm:$0xff] %v2932
        %3445 = vst [vmem:[%s310 + $0x7d0] sm:$0xff] %v2933
        %3446 = vst [vmem:[%s310 + $0x7d8] sm:$0xff] %v2934
        %3447 = vst [vmem:[%s310 + $0x7e0] sm:$0xff] %v2935
        %3448 = vst [vmem:[%s310 + $0x7e8] sm:$0xff] %v2936
        %3449 = vst [vmem:[%s310 + $0x7f0] sm:$0xff] %v2937
        %3450 = vst [vmem:[%s310 + $0x7f8] sm:$0xff] %v2938
        %3451 = vst [vmem:[%s310 + $0x800] sm:$0xff] %v2939
        %3452 = vst [vmem:[%s310 + $0x808] sm:$0xff] %v2940
        %3453 = vst [vmem:[%s310 + $0x810] sm:$0xff] %v2941
        %3454 = vst [vmem:[%s310 + $0x818] sm:$0xff] %v2942
        %3455 = vst [vmem:[%s310 + $0x820] sm:$0xff] %v2943
        %3456 = vst [vmem:[%s310 + $0x828] sm:$0xff] %v2944
        %3457 = vst [vmem:[%s310 + $0x830] sm:$0xff] %v2945
        %3458 = vst [vmem:[%s310 + $0x838] sm:$0xff] %v2946
        %3459 = vst [vmem:[%s310 + $0x840] sm:$0xff] %v2947
        %3460 = vst [vmem:[%s310 + $0x848] sm:$0xff] %v2948
        %3461 = vst [vmem:[%s310 + $0x850] sm:$0xff] %v2949
        %3462 = vst [vmem:[%s310 + $0x858] sm:$0xff] %v2950
        %3463 = vst [vmem:[%s310 + $0x860] sm:$0xff] %v2951
        %3464 = vst [vmem:[%s310 + $0x868] sm:$0xff] %v2952
        %3465 = vst [vmem:[%s310 + $0x870] sm:$0xff] %v2953
        %3466 = vst [vmem:[%s310 + $0x878] sm:$0xff] %v2954
        %3467 = vst [vmem:[%s310 + $0x880] sm:$0xff] %v2955
        %3468 = vst [vmem:[%s310 + $0x888] sm:$0xff] %v2956
        %3469 = vst [vmem:[%s310 + $0x890] sm:$0xff] %v2957
        %3470 = vst [vmem:[%s310 + $0x898] sm:$0xff] %v2958
        %3471 = vst [vmem:[%s310 + $0x8a0] sm:$0xff] %v2959
        %3472 = vst [vmem:[%s310 + $0x8a8] sm:$0xff] %v2960
        %3473 = vst [vmem:[%s310 + $0x8b0] sm:$0xff] %v2961
        %3474 = vst [vmem:[%s310 + $0x8b8] sm:$0xff] %v2962
        %3475 = vst [vmem:[%s310 + $0x8c0] sm:$0xff] %v2963
        %3476 = vst [vmem:[%s310 + $0x8c8] sm:$0xff] %v2964
        %3477 = vst [vmem:[%s310 + $0x8d0] sm:$0xff] %v2965
        %3478 = vst [vmem:[%s310 + $0x8d8] sm:$0xff] %v2966
        %3479 = vst [vmem:[%s310 + $0x8e0] sm:$0xff] %v2967
        %3480 = vst [vmem:[%s310 + $0x8e8] sm:$0xff] %v2968
        %3481 = vst [vmem:[%s310 + $0x8f0] sm:$0xff] %v2969
        %3482 = vst [vmem:[%s310 + $0x8f8] sm:$0xff] %v2970
        %3483 = vst [vmem:[%s310 + $0x900] sm:$0xff] %v2971
        %3484 = vst [vmem:[%s310 + $0x908] sm:$0xff] %v2972
        %3485 = vst [vmem:[%s310 + $0x910] sm:$0xff] %v2973
        %3486 = vst [vmem:[%s310 + $0x918] sm:$0xff] %v2974
        %3487 = vst [vmem:[%s310 + $0x920] sm:$0xff] %v2975
        %3488 = vst [vmem:[%s310 + $0x928] sm:$0xff] %v2976
        %3489 = vst [vmem:[%s310 + $0x930] sm:$0xff] %v2977
        %3490 = vst [vmem:[%s310 + $0x938] sm:$0xff] %v2978
        %3491 = vst [vmem:[%s310 + $0x940] sm:$0xff] %v2979
        %3492 = vst [vmem:[%s310 + $0x948] sm:$0xff] %v2980
        %3493 = vst [vmem:[%s310 + $0x950] sm:$0xff] %v2981
        %3494 = vst [vmem:[%s310 + $0x958] sm:$0xff] %v2982
        %3495 = vst [vmem:[%s310 + $0x960] sm:$0xff] %v2983
        %3496 = vst [vmem:[%s310 + $0x968] sm:$0xff] %v2984
        %3497 = vst [vmem:[%s310 + $0x970] sm:$0xff] %v2985
        %3498 = vst [vmem:[%s310 + $0x978] sm:$0xff] %v2986
        %3499 = vst [vmem:[%s310 + $0x980] sm:$0xff] %v2987
        %3500 = vst [vmem:[%s310 + $0x988] sm:$0xff] %v2988
        %3501 = vst [vmem:[%s310 + $0x990] sm:$0xff] %v2989
        %3502 = vst [vmem:[%s310 + $0x998] sm:$0xff] %v2990
        %3503 = vst [vmem:[%s310 + $0x9a0] sm:$0xff] %v2991
        %3504 = vst [vmem:[%s310 + $0x9a8] sm:$0xff] %v2992
        %3505 = vst [vmem:[%s310 + $0x9b0] sm:$0xff] %v2993
        %3506 = vst [vmem:[%s310 + $0x9b8] sm:$0xff] %v2994
        %3507 = vst [vmem:[%s310 + $0x9c0] sm:$0xff] %v2995
        %3508 = vst [vmem:[%s310 + $0x9c8] sm:$0xff] %v2996
        %3509 = vst [vmem:[%s310 + $0x9d0] sm:$0xff] %v2997
        %3510 = vst [vmem:[%s310 + $0x9d8] sm:$0xff] %v2998
        %3511 = vst [vmem:[%s310 + $0x9e0] sm:$0xff] %v2999
        %3512 = vst [vmem:[%s310 + $0x9e8] sm:$0xff] %v3000
        %3513 = vst [vmem:[%s310 + $0x9f0] sm:$0xff] %v3001
        %3514 = vst [vmem:[%s310 + $0x9f8] sm:$0xff] %v3002
        %3515 = vst [vmem:[%s310 + $0xa00] sm:$0xff] %v3003
        %3516 = vst [vmem:[%s310 + $0xa08] sm:$0xff] %v3004
        %3517 = vst [vmem:[%s310 + $0xa10] sm:$0xff] %v3005
        %3518 = vst [vmem:[%s310 + $0xa18] sm:$0xff] %v3006
        %3519 = vst [vmem:[%s310 + $0xa20] sm:$0xff] %v3007
        %3520 = vst [vmem:[%s310 + $0xa28] sm:$0xff] %v3008
        %3521 = vst [vmem:[%s310 + $0xa30] sm:$0xff] %v3009
        %3522 = vst [vmem:[%s310 + $0xa38] sm:$0xff] %v3010
        %3523 = vst [vmem:[%s310 + $0xa40] sm:$0xff] %v3011
        %3524 = vst [vmem:[%s310 + $0xa48] sm:$0xff] %v3012
        %3525 = vst [vmem:[%s310 + $0xa50] sm:$0xff] %v3013
        %3526 = vst [vmem:[%s310 + $0xa58] sm:$0xff] %v3014
        %3527 = vst [vmem:[%s310 + $0xa60] sm:$0xff] %v3015
        %3528 = vst [vmem:[%s310 + $0xa68] sm:$0xff] %v3016
        %3529 = vst [vmem:[%s310 + $0xa70] sm:$0xff] %v3017
        %3530 = vst [vmem:[%s310 + $0xa78] sm:$0xff] %v3018
        %3531 = vst [vmem:[%s310 + $0xa80] sm:$0xff] %v3019
        %3532 = vst [vmem:[%s310 + $0xa88] sm:$0xff] %v3020
        %3533 = vst [vmem:[%s310 + $0xa90] sm:$0xff] %v3021
        %3534 = vst [vmem:[%s310 + $0xa98] sm:$0xff] %v3022
        %3535 = vst [vmem:[%s310 + $0xaa0] sm:$0xff] %v3023
        %3536 = vst [vmem:[%s310 + $0xaa8] sm:$0xff] %v3024
        %3537 = vst [vmem:[%s310 + $0xab0] sm:$0xff] %v3025
        %3538 = vst [vmem:[%s310 + $0xab8] sm:$0xff] %v3026
        %3539 = vst [vmem:[%s310 + $0xac0] sm:$0xff] %v3027
        %3540 = vst [vmem:[%s310 + $0xac8] sm:$0xff] %v3028
        %3541 = vst [vmem:[%s310 + $0xad0] sm:$0xff] %v3029
        %3542 = vst [vmem:[%s310 + $0xad8] sm:$0xff] %v3030
        %3543 = vst [vmem:[%s310 + $0xae0] sm:$0xff] %v3031
        %3544 = vst [vmem:[%s310 + $0xae8] sm:$0xff] %v3032
        %3545 = vst [vmem:[%s310 + $0xaf0] sm:$0xff] %v3033
        %3546 = vst [vmem:[%s310 + $0xaf8] sm:$0xff] %v3034
        %3547 = vst [vmem:[%s310 + $0xb00] sm:$0xff] %v3035
        %3548 = vst [vmem:[%s310 + $0xb08] sm:$0xff] %v3036
        %3549 = vst [vmem:[%s310 + $0xb10] sm:$0xff] %v3037
        %3550 = vst [vmem:[%s310 + $0xb18] sm:$0xff] %v3038
        %3551 = vst [vmem:[%s310 + $0xb20] sm:$0xff] %v3039
        %3552 = vst [vmem:[%s310 + $0xb28] sm:$0xff] %v3040
        %3553 = vst [vmem:[%s310 + $0xb30] sm:$0xff] %v3041
        %3554 = vst [vmem:[%s310 + $0xb38] sm:$0xff] %v3042
        %3555 = vst [vmem:[%s310 + $0xb40] sm:$0xff] %v3043
        %3556 = vst [vmem:[%s310 + $0xb48] sm:$0xff] %v3044
        %3557 = vst [vmem:[%s310 + $0xb50] sm:$0xff] %v3045
        %3558 = vst [vmem:[%s310 + $0xb58] sm:$0xff] %v3046
        %3559 = vst [vmem:[%s310 + $0xb60] sm:$0xff] %v3047
        %3560 = vst [vmem:[%s310 + $0xb68] sm:$0xff] %v3048
        %3561 = vst [vmem:[%s310 + $0xb70] sm:$0xff] %v3049
        %3562 = vst [vmem:[%s310 + $0xb78] sm:$0xff] %v3050
        %3563 = vst [vmem:[%s310 + $0xb80] sm:$0xff] %v3051
        %3564 = vst [vmem:[%s310 + $0xb88] sm:$0xff] %v3052
        %3565 = vst [vmem:[%s310 + $0xb90] sm:$0xff] %v3053
        %3566 = vst [vmem:[%s310 + $0xb98] sm:$0xff] %v3054
        %3567 = vst [vmem:[%s310 + $0xba0] sm:$0xff] %v3055
        %3568 = vst [vmem:[%s310 + $0xba8] sm:$0xff] %v3056
        %3569 = vst [vmem:[%s310 + $0xbb0] sm:$0xff] %v3057
        %3570 = vst [vmem:[%s310 + $0xbb8] sm:$0xff] %v3058
        %3571 = vst [vmem:[%s310 + $0xbc0] sm:$0xff] %v3059
        %3572 = vst [vmem:[%s310 + $0xbc8] sm:$0xff] %v3060
        %3573 = vst [vmem:[%s310 + $0xbd0] sm:$0xff] %v3061
        %3574 = vst [vmem:[%s310 + $0xbd8] sm:$0xff] %v3062
        %3575 = vst [vmem:[%s310 + $0xbe0] sm:$0xff] %v3063
        %3576 = vst [vmem:[%s310 + $0xbe8] sm:$0xff] %v3064
        %3577 = vst [vmem:[%s310 + $0xbf0] sm:$0xff] %v3065
        %3578 = vst [vmem:[%s310 + $0xbf8] sm:$0xff] %v3066
        %3579 = vst [vmem:[%s310 + $0xc00] sm:$0xff] %v3067
        %3580 = vst [vmem:[%s310 + $0xc08] sm:$0xff] %v3068
        %3581 = vst [vmem:[%s310 + $0xc10] sm:$0xff] %v3069
        %3582 = vst [vmem:[%s310 + $0xc18] sm:$0xff] %v3070
        %3583 = vst [vmem:[%s310 + $0xc20] sm:$0xff] %v3071
        %3584 = vst [vmem:[%s310 + $0xc28] sm:$0xff] %v3072
        %3585 = vst [vmem:[%s310 + $0xc30] sm:$0xff] %v3073
        %3586 = vst [vmem:[%s310 + $0xc38] sm:$0xff] %v3074
        %3587 = vst [vmem:[%s310 + $0xc40] sm:$0xff] %v3075
        %3588 = vst [vmem:[%s310 + $0xc48] sm:$0xff] %v3076
        %3589 = vst [vmem:[%s310 + $0xc50] sm:$0xff] %v3077
        %3590 = vst [vmem:[%s310 + $0xc58] sm:$0xff] %v3078
        %3591 = vst [vmem:[%s310 + $0xc60] sm:$0xff] %v3079
        %3592 = vst [vmem:[%s310 + $0xc68] sm:$0xff] %v3080
        %3593 = vst [vmem:[%s310 + $0xc70] sm:$0xff] %v3081
        %3594 = vst [vmem:[%s310 + $0xc78] sm:$0xff] %v3082
        %3595 = vst [vmem:[%s310 + $0xc80] sm:$0xff] %v3083
        %3596 = vst [vmem:[%s310 + $0xc88] sm:$0xff] %v3084
        %3597 = vst [vmem:[%s310 + $0xc90] sm:$0xff] %v3085
        %3598 = vst [vmem:[%s310 + $0xc98] sm:$0xff] %v3086
        %3599 = vst [vmem:[%s310 + $0xca0] sm:$0xff] %v3087
        %3600 = vst [vmem:[%s310 + $0xca8] sm:$0xff] %v3088
        %3601 = vst [vmem:[%s310 + $0xcb0] sm:$0xff] %v3089
        %3602 = vst [vmem:[%s310 + $0xcb8] sm:$0xff] %v3090
        %3603 = vst [vmem:[%s310 + $0xcc0] sm:$0xff] %v3091
        %3604 = vst [vmem:[%s310 + $0xcc8] sm:$0xff] %v3092
        %3605 = vst [vmem:[%s310 + $0xcd0] sm:$0xff] %v3093
        %3606 = vst [vmem:[%s310 + $0xcd8] sm:$0xff] %v3094
        %3607 = vst [vmem:[%s310 + $0xce0] sm:$0xff] %v3095
        %3608 = vst [vmem:[%s310 + $0xce8] sm:$0xff] %v3096
        %3609 = vst [vmem:[%s310 + $0xcf0] sm:$0xff] %v3097
        %3610 = vst [vmem:[%s310 + $0xcf8] sm:$0xff] %v3098
        %3611 = vst [vmem:[%s310 + $0xd00] sm:$0xff] %v3099
        %3612 = vst [vmem:[%s310 + $0xd08] sm:$0xff] %v3100
        %3613 = vst [vmem:[%s310 + $0xd10] sm:$0xff] %v3101
        %3614 = vst [vmem:[%s310 + $0xd18] sm:$0xff] %v3102
        %3615 = vst [vmem:[%s310 + $0xd20] sm:$0xff] %v3103
        %3616 = vst [vmem:[%s310 + $0xd28] sm:$0xff] %v3104
        %3617 = vst [vmem:[%s310 + $0xd30] sm:$0xff] %v3105
        %3618 = vst [vmem:[%s310 + $0xd38] sm:$0xff] %v3106
        %3619 = vst [vmem:[%s310 + $0xd40] sm:$0xff] %v3107
        %3620 = vst [vmem:[%s310 + $0xd48] sm:$0xff] %v3108
        %3621 = vst [vmem:[%s310 + $0xd50] sm:$0xff] %v3109
        %3622 = vst [vmem:[%s310 + $0xd58] sm:$0xff] %v3110
        %3623 = vst [vmem:[%s310 + $0xd60] sm:$0xff] %v3111
        %3624 = vst [vmem:[%s310 + $0xd68] sm:$0xff] %v3112
        %3625 = vst [vmem:[%s310 + $0xd70] sm:$0xff] %v3113
        %3626 = vst [vmem:[%s310 + $0xd78] sm:$0xff] %v3114
        %3627 = vst [vmem:[%s310 + $0xd80] sm:$0xff] %v3115
        %3628 = vst [vmem:[%s310 + $0xd88] sm:$0xff] %v3116
        %3629 = vst [vmem:[%s310 + $0xd90] sm:$0xff] %v3117
        %3630 = vst [vmem:[%s310 + $0xd98] sm:$0xff] %v3118
        %3631 = vst [vmem:[%s310 + $0xda0] sm:$0xff] %v3119
        %3632 = vst [vmem:[%s310 + $0xda8] sm:$0xff] %v3120
        %3633 = vst [vmem:[%s310 + $0xdb0] sm:$0xff] %v3121
        %3634 = vst [vmem:[%s310 + $0xdb8] sm:$0xff] %v3122
        %3635 = vst [vmem:[%s310 + $0xdc0] sm:$0xff] %v3123
        %3636 = vst [vmem:[%s310 + $0xdc8] sm:$0xff] %v3124
        %3637 = vst [vmem:[%s310 + $0xdd0] sm:$0xff] %v3125
        %3638 = vst [vmem:[%s310 + $0xdd8] sm:$0xff] %v3126
        %3639 = vst [vmem:[%s310 + $0xde0] sm:$0xff] %v3127
        %3640 = vst [vmem:[%s310 + $0xde8] sm:$0xff] %v3128
        %3641 = vst [vmem:[%s310 + $0xdf0] sm:$0xff] %v3129
        %3642 = vst [vmem:[%s310 + $0xdf8] sm:$0xff] %v3130
        %3643 = vst [vmem:[%s310 + $0xe00] sm:$0xff] %v3131
        %3644 = vst [vmem:[%s310 + $0xe08] sm:$0xff] %v3132
        %3645 = vst [vmem:[%s310 + $0xe10] sm:$0xff] %v3133
        %3646 = vst [vmem:[%s310 + $0xe18] sm:$0xff] %v3134
        %3647 = vst [vmem:[%s310 + $0xe20] sm:$0xff] %v3135
        %3648 = vst [vmem:[%s310 + $0xe28] sm:$0xff] %v3136
        %3649 = vst [vmem:[%s310 + $0xe30] sm:$0xff] %v3137
        %3650 = vst [vmem:[%s310 + $0xe38] sm:$0xff] %v3138
        %3651 = vst [vmem:[%s310 + $0xe40] sm:$0xff] %v3139
        %3652 = vst [vmem:[%s310 + $0xe48] sm:$0xff] %v3140
        %3653 = vst [vmem:[%s310 + $0xe50] sm:$0xff] %v3141
        %3654 = vst [vmem:[%s310 + $0xe58] sm:$0xff] %v3142
        %3655 = vst [vmem:[%s310 + $0xe60] sm:$0xff] %v3143
        %3656 = vst [vmem:[%s310 + $0xe68] sm:$0xff] %v3144
        %3657 = vst [vmem:[%s310 + $0xe70] sm:$0xff] %v3145
        %3658 = vst [vmem:[%s310 + $0xe78] sm:$0xff] %v3146
        %3659 = vst [vmem:[%s310 + $0xe80] sm:$0xff] %v3147
        %3660 = vst [vmem:[%s310 + $0xe88] sm:$0xff] %v3148
        %3661 = vst [vmem:[%s310 + $0xe90] sm:$0xff] %v3149
        %3662 = vst [vmem:[%s310 + $0xe98] sm:$0xff] %v3150
        %3663 = vst [vmem:[%s310 + $0xea0] sm:$0xff] %v3151
        %3664 = vst [vmem:[%s310 + $0xea8] sm:$0xff] %v3152
        %3665 = vst [vmem:[%s310 + $0xeb0] sm:$0xff] %v3153
        %3666 = vst [vmem:[%s310 + $0xeb8] sm:$0xff] %v3154
        %3667 = vst [vmem:[%s310 + $0xec0] sm:$0xff] %v3155
        %3668 = vst [vmem:[%s310 + $0xec8] sm:$0xff] %v3156
        %3669 = vst [vmem:[%s310 + $0xed0] sm:$0xff] %v3157
        %3670 = vst [vmem:[%s310 + $0xed8] sm:$0xff] %v3158
        %3671 = vst [vmem:[%s310 + $0xee0] sm:$0xff] %v3159
        %3672 = vst [vmem:[%s310 + $0xee8] sm:$0xff] %v3160
        %3673 = vst [vmem:[%s310 + $0xef0] sm:$0xff] %v3161
        %3674 = vst [vmem:[%s310 + $0xef8] sm:$0xff] %v3162
        %3675 = vst [vmem:[%s310 + $0xf00] sm:$0xff] %v3163
        %3676 = vst [vmem:[%s310 + $0xf08] sm:$0xff] %v3164
        %3677 = vst [vmem:[%s310 + $0xf10] sm:$0xff] %v3165
        %3678 = vst [vmem:[%s310 + $0xf18] sm:$0xff] %v3166
        %3679 = vst [vmem:[%s310 + $0xf20] sm:$0xff] %v3167
        %3680 = vst [vmem:[%s310 + $0xf28] sm:$0xff] %v3168
        %3681 = vst [vmem:[%s310 + $0xf30] sm:$0xff] %v3169
        %3682 = vst [vmem:[%s310 + $0xf38] sm:$0xff] %v3170
        %3683 = vst [vmem:[%s310 + $0xf40] sm:$0xff] %v3171
        %3684 = vst [vmem:[%s310 + $0xf48] sm:$0xff] %v3172
        %3685 = vst [vmem:[%s310 + $0xf50] sm:$0xff] %v3173
        %3686 = vst [vmem:[%s310 + $0xf58] sm:$0xff] %v3174
        %3687 = vst [vmem:[%s310 + $0xf60] sm:$0xff] %v3175
        %3688 = vst [vmem:[%s310 + $0xf68] sm:$0xff] %v3176
        %3689 = vst [vmem:[%s310 + $0xf70] sm:$0xff] %v3177
        %3690 = vst [vmem:[%s310 + $0xf78] sm:$0xff] %v3178
        %3691 = vst [vmem:[%s310 + $0xf80] sm:$0xff] %v3179
        %3692 = vst [vmem:[%s310 + $0xf88] sm:$0xff] %v3180
        %3693 = vst [vmem:[%s310 + $0xf90] sm:$0xff] %v3181
        %3694 = vst [vmem:[%s310 + $0xf98] sm:$0xff] %v3182
        %3695 = vst [vmem:[%s310 + $0xfa0] sm:$0xff] %v3183
        %3696 = vst [vmem:[%s310 + $0xfa8] sm:$0xff] %v3184
        %3697 = vst [vmem:[%s310 + $0xfb0] sm:$0xff] %v3185
        %3698 = vst [vmem:[%s310 + $0xfb8] sm:$0xff] %v3186
        %3699 = vst [vmem:[%s310 + $0xfc0] sm:$0xff] %v3187
        %3700 = vst [vmem:[%s310 + $0xfc8] sm:$0xff] %v3188
        %3701 = vst [vmem:[%s310 + $0xfd0] sm:$0xff] %v3189
        %3702 = vst [vmem:[%s310 + $0xfd8] sm:$0xff] %v3190
        %3703 = vst [vmem:[%s310 + $0xfe0] sm:$0xff] %v3191
        %3704 = vst [vmem:[%s310 + $0xfe8] sm:$0xff] %v3192
        %3705 = vst [vmem:[%s310 + $0xff0] sm:$0xff] %v3193
        %3706 = vst [vmem:[%s310 + $0xff8] sm:$0xff] %v3194
        %s3707 = sand.u32 %s90, 1
        %s3708 = sand.u32 %s90, 1
        %s3709 = smul.addr %s3708, 4096
        %s3710 = scalar_lea.vmem [#allocation3], %s3709
        // Predicated region
        $region56: #{fnet_forward.3} parent=50 // pred_check
          %p3711 = pneg %p100
        $region57: #{fnet_forward.3} parent=50 // pred_check_branch
          %3713 = sbr.rel (%p3711) target = $region59
        $region58: #{fnet_forward.3} parent=50 // pred_region
          %s3714 = smul.u32 32, %s14
          %s3715 = smul.addr %s3714, 8
          %s3716 = scalar_lea.vmem %s3, %s3715
          // Predicated region
          $region60: #{fnet_forward.3} parent=58 // pred_check
            _
          $region61: #{fnet_forward.3} parent=58 // pred_check_branch
            %3718 = sbr.rel (0) target = $region63
          $region62: #{fnet_forward.3} parent=58 // pred_region
            // Predicated region
            $region64: #{fnet_forward.3} parent=62 // pred_check
              _
            $region65: #{fnet_forward.3} parent=62 // pred_check_branch
              %3720 = sbr.rel (0) target = $region67
            $region66: #{fnet_forward.3} parent=62 // pred_region
              loop: start=0, step=1, limit=1
              $region68: #{fnet_forward.3} parent=66 // loop_pre_header
                _
              $region69: #{fnet_forward.3} parent=66 // loop_header
                %s3722 = sphi 0, %s3726
                %p3723 = scmp.ge.s32.totalorder %s3722, 1
                %s3727 = sphi %s3710, %s3710
                %s3728 = sphi %s3716, %s3716
              $region70: #{fnet_forward.3} parent=66 // loop_header_branch
                %3725 = sbr.rel (%p3723) target = $region74
              $region71: #{fnet_forward.3} parent=66 // loop_body
                %v3729 = vld [vmem:[%s3727] sm:$0xff]
                %3730 = vst [vmem:[%s3728] sm:$0xff] %v3729
                %v3731 = vld [vmem:[%s3727 + $0x8] sm:$0xff]
                %3732 = vst [vmem:[%s3728 + $0x8] sm:$0xff] %v3731
                %v3733 = vld [vmem:[%s3727 + $0x10] sm:$0xff]
                %3734 = vst [vmem:[%s3728 + $0x10] sm:$0xff] %v3733
                %v3735 = vld [vmem:[%s3727 + $0x18] sm:$0xff]
                %3736 = vst [vmem:[%s3728 + $0x18] sm:$0xff] %v3735
                %v3737 = vld [vmem:[%s3727 + $0x20] sm:$0xff]
                %3738 = vst [vmem:[%s3728 + $0x20] sm:$0xff] %v3737
                %v3739 = vld [vmem:[%s3727 + $0x28] sm:$0xff]
                %3740 = vst [vmem:[%s3728 + $0x28] sm:$0xff] %v3739
                %v3741 = vld [vmem:[%s3727 + $0x30] sm:$0xff]
                %3742 = vst [vmem:[%s3728 + $0x30] sm:$0xff] %v3741
                %v3743 = vld [vmem:[%s3727 + $0x38] sm:$0xff]
                %3744 = vst [vmem:[%s3728 + $0x38] sm:$0xff] %v3743
                %v3745 = vld [vmem:[%s3727 + $0x40] sm:$0xff]
                %3746 = vst [vmem:[%s3728 + $0x40] sm:$0xff] %v3745
                %v3747 = vld [vmem:[%s3727 + $0x48] sm:$0xff]
                %3748 = vst [vmem:[%s3728 + $0x48] sm:$0xff] %v3747
                %v3749 = vld [vmem:[%s3727 + $0x50] sm:$0xff]
                %3750 = vst [vmem:[%s3728 + $0x50] sm:$0xff] %v3749
                %v3751 = vld [vmem:[%s3727 + $0x58] sm:$0xff]
                %3752 = vst [vmem:[%s3728 + $0x58] sm:$0xff] %v3751
                %v3753 = vld [vmem:[%s3727 + $0x60] sm:$0xff]
                %3754 = vst [vmem:[%s3728 + $0x60] sm:$0xff] %v3753
                %v3755 = vld [vmem:[%s3727 + $0x68] sm:$0xff]
                %3756 = vst [vmem:[%s3728 + $0x68] sm:$0xff] %v3755
                %v3757 = vld [vmem:[%s3727 + $0x70] sm:$0xff]
                %3758 = vst [vmem:[%s3728 + $0x70] sm:$0xff] %v3757
                %v3759 = vld [vmem:[%s3727 + $0x78] sm:$0xff]
                %3760 = vst [vmem:[%s3728 + $0x78] sm:$0xff] %v3759
                %v3761 = vld [vmem:[%s3727 + $0x80] sm:$0xff]
                %3762 = vst [vmem:[%s3728 + $0x80] sm:$0xff] %v3761
                %v3763 = vld [vmem:[%s3727 + $0x88] sm:$0xff]
                %3764 = vst [vmem:[%s3728 + $0x88] sm:$0xff] %v3763
                %v3765 = vld [vmem:[%s3727 + $0x90] sm:$0xff]
                %3766 = vst [vmem:[%s3728 + $0x90] sm:$0xff] %v3765
                %v3767 = vld [vmem:[%s3727 + $0x98] sm:$0xff]
                %3768 = vst [vmem:[%s3728 + $0x98] sm:$0xff] %v3767
                %v3769 = vld [vmem:[%s3727 + $0xa0] sm:$0xff]
                %3770 = vst [vmem:[%s3728 + $0xa0] sm:$0xff] %v3769
                %v3771 = vld [vmem:[%s3727 + $0xa8] sm:$0xff]
                %3772 = vst [vmem:[%s3728 + $0xa8] sm:$0xff] %v3771
                %v3773 = vld [vmem:[%s3727 + $0xb0] sm:$0xff]
                %3774 = vst [vmem:[%s3728 + $0xb0] sm:$0xff] %v3773
                %v3775 = vld [vmem:[%s3727 + $0xb8] sm:$0xff]
                %3776 = vst [vmem:[%s3728 + $0xb8] sm:$0xff] %v3775
                %v3777 = vld [vmem:[%s3727 + $0xc0] sm:$0xff]
                %3778 = vst [vmem:[%s3728 + $0xc0] sm:$0xff] %v3777
                %v3779 = vld [vmem:[%s3727 + $0xc8] sm:$0xff]
                %3780 = vst [vmem:[%s3728 + $0xc8] sm:$0xff] %v3779
                %v3781 = vld [vmem:[%s3727 + $0xd0] sm:$0xff]
                %3782 = vst [vmem:[%s3728 + $0xd0] sm:$0xff] %v3781
                %v3783 = vld [vmem:[%s3727 + $0xd8] sm:$0xff]
                %3784 = vst [vmem:[%s3728 + $0xd8] sm:$0xff] %v3783
                %v3785 = vld [vmem:[%s3727 + $0xe0] sm:$0xff]
                %3786 = vst [vmem:[%s3728 + $0xe0] sm:$0xff] %v3785
                %v3787 = vld [vmem:[%s3727 + $0xe8] sm:$0xff]
                %3788 = vst [vmem:[%s3728 + $0xe8] sm:$0xff] %v3787
                %v3789 = vld [vmem:[%s3727 + $0xf0] sm:$0xff]
                %3790 = vst [vmem:[%s3728 + $0xf0] sm:$0xff] %v3789
                %v3791 = vld [vmem:[%s3727 + $0xf8] sm:$0xff]
                %3792 = vst [vmem:[%s3728 + $0xf8] sm:$0xff] %v3791
                %v3793 = vld [vmem:[%s3727 + $0x100] sm:$0xff]
                %3794 = vst [vmem:[%s3728 + $0x800] sm:$0xff] %v3793
                %v3795 = vld [vmem:[%s3727 + $0x108] sm:$0xff]
                %3796 = vst [vmem:[%s3728 + $0x808] sm:$0xff] %v3795
                %v3797 = vld [vmem:[%s3727 + $0x110] sm:$0xff]
                %3798 = vst [vmem:[%s3728 + $0x810] sm:$0xff] %v3797
                %v3799 = vld [vmem:[%s3727 + $0x118] sm:$0xff]
                %3800 = vst [vmem:[%s3728 + $0x818] sm:$0xff] %v3799
                %v3801 = vld [vmem:[%s3727 + $0x120] sm:$0xff]
                %3802 = vst [vmem:[%s3728 + $0x820] sm:$0xff] %v3801
                %v3803 = vld [vmem:[%s3727 + $0x128] sm:$0xff]
                %3804 = vst [vmem:[%s3728 + $0x828] sm:$0xff] %v3803
                %v3805 = vld [vmem:[%s3727 + $0x130] sm:$0xff]
                %3806 = vst [vmem:[%s3728 + $0x830] sm:$0xff] %v3805
                %v3807 = vld [vmem:[%s3727 + $0x138] sm:$0xff]
                %3808 = vst [vmem:[%s3728 + $0x838] sm:$0xff] %v3807
                %v3809 = vld [vmem:[%s3727 + $0x140] sm:$0xff]
                %3810 = vst [vmem:[%s3728 + $0x840] sm:$0xff] %v3809
                %v3811 = vld [vmem:[%s3727 + $0x148] sm:$0xff]
                %3812 = vst [vmem:[%s3728 + $0x848] sm:$0xff] %v3811
                %v3813 = vld [vmem:[%s3727 + $0x150] sm:$0xff]
                %3814 = vst [vmem:[%s3728 + $0x850] sm:$0xff] %v3813
                %v3815 = vld [vmem:[%s3727 + $0x158] sm:$0xff]
                %3816 = vst [vmem:[%s3728 + $0x858] sm:$0xff] %v3815
                %v3817 = vld [vmem:[%s3727 + $0x160] sm:$0xff]
                %3818 = vst [vmem:[%s3728 + $0x860] sm:$0xff] %v3817
                %v3819 = vld [vmem:[%s3727 + $0x168] sm:$0xff]
                %3820 = vst [vmem:[%s3728 + $0x868] sm:$0xff] %v3819
                %v3821 = vld [vmem:[%s3727 + $0x170] sm:$0xff]
                %3822 = vst [vmem:[%s3728 + $0x870] sm:$0xff] %v3821
                %v3823 = vld [vmem:[%s3727 + $0x178] sm:$0xff]
                %3824 = vst [vmem:[%s3728 + $0x878] sm:$0xff] %v3823
                %v3825 = vld [vmem:[%s3727 + $0x180] sm:$0xff]
                %3826 = vst [vmem:[%s3728 + $0x880] sm:$0xff] %v3825
                %v3827 = vld [vmem:[%s3727 + $0x188] sm:$0xff]
                %3828 = vst [vmem:[%s3728 + $0x888] sm:$0xff] %v3827
                %v3829 = vld [vmem:[%s3727 + $0x190] sm:$0xff]
                %3830 = vst [vmem:[%s3728 + $0x890] sm:$0xff] %v3829
                %v3831 = vld [vmem:[%s3727 + $0x198] sm:$0xff]
                %3832 = vst [vmem:[%s3728 + $0x898] sm:$0xff] %v3831
                %v3833 = vld [vmem:[%s3727 + $0x1a0] sm:$0xff]
                %3834 = vst [vmem:[%s3728 + $0x8a0] sm:$0xff] %v3833
                %v3835 = vld [vmem:[%s3727 + $0x1a8] sm:$0xff]
                %3836 = vst [vmem:[%s3728 + $0x8a8] sm:$0xff] %v3835
                %v3837 = vld [vmem:[%s3727 + $0x1b0] sm:$0xff]
                %3838 = vst [vmem:[%s3728 + $0x8b0] sm:$0xff] %v3837
                %v3839 = vld [vmem:[%s3727 + $0x1b8] sm:$0xff]
                %3840 = vst [vmem:[%s3728 + $0x8b8] sm:$0xff] %v3839
                %v3841 = vld [vmem:[%s3727 + $0x1c0] sm:$0xff]
                %3842 = vst [vmem:[%s3728 + $0x8c0] sm:$0xff] %v3841
                %v3843 = vld [vmem:[%s3727 + $0x1c8] sm:$0xff]
                %3844 = vst [vmem:[%s3728 + $0x8c8] sm:$0xff] %v3843
                %v3845 = vld [vmem:[%s3727 + $0x1d0] sm:$0xff]
                %3846 = vst [vmem:[%s3728 + $0x8d0] sm:$0xff] %v3845
                %v3847 = vld [vmem:[%s3727 + $0x1d8] sm:$0xff]
                %3848 = vst [vmem:[%s3728 + $0x8d8] sm:$0xff] %v3847
                %v3849 = vld [vmem:[%s3727 + $0x1e0] sm:$0xff]
                %3850 = vst [vmem:[%s3728 + $0x8e0] sm:$0xff] %v3849
                %v3851 = vld [vmem:[%s3727 + $0x1e8] sm:$0xff]
                %3852 = vst [vmem:[%s3728 + $0x8e8] sm:$0xff] %v3851
                %v3853 = vld [vmem:[%s3727 + $0x1f0] sm:$0xff]
                %3854 = vst [vmem:[%s3728 + $0x8f0] sm:$0xff] %v3853
                %v3855 = vld [vmem:[%s3727 + $0x1f8] sm:$0xff]
                %3856 = vst [vmem:[%s3728 + $0x8f8] sm:$0xff] %v3855
                %v3857 = vld [vmem:[%s3727 + $0x200] sm:$0xff]
                %3858 = vst [vmem:[%s3728 + $0x1000] sm:$0xff] %v3857
                %v3859 = vld [vmem:[%s3727 + $0x208] sm:$0xff]
                %3860 = vst [vmem:[%s3728 + $0x1008] sm:$0xff] %v3859
                %v3861 = vld [vmem:[%s3727 + $0x210] sm:$0xff]
                %3862 = vst [vmem:[%s3728 + $0x1010] sm:$0xff] %v3861
                %v3863 = vld [vmem:[%s3727 + $0x218] sm:$0xff]
                %3864 = vst [vmem:[%s3728 + $0x1018] sm:$0xff] %v3863
                %v3865 = vld [vmem:[%s3727 + $0x220] sm:$0xff]
                %3866 = vst [vmem:[%s3728 + $0x1020] sm:$0xff] %v3865
                %v3867 = vld [vmem:[%s3727 + $0x228] sm:$0xff]
                %3868 = vst [vmem:[%s3728 + $0x1028] sm:$0xff] %v3867
                %v3869 = vld [vmem:[%s3727 + $0x230] sm:$0xff]
                %3870 = vst [vmem:[%s3728 + $0x1030] sm:$0xff] %v3869
                %v3871 = vld [vmem:[%s3727 + $0x238] sm:$0xff]
                %3872 = vst [vmem:[%s3728 + $0x1038] sm:$0xff] %v3871
                %v3873 = vld [vmem:[%s3727 + $0x240] sm:$0xff]
                %3874 = vst [vmem:[%s3728 + $0x1040] sm:$0xff] %v3873
                %v3875 = vld [vmem:[%s3727 + $0x248] sm:$0xff]
                %3876 = vst [vmem:[%s3728 + $0x1048] sm:$0xff] %v3875
                %v3877 = vld [vmem:[%s3727 + $0x250] sm:$0xff]
                %3878 = vst [vmem:[%s3728 + $0x1050] sm:$0xff] %v3877
                %v3879 = vld [vmem:[%s3727 + $0x258] sm:$0xff]
                %3880 = vst [vmem:[%s3728 + $0x1058] sm:$0xff] %v3879
                %v3881 = vld [vmem:[%s3727 + $0x260] sm:$0xff]
                %3882 = vst [vmem:[%s3728 + $0x1060] sm:$0xff] %v3881
                %v3883 = vld [vmem:[%s3727 + $0x268] sm:$0xff]
                %3884 = vst [vmem:[%s3728 + $0x1068] sm:$0xff] %v3883
                %v3885 = vld [vmem:[%s3727 + $0x270] sm:$0xff]
                %3886 = vst [vmem:[%s3728 + $0x1070] sm:$0xff] %v3885
                %v3887 = vld [vmem:[%s3727 + $0x278] sm:$0xff]
                %3888 = vst [vmem:[%s3728 + $0x1078] sm:$0xff] %v3887
                %v3889 = vld [vmem:[%s3727 + $0x280] sm:$0xff]
                %3890 = vst [vmem:[%s3728 + $0x1080] sm:$0xff] %v3889
                %v3891 = vld [vmem:[%s3727 + $0x288] sm:$0xff]
                %3892 = vst [vmem:[%s3728 + $0x1088] sm:$0xff] %v3891
                %v3893 = vld [vmem:[%s3727 + $0x290] sm:$0xff]
                %3894 = vst [vmem:[%s3728 + $0x1090] sm:$0xff] %v3893
                %v3895 = vld [vmem:[%s3727 + $0x298] sm:$0xff]
                %3896 = vst [vmem:[%s3728 + $0x1098] sm:$0xff] %v3895
                %v3897 = vld [vmem:[%s3727 + $0x2a0] sm:$0xff]
                %3898 = vst [vmem:[%s3728 + $0x10a0] sm:$0xff] %v3897
                %v3899 = vld [vmem:[%s3727 + $0x2a8] sm:$0xff]
                %3900 = vst [vmem:[%s3728 + $0x10a8] sm:$0xff] %v3899
                %v3901 = vld [vmem:[%s3727 + $0x2b0] sm:$0xff]
                %3902 = vst [vmem:[%s3728 + $0x10b0] sm:$0xff] %v3901
                %v3903 = vld [vmem:[%s3727 + $0x2b8] sm:$0xff]
                %3904 = vst [vmem:[%s3728 + $0x10b8] sm:$0xff] %v3903
                %v3905 = vld [vmem:[%s3727 + $0x2c0] sm:$0xff]
                %3906 = vst [vmem:[%s3728 + $0x10c0] sm:$0xff] %v3905
                %v3907 = vld [vmem:[%s3727 + $0x2c8] sm:$0xff]
                %3908 = vst [vmem:[%s3728 + $0x10c8] sm:$0xff] %v3907
                %v3909 = vld [vmem:[%s3727 + $0x2d0] sm:$0xff]
                %3910 = vst [vmem:[%s3728 + $0x10d0] sm:$0xff] %v3909
                %v3911 = vld [vmem:[%s3727 + $0x2d8] sm:$0xff]
                %3912 = vst [vmem:[%s3728 + $0x10d8] sm:$0xff] %v3911
                %v3913 = vld [vmem:[%s3727 + $0x2e0] sm:$0xff]
                %3914 = vst [vmem:[%s3728 + $0x10e0] sm:$0xff] %v3913
                %v3915 = vld [vmem:[%s3727 + $0x2e8] sm:$0xff]
                %3916 = vst [vmem:[%s3728 + $0x10e8] sm:$0xff] %v3915
                %v3917 = vld [vmem:[%s3727 + $0x2f0] sm:$0xff]
                %3918 = vst [vmem:[%s3728 + $0x10f0] sm:$0xff] %v3917
                %v3919 = vld [vmem:[%s3727 + $0x2f8] sm:$0xff]
                %3920 = vst [vmem:[%s3728 + $0x10f8] sm:$0xff] %v3919
                %v3921 = vld [vmem:[%s3727 + $0x300] sm:$0xff]
                %3922 = vst [vmem:[%s3728 + $0x1800] sm:$0xff] %v3921
                %v3923 = vld [vmem:[%s3727 + $0x308] sm:$0xff]
                %3924 = vst [vmem:[%s3728 + $0x1808] sm:$0xff] %v3923
                %v3925 = vld [vmem:[%s3727 + $0x310] sm:$0xff]
                %3926 = vst [vmem:[%s3728 + $0x1810] sm:$0xff] %v3925
                %v3927 = vld [vmem:[%s3727 + $0x318] sm:$0xff]
                %3928 = vst [vmem:[%s3728 + $0x1818] sm:$0xff] %v3927
                %v3929 = vld [vmem:[%s3727 + $0x320] sm:$0xff]
                %3930 = vst [vmem:[%s3728 + $0x1820] sm:$0xff] %v3929
                %v3931 = vld [vmem:[%s3727 + $0x328] sm:$0xff]
                %3932 = vst [vmem:[%s3728 + $0x1828] sm:$0xff] %v3931
                %v3933 = vld [vmem:[%s3727 + $0x330] sm:$0xff]
                %3934 = vst [vmem:[%s3728 + $0x1830] sm:$0xff] %v3933
                %v3935 = vld [vmem:[%s3727 + $0x338] sm:$0xff]
                %3936 = vst [vmem:[%s3728 + $0x1838] sm:$0xff] %v3935
                %v3937 = vld [vmem:[%s3727 + $0x340] sm:$0xff]
                %3938 = vst [vmem:[%s3728 + $0x1840] sm:$0xff] %v3937
                %v3939 = vld [vmem:[%s3727 + $0x348] sm:$0xff]
                %3940 = vst [vmem:[%s3728 + $0x1848] sm:$0xff] %v3939
                %v3941 = vld [vmem:[%s3727 + $0x350] sm:$0xff]
                %3942 = vst [vmem:[%s3728 + $0x1850] sm:$0xff] %v3941
                %v3943 = vld [vmem:[%s3727 + $0x358] sm:$0xff]
                %3944 = vst [vmem:[%s3728 + $0x1858] sm:$0xff] %v3943
                %v3945 = vld [vmem:[%s3727 + $0x360] sm:$0xff]
                %3946 = vst [vmem:[%s3728 + $0x1860] sm:$0xff] %v3945
                %v3947 = vld [vmem:[%s3727 + $0x368] sm:$0xff]
                %3948 = vst [vmem:[%s3728 + $0x1868] sm:$0xff] %v3947
                %v3949 = vld [vmem:[%s3727 + $0x370] sm:$0xff]
                %3950 = vst [vmem:[%s3728 + $0x1870] sm:$0xff] %v3949
                %v3951 = vld [vmem:[%s3727 + $0x378] sm:$0xff]
                %3952 = vst [vmem:[%s3728 + $0x1878] sm:$0xff] %v3951
                %v3953 = vld [vmem:[%s3727 + $0x380] sm:$0xff]
                %3954 = vst [vmem:[%s3728 + $0x1880] sm:$0xff] %v3953
                %v3955 = vld [vmem:[%s3727 + $0x388] sm:$0xff]
                %3956 = vst [vmem:[%s3728 + $0x1888] sm:$0xff] %v3955
                %v3957 = vld [vmem:[%s3727 + $0x390] sm:$0xff]
                %3958 = vst [vmem:[%s3728 + $0x1890] sm:$0xff] %v3957
                %v3959 = vld [vmem:[%s3727 + $0x398] sm:$0xff]
                %3960 = vst [vmem:[%s3728 + $0x1898] sm:$0xff] %v3959
                %v3961 = vld [vmem:[%s3727 + $0x3a0] sm:$0xff]
                %3962 = vst [vmem:[%s3728 + $0x18a0] sm:$0xff] %v3961
                %v3963 = vld [vmem:[%s3727 + $0x3a8] sm:$0xff]
                %3964 = vst [vmem:[%s3728 + $0x18a8] sm:$0xff] %v3963
                %v3965 = vld [vmem:[%s3727 + $0x3b0] sm:$0xff]
                %3966 = vst [vmem:[%s3728 + $0x18b0] sm:$0xff] %v3965
                %v3967 = vld [vmem:[%s3727 + $0x3b8] sm:$0xff]
                %3968 = vst [vmem:[%s3728 + $0x18b8] sm:$0xff] %v3967
                %v3969 = vld [vmem:[%s3727 + $0x3c0] sm:$0xff]
                %3970 = vst [vmem:[%s3728 + $0x18c0] sm:$0xff] %v3969
                %v3971 = vld [vmem:[%s3727 + $0x3c8] sm:$0xff]
                %3972 = vst [vmem:[%s3728 + $0x18c8] sm:$0xff] %v3971
                %v3973 = vld [vmem:[%s3727 + $0x3d0] sm:$0xff]
                %3974 = vst [vmem:[%s3728 + $0x18d0] sm:$0xff] %v3973
                %v3975 = vld [vmem:[%s3727 + $0x3d8] sm:$0xff]
                %3976 = vst [vmem:[%s3728 + $0x18d8] sm:$0xff] %v3975
                %v3977 = vld [vmem:[%s3727 + $0x3e0] sm:$0xff]
                %3978 = vst [vmem:[%s3728 + $0x18e0] sm:$0xff] %v3977
                %v3979 = vld [vmem:[%s3727 + $0x3e8] sm:$0xff]
                %3980 = vst [vmem:[%s3728 + $0x18e8] sm:$0xff] %v3979
                %v3981 = vld [vmem:[%s3727 + $0x3f0] sm:$0xff]
                %3982 = vst [vmem:[%s3728 + $0x18f0] sm:$0xff] %v3981
                %v3983 = vld [vmem:[%s3727 + $0x3f8] sm:$0xff]
                %3984 = vst [vmem:[%s3728 + $0x18f8] sm:$0xff] %v3983
                %v3985 = vld [vmem:[%s3727 + $0x400] sm:$0xff]
                %3986 = vst [vmem:[%s3728 + $0x2000] sm:$0xff] %v3985
                %v3987 = vld [vmem:[%s3727 + $0x408] sm:$0xff]
                %3988 = vst [vmem:[%s3728 + $0x2008] sm:$0xff] %v3987
                %v3989 = vld [vmem:[%s3727 + $0x410] sm:$0xff]
                %3990 = vst [vmem:[%s3728 + $0x2010] sm:$0xff] %v3989
                %v3991 = vld [vmem:[%s3727 + $0x418] sm:$0xff]
                %3992 = vst [vmem:[%s3728 + $0x2018] sm:$0xff] %v3991
                %v3993 = vld [vmem:[%s3727 + $0x420] sm:$0xff]
                %3994 = vst [vmem:[%s3728 + $0x2020] sm:$0xff] %v3993
                %v3995 = vld [vmem:[%s3727 + $0x428] sm:$0xff]
                %3996 = vst [vmem:[%s3728 + $0x2028] sm:$0xff] %v3995
                %v3997 = vld [vmem:[%s3727 + $0x430] sm:$0xff]
                %3998 = vst [vmem:[%s3728 + $0x2030] sm:$0xff] %v3997
                %v3999 = vld [vmem:[%s3727 + $0x438] sm:$0xff]
                %4000 = vst [vmem:[%s3728 + $0x2038] sm:$0xff] %v3999
                %v4001 = vld [vmem:[%s3727 + $0x440] sm:$0xff]
                %4002 = vst [vmem:[%s3728 + $0x2040] sm:$0xff] %v4001
                %v4003 = vld [vmem:[%s3727 + $0x448] sm:$0xff]
                %4004 = vst [vmem:[%s3728 + $0x2048] sm:$0xff] %v4003
                %v4005 = vld [vmem:[%s3727 + $0x450] sm:$0xff]
                %4006 = vst [vmem:[%s3728 + $0x2050] sm:$0xff] %v4005
                %v4007 = vld [vmem:[%s3727 + $0x458] sm:$0xff]
                %4008 = vst [vmem:[%s3728 + $0x2058] sm:$0xff] %v4007
                %v4009 = vld [vmem:[%s3727 + $0x460] sm:$0xff]
                %4010 = vst [vmem:[%s3728 + $0x2060] sm:$0xff] %v4009
                %v4011 = vld [vmem:[%s3727 + $0x468] sm:$0xff]
                %4012 = vst [vmem:[%s3728 + $0x2068] sm:$0xff] %v4011
                %v4013 = vld [vmem:[%s3727 + $0x470] sm:$0xff]
                %4014 = vst [vmem:[%s3728 + $0x2070] sm:$0xff] %v4013
                %v4015 = vld [vmem:[%s3727 + $0x478] sm:$0xff]
                %4016 = vst [vmem:[%s3728 + $0x2078] sm:$0xff] %v4015
                %v4017 = vld [vmem:[%s3727 + $0x480] sm:$0xff]
                %4018 = vst [vmem:[%s3728 + $0x2080] sm:$0xff] %v4017
                %v4019 = vld [vmem:[%s3727 + $0x488] sm:$0xff]
                %4020 = vst [vmem:[%s3728 + $0x2088] sm:$0xff] %v4019
                %v4021 = vld [vmem:[%s3727 + $0x490] sm:$0xff]
                %4022 = vst [vmem:[%s3728 + $0x2090] sm:$0xff] %v4021
                %v4023 = vld [vmem:[%s3727 + $0x498] sm:$0xff]
                %4024 = vst [vmem:[%s3728 + $0x2098] sm:$0xff] %v4023
                %v4025 = vld [vmem:[%s3727 + $0x4a0] sm:$0xff]
                %4026 = vst [vmem:[%s3728 + $0x20a0] sm:$0xff] %v4025
                %v4027 = vld [vmem:[%s3727 + $0x4a8] sm:$0xff]
                %4028 = vst [vmem:[%s3728 + $0x20a8] sm:$0xff] %v4027
                %v4029 = vld [vmem:[%s3727 + $0x4b0] sm:$0xff]
                %4030 = vst [vmem:[%s3728 + $0x20b0] sm:$0xff] %v4029
                %v4031 = vld [vmem:[%s3727 + $0x4b8] sm:$0xff]
                %4032 = vst [vmem:[%s3728 + $0x20b8] sm:$0xff] %v4031
                %v4033 = vld [vmem:[%s3727 + $0x4c0] sm:$0xff]
                %4034 = vst [vmem:[%s3728 + $0x20c0] sm:$0xff] %v4033
                %v4035 = vld [vmem:[%s3727 + $0x4c8] sm:$0xff]
                %4036 = vst [vmem:[%s3728 + $0x20c8] sm:$0xff] %v4035
                %v4037 = vld [vmem:[%s3727 + $0x4d0] sm:$0xff]
                %4038 = vst [vmem:[%s3728 + $0x20d0] sm:$0xff] %v4037
                %v4039 = vld [vmem:[%s3727 + $0x4d8] sm:$0xff]
                %4040 = vst [vmem:[%s3728 + $0x20d8] sm:$0xff] %v4039
                %v4041 = vld [vmem:[%s3727 + $0x4e0] sm:$0xff]
                %4042 = vst [vmem:[%s3728 + $0x20e0] sm:$0xff] %v4041
                %v4043 = vld [vmem:[%s3727 + $0x4e8] sm:$0xff]
                %4044 = vst [vmem:[%s3728 + $0x20e8] sm:$0xff] %v4043
                %v4045 = vld [vmem:[%s3727 + $0x4f0] sm:$0xff]
                %4046 = vst [vmem:[%s3728 + $0x20f0] sm:$0xff] %v4045
                %v4047 = vld [vmem:[%s3727 + $0x4f8] sm:$0xff]
                %4048 = vst [vmem:[%s3728 + $0x20f8] sm:$0xff] %v4047
                %v4049 = vld [vmem:[%s3727 + $0x500] sm:$0xff]
                %4050 = vst [vmem:[%s3728 + $0x2800] sm:$0xff] %v4049
                %v4051 = vld [vmem:[%s3727 + $0x508] sm:$0xff]
                %4052 = vst [vmem:[%s3728 + $0x2808] sm:$0xff] %v4051
                %v4053 = vld [vmem:[%s3727 + $0x510] sm:$0xff]
                %4054 = vst [vmem:[%s3728 + $0x2810] sm:$0xff] %v4053
                %v4055 = vld [vmem:[%s3727 + $0x518] sm:$0xff]
                %4056 = vst [vmem:[%s3728 + $0x2818] sm:$0xff] %v4055
                %v4057 = vld [vmem:[%s3727 + $0x520] sm:$0xff]
                %4058 = vst [vmem:[%s3728 + $0x2820] sm:$0xff] %v4057
                %v4059 = vld [vmem:[%s3727 + $0x528] sm:$0xff]
                %4060 = vst [vmem:[%s3728 + $0x2828] sm:$0xff] %v4059
                %v4061 = vld [vmem:[%s3727 + $0x530] sm:$0xff]
                %4062 = vst [vmem:[%s3728 + $0x2830] sm:$0xff] %v4061
                %v4063 = vld [vmem:[%s3727 + $0x538] sm:$0xff]
                %4064 = vst [vmem:[%s3728 + $0x2838] sm:$0xff] %v4063
                %v4065 = vld [vmem:[%s3727 + $0x540] sm:$0xff]
                %4066 = vst [vmem:[%s3728 + $0x2840] sm:$0xff] %v4065
                %v4067 = vld [vmem:[%s3727 + $0x548] sm:$0xff]
                %4068 = vst [vmem:[%s3728 + $0x2848] sm:$0xff] %v4067
                %v4069 = vld [vmem:[%s3727 + $0x550] sm:$0xff]
                %4070 = vst [vmem:[%s3728 + $0x2850] sm:$0xff] %v4069
                %v4071 = vld [vmem:[%s3727 + $0x558] sm:$0xff]
                %4072 = vst [vmem:[%s3728 + $0x2858] sm:$0xff] %v4071
                %v4073 = vld [vmem:[%s3727 + $0x560] sm:$0xff]
                %4074 = vst [vmem:[%s3728 + $0x2860] sm:$0xff] %v4073
                %v4075 = vld [vmem:[%s3727 + $0x568] sm:$0xff]
                %4076 = vst [vmem:[%s3728 + $0x2868] sm:$0xff] %v4075
                %v4077 = vld [vmem:[%s3727 + $0x570] sm:$0xff]
                %4078 = vst [vmem:[%s3728 + $0x2870] sm:$0xff] %v4077
                %v4079 = vld [vmem:[%s3727 + $0x578] sm:$0xff]
                %4080 = vst [vmem:[%s3728 + $0x2878] sm:$0xff] %v4079
                %v4081 = vld [vmem:[%s3727 + $0x580] sm:$0xff]
                %4082 = vst [vmem:[%s3728 + $0x2880] sm:$0xff] %v4081
                %v4083 = vld [vmem:[%s3727 + $0x588] sm:$0xff]
                %4084 = vst [vmem:[%s3728 + $0x2888] sm:$0xff] %v4083
                %v4085 = vld [vmem:[%s3727 + $0x590] sm:$0xff]
                %4086 = vst [vmem:[%s3728 + $0x2890] sm:$0xff] %v4085
                %v4087 = vld [vmem:[%s3727 + $0x598] sm:$0xff]
                %4088 = vst [vmem:[%s3728 + $0x2898] sm:$0xff] %v4087
                %v4089 = vld [vmem:[%s3727 + $0x5a0] sm:$0xff]
                %4090 = vst [vmem:[%s3728 + $0x28a0] sm:$0xff] %v4089
                %v4091 = vld [vmem:[%s3727 + $0x5a8] sm:$0xff]
                %4092 = vst [vmem:[%s3728 + $0x28a8] sm:$0xff] %v4091
                %v4093 = vld [vmem:[%s3727 + $0x5b0] sm:$0xff]
                %4094 = vst [vmem:[%s3728 + $0x28b0] sm:$0xff] %v4093
                %v4095 = vld [vmem:[%s3727 + $0x5b8] sm:$0xff]
                %4096 = vst [vmem:[%s3728 + $0x28b8] sm:$0xff] %v4095
                %v4097 = vld [vmem:[%s3727 + $0x5c0] sm:$0xff]
                %4098 = vst [vmem:[%s3728 + $0x28c0] sm:$0xff] %v4097
                %v4099 = vld [vmem:[%s3727 + $0x5c8] sm:$0xff]
                %4100 = vst [vmem:[%s3728 + $0x28c8] sm:$0xff] %v4099
                %v4101 = vld [vmem:[%s3727 + $0x5d0] sm:$0xff]
                %4102 = vst [vmem:[%s3728 + $0x28d0] sm:$0xff] %v4101
                %v4103 = vld [vmem:[%s3727 + $0x5d8] sm:$0xff]
                %4104 = vst [vmem:[%s3728 + $0x28d8] sm:$0xff] %v4103
                %v4105 = vld [vmem:[%s3727 + $0x5e0] sm:$0xff]
                %4106 = vst [vmem:[%s3728 + $0x28e0] sm:$0xff] %v4105
                %v4107 = vld [vmem:[%s3727 + $0x5e8] sm:$0xff]
                %4108 = vst [vmem:[%s3728 + $0x28e8] sm:$0xff] %v4107
                %v4109 = vld [vmem:[%s3727 + $0x5f0] sm:$0xff]
                %4110 = vst [vmem:[%s3728 + $0x28f0] sm:$0xff] %v4109
                %v4111 = vld [vmem:[%s3727 + $0x5f8] sm:$0xff]
                %4112 = vst [vmem:[%s3728 + $0x28f8] sm:$0xff] %v4111
                %v4113 = vld [vmem:[%s3727 + $0x600] sm:$0xff]
                %4114 = vst [vmem:[%s3728 + $0x3000] sm:$0xff] %v4113
                %v4115 = vld [vmem:[%s3727 + $0x608] sm:$0xff]
                %4116 = vst [vmem:[%s3728 + $0x3008] sm:$0xff] %v4115
                %v4117 = vld [vmem:[%s3727 + $0x610] sm:$0xff]
                %4118 = vst [vmem:[%s3728 + $0x3010] sm:$0xff] %v4117
                %v4119 = vld [vmem:[%s3727 + $0x618] sm:$0xff]
                %4120 = vst [vmem:[%s3728 + $0x3018] sm:$0xff] %v4119
                %v4121 = vld [vmem:[%s3727 + $0x620] sm:$0xff]
                %4122 = vst [vmem:[%s3728 + $0x3020] sm:$0xff] %v4121
                %v4123 = vld [vmem:[%s3727 + $0x628] sm:$0xff]
                %4124 = vst [vmem:[%s3728 + $0x3028] sm:$0xff] %v4123
                %v4125 = vld [vmem:[%s3727 + $0x630] sm:$0xff]
                %4126 = vst [vmem:[%s3728 + $0x3030] sm:$0xff] %v4125
                %v4127 = vld [vmem:[%s3727 + $0x638] sm:$0xff]
                %4128 = vst [vmem:[%s3728 + $0x3038] sm:$0xff] %v4127
                %v4129 = vld [vmem:[%s3727 + $0x640] sm:$0xff]
                %4130 = vst [vmem:[%s3728 + $0x3040] sm:$0xff] %v4129
                %v4131 = vld [vmem:[%s3727 + $0x648] sm:$0xff]
                %4132 = vst [vmem:[%s3728 + $0x3048] sm:$0xff] %v4131
                %v4133 = vld [vmem:[%s3727 + $0x650] sm:$0xff]
                %4134 = vst [vmem:[%s3728 + $0x3050] sm:$0xff] %v4133
                %v4135 = vld [vmem:[%s3727 + $0x658] sm:$0xff]
                %4136 = vst [vmem:[%s3728 + $0x3058] sm:$0xff] %v4135
                %v4137 = vld [vmem:[%s3727 + $0x660] sm:$0xff]
                %4138 = vst [vmem:[%s3728 + $0x3060] sm:$0xff] %v4137
                %v4139 = vld [vmem:[%s3727 + $0x668] sm:$0xff]
                %4140 = vst [vmem:[%s3728 + $0x3068] sm:$0xff] %v4139
                %v4141 = vld [vmem:[%s3727 + $0x670] sm:$0xff]
                %4142 = vst [vmem:[%s3728 + $0x3070] sm:$0xff] %v4141
                %v4143 = vld [vmem:[%s3727 + $0x678] sm:$0xff]
                %4144 = vst [vmem:[%s3728 + $0x3078] sm:$0xff] %v4143
                %v4145 = vld [vmem:[%s3727 + $0x680] sm:$0xff]
                %4146 = vst [vmem:[%s3728 + $0x3080] sm:$0xff] %v4145
                %v4147 = vld [vmem:[%s3727 + $0x688] sm:$0xff]
                %4148 = vst [vmem:[%s3728 + $0x3088] sm:$0xff] %v4147
                %v4149 = vld [vmem:[%s3727 + $0x690] sm:$0xff]
                %4150 = vst [vmem:[%s3728 + $0x3090] sm:$0xff] %v4149
                %v4151 = vld [vmem:[%s3727 + $0x698] sm:$0xff]
                %4152 = vst [vmem:[%s3728 + $0x3098] sm:$0xff] %v4151
                %v4153 = vld [vmem:[%s3727 + $0x6a0] sm:$0xff]
                %4154 = vst [vmem:[%s3728 + $0x30a0] sm:$0xff] %v4153
                %v4155 = vld [vmem:[%s3727 + $0x6a8] sm:$0xff]
                %4156 = vst [vmem:[%s3728 + $0x30a8] sm:$0xff] %v4155
                %v4157 = vld [vmem:[%s3727 + $0x6b0] sm:$0xff]
                %4158 = vst [vmem:[%s3728 + $0x30b0] sm:$0xff] %v4157
                %v4159 = vld [vmem:[%s3727 + $0x6b8] sm:$0xff]
                %4160 = vst [vmem:[%s3728 + $0x30b8] sm:$0xff] %v4159
                %v4161 = vld [vmem:[%s3727 + $0x6c0] sm:$0xff]
                %4162 = vst [vmem:[%s3728 + $0x30c0] sm:$0xff] %v4161
                %v4163 = vld [vmem:[%s3727 + $0x6c8] sm:$0xff]
                %4164 = vst [vmem:[%s3728 + $0x30c8] sm:$0xff] %v4163
                %v4165 = vld [vmem:[%s3727 + $0x6d0] sm:$0xff]
                %4166 = vst [vmem:[%s3728 + $0x30d0] sm:$0xff] %v4165
                %v4167 = vld [vmem:[%s3727 + $0x6d8] sm:$0xff]
                %4168 = vst [vmem:[%s3728 + $0x30d8] sm:$0xff] %v4167
                %v4169 = vld [vmem:[%s3727 + $0x6e0] sm:$0xff]
                %4170 = vst [vmem:[%s3728 + $0x30e0] sm:$0xff] %v4169
                %v4171 = vld [vmem:[%s3727 + $0x6e8] sm:$0xff]
                %4172 = vst [vmem:[%s3728 + $0x30e8] sm:$0xff] %v4171
                %v4173 = vld [vmem:[%s3727 + $0x6f0] sm:$0xff]
                %4174 = vst [vmem:[%s3728 + $0x30f0] sm:$0xff] %v4173
                %v4175 = vld [vmem:[%s3727 + $0x6f8] sm:$0xff]
                %4176 = vst [vmem:[%s3728 + $0x30f8] sm:$0xff] %v4175
                %v4177 = vld [vmem:[%s3727 + $0x700] sm:$0xff]
                %4178 = vst [vmem:[%s3728 + $0x3800] sm:$0xff] %v4177
                %v4179 = vld [vmem:[%s3727 + $0x708] sm:$0xff]
                %4180 = vst [vmem:[%s3728 + $0x3808] sm:$0xff] %v4179
                %v4181 = vld [vmem:[%s3727 + $0x710] sm:$0xff]
                %4182 = vst [vmem:[%s3728 + $0x3810] sm:$0xff] %v4181
                %v4183 = vld [vmem:[%s3727 + $0x718] sm:$0xff]
                %4184 = vst [vmem:[%s3728 + $0x3818] sm:$0xff] %v4183
                %v4185 = vld [vmem:[%s3727 + $0x720] sm:$0xff]
                %4186 = vst [vmem:[%s3728 + $0x3820] sm:$0xff] %v4185
                %v4187 = vld [vmem:[%s3727 + $0x728] sm:$0xff]
                %4188 = vst [vmem:[%s3728 + $0x3828] sm:$0xff] %v4187
                %v4189 = vld [vmem:[%s3727 + $0x730] sm:$0xff]
                %4190 = vst [vmem:[%s3728 + $0x3830] sm:$0xff] %v4189
                %v4191 = vld [vmem:[%s3727 + $0x738] sm:$0xff]
                %4192 = vst [vmem:[%s3728 + $0x3838] sm:$0xff] %v4191
                %v4193 = vld [vmem:[%s3727 + $0x740] sm:$0xff]
                %4194 = vst [vmem:[%s3728 + $0x3840] sm:$0xff] %v4193
                %v4195 = vld [vmem:[%s3727 + $0x748] sm:$0xff]
                %4196 = vst [vmem:[%s3728 + $0x3848] sm:$0xff] %v4195
                %v4197 = vld [vmem:[%s3727 + $0x750] sm:$0xff]
                %4198 = vst [vmem:[%s3728 + $0x3850] sm:$0xff] %v4197
                %v4199 = vld [vmem:[%s3727 + $0x758] sm:$0xff]
                %4200 = vst [vmem:[%s3728 + $0x3858] sm:$0xff] %v4199
                %v4201 = vld [vmem:[%s3727 + $0x760] sm:$0xff]
                %4202 = vst [vmem:[%s3728 + $0x3860] sm:$0xff] %v4201
                %v4203 = vld [vmem:[%s3727 + $0x768] sm:$0xff]
                %4204 = vst [vmem:[%s3728 + $0x3868] sm:$0xff] %v4203
                %v4205 = vld [vmem:[%s3727 + $0x770] sm:$0xff]
                %4206 = vst [vmem:[%s3728 + $0x3870] sm:$0xff] %v4205
                %v4207 = vld [vmem:[%s3727 + $0x778] sm:$0xff]
                %4208 = vst [vmem:[%s3728 + $0x3878] sm:$0xff] %v4207
                %v4209 = vld [vmem:[%s3727 + $0x780] sm:$0xff]
                %4210 = vst [vmem:[%s3728 + $0x3880] sm:$0xff] %v4209
                %v4211 = vld [vmem:[%s3727 + $0x788] sm:$0xff]
                %4212 = vst [vmem:[%s3728 + $0x3888] sm:$0xff] %v4211
                %v4213 = vld [vmem:[%s3727 + $0x790] sm:$0xff]
                %4214 = vst [vmem:[%s3728 + $0x3890] sm:$0xff] %v4213
                %v4215 = vld [vmem:[%s3727 + $0x798] sm:$0xff]
                %4216 = vst [vmem:[%s3728 + $0x3898] sm:$0xff] %v4215
                %v4217 = vld [vmem:[%s3727 + $0x7a0] sm:$0xff]
                %4218 = vst [vmem:[%s3728 + $0x38a0] sm:$0xff] %v4217
                %v4219 = vld [vmem:[%s3727 + $0x7a8] sm:$0xff]
                %4220 = vst [vmem:[%s3728 + $0x38a8] sm:$0xff] %v4219
                %v4221 = vld [vmem:[%s3727 + $0x7b0] sm:$0xff]
                %4222 = vst [vmem:[%s3728 + $0x38b0] sm:$0xff] %v4221
                %v4223 = vld [vmem:[%s3727 + $0x7b8] sm:$0xff]
                %4224 = vst [vmem:[%s3728 + $0x38b8] sm:$0xff] %v4223
                %v4225 = vld [vmem:[%s3727 + $0x7c0] sm:$0xff]
                %4226 = vst [vmem:[%s3728 + $0x38c0] sm:$0xff] %v4225
                %v4227 = vld [vmem:[%s3727 + $0x7c8] sm:$0xff]
                %4228 = vst [vmem:[%s3728 + $0x38c8] sm:$0xff] %v4227
                %v4229 = vld [vmem:[%s3727 + $0x7d0] sm:$0xff]
                %4230 = vst [vmem:[%s3728 + $0x38d0] sm:$0xff] %v4229
                %v4231 = vld [vmem:[%s3727 + $0x7d8] sm:$0xff]
                %4232 = vst [vmem:[%s3728 + $0x38d8] sm:$0xff] %v4231
                %v4233 = vld [vmem:[%s3727 + $0x7e0] sm:$0xff]
                %4234 = vst [vmem:[%s3728 + $0x38e0] sm:$0xff] %v4233
                %v4235 = vld [vmem:[%s3727 + $0x7e8] sm:$0xff]
                %4236 = vst [vmem:[%s3728 + $0x38e8] sm:$0xff] %v4235
                %v4237 = vld [vmem:[%s3727 + $0x7f0] sm:$0xff]
                %4238 = vst [vmem:[%s3728 + $0x38f0] sm:$0xff] %v4237
                %v4239 = vld [vmem:[%s3727 + $0x7f8] sm:$0xff]
                %4240 = vst [vmem:[%s3728 + $0x38f8] sm:$0xff] %v4239
                %v4241 = vld [vmem:[%s3727 + $0x800] sm:$0xff]
                %4242 = vst [vmem:[%s3728 + $0x4000] sm:$0xff] %v4241
                %v4243 = vld [vmem:[%s3727 + $0x808] sm:$0xff]
                %4244 = vst [vmem:[%s3728 + $0x4008] sm:$0xff] %v4243
                %v4245 = vld [vmem:[%s3727 + $0x810] sm:$0xff]
                %4246 = vst [vmem:[%s3728 + $0x4010] sm:$0xff] %v4245
                %v4247 = vld [vmem:[%s3727 + $0x818] sm:$0xff]
                %4248 = vst [vmem:[%s3728 + $0x4018] sm:$0xff] %v4247
                %v4249 = vld [vmem:[%s3727 + $0x820] sm:$0xff]
                %4250 = vst [vmem:[%s3728 + $0x4020] sm:$0xff] %v4249
                %v4251 = vld [vmem:[%s3727 + $0x828] sm:$0xff]
                %4252 = vst [vmem:[%s3728 + $0x4028] sm:$0xff] %v4251
                %v4253 = vld [vmem:[%s3727 + $0x830] sm:$0xff]
                %4254 = vst [vmem:[%s3728 + $0x4030] sm:$0xff] %v4253
                %v4255 = vld [vmem:[%s3727 + $0x838] sm:$0xff]
                %4256 = vst [vmem:[%s3728 + $0x4038] sm:$0xff] %v4255
                %v4257 = vld [vmem:[%s3727 + $0x840] sm:$0xff]
                %4258 = vst [vmem:[%s3728 + $0x4040] sm:$0xff] %v4257
                %v4259 = vld [vmem:[%s3727 + $0x848] sm:$0xff]
                %4260 = vst [vmem:[%s3728 + $0x4048] sm:$0xff] %v4259
                %v4261 = vld [vmem:[%s3727 + $0x850] sm:$0xff]
                %4262 = vst [vmem:[%s3728 + $0x4050] sm:$0xff] %v4261
                %v4263 = vld [vmem:[%s3727 + $0x858] sm:$0xff]
                %4264 = vst [vmem:[%s3728 + $0x4058] sm:$0xff] %v4263
                %v4265 = vld [vmem:[%s3727 + $0x860] sm:$0xff]
                %4266 = vst [vmem:[%s3728 + $0x4060] sm:$0xff] %v4265
                %v4267 = vld [vmem:[%s3727 + $0x868] sm:$0xff]
                %4268 = vst [vmem:[%s3728 + $0x4068] sm:$0xff] %v4267
                %v4269 = vld [vmem:[%s3727 + $0x870] sm:$0xff]
                %4270 = vst [vmem:[%s3728 + $0x4070] sm:$0xff] %v4269
                %v4271 = vld [vmem:[%s3727 + $0x878] sm:$0xff]
                %4272 = vst [vmem:[%s3728 + $0x4078] sm:$0xff] %v4271
                %v4273 = vld [vmem:[%s3727 + $0x880] sm:$0xff]
                %4274 = vst [vmem:[%s3728 + $0x4080] sm:$0xff] %v4273
                %v4275 = vld [vmem:[%s3727 + $0x888] sm:$0xff]
                %4276 = vst [vmem:[%s3728 + $0x4088] sm:$0xff] %v4275
                %v4277 = vld [vmem:[%s3727 + $0x890] sm:$0xff]
                %4278 = vst [vmem:[%s3728 + $0x4090] sm:$0xff] %v4277
                %v4279 = vld [vmem:[%s3727 + $0x898] sm:$0xff]
                %4280 = vst [vmem:[%s3728 + $0x4098] sm:$0xff] %v4279
                %v4281 = vld [vmem:[%s3727 + $0x8a0] sm:$0xff]
                %4282 = vst [vmem:[%s3728 + $0x40a0] sm:$0xff] %v4281
                %v4283 = vld [vmem:[%s3727 + $0x8a8] sm:$0xff]
                %4284 = vst [vmem:[%s3728 + $0x40a8] sm:$0xff] %v4283
                %v4285 = vld [vmem:[%s3727 + $0x8b0] sm:$0xff]
                %4286 = vst [vmem:[%s3728 + $0x40b0] sm:$0xff] %v4285
                %v4287 = vld [vmem:[%s3727 + $0x8b8] sm:$0xff]
                %4288 = vst [vmem:[%s3728 + $0x40b8] sm:$0xff] %v4287
                %v4289 = vld [vmem:[%s3727 + $0x8c0] sm:$0xff]
                %4290 = vst [vmem:[%s3728 + $0x40c0] sm:$0xff] %v4289
                %v4291 = vld [vmem:[%s3727 + $0x8c8] sm:$0xff]
                %4292 = vst [vmem:[%s3728 + $0x40c8] sm:$0xff] %v4291
                %v4293 = vld [vmem:[%s3727 + $0x8d0] sm:$0xff]
                %4294 = vst [vmem:[%s3728 + $0x40d0] sm:$0xff] %v4293
                %v4295 = vld [vmem:[%s3727 + $0x8d8] sm:$0xff]
                %4296 = vst [vmem:[%s3728 + $0x40d8] sm:$0xff] %v4295
                %v4297 = vld [vmem:[%s3727 + $0x8e0] sm:$0xff]
                %4298 = vst [vmem:[%s3728 + $0x40e0] sm:$0xff] %v4297
                %v4299 = vld [vmem:[%s3727 + $0x8e8] sm:$0xff]
                %4300 = vst [vmem:[%s3728 + $0x40e8] sm:$0xff] %v4299
                %v4301 = vld [vmem:[%s3727 + $0x8f0] sm:$0xff]
                %4302 = vst [vmem:[%s3728 + $0x40f0] sm:$0xff] %v4301
                %v4303 = vld [vmem:[%s3727 + $0x8f8] sm:$0xff]
                %4304 = vst [vmem:[%s3728 + $0x40f8] sm:$0xff] %v4303
                %v4305 = vld [vmem:[%s3727 + $0x900] sm:$0xff]
                %4306 = vst [vmem:[%s3728 + $0x4800] sm:$0xff] %v4305
                %v4307 = vld [vmem:[%s3727 + $0x908] sm:$0xff]
                %4308 = vst [vmem:[%s3728 + $0x4808] sm:$0xff] %v4307
                %v4309 = vld [vmem:[%s3727 + $0x910] sm:$0xff]
                %4310 = vst [vmem:[%s3728 + $0x4810] sm:$0xff] %v4309
                %v4311 = vld [vmem:[%s3727 + $0x918] sm:$0xff]
                %4312 = vst [vmem:[%s3728 + $0x4818] sm:$0xff] %v4311
                %v4313 = vld [vmem:[%s3727 + $0x920] sm:$0xff]
                %4314 = vst [vmem:[%s3728 + $0x4820] sm:$0xff] %v4313
                %v4315 = vld [vmem:[%s3727 + $0x928] sm:$0xff]
                %4316 = vst [vmem:[%s3728 + $0x4828] sm:$0xff] %v4315
                %v4317 = vld [vmem:[%s3727 + $0x930] sm:$0xff]
                %4318 = vst [vmem:[%s3728 + $0x4830] sm:$0xff] %v4317
                %v4319 = vld [vmem:[%s3727 + $0x938] sm:$0xff]
                %4320 = vst [vmem:[%s3728 + $0x4838] sm:$0xff] %v4319
                %v4321 = vld [vmem:[%s3727 + $0x940] sm:$0xff]
                %4322 = vst [vmem:[%s3728 + $0x4840] sm:$0xff] %v4321
                %v4323 = vld [vmem:[%s3727 + $0x948] sm:$0xff]
                %4324 = vst [vmem:[%s3728 + $0x4848] sm:$0xff] %v4323
                %v4325 = vld [vmem:[%s3727 + $0x950] sm:$0xff]
                %4326 = vst [vmem:[%s3728 + $0x4850] sm:$0xff] %v4325
                %v4327 = vld [vmem:[%s3727 + $0x958] sm:$0xff]
                %4328 = vst [vmem:[%s3728 + $0x4858] sm:$0xff] %v4327
                %v4329 = vld [vmem:[%s3727 + $0x960] sm:$0xff]
                %4330 = vst [vmem:[%s3728 + $0x4860] sm:$0xff] %v4329
                %v4331 = vld [vmem:[%s3727 + $0x968] sm:$0xff]
                %4332 = vst [vmem:[%s3728 + $0x4868] sm:$0xff] %v4331
                %v4333 = vld [vmem:[%s3727 + $0x970] sm:$0xff]
                %4334 = vst [vmem:[%s3728 + $0x4870] sm:$0xff] %v4333
                %v4335 = vld [vmem:[%s3727 + $0x978] sm:$0xff]
                %4336 = vst [vmem:[%s3728 + $0x4878] sm:$0xff] %v4335
                %v4337 = vld [vmem:[%s3727 + $0x980] sm:$0xff]
                %4338 = vst [vmem:[%s3728 + $0x4880] sm:$0xff] %v4337
                %v4339 = vld [vmem:[%s3727 + $0x988] sm:$0xff]
                %4340 = vst [vmem:[%s3728 + $0x4888] sm:$0xff] %v4339
                %v4341 = vld [vmem:[%s3727 + $0x990] sm:$0xff]
                %4342 = vst [vmem:[%s3728 + $0x4890] sm:$0xff] %v4341
                %v4343 = vld [vmem:[%s3727 + $0x998] sm:$0xff]
                %4344 = vst [vmem:[%s3728 + $0x4898] sm:$0xff] %v4343
                %v4345 = vld [vmem:[%s3727 + $0x9a0] sm:$0xff]
                %4346 = vst [vmem:[%s3728 + $0x48a0] sm:$0xff] %v4345
                %v4347 = vld [vmem:[%s3727 + $0x9a8] sm:$0xff]
                %4348 = vst [vmem:[%s3728 + $0x48a8] sm:$0xff] %v4347
                %v4349 = vld [vmem:[%s3727 + $0x9b0] sm:$0xff]
                %4350 = vst [vmem:[%s3728 + $0x48b0] sm:$0xff] %v4349
                %v4351 = vld [vmem:[%s3727 + $0x9b8] sm:$0xff]
                %4352 = vst [vmem:[%s3728 + $0x48b8] sm:$0xff] %v4351
                %v4353 = vld [vmem:[%s3727 + $0x9c0] sm:$0xff]
                %4354 = vst [vmem:[%s3728 + $0x48c0] sm:$0xff] %v4353
                %v4355 = vld [vmem:[%s3727 + $0x9c8] sm:$0xff]
                %4356 = vst [vmem:[%s3728 + $0x48c8] sm:$0xff] %v4355
                %v4357 = vld [vmem:[%s3727 + $0x9d0] sm:$0xff]
                %4358 = vst [vmem:[%s3728 + $0x48d0] sm:$0xff] %v4357
                %v4359 = vld [vmem:[%s3727 + $0x9d8] sm:$0xff]
                %4360 = vst [vmem:[%s3728 + $0x48d8] sm:$0xff] %v4359
                %v4361 = vld [vmem:[%s3727 + $0x9e0] sm:$0xff]
                %4362 = vst [vmem:[%s3728 + $0x48e0] sm:$0xff] %v4361
                %v4363 = vld [vmem:[%s3727 + $0x9e8] sm:$0xff]
                %4364 = vst [vmem:[%s3728 + $0x48e8] sm:$0xff] %v4363
                %v4365 = vld [vmem:[%s3727 + $0x9f0] sm:$0xff]
                %4366 = vst [vmem:[%s3728 + $0x48f0] sm:$0xff] %v4365
                %v4367 = vld [vmem:[%s3727 + $0x9f8] sm:$0xff]
                %4368 = vst [vmem:[%s3728 + $0x48f8] sm:$0xff] %v4367
                %v4369 = vld [vmem:[%s3727 + $0xa00] sm:$0xff]
                %4370 = vst [vmem:[%s3728 + $0x5000] sm:$0xff] %v4369
                %v4371 = vld [vmem:[%s3727 + $0xa08] sm:$0xff]
                %4372 = vst [vmem:[%s3728 + $0x5008] sm:$0xff] %v4371
                %v4373 = vld [vmem:[%s3727 + $0xa10] sm:$0xff]
                %4374 = vst [vmem:[%s3728 + $0x5010] sm:$0xff] %v4373
                %v4375 = vld [vmem:[%s3727 + $0xa18] sm:$0xff]
                %4376 = vst [vmem:[%s3728 + $0x5018] sm:$0xff] %v4375
                %v4377 = vld [vmem:[%s3727 + $0xa20] sm:$0xff]
                %4378 = vst [vmem:[%s3728 + $0x5020] sm:$0xff] %v4377
                %v4379 = vld [vmem:[%s3727 + $0xa28] sm:$0xff]
                %4380 = vst [vmem:[%s3728 + $0x5028] sm:$0xff] %v4379
                %v4381 = vld [vmem:[%s3727 + $0xa30] sm:$0xff]
                %4382 = vst [vmem:[%s3728 + $0x5030] sm:$0xff] %v4381
                %v4383 = vld [vmem:[%s3727 + $0xa38] sm:$0xff]
                %4384 = vst [vmem:[%s3728 + $0x5038] sm:$0xff] %v4383
                %v4385 = vld [vmem:[%s3727 + $0xa40] sm:$0xff]
                %4386 = vst [vmem:[%s3728 + $0x5040] sm:$0xff] %v4385
                %v4387 = vld [vmem:[%s3727 + $0xa48] sm:$0xff]
                %4388 = vst [vmem:[%s3728 + $0x5048] sm:$0xff] %v4387
                %v4389 = vld [vmem:[%s3727 + $0xa50] sm:$0xff]
                %4390 = vst [vmem:[%s3728 + $0x5050] sm:$0xff] %v4389
                %v4391 = vld [vmem:[%s3727 + $0xa58] sm:$0xff]
                %4392 = vst [vmem:[%s3728 + $0x5058] sm:$0xff] %v4391
                %v4393 = vld [vmem:[%s3727 + $0xa60] sm:$0xff]
                %4394 = vst [vmem:[%s3728 + $0x5060] sm:$0xff] %v4393
                %v4395 = vld [vmem:[%s3727 + $0xa68] sm:$0xff]
                %4396 = vst [vmem:[%s3728 + $0x5068] sm:$0xff] %v4395
                %v4397 = vld [vmem:[%s3727 + $0xa70] sm:$0xff]
                %4398 = vst [vmem:[%s3728 + $0x5070] sm:$0xff] %v4397
                %v4399 = vld [vmem:[%s3727 + $0xa78] sm:$0xff]
                %4400 = vst [vmem:[%s3728 + $0x5078] sm:$0xff] %v4399
                %v4401 = vld [vmem:[%s3727 + $0xa80] sm:$0xff]
                %4402 = vst [vmem:[%s3728 + $0x5080] sm:$0xff] %v4401
                %v4403 = vld [vmem:[%s3727 + $0xa88] sm:$0xff]
                %4404 = vst [vmem:[%s3728 + $0x5088] sm:$0xff] %v4403
                %v4405 = vld [vmem:[%s3727 + $0xa90] sm:$0xff]
                %4406 = vst [vmem:[%s3728 + $0x5090] sm:$0xff] %v4405
                %v4407 = vld [vmem:[%s3727 + $0xa98] sm:$0xff]
                %4408 = vst [vmem:[%s3728 + $0x5098] sm:$0xff] %v4407
                %v4409 = vld [vmem:[%s3727 + $0xaa0] sm:$0xff]
                %4410 = vst [vmem:[%s3728 + $0x50a0] sm:$0xff] %v4409
                %v4411 = vld [vmem:[%s3727 + $0xaa8] sm:$0xff]
                %4412 = vst [vmem:[%s3728 + $0x50a8] sm:$0xff] %v4411
                %v4413 = vld [vmem:[%s3727 + $0xab0] sm:$0xff]
                %4414 = vst [vmem:[%s3728 + $0x50b0] sm:$0xff] %v4413
                %v4415 = vld [vmem:[%s3727 + $0xab8] sm:$0xff]
                %4416 = vst [vmem:[%s3728 + $0x50b8] sm:$0xff] %v4415
                %v4417 = vld [vmem:[%s3727 + $0xac0] sm:$0xff]
                %4418 = vst [vmem:[%s3728 + $0x50c0] sm:$0xff] %v4417
                %v4419 = vld [vmem:[%s3727 + $0xac8] sm:$0xff]
                %4420 = vst [vmem:[%s3728 + $0x50c8] sm:$0xff] %v4419
                %v4421 = vld [vmem:[%s3727 + $0xad0] sm:$0xff]
                %4422 = vst [vmem:[%s3728 + $0x50d0] sm:$0xff] %v4421
                %v4423 = vld [vmem:[%s3727 + $0xad8] sm:$0xff]
                %4424 = vst [vmem:[%s3728 + $0x50d8] sm:$0xff] %v4423
                %v4425 = vld [vmem:[%s3727 + $0xae0] sm:$0xff]
                %4426 = vst [vmem:[%s3728 + $0x50e0] sm:$0xff] %v4425
                %v4427 = vld [vmem:[%s3727 + $0xae8] sm:$0xff]
                %4428 = vst [vmem:[%s3728 + $0x50e8] sm:$0xff] %v4427
                %v4429 = vld [vmem:[%s3727 + $0xaf0] sm:$0xff]
                %4430 = vst [vmem:[%s3728 + $0x50f0] sm:$0xff] %v4429
                %v4431 = vld [vmem:[%s3727 + $0xaf8] sm:$0xff]
                %4432 = vst [vmem:[%s3728 + $0x50f8] sm:$0xff] %v4431
                %v4433 = vld [vmem:[%s3727 + $0xb00] sm:$0xff]
                %4434 = vst [vmem:[%s3728 + $0x5800] sm:$0xff] %v4433
                %v4435 = vld [vmem:[%s3727 + $0xb08] sm:$0xff]
                %4436 = vst [vmem:[%s3728 + $0x5808] sm:$0xff] %v4435
                %v4437 = vld [vmem:[%s3727 + $0xb10] sm:$0xff]
                %4438 = vst [vmem:[%s3728 + $0x5810] sm:$0xff] %v4437
                %v4439 = vld [vmem:[%s3727 + $0xb18] sm:$0xff]
                %4440 = vst [vmem:[%s3728 + $0x5818] sm:$0xff] %v4439
                %v4441 = vld [vmem:[%s3727 + $0xb20] sm:$0xff]
                %4442 = vst [vmem:[%s3728 + $0x5820] sm:$0xff] %v4441
                %v4443 = vld [vmem:[%s3727 + $0xb28] sm:$0xff]
                %4444 = vst [vmem:[%s3728 + $0x5828] sm:$0xff] %v4443
                %v4445 = vld [vmem:[%s3727 + $0xb30] sm:$0xff]
                %4446 = vst [vmem:[%s3728 + $0x5830] sm:$0xff] %v4445
                %v4447 = vld [vmem:[%s3727 + $0xb38] sm:$0xff]
                %4448 = vst [vmem:[%s3728 + $0x5838] sm:$0xff] %v4447
                %v4449 = vld [vmem:[%s3727 + $0xb40] sm:$0xff]
                %4450 = vst [vmem:[%s3728 + $0x5840] sm:$0xff] %v4449
                %v4451 = vld [vmem:[%s3727 + $0xb48] sm:$0xff]
                %4452 = vst [vmem:[%s3728 + $0x5848] sm:$0xff] %v4451
                %v4453 = vld [vmem:[%s3727 + $0xb50] sm:$0xff]
                %4454 = vst [vmem:[%s3728 + $0x5850] sm:$0xff] %v4453
                %v4455 = vld [vmem:[%s3727 + $0xb58] sm:$0xff]
                %4456 = vst [vmem:[%s3728 + $0x5858] sm:$0xff] %v4455
                %v4457 = vld [vmem:[%s3727 + $0xb60] sm:$0xff]
                %4458 = vst [vmem:[%s3728 + $0x5860] sm:$0xff] %v4457
                %v4459 = vld [vmem:[%s3727 + $0xb68] sm:$0xff]
                %4460 = vst [vmem:[%s3728 + $0x5868] sm:$0xff] %v4459
                %v4461 = vld [vmem:[%s3727 + $0xb70] sm:$0xff]
                %4462 = vst [vmem:[%s3728 + $0x5870] sm:$0xff] %v4461
                %v4463 = vld [vmem:[%s3727 + $0xb78] sm:$0xff]
                %4464 = vst [vmem:[%s3728 + $0x5878] sm:$0xff] %v4463
                %v4465 = vld [vmem:[%s3727 + $0xb80] sm:$0xff]
                %4466 = vst [vmem:[%s3728 + $0x5880] sm:$0xff] %v4465
                %v4467 = vld [vmem:[%s3727 + $0xb88] sm:$0xff]
                %4468 = vst [vmem:[%s3728 + $0x5888] sm:$0xff] %v4467
                %v4469 = vld [vmem:[%s3727 + $0xb90] sm:$0xff]
                %4470 = vst [vmem:[%s3728 + $0x5890] sm:$0xff] %v4469
                %v4471 = vld [vmem:[%s3727 + $0xb98] sm:$0xff]
                %4472 = vst [vmem:[%s3728 + $0x5898] sm:$0xff] %v4471
                %v4473 = vld [vmem:[%s3727 + $0xba0] sm:$0xff]
                %4474 = vst [vmem:[%s3728 + $0x58a0] sm:$0xff] %v4473
                %v4475 = vld [vmem:[%s3727 + $0xba8] sm:$0xff]
                %4476 = vst [vmem:[%s3728 + $0x58a8] sm:$0xff] %v4475
                %v4477 = vld [vmem:[%s3727 + $0xbb0] sm:$0xff]
                %4478 = vst [vmem:[%s3728 + $0x58b0] sm:$0xff] %v4477
                %v4479 = vld [vmem:[%s3727 + $0xbb8] sm:$0xff]
                %4480 = vst [vmem:[%s3728 + $0x58b8] sm:$0xff] %v4479
                %v4481 = vld [vmem:[%s3727 + $0xbc0] sm:$0xff]
                %4482 = vst [vmem:[%s3728 + $0x58c0] sm:$0xff] %v4481
                %v4483 = vld [vmem:[%s3727 + $0xbc8] sm:$0xff]
                %4484 = vst [vmem:[%s3728 + $0x58c8] sm:$0xff] %v4483
                %v4485 = vld [vmem:[%s3727 + $0xbd0] sm:$0xff]
                %4486 = vst [vmem:[%s3728 + $0x58d0] sm:$0xff] %v4485
                %v4487 = vld [vmem:[%s3727 + $0xbd8] sm:$0xff]
                %4488 = vst [vmem:[%s3728 + $0x58d8] sm:$0xff] %v4487
                %v4489 = vld [vmem:[%s3727 + $0xbe0] sm:$0xff]
                %4490 = vst [vmem:[%s3728 + $0x58e0] sm:$0xff] %v4489
                %v4491 = vld [vmem:[%s3727 + $0xbe8] sm:$0xff]
                %4492 = vst [vmem:[%s3728 + $0x58e8] sm:$0xff] %v4491
                %v4493 = vld [vmem:[%s3727 + $0xbf0] sm:$0xff]
                %4494 = vst [vmem:[%s3728 + $0x58f0] sm:$0xff] %v4493
                %v4495 = vld [vmem:[%s3727 + $0xbf8] sm:$0xff]
                %4496 = vst [vmem:[%s3728 + $0x58f8] sm:$0xff] %v4495
                %v4497 = vld [vmem:[%s3727 + $0xc00] sm:$0xff]
                %4498 = vst [vmem:[%s3728 + $0x6000] sm:$0xff] %v4497
                %v4499 = vld [vmem:[%s3727 + $0xc08] sm:$0xff]
                %4500 = vst [vmem:[%s3728 + $0x6008] sm:$0xff] %v4499
                %v4501 = vld [vmem:[%s3727 + $0xc10] sm:$0xff]
                %4502 = vst [vmem:[%s3728 + $0x6010] sm:$0xff] %v4501
                %v4503 = vld [vmem:[%s3727 + $0xc18] sm:$0xff]
                %4504 = vst [vmem:[%s3728 + $0x6018] sm:$0xff] %v4503
                %v4505 = vld [vmem:[%s3727 + $0xc20] sm:$0xff]
                %4506 = vst [vmem:[%s3728 + $0x6020] sm:$0xff] %v4505
                %v4507 = vld [vmem:[%s3727 + $0xc28] sm:$0xff]
                %4508 = vst [vmem:[%s3728 + $0x6028] sm:$0xff] %v4507
                %v4509 = vld [vmem:[%s3727 + $0xc30] sm:$0xff]
                %4510 = vst [vmem:[%s3728 + $0x6030] sm:$0xff] %v4509
                %v4511 = vld [vmem:[%s3727 + $0xc38] sm:$0xff]
                %4512 = vst [vmem:[%s3728 + $0x6038] sm:$0xff] %v4511
                %v4513 = vld [vmem:[%s3727 + $0xc40] sm:$0xff]
                %4514 = vst [vmem:[%s3728 + $0x6040] sm:$0xff] %v4513
                %v4515 = vld [vmem:[%s3727 + $0xc48] sm:$0xff]
                %4516 = vst [vmem:[%s3728 + $0x6048] sm:$0xff] %v4515
                %v4517 = vld [vmem:[%s3727 + $0xc50] sm:$0xff]
                %4518 = vst [vmem:[%s3728 + $0x6050] sm:$0xff] %v4517
                %v4519 = vld [vmem:[%s3727 + $0xc58] sm:$0xff]
                %4520 = vst [vmem:[%s3728 + $0x6058] sm:$0xff] %v4519
                %v4521 = vld [vmem:[%s3727 + $0xc60] sm:$0xff]
                %4522 = vst [vmem:[%s3728 + $0x6060] sm:$0xff] %v4521
                %v4523 = vld [vmem:[%s3727 + $0xc68] sm:$0xff]
                %4524 = vst [vmem:[%s3728 + $0x6068] sm:$0xff] %v4523
                %v4525 = vld [vmem:[%s3727 + $0xc70] sm:$0xff]
                %4526 = vst [vmem:[%s3728 + $0x6070] sm:$0xff] %v4525
                %v4527 = vld [vmem:[%s3727 + $0xc78] sm:$0xff]
                %4528 = vst [vmem:[%s3728 + $0x6078] sm:$0xff] %v4527
                %v4529 = vld [vmem:[%s3727 + $0xc80] sm:$0xff]
                %4530 = vst [vmem:[%s3728 + $0x6080] sm:$0xff] %v4529
                %v4531 = vld [vmem:[%s3727 + $0xc88] sm:$0xff]
                %4532 = vst [vmem:[%s3728 + $0x6088] sm:$0xff] %v4531
                %v4533 = vld [vmem:[%s3727 + $0xc90] sm:$0xff]
                %4534 = vst [vmem:[%s3728 + $0x6090] sm:$0xff] %v4533
                %v4535 = vld [vmem:[%s3727 + $0xc98] sm:$0xff]
                %4536 = vst [vmem:[%s3728 + $0x6098] sm:$0xff] %v4535
                %v4537 = vld [vmem:[%s3727 + $0xca0] sm:$0xff]
                %4538 = vst [vmem:[%s3728 + $0x60a0] sm:$0xff] %v4537
                %v4539 = vld [vmem:[%s3727 + $0xca8] sm:$0xff]
                %4540 = vst [vmem:[%s3728 + $0x60a8] sm:$0xff] %v4539
                %v4541 = vld [vmem:[%s3727 + $0xcb0] sm:$0xff]
                %4542 = vst [vmem:[%s3728 + $0x60b0] sm:$0xff] %v4541
                %v4543 = vld [vmem:[%s3727 + $0xcb8] sm:$0xff]
                %4544 = vst [vmem:[%s3728 + $0x60b8] sm:$0xff] %v4543
                %v4545 = vld [vmem:[%s3727 + $0xcc0] sm:$0xff]
                %4546 = vst [vmem:[%s3728 + $0x60c0] sm:$0xff] %v4545
                %v4547 = vld [vmem:[%s3727 + $0xcc8] sm:$0xff]
                %4548 = vst [vmem:[%s3728 + $0x60c8] sm:$0xff] %v4547
                %v4549 = vld [vmem:[%s3727 + $0xcd0] sm:$0xff]
                %4550 = vst [vmem:[%s3728 + $0x60d0] sm:$0xff] %v4549
                %v4551 = vld [vmem:[%s3727 + $0xcd8] sm:$0xff]
                %4552 = vst [vmem:[%s3728 + $0x60d8] sm:$0xff] %v4551
                %v4553 = vld [vmem:[%s3727 + $0xce0] sm:$0xff]
                %4554 = vst [vmem:[%s3728 + $0x60e0] sm:$0xff] %v4553
                %v4555 = vld [vmem:[%s3727 + $0xce8] sm:$0xff]
                %4556 = vst [vmem:[%s3728 + $0x60e8] sm:$0xff] %v4555
                %v4557 = vld [vmem:[%s3727 + $0xcf0] sm:$0xff]
                %4558 = vst [vmem:[%s3728 + $0x60f0] sm:$0xff] %v4557
                %v4559 = vld [vmem:[%s3727 + $0xcf8] sm:$0xff]
                %4560 = vst [vmem:[%s3728 + $0x60f8] sm:$0xff] %v4559
                %v4561 = vld [vmem:[%s3727 + $0xd00] sm:$0xff]
                %4562 = vst [vmem:[%s3728 + $0x6800] sm:$0xff] %v4561
                %v4563 = vld [vmem:[%s3727 + $0xd08] sm:$0xff]
                %4564 = vst [vmem:[%s3728 + $0x6808] sm:$0xff] %v4563
                %v4565 = vld [vmem:[%s3727 + $0xd10] sm:$0xff]
                %4566 = vst [vmem:[%s3728 + $0x6810] sm:$0xff] %v4565
                %v4567 = vld [vmem:[%s3727 + $0xd18] sm:$0xff]
                %4568 = vst [vmem:[%s3728 + $0x6818] sm:$0xff] %v4567
                %v4569 = vld [vmem:[%s3727 + $0xd20] sm:$0xff]
                %4570 = vst [vmem:[%s3728 + $0x6820] sm:$0xff] %v4569
                %v4571 = vld [vmem:[%s3727 + $0xd28] sm:$0xff]
                %4572 = vst [vmem:[%s3728 + $0x6828] sm:$0xff] %v4571
                %v4573 = vld [vmem:[%s3727 + $0xd30] sm:$0xff]
                %4574 = vst [vmem:[%s3728 + $0x6830] sm:$0xff] %v4573
                %v4575 = vld [vmem:[%s3727 + $0xd38] sm:$0xff]
                %4576 = vst [vmem:[%s3728 + $0x6838] sm:$0xff] %v4575
                %v4577 = vld [vmem:[%s3727 + $0xd40] sm:$0xff]
                %4578 = vst [vmem:[%s3728 + $0x6840] sm:$0xff] %v4577
                %v4579 = vld [vmem:[%s3727 + $0xd48] sm:$0xff]
                %4580 = vst [vmem:[%s3728 + $0x6848] sm:$0xff] %v4579
                %v4581 = vld [vmem:[%s3727 + $0xd50] sm:$0xff]
                %4582 = vst [vmem:[%s3728 + $0x6850] sm:$0xff] %v4581
                %v4583 = vld [vmem:[%s3727 + $0xd58] sm:$0xff]
                %4584 = vst [vmem:[%s3728 + $0x6858] sm:$0xff] %v4583
                %v4585 = vld [vmem:[%s3727 + $0xd60] sm:$0xff]
                %4586 = vst [vmem:[%s3728 + $0x6860] sm:$0xff] %v4585
                %v4587 = vld [vmem:[%s3727 + $0xd68] sm:$0xff]
                %4588 = vst [vmem:[%s3728 + $0x6868] sm:$0xff] %v4587
                %v4589 = vld [vmem:[%s3727 + $0xd70] sm:$0xff]
                %4590 = vst [vmem:[%s3728 + $0x6870] sm:$0xff] %v4589
                %v4591 = vld [vmem:[%s3727 + $0xd78] sm:$0xff]
                %4592 = vst [vmem:[%s3728 + $0x6878] sm:$0xff] %v4591
                %v4593 = vld [vmem:[%s3727 + $0xd80] sm:$0xff]
                %4594 = vst [vmem:[%s3728 + $0x6880] sm:$0xff] %v4593
                %v4595 = vld [vmem:[%s3727 + $0xd88] sm:$0xff]
                %4596 = vst [vmem:[%s3728 + $0x6888] sm:$0xff] %v4595
                %v4597 = vld [vmem:[%s3727 + $0xd90] sm:$0xff]
                %4598 = vst [vmem:[%s3728 + $0x6890] sm:$0xff] %v4597
                %v4599 = vld [vmem:[%s3727 + $0xd98] sm:$0xff]
                %4600 = vst [vmem:[%s3728 + $0x6898] sm:$0xff] %v4599
                %v4601 = vld [vmem:[%s3727 + $0xda0] sm:$0xff]
                %4602 = vst [vmem:[%s3728 + $0x68a0] sm:$0xff] %v4601
                %v4603 = vld [vmem:[%s3727 + $0xda8] sm:$0xff]
                %4604 = vst [vmem:[%s3728 + $0x68a8] sm:$0xff] %v4603
                %v4605 = vld [vmem:[%s3727 + $0xdb0] sm:$0xff]
                %4606 = vst [vmem:[%s3728 + $0x68b0] sm:$0xff] %v4605
                %v4607 = vld [vmem:[%s3727 + $0xdb8] sm:$0xff]
                %4608 = vst [vmem:[%s3728 + $0x68b8] sm:$0xff] %v4607
                %v4609 = vld [vmem:[%s3727 + $0xdc0] sm:$0xff]
                %4610 = vst [vmem:[%s3728 + $0x68c0] sm:$0xff] %v4609
                %v4611 = vld [vmem:[%s3727 + $0xdc8] sm:$0xff]
                %4612 = vst [vmem:[%s3728 + $0x68c8] sm:$0xff] %v4611
                %v4613 = vld [vmem:[%s3727 + $0xdd0] sm:$0xff]
                %4614 = vst [vmem:[%s3728 + $0x68d0] sm:$0xff] %v4613
                %v4615 = vld [vmem:[%s3727 + $0xdd8] sm:$0xff]
                %4616 = vst [vmem:[%s3728 + $0x68d8] sm:$0xff] %v4615
                %v4617 = vld [vmem:[%s3727 + $0xde0] sm:$0xff]
                %4618 = vst [vmem:[%s3728 + $0x68e0] sm:$0xff] %v4617
                %v4619 = vld [vmem:[%s3727 + $0xde8] sm:$0xff]
                %4620 = vst [vmem:[%s3728 + $0x68e8] sm:$0xff] %v4619
                %v4621 = vld [vmem:[%s3727 + $0xdf0] sm:$0xff]
                %4622 = vst [vmem:[%s3728 + $0x68f0] sm:$0xff] %v4621
                %v4623 = vld [vmem:[%s3727 + $0xdf8] sm:$0xff]
                %4624 = vst [vmem:[%s3728 + $0x68f8] sm:$0xff] %v4623
                %v4625 = vld [vmem:[%s3727 + $0xe00] sm:$0xff]
                %4626 = vst [vmem:[%s3728 + $0x7000] sm:$0xff] %v4625
                %v4627 = vld [vmem:[%s3727 + $0xe08] sm:$0xff]
                %4628 = vst [vmem:[%s3728 + $0x7008] sm:$0xff] %v4627
                %v4629 = vld [vmem:[%s3727 + $0xe10] sm:$0xff]
                %4630 = vst [vmem:[%s3728 + $0x7010] sm:$0xff] %v4629
                %v4631 = vld [vmem:[%s3727 + $0xe18] sm:$0xff]
                %4632 = vst [vmem:[%s3728 + $0x7018] sm:$0xff] %v4631
                %v4633 = vld [vmem:[%s3727 + $0xe20] sm:$0xff]
                %4634 = vst [vmem:[%s3728 + $0x7020] sm:$0xff] %v4633
                %v4635 = vld [vmem:[%s3727 + $0xe28] sm:$0xff]
                %4636 = vst [vmem:[%s3728 + $0x7028] sm:$0xff] %v4635
                %v4637 = vld [vmem:[%s3727 + $0xe30] sm:$0xff]
                %4638 = vst [vmem:[%s3728 + $0x7030] sm:$0xff] %v4637
                %v4639 = vld [vmem:[%s3727 + $0xe38] sm:$0xff]
                %4640 = vst [vmem:[%s3728 + $0x7038] sm:$0xff] %v4639
                %v4641 = vld [vmem:[%s3727 + $0xe40] sm:$0xff]
                %4642 = vst [vmem:[%s3728 + $0x7040] sm:$0xff] %v4641
                %v4643 = vld [vmem:[%s3727 + $0xe48] sm:$0xff]
                %4644 = vst [vmem:[%s3728 + $0x7048] sm:$0xff] %v4643
                %v4645 = vld [vmem:[%s3727 + $0xe50] sm:$0xff]
                %4646 = vst [vmem:[%s3728 + $0x7050] sm:$0xff] %v4645
                %v4647 = vld [vmem:[%s3727 + $0xe58] sm:$0xff]
                %4648 = vst [vmem:[%s3728 + $0x7058] sm:$0xff] %v4647
                %v4649 = vld [vmem:[%s3727 + $0xe60] sm:$0xff]
                %4650 = vst [vmem:[%s3728 + $0x7060] sm:$0xff] %v4649
                %v4651 = vld [vmem:[%s3727 + $0xe68] sm:$0xff]
                %4652 = vst [vmem:[%s3728 + $0x7068] sm:$0xff] %v4651
                %v4653 = vld [vmem:[%s3727 + $0xe70] sm:$0xff]
                %4654 = vst [vmem:[%s3728 + $0x7070] sm:$0xff] %v4653
                %v4655 = vld [vmem:[%s3727 + $0xe78] sm:$0xff]
                %4656 = vst [vmem:[%s3728 + $0x7078] sm:$0xff] %v4655
                %v4657 = vld [vmem:[%s3727 + $0xe80] sm:$0xff]
                %4658 = vst [vmem:[%s3728 + $0x7080] sm:$0xff] %v4657
                %v4659 = vld [vmem:[%s3727 + $0xe88] sm:$0xff]
                %4660 = vst [vmem:[%s3728 + $0x7088] sm:$0xff] %v4659
                %v4661 = vld [vmem:[%s3727 + $0xe90] sm:$0xff]
                %4662 = vst [vmem:[%s3728 + $0x7090] sm:$0xff] %v4661
                %v4663 = vld [vmem:[%s3727 + $0xe98] sm:$0xff]
                %4664 = vst [vmem:[%s3728 + $0x7098] sm:$0xff] %v4663
                %v4665 = vld [vmem:[%s3727 + $0xea0] sm:$0xff]
                %4666 = vst [vmem:[%s3728 + $0x70a0] sm:$0xff] %v4665
                %v4667 = vld [vmem:[%s3727 + $0xea8] sm:$0xff]
                %4668 = vst [vmem:[%s3728 + $0x70a8] sm:$0xff] %v4667
                %v4669 = vld [vmem:[%s3727 + $0xeb0] sm:$0xff]
                %4670 = vst [vmem:[%s3728 + $0x70b0] sm:$0xff] %v4669
                %v4671 = vld [vmem:[%s3727 + $0xeb8] sm:$0xff]
                %4672 = vst [vmem:[%s3728 + $0x70b8] sm:$0xff] %v4671
                %v4673 = vld [vmem:[%s3727 + $0xec0] sm:$0xff]
                %4674 = vst [vmem:[%s3728 + $0x70c0] sm:$0xff] %v4673
                %v4675 = vld [vmem:[%s3727 + $0xec8] sm:$0xff]
                %4676 = vst [vmem:[%s3728 + $0x70c8] sm:$0xff] %v4675
                %v4677 = vld [vmem:[%s3727 + $0xed0] sm:$0xff]
                %4678 = vst [vmem:[%s3728 + $0x70d0] sm:$0xff] %v4677
                %v4679 = vld [vmem:[%s3727 + $0xed8] sm:$0xff]
                %4680 = vst [vmem:[%s3728 + $0x70d8] sm:$0xff] %v4679
                %v4681 = vld [vmem:[%s3727 + $0xee0] sm:$0xff]
                %4682 = vst [vmem:[%s3728 + $0x70e0] sm:$0xff] %v4681
                %v4683 = vld [vmem:[%s3727 + $0xee8] sm:$0xff]
                %4684 = vst [vmem:[%s3728 + $0x70e8] sm:$0xff] %v4683
                %v4685 = vld [vmem:[%s3727 + $0xef0] sm:$0xff]
                %4686 = vst [vmem:[%s3728 + $0x70f0] sm:$0xff] %v4685
                %v4687 = vld [vmem:[%s3727 + $0xef8] sm:$0xff]
                %4688 = vst [vmem:[%s3728 + $0x70f8] sm:$0xff] %v4687
                %v4689 = vld [vmem:[%s3727 + $0xf00] sm:$0xff]
                %4690 = vst [vmem:[%s3728 + $0x7800] sm:$0xff] %v4689
                %v4691 = vld [vmem:[%s3727 + $0xf08] sm:$0xff]
                %4692 = vst [vmem:[%s3728 + $0x7808] sm:$0xff] %v4691
                %v4693 = vld [vmem:[%s3727 + $0xf10] sm:$0xff]
                %4694 = vst [vmem:[%s3728 + $0x7810] sm:$0xff] %v4693
                %v4695 = vld [vmem:[%s3727 + $0xf18] sm:$0xff]
                %4696 = vst [vmem:[%s3728 + $0x7818] sm:$0xff] %v4695
                %v4697 = vld [vmem:[%s3727 + $0xf20] sm:$0xff]
                %4698 = vst [vmem:[%s3728 + $0x7820] sm:$0xff] %v4697
                %v4699 = vld [vmem:[%s3727 + $0xf28] sm:$0xff]
                %4700 = vst [vmem:[%s3728 + $0x7828] sm:$0xff] %v4699
                %v4701 = vld [vmem:[%s3727 + $0xf30] sm:$0xff]
                %4702 = vst [vmem:[%s3728 + $0x7830] sm:$0xff] %v4701
                %v4703 = vld [vmem:[%s3727 + $0xf38] sm:$0xff]
                %4704 = vst [vmem:[%s3728 + $0x7838] sm:$0xff] %v4703
                %v4705 = vld [vmem:[%s3727 + $0xf40] sm:$0xff]
                %4706 = vst [vmem:[%s3728 + $0x7840] sm:$0xff] %v4705
                %v4707 = vld [vmem:[%s3727 + $0xf48] sm:$0xff]
                %4708 = vst [vmem:[%s3728 + $0x7848] sm:$0xff] %v4707
                %v4709 = vld [vmem:[%s3727 + $0xf50] sm:$0xff]
                %4710 = vst [vmem:[%s3728 + $0x7850] sm:$0xff] %v4709
                %v4711 = vld [vmem:[%s3727 + $0xf58] sm:$0xff]
                %4712 = vst [vmem:[%s3728 + $0x7858] sm:$0xff] %v4711
                %v4713 = vld [vmem:[%s3727 + $0xf60] sm:$0xff]
                %4714 = vst [vmem:[%s3728 + $0x7860] sm:$0xff] %v4713
                %v4715 = vld [vmem:[%s3727 + $0xf68] sm:$0xff]
                %4716 = vst [vmem:[%s3728 + $0x7868] sm:$0xff] %v4715
                %v4717 = vld [vmem:[%s3727 + $0xf70] sm:$0xff]
                %4718 = vst [vmem:[%s3728 + $0x7870] sm:$0xff] %v4717
                %v4719 = vld [vmem:[%s3727 + $0xf78] sm:$0xff]
                %4720 = vst [vmem:[%s3728 + $0x7878] sm:$0xff] %v4719
                %v4721 = vld [vmem:[%s3727 + $0xf80] sm:$0xff]
                %4722 = vst [vmem:[%s3728 + $0x7880] sm:$0xff] %v4721
                %v4723 = vld [vmem:[%s3727 + $0xf88] sm:$0xff]
                %4724 = vst [vmem:[%s3728 + $0x7888] sm:$0xff] %v4723
                %v4725 = vld [vmem:[%s3727 + $0xf90] sm:$0xff]
                %4726 = vst [vmem:[%s3728 + $0x7890] sm:$0xff] %v4725
                %v4727 = vld [vmem:[%s3727 + $0xf98] sm:$0xff]
                %4728 = vst [vmem:[%s3728 + $0x7898] sm:$0xff] %v4727
                %v4729 = vld [vmem:[%s3727 + $0xfa0] sm:$0xff]
                %4730 = vst [vmem:[%s3728 + $0x78a0] sm:$0xff] %v4729
                %v4731 = vld [vmem:[%s3727 + $0xfa8] sm:$0xff]
                %4732 = vst [vmem:[%s3728 + $0x78a8] sm:$0xff] %v4731
                %v4733 = vld [vmem:[%s3727 + $0xfb0] sm:$0xff]
                %4734 = vst [vmem:[%s3728 + $0x78b0] sm:$0xff] %v4733
                %v4735 = vld [vmem:[%s3727 + $0xfb8] sm:$0xff]
                %4736 = vst [vmem:[%s3728 + $0x78b8] sm:$0xff] %v4735
                %v4737 = vld [vmem:[%s3727 + $0xfc0] sm:$0xff]
                %4738 = vst [vmem:[%s3728 + $0x78c0] sm:$0xff] %v4737
                %v4739 = vld [vmem:[%s3727 + $0xfc8] sm:$0xff]
                %4740 = vst [vmem:[%s3728 + $0x78c8] sm:$0xff] %v4739
                %v4741 = vld [vmem:[%s3727 + $0xfd0] sm:$0xff]
                %4742 = vst [vmem:[%s3728 + $0x78d0] sm:$0xff] %v4741
                %v4743 = vld [vmem:[%s3727 + $0xfd8] sm:$0xff]
                %4744 = vst [vmem:[%s3728 + $0x78d8] sm:$0xff] %v4743
                %v4745 = vld [vmem:[%s3727 + $0xfe0] sm:$0xff]
                %4746 = vst [vmem:[%s3728 + $0x78e0] sm:$0xff] %v4745
                %v4747 = vld [vmem:[%s3727 + $0xfe8] sm:$0xff]
                %4748 = vst [vmem:[%s3728 + $0x78e8] sm:$0xff] %v4747
                %v4749 = vld [vmem:[%s3727 + $0xff0] sm:$0xff]
                %4750 = vst [vmem:[%s3728 + $0x78f0] sm:$0xff] %v4749
                %v4751 = vld [vmem:[%s3727 + $0xff8] sm:$0xff]
                %4752 = vst [vmem:[%s3728 + $0x78f8] sm:$0xff] %v4751
              $region72: #{fnet_forward.3} parent=66 // loop_footer
                %s3726 = sadd.s32 1, %s3722
              $region73: #{fnet_forward.3} parent=66 // loop_footer_branch
                %3721 = sbr.rel target = $region69
              $region74: #{fnet_forward.3} parent=66 // loop_exit
                _
            $region67: #{fnet_forward.3} parent=62 // pred_fallthru
              _
            // Predicated region
            $region75: #{fnet_forward.3} parent=62 // pred_check
              _
            $region76: #{fnet_forward.3} parent=62 // pred_check_branch
              %4754 = sbr.rel target = $region78
            $region77: #{fnet_forward.3} parent=62 // pred_region
              _
            $region78: #{fnet_forward.3} parent=62 // pred_fallthru
              _
          $region63: #{fnet_forward.3} parent=58 // pred_fallthru
            _
          %4755 = vnop
        $region59: #{fnet_forward.3} parent=50 // pred_fallthru
          _
      $region51: #{fnet_forward.3} parent=5 // pred_fallthru
        _
      %p4756 = scmp.le.s32.totalorder 2, %s9
      // Predicated region
      $region79: #{fnet_forward.3} parent=5 // pred_check
        %p4757 = pneg %p4756
      $region80: #{fnet_forward.3} parent=5 // pred_check_branch
        %4759 = sbr.rel (%p4757) target = $region82
      $region81: #{fnet_forward.3} parent=5 // pred_region
        %s4760 = ssub.s32 %s9, 2
        // Predicated region
        $region83: #{fnet_forward.3} parent=81 // pred_check
          %p4761 = pneg %p106
        $region84: #{fnet_forward.3} parent=81 // pred_check_branch
          %4763 = sbr.rel (%p4761) target = $region86
        $region85: #{fnet_forward.3} parent=81 // pred_region
          %s4764 = sand.u32 %s91, 1
          %s4765 = sand.u32 %s91, 1
          %s4766 = smul.addr %s4765, 4096
          %s4767 = scalar_lea.vmem [#allocation3], %s4766
        $region86: #{fnet_forward.3} parent=81 // pred_fallthru
          _
      $region82: #{fnet_forward.3} parent=5 // pred_fallthru
        _
    $region6: #{fnet_forward.3} parent=1 // loop_footer
      %s13 = sadd.s32 1, %s9
    $region7: #{fnet_forward.3} parent=1 // loop_footer_branch
      %8 = sbr.rel target = $region3
    $region8: #{fnet_forward.3} parent=1 // loop_exit
      _

</llo_original>
